<compile_context>
chip_gen: v7x
topology: tpu7x:2x2x1
jax: 0.10.0
libtpu: 0.0.40
codegen_flags: <defaults>
</compile_context>

<pallas_src>
import functools

import jax
import jax.numpy as jnp
from jax.experimental import pallas as pl
from jax.experimental.pallas import tpu as pltpu

_LRELU_SLOPE = 0.2
_ROW_BUDGET = 4 << 20                     # per-row-tile working-set target


def _cdiv(a, b):
    return -(-a // b)


def _vmem_capacity_bytes():
    try:
        cap = getattr(pltpu.get_tpu_info(), "vmem_capacity_bytes", None)
        if cap:
            return int(cap)
    except Exception:
        pass
    return 64 << 20                       # conservative: v7x per-core VMEM


_VMEM_SAFE = (_vmem_capacity_bytes() * 7) // 10   # leave compiler headroom


def _compiler_params(need_bytes, semantics):
    limit = int(min(max(int(need_bytes) * 3 // 2, 24 << 20), _VMEM_SAFE))
    return pltpu.CompilerParams(dimension_semantics=semantics,
                                vmem_limit_bytes=limit)


def _pick_row_tile(ho, wo, cin, cout):
    per_row = wo * (cin * 2 + cout * 6) + 1
    th = max(1, min(ho, _ROW_BUDGET // per_row))
    if th < ho and th > 8:
        th -= th % 8                      # sublane-friendly slicing when tiled
    return th


def _pick_row_tile_out(ho, wo, c):
    per_row = wo * (c * 6 + 8) + 1
    th = max(1, min(ho, _ROW_BUDGET // per_row))
    if th < ho:
        th = min(ho, max(8, th - th % 8))  # 2nd-minor out dim: mult of 8 if tiled
    return th


# --------------------------------------------------------------------------
# Kernel 1: fused ReflectionPad(1)+Conv4x4+activation.
# The per-batch padded input is VMEM-resident; the kk*kk taps are accumulated
# as separate MXU matmuls (in-VMEM "im2col", no HBM slab).
# --------------------------------------------------------------------------

def _conv_tap_kernel(x_ref, w_ref, b_ref, o_ref, *, kk, th, wo, act):
    # x_ref: (1, Hin, Win, Cin)  padded input, resident per batch
    # w_ref: (kk*kk, Cin, Cout)  resident;  b_ref: (1, Cout) f32
    # o_ref: (1, th, wo, Cout)
    i = pl.program_id(1)
    r0 = pl.multiple_of(i * th, th)
    cout = o_ref.shape[-1]
    acc = jnp.zeros((th * wo, cout), jnp.float32) + b_ref[...]
    for kh in range(kk):
        rows = x_ref[0, pl.ds(r0 + kh, th), :, :]          # (th, Win, Cin) bf16
        for kw in range(kk):
            t = rows[:, kw:kw + wo, :].reshape(th * wo, -1)
            acc = acc + jnp.dot(t, w_ref[kh * kk + kw],
                                preferred_element_type=jnp.float32)
    if act == "lrelu":
        acc = jnp.where(acc > 0, acc, _LRELU_SLOPE * acc)
    elif act == "tanh":
        acc = jnp.tanh(acc)
    o_ref[0] = acc.reshape(th, wo, cout).astype(o_ref.dtype)


def _conv_stride1_fused(xin, w_tck, b, kk, ho, wo, act, out_dtype):
    B, Hin, Win, cin = xin.shape
    T, cin2, cout = w_tck.shape
    assert T == kk * kk and cin2 == cin
    th = _pick_row_tile(ho, wo, cin, cout)
    nt = _cdiv(ho, th)
    hop = nt * th
    need_rows = hop - 1 + kk
    if need_rows > Hin:                   # zero rows only feed sliced-off output
        xin = jnp.pad(xin, ((0, 0), (0, need_rows - Hin), (0, 0), (0, 0)))
        Hin = need_rows
    # TODO(synk): for very large feature maps switch the resident-input block
    # to an overlapping halo row tile instead of the full padded map per batch.
    need_bytes = (2 * Hin * Win * cin * 2 + 2 * T * cin * cout * 2
                  + 2 * th * wo * cout * 2 + th * wo * cout * 4
                  + th * Win * cin * 2 + 2 * cout * 4 + (1 << 20))
    out = pl.pallas_call(
        functools.partial(_conv_tap_kernel, kk=kk, th=th, wo=wo, act=act),
        out_shape=jax.ShapeDtypeStruct((B, hop, wo, cout), out_dtype),
        grid=(B, nt),
        in_specs=[pl.BlockSpec((1, Hin, Win, cin), lambda bi, i: (bi, 0, 0, 0)),
                  pl.BlockSpec((T, cin, cout), lambda bi, i: (0, 0, 0)),
                  pl.BlockSpec((1, cout), lambda bi, i: (0, 0))],
        out_specs=pl.BlockSpec((1, th, wo, cout), lambda bi, i: (bi, i, 0, 0)),
        compiler_params=_compiler_params(need_bytes, ("parallel", "parallel")),
    )(xin.astype(jnp.bfloat16), w_tck.astype(jnp.bfloat16),
      b.reshape(1, cout).astype(jnp.float32))
    return out[:, :ho] if hop != ho else out


def conv4x4_refl(x_nhwc, w_oihw, b, stride, act, out_dtype=jnp.bfloat16):
    """ReflectionPad2d(1) + Conv2d(k=4, stride) + activation.

    stride-2 is rewritten as a stride-1 k=2 conv on the space-to-depth(2)
    transform of the padded input (unit-stride ref access, lane-dense K)."""
    B, H, W, Cin = x_nhwc.shape
    Cout = w_oihw.shape[0]
    xp = jnp.pad(x_nhwc, ((0, 0), (1, 1), (1, 1), (0, 0)), mode="reflect")
    Ho = (H + 2 - 4) // stride + 1
    Wo = (W + 2 - 4) // stride + 1
    if stride == 2:
        Hp, Wp = H + 2, W + 2
        assert Hp % 2 == 0 and Wp % 2 == 0
        xs = xp.reshape(B, Hp // 2, 2, Wp // 2, 2, Cin)
        xs = jnp.transpose(xs, (0, 1, 3, 2, 4, 5)).reshape(
            B, Hp // 2, Wp // 2, 4 * Cin)
        wk = w_oihw.reshape(Cout, Cin, 2, 2, 2, 2)       # (Cout,Cin,ph,rh,pw,rw)
        w_tck = jnp.transpose(wk, (2, 4, 3, 5, 1, 0)).reshape(4, 4 * Cin, Cout)
        return _conv_stride1_fused(xs, w_tck, b, 2, Ho, Wo, act, out_dtype)
    w_tck = jnp.transpose(w_oihw, (2, 3, 1, 0)).reshape(16, Cin, Cout)
    return _conv_stride1_fused(xp, w_tck, b, 4, Ho, Wo, act, out_dtype)


# --------------------------------------------------------------------------
# Kernel 2: fused CAM — pooling logits + (x*g, x*m) cat + conv1x1 + LeakyReLU
# + heatmap.  Grid (B, HW-tiles); per-batch avg/max accumulated in VMEM
# scratch over the "arbitrary" HW axis; logits written once in the finalize
# step as a full 128-lane store.
# --------------------------------------------------------------------------

def _cam_fused_kernel(x_ref, wf_ref, b_ref, wgap_ref, wgmp_ref,
                      y_ref, logit_ref, heat_ref, sum_acc, max_acc,
                      *, hw, thw, masked):
    j = pl.program_id(1)

    @pl.when(j == 0)
    def _():
        sum_acc[...] = jnp.zeros_like(sum_acc)
        max_acc[...] = jnp.full_like(max_acc, -jnp.inf)

    x = x_ref[0]                                         # (thw, C) bf16

    # adaptive_avg_pool2d(.,1): padded rows (if any) are zeros -> no mask.
    sum_acc[...] += jnp.sum(x.astype(jnp.float32), axis=0, keepdims=True)

    # adaptive_max_pool2d(.,1): mask only when HW was padded up (static flag).
    if masked:
        row = j * thw + jax.lax.broadcasted_iota(jnp.int32, (thw, 1), 0)
        xm = jnp.where(row < hw, x, jnp.full_like(x, -jnp.inf))
    else:
        xm = x
    max_acc[...] = jnp.maximum(
        max_acc[...], jnp.max(xm, axis=0, keepdims=True).astype(jnp.float32))

    # leaky_relu(cat[x*g, x*m] @ W11 + b) == leaky_relu(x @ Wf + b)
    y = jnp.dot(x, wf_ref[...], preferred_element_type=jnp.float32) + b_ref[...]
    y = jnp.where(y > 0, y, _LRELU_SLOPE * y)
    y_ref[0] = y.astype(y_ref.dtype)

    # heatmap = sum over channels, fused so y is not re-read from HBM.
    heat_ref[0] = jnp.sum(y, axis=1, keepdims=True)

    @pl.when(j == pl.num_programs(1) - 1)
    def _():
        avg = sum_acc[...] * (1.0 / hw)
        gl = jnp.sum(avg * wgap_ref[...], axis=1, keepdims=True)          # (1,1)
        ml = jnp.sum(max_acc[...] * wgmp_ref[...], axis=1, keepdims=True)  # (1,1)
        lane = jax.lax.broadcasted_iota(jnp.int32, (1, 128), 1)
        logit_ref[0] = (jnp.where(lane == 0, gl, 0.0)
                        + jnp.where(lane == 1, ml, 0.0))                  # (1,128)


def cam_fused(x_bhwc, wf, b_1c, wgap_1c, wgmp_1c, max_thw=1024):
    B, HW, C = x_bhwc.shape
    if HW <= max_thw:
        thw, HWp = HW, HW
    else:
        thw = max_thw                                    # multiple of 128
        HWp = _cdiv(HW, thw) * thw
        x_bhwc = jnp.pad(x_bhwc, ((0, 0), (0, HWp - HW), (0, 0)))
    masked = HWp != HW
    need_bytes = (4 * thw * C * 2 + 2 * C * C * 2 + thw * C * 4
                  + 8 * C * 4 + 2 * thw * 4 + 1024 + (1 << 20))
    y, logit, heat = pl.pallas_call(
        functools.partial(_cam_fused_kernel, hw=HW, thw=thw, masked=masked),
        out_shape=(jax.ShapeDtypeStruct((B, HWp, C), jnp.bfloat16),
                   jax.ShapeDtypeStruct((B, 1, 128), jnp.float32),
                   jax.ShapeDtypeStruct((B, HWp, 1), jnp.float32)),
        grid=(B, HWp // thw),
        in_specs=[pl.BlockSpec((1, thw, C), lambda b, j: (b, j, 0)),
                  pl.BlockSpec((C, C), lambda b, j: (0, 0)),
                  pl.BlockSpec((1, C), lambda b, j: (0, 0)),
                  pl.BlockSpec((1, C), lambda b, j: (0, 0)),
                  pl.BlockSpec((1, C), lambda b, j: (0, 0))],
        out_specs=(pl.BlockSpec((1, thw, C), lambda b, j: (b, j, 0)),
                   pl.BlockSpec((1, 1, 128), lambda b, j: (b, 0, 0)),
                   pl.BlockSpec((1, thw, 1), lambda b, j: (b, j, 0))),
        scratch_shapes=[pltpu.VMEM((1, C), jnp.float32),      # running sum
                        pltpu.VMEM((1, C), jnp.float32)],     # running max
        compiler_params=_compiler_params(need_bytes, ("parallel", "arbitrary")),
    )(x_bhwc.astype(jnp.bfloat16), wf.astype(jnp.bfloat16),
      b_1c.astype(jnp.float32), wgap_1c.astype(jnp.float32),
      wgmp_1c.astype(jnp.float32))
    return y[:, :HW, :], logit[:, 0, :2], heat[:, :HW, 0]


# --------------------------------------------------------------------------
# Kernel 3: out_map = ReflectionPad(1) + Conv4x4 (Cout=1) + Tanh as a 16-tap
# VPU multiply-accumulate + lane reduction; lane-dense (th, Wo) output, y is
# read once (no im2col slab, no HBM transpose).
# --------------------------------------------------------------------------

def _outmap_kernel(y_ref, w_ref, b_ref, o_ref, *, th, wo):
    # y_ref: (1, Hin, Win, C) padded y, resident per batch
    # w_ref: (16, C) f32;  b_ref: (1, 1) f32;  o_ref: (1, th, wo) f32
    i = pl.program_id(1)
    r0 = pl.multiple_of(i * th, th)
    acc = jnp.zeros((th, wo), jnp.float32)
    for kh in range(4):
        rows = y_ref[0, pl.ds(r0 + kh, th), :, :].astype(jnp.float32)
        for kw in range(4):
            acc = acc + jnp.sum(rows[:, kw:kw + wo, :] * w_ref[kh * 4 + kw, :],
                                axis=-1)
    o_ref[0] = jnp.tanh(acc + b_ref[...])


def outmap_conv_tanh(y_nhwc, w_oihw, b):
    B, H, W, C = y_nhwc.shape
    yp = jnp.pad(y_nhwc, ((0, 0), (1, 1), (1, 1), (0, 0)), mode="reflect")
    Hin, Win = H + 2, W + 2
    Ho, Wo = H - 1, W - 1
    w16 = jnp.transpose(w_oihw[0], (1, 2, 0)).reshape(16, C)
    th = _pick_row_tile_out(Ho, Wo, C)
    nt = _cdiv(Ho, th)
    hop = nt * th
    need_rows = hop - 1 + 4
    if need_rows > Hin:
        yp = jnp.pad(yp, ((0, 0), (0, need_rows - Hin), (0, 0), (0, 0)))
        Hin = need_rows
    need_bytes = (2 * Hin * Win * C * 2 + 2 * 16 * C * 4 + 2 * th * Wo * 4
                  + th * Win * C * 4 + (1 << 20))
    out = pl.pallas_call(
        functools.partial(_outmap_kernel, th=th, wo=Wo),
        out_shape=jax.ShapeDtypeStruct((B, hop, Wo), jnp.float32),
        grid=(B, nt),
        in_specs=[pl.BlockSpec((1, Hin, Win, C), lambda bi, i: (bi, 0, 0, 0)),
                  pl.BlockSpec((16, C), lambda bi, i: (0, 0)),
                  pl.BlockSpec((1, 1), lambda bi, i: (0, 0))],
        out_specs=pl.BlockSpec((1, th, Wo), lambda bi, i: (bi, i, 0)),
        compiler_params=_compiler_params(need_bytes, ("parallel", "parallel")),
    )(yp.astype(jnp.bfloat16), w16.astype(jnp.float32),
      b.reshape(1, 1).astype(jnp.float32))
    return out[:, :Ho] if hop != Ho else out


# --------------------------------------------------------------------------
# Discriminator forward
# --------------------------------------------------------------------------

def discriminator_forward(params, x_nchw, *, base, downsample):
    x = jnp.transpose(x_nchw, (0, 2, 3, 1)).astype(jnp.bfloat16)   # NCHW->NHWC

    # ---- self.down ----
    x = conv4x4_refl(x, params["down_w"][0], params["down_b"][0], 2, "lrelu")
    for i in range(downsample):
        stride = 2 if i != downsample - 1 else 1
        x = conv4x4_refl(x, params["down_w"][i + 1], params["down_b"][i + 1],
                         stride, "lrelu")

    B, H, W, C = x.shape
    x3 = x.reshape(B, H * W, C)

    # ---- fused CAM: pooled logits + channel scaling + conv1x1 + LeakyReLU +
    #      heatmap ----
    wgap = params["gap_w"].reshape(1, C)               # Linear(C,1) weight (1, C)
    wgmp = params["gmp_w"].reshape(1, C)
    w11 = params["conv11_w"].reshape(C, 2 * C)         # (Cout=C, Cin=2C)
    wf = (jnp.transpose(w11[:, :C]) * wgap.reshape(C, 1)
          + jnp.transpose(w11[:, C:]) * wgmp.reshape(C, 1))    # (C, C) fused
    y3, logit, heat = cam_fused(x3, wf, params["conv11_b"].reshape(1, C),
                                wgap, wgmp)

    y = y3.reshape(B, H, W, C)
    heatmap = heat.reshape(B, H, W)                    # torch.sum(x, dim=1)

    # ---- out_map: ReflectionPad2d(1) + Conv2d(k=4, s=1, Cout=1) + Tanh ----
    out_vals = outmap_conv_tanh(y, params["out_w"], params["out_b"])
    out = out_vals[:, None, :, :]                      # NCHW, Cout=1

    return out, logit, heatmap


# --------------------------------------------------------------------------
# Deterministic parameter init (shapes follow Discriminator.__init__)
# --------------------------------------------------------------------------

def init_params(key, base, downsample, dtype=jnp.float32):
    chans = [(3, base)] + [(base * 2 ** i, base * 2 ** (i + 1))
                           for i in range(downsample)]
    keys = jax.random.split(key, 2 * len(chans) + 6)
    params = {"down_w": [], "down_b": []}
    idx = 0
    for cin, cout in chans:
        params["down_w"].append(
            0.1 * jax.random.normal(keys[idx], (cout, cin, 4, 4), dtype)); idx += 1
        params["down_b"].append(
            0.1 * jax.random.normal(keys[idx], (cout,), dtype)); idx += 1
    C = base * 2 ** downsample                         # base * scale * 2
    params["gap_w"] = 0.1 * jax.random.normal(keys[idx], (1, C), dtype); idx += 1
    params["gmp_w"] = 0.1 * jax.random.normal(keys[idx], (1, C), dtype); idx += 1
    params["conv11_w"] = 0.1 * jax.random.normal(keys[idx], (C, 2 * C, 1, 1), dtype); idx += 1
    params["conv11_b"] = 0.1 * jax.random.normal(keys[idx], (C,), dtype); idx += 1
    params["out_w"] = 0.1 * jax.random.normal(keys[idx], (1, C, 4, 4), dtype); idx += 1
    params["out_b"] = 0.1 * jax.random.normal(keys[idx], (1,), dtype); idx += 1
    return params


if __name__ == "__main__":
    base, downsample = 8, 3                            # small, same structure
    key = jax.random.PRNGKey(0)
    pkey, xkey = jax.random.split(key)
    params = init_params(pkey, base, downsample)
    x = jax.random.normal(xkey, (2, 3, 32, 32), jnp.float32)   # NCHW like PyTorch

    fwd = jax.jit(functools.partial(discriminator_forward,
                                    base=base, downsample=downsample))
    out, logit, heatmap = fwd(params, x)
    jax.block_until_ready((out, logit, heatmap))

    # 32 -> 16 -> 8 -> 4 -> 3 (last stride 1); out_map: 3 -> 2
    assert out.shape == (2, 1, 2, 2), out.shape
    assert logit.shape == (2, 2), logit.shape
    assert heatmap.shape == (2, 3, 3), heatmap.shape
    assert bool(jnp.all(jnp.isfinite(out)))
    assert bool(jnp.all(jnp.isfinite(logit)))
    assert bool(jnp.all(jnp.isfinite(heatmap)))
    print("KERNEL_OK")
</pallas_src>

<mosaic_0001>
module attributes {stable_mosaic.version = 11 : i64} {
  func.func @_conv_tap_kernel(%arg0: i32, %arg1: i32, %arg2: memref<1x17x17x12xbf16, #tpu.memory_space<vmem>>, %arg3: memref<4x12x8xbf16, #tpu.memory_space<vmem>>, %arg4: memref<1x8xf32, #tpu.memory_space<vmem>>, %arg5: memref<1x16x16x8xbf16, #tpu.memory_space<vmem>>) attributes {dimension_semantics = [#tpu.dimension_semantics<parallel>, #tpu.dimension_semantics<parallel>], iteration_bounds = array<i64: 2, 1>, scalar_prefetch = 0 : i64, scratch_operands = 0 : i64, tpu.core_type = #tpu.core_type<tc>, window_params = [{transform_indices = @transform_0, window_bounds = array<i64: 1, 17, 17, 12>}, {pipeline_mode = #tpu.pipeline_mode<synchronous>, transform_indices = @transform_1, window_bounds = array<i64: 4, 12, 8>}, {pipeline_mode = #tpu.pipeline_mode<synchronous>, transform_indices = @transform_2, window_bounds = array<i64: 1, 8>}, {transform_indices = @transform_3, window_bounds = array<i64: 1, 16, 16, 8>}]} {
    %c16_i32 = arith.constant 16 : i32
    %0 = arith.muli %arg1, %c16_i32 : i32
    %1 = tpu.assume_multiple %0, 16 : i32
    %cst = arith.constant 0.000000e+00 : f32
    %2 = vector.broadcast %cst : f32 to vector<256x8xf32>
    %c0 = arith.constant 0 : index
    %c0_0 = arith.constant 0 : index
    %3 = vector.load %arg4[%c0, %c0_0] : memref<1x8xf32, #tpu.memory_space<vmem>>, vector<1x8xf32>
    %4 = vector.broadcast %3 : vector<1x8xf32> to vector<256x8xf32>
    %5 = arith.addf %2, %4 : vector<256x8xf32>
    %c0_i32 = arith.constant 0 : i32
    %6 = arith.addi %1, %c0_i32 : i32
    %c0_1 = arith.constant 0 : index
    %7 = arith.index_cast %6 : i32 to index
    %c0_2 = arith.constant 0 : index
    %c0_3 = arith.constant 0 : index
    %8 = vector.load %arg2[%c0_1, %7, %c0_2, %c0_3] : memref<1x17x17x12xbf16, #tpu.memory_space<vmem>>, vector<1x16x17x12xbf16>
    %9 = vector.shape_cast %8 : vector<1x16x17x12xbf16> to vector<16x17x12xbf16>
    %10 = vector.extract_strided_slice %9 {offsets = [0, 0, 0], sizes = [16, 16, 12], strides = [1, 1, 1]} : vector<16x17x12xbf16> to vector<16x16x12xbf16>
    %11 = vector.shape_cast %10 : vector<16x16x12xbf16> to vector<256x12xbf16>
    %c0_4 = arith.constant 0 : index
    %c0_5 = arith.constant 0 : index
    %c0_6 = arith.constant 0 : index
    %12 = vector.load %arg3[%c0_4, %c0_5, %c0_6] : memref<4x12x8xbf16, #tpu.memory_space<vmem>>, vector<1x12x8xbf16>
    %13 = vector.shape_cast %12 : vector<1x12x8xbf16> to vector<12x8xbf16>
    %cst_7 = arith.constant dense<0.000000e+00> : vector<256x8xf32>
    %14 = tpu.matmul %11, %13, %cst_7 {dimension_numbers = #tpu.dot_dimension_numbers<[1], [0], [0], [1], [0, 0, 1, 1], [], []>} : vector<256x12xbf16>, vector<12x8xbf16>, vector<256x8xf32> -> vector<256x8xf32>
    %15 = arith.addf %5, %14 : vector<256x8xf32>
    %16 = vector.extract_strided_slice %9 {offsets = [0, 1, 0], sizes = [16, 16, 12], strides = [1, 1, 1]} : vector<16x17x12xbf16> to vector<16x16x12xbf16>
    %17 = vector.shape_cast %16 : vector<16x16x12xbf16> to vector<256x12xbf16>
    %c1 = arith.constant 1 : index
    %c0_8 = arith.constant 0 : index
    %c0_9 = arith.constant 0 : index
    %18 = vector.load %arg3[%c1, %c0_8, %c0_9] : memref<4x12x8xbf16, #tpu.memory_space<vmem>>, vector<1x12x8xbf16>
    %19 = vector.shape_cast %18 : vector<1x12x8xbf16> to vector<12x8xbf16>
    %cst_10 = arith.constant dense<0.000000e+00> : vector<256x8xf32>
    %20 = tpu.matmul %17, %19, %cst_10 {dimension_numbers = #tpu.dot_dimension_numbers<[1], [0], [0], [1], [0, 0, 1, 1], [], []>} : vector<256x12xbf16>, vector<12x8xbf16>, vector<256x8xf32> -> vector<256x8xf32>
    %21 = arith.addf %15, %20 : vector<256x8xf32>
    %c1_i32 = arith.constant 1 : i32
    %22 = arith.addi %1, %c1_i32 : i32
    %c0_11 = arith.constant 0 : index
    %23 = arith.index_cast %22 : i32 to index
    %c0_12 = arith.constant 0 : index
    %c0_13 = arith.constant 0 : index
    %24 = vector.load %arg2[%c0_11, %23, %c0_12, %c0_13] : memref<1x17x17x12xbf16, #tpu.memory_space<vmem>>, vector<1x16x17x12xbf16>
    %25 = vector.shape_cast %24 : vector<1x16x17x12xbf16> to vector<16x17x12xbf16>
    %26 = vector.extract_strided_slice %25 {offsets = [0, 0, 0], sizes = [16, 16, 12], strides = [1, 1, 1]} : vector<16x17x12xbf16> to vector<16x16x12xbf16>
    %27 = vector.shape_cast %26 : vector<16x16x12xbf16> to vector<256x12xbf16>
    %c2 = arith.constant 2 : index
    %c0_14 = arith.constant 0 : index
    %c0_15 = arith.constant 0 : index
    %28 = vector.load %arg3[%c2, %c0_14, %c0_15] : memref<4x12x8xbf16, #tpu.memory_space<vmem>>, vector<1x12x8xbf16>
    %29 = vector.shape_cast %28 : vector<1x12x8xbf16> to vector<12x8xbf16>
    %cst_16 = arith.constant dense<0.000000e+00> : vector<256x8xf32>
    %30 = tpu.matmul %27, %29, %cst_16 {dimension_numbers = #tpu.dot_dimension_numbers<[1], [0], [0], [1], [0, 0, 1, 1], [], []>} : vector<256x12xbf16>, vector<12x8xbf16>, vector<256x8xf32> -> vector<256x8xf32>
    %31 = arith.addf %21, %30 : vector<256x8xf32>
    %32 = vector.extract_strided_slice %25 {offsets = [0, 1, 0], sizes = [16, 16, 12], strides = [1, 1, 1]} : vector<16x17x12xbf16> to vector<16x16x12xbf16>
    %33 = vector.shape_cast %32 : vector<16x16x12xbf16> to vector<256x12xbf16>
    %c3 = arith.constant 3 : index
    %c0_17 = arith.constant 0 : index
    %c0_18 = arith.constant 0 : index
    %34 = vector.load %arg3[%c3, %c0_17, %c0_18] : memref<4x12x8xbf16, #tpu.memory_space<vmem>>, vector<1x12x8xbf16>
    %35 = vector.shape_cast %34 : vector<1x12x8xbf16> to vector<12x8xbf16>
    %cst_19 = arith.constant dense<0.000000e+00> : vector<256x8xf32>
    %36 = tpu.matmul %33, %35, %cst_19 {dimension_numbers = #tpu.dot_dimension_numbers<[1], [0], [0], [1], [0, 0, 1, 1], [], []>} : vector<256x12xbf16>, vector<12x8xbf16>, vector<256x8xf32> -> vector<256x8xf32>
    %37 = arith.addf %31, %36 : vector<256x8xf32>
    %cst_20 = arith.constant 0.000000e+00 : f32
    %38 = vector.broadcast %cst_20 : f32 to vector<256x8xf32>
    %39 = arith.cmpf ogt, %37, %38 : vector<256x8xf32>
    %cst_21 = arith.constant 2.000000e-01 : f32
    %40 = vector.broadcast %cst_21 : f32 to vector<256x8xf32>
    %41 = arith.mulf %40, %37 : vector<256x8xf32>
    %42 = arith.select %39, %37, %41 : vector<256x8xi1>, vector<256x8xf32>
    %43 = vector.shape_cast %42 : vector<256x8xf32> to vector<16x16x8xf32>
    %44 = arith.truncf %43 : vector<16x16x8xf32> to vector<16x16x8xbf16>
    %c0_22 = arith.constant 0 : index
    %c0_23 = arith.constant 0 : index
    %c0_24 = arith.constant 0 : index
    %c0_25 = arith.constant 0 : index
    %45 = vector.load %arg5[%c0_22, %c0_23, %c0_24, %c0_25] : memref<1x16x16x8xbf16, #tpu.memory_space<vmem>>, vector<1x16x16x8xbf16>
    %46 = vector.shape_cast %45 : vector<1x16x16x8xbf16> to vector<16x16x8xbf16>
    %47 = vector.shape_cast %44 : vector<16x16x8xbf16> to vector<1x16x16x8xbf16>
    tpu.vector_store %arg5[%c0_22, %c0_23, %c0_24, %c0_25], %47 {strides = array<i32>} : memref<1x16x16x8xbf16, #tpu.memory_space<vmem>>, vector<1x16x16x8xbf16>,
    return
  }
  func.func @transform_0(%arg0: i32, %arg1: i32) -> (i32, i32, i32, i32) {
    %c0_i32 = arith.constant 0 : i32
    %c0_i32_0 = arith.constant 0 : i32
    %c0_i32_1 = arith.constant 0 : i32
    %c0_i32_2 = arith.constant 0 : i32
    return %arg0, %c0_i32, %c0_i32_0, %c0_i32_1 : i32, i32, i32, i32
  }
  func.func @transform_1(%arg0: i32, %arg1: i32) -> (i32, i32, i32) {
    %c0_i32 = arith.constant 0 : i32
    %c0_i32_0 = arith.constant 0 : i32
    %c0_i32_1 = arith.constant 0 : i32
    %c0_i32_2 = arith.constant 0 : i32
    return %c0_i32, %c0_i32_0, %c0_i32_1 : i32, i32, i32
  }
  func.func @transform_2(%arg0: i32, %arg1: i32) -> (i32, i32) {
    %c0_i32 = arith.constant 0 : i32
    %c0_i32_0 = arith.constant 0 : i32
    %c0_i32_1 = arith.constant 0 : i32
    return %c0_i32, %c0_i32_0 : i32, i32
  }
  func.func @transform_3(%arg0: i32, %arg1: i32) -> (i32, i32, i32, i32) {
    %c0_i32 = arith.constant 0 : i32
    %c0_i32_0 = arith.constant 0 : i32
    %c0_i32_1 = arith.constant 0 : i32
    return %arg0, %arg1, %c0_i32, %c0_i32_0 : i32, i32, i32, i32
  }
}

module attributes {stable_mosaic.version = 11 : i64} {
  func.func @_conv_tap_kernel(%arg0: i32, %arg1: i32, %arg2: memref<1x9x9x32xbf16, #tpu.memory_space<vmem>>, %arg3: memref<4x32x16xbf16, #tpu.memory_space<vmem>>, %arg4: memref<1x16xf32, #tpu.memory_space<vmem>>, %arg5: memref<1x8x8x16xbf16, #tpu.memory_space<vmem>>) attributes {dimension_semantics = [#tpu.dimension_semantics<parallel>, #tpu.dimension_semantics<parallel>], iteration_bounds = array<i64: 2, 1>, scalar_prefetch = 0 : i64, scratch_operands = 0 : i64, tpu.core_type = #tpu.core_type<tc>, window_params = [{transform_indices = @transform_0, window_bounds = array<i64: 1, 9, 9, 32>}, {pipeline_mode = #tpu.pipeline_mode<synchronous>, transform_indices = @transform_1, window_bounds = array<i64: 4, 32, 16>}, {pipeline_mode = #tpu.pipeline_mode<synchronous>, transform_indices = @transform_2, window_bounds = array<i64: 1, 16>}, {transform_indices = @transform_3, window_bounds = array<i64: 1, 8, 8, 16>}]} {
    %c8_i32 = arith.constant 8 : i32
    %0 = arith.muli %arg1, %c8_i32 : i32
    %1 = tpu.assume_multiple %0, 8 : i32
    %cst = arith.constant 0.000000e+00 : f32
    %2 = vector.broadcast %cst : f32 to vector<64x16xf32>
    %c0 = arith.constant 0 : index
    %c0_0 = arith.constant 0 : index
    %3 = vector.load %arg4[%c0, %c0_0] : memref<1x16xf32, #tpu.memory_space<vmem>>, vector<1x16xf32>
    %4 = vector.broadcast %3 : vector<1x16xf32> to vector<64x16xf32>
    %5 = arith.addf %2, %4 : vector<64x16xf32>
    %c0_i32 = arith.constant 0 : i32
    %6 = arith.addi %1, %c0_i32 : i32
    %c0_1 = arith.constant 0 : index
    %7 = arith.index_cast %6 : i32 to index
    %c0_2 = arith.constant 0 : index
    %c0_3 = arith.constant 0 : index
    %8 = vector.load %arg2[%c0_1, %7, %c0_2, %c0_3] : memref<1x9x9x32xbf16, #tpu.memory_space<vmem>>, vector<1x8x9x32xbf16>
    %9 = vector.shape_cast %8 : vector<1x8x9x32xbf16> to vector<8x9x32xbf16>
    %10 = vector.extract_strided_slice %9 {offsets = [0, 0, 0], sizes = [8, 8, 32], strides = [1, 1, 1]} : vector<8x9x32xbf16> to vector<8x8x32xbf16>
    %11 = vector.shape_cast %10 : vector<8x8x32xbf16> to vector<64x32xbf16>
    %c0_4 = arith.constant 0 : index
    %c0_5 = arith.constant 0 : index
    %c0_6 = arith.constant 0 : index
    %12 = vector.load %arg3[%c0_4, %c0_5, %c0_6] : memref<4x32x16xbf16, #tpu.memory_space<vmem>>, vector<1x32x16xbf16>
    %13 = vector.shape_cast %12 : vector<1x32x16xbf16> to vector<32x16xbf16>
    %cst_7 = arith.constant dense<0.000000e+00> : vector<64x16xf32>
    %14 = tpu.matmul %11, %13, %cst_7 {dimension_numbers = #tpu.dot_dimension_numbers<[1], [0], [0], [1], [0, 0, 1, 1], [], []>} : vector<64x32xbf16>, vector<32x16xbf16>, vector<64x16xf32> -> vector<64x16xf32>
    %15 = arith.addf %5, %14 : vector<64x16xf32>
    %16 = vector.extract_strided_slice %9 {offsets = [0, 1, 0], sizes = [8, 8, 32], strides = [1, 1, 1]} : vector<8x9x32xbf16> to vector<8x8x32xbf16>
    %17 = vector.shape_cast %16 : vector<8x8x32xbf16> to vector<64x32xbf16>
    %c1 = arith.constant 1 : index
    %c0_8 = arith.constant 0 : index
    %c0_9 = arith.constant 0 : index
    %18 = vector.load %arg3[%c1, %c0_8, %c0_9] : memref<4x32x16xbf16, #tpu.memory_space<vmem>>, vector<1x32x16xbf16>
    %19 = vector.shape_cast %18 : vector<1x32x16xbf16> to vector<32x16xbf16>
    %cst_10 = arith.constant dense<0.000000e+00> : vector<64x16xf32>
    %20 = tpu.matmul %17, %19, %cst_10 {dimension_numbers = #tpu.dot_dimension_numbers<[1], [0], [0], [1], [0, 0, 1, 1], [], []>} : vector<64x32xbf16>, vector<32x16xbf16>, vector<64x16xf32> -> vector<64x16xf32>
    %21 = arith.addf %15, %20 : vector<64x16xf32>
    %c1_i32 = arith.constant 1 : i32
    %22 = arith.addi %1, %c1_i32 : i32
    %c0_11 = arith.constant 0 : index
    %23 = arith.index_cast %22 : i32 to index
    %c0_12 = arith.constant 0 : index
    %c0_13 = arith.constant 0 : index
    %24 = vector.load %arg2[%c0_11, %23, %c0_12, %c0_13] : memref<1x9x9x32xbf16, #tpu.memory_space<vmem>>, vector<1x8x9x32xbf16>
    %25 = vector.shape_cast %24 : vector<1x8x9x32xbf16> to vector<8x9x32xbf16>
    %26 = vector.extract_strided_slice %25 {offsets = [0, 0, 0], sizes = [8, 8, 32], strides = [1, 1, 1]} : vector<8x9x32xbf16> to vector<8x8x32xbf16>
    %27 = vector.shape_cast %26 : vector<8x8x32xbf16> to vector<64x32xbf16>
    %c2 = arith.constant 2 : index
    %c0_14 = arith.constant 0 : index
    %c0_15 = arith.constant 0 : index
    %28 = vector.load %arg3[%c2, %c0_14, %c0_15] : memref<4x32x16xbf16, #tpu.memory_space<vmem>>, vector<1x32x16xbf16>
    %29 = vector.shape_cast %28 : vector<1x32x16xbf16> to vector<32x16xbf16>
    %cst_16 = arith.constant dense<0.000000e+00> : vector<64x16xf32>
    %30 = tpu.matmul %27, %29, %cst_16 {dimension_numbers = #tpu.dot_dimension_numbers<[1], [0], [0], [1], [0, 0, 1, 1], [], []>} : vector<64x32xbf16>, vector<32x16xbf16>, vector<64x16xf32> -> vector<64x16xf32>
    %31 = arith.addf %21, %30 : vector<64x16xf32>
    %32 = vector.extract_strided_slice %25 {offsets = [0, 1, 0], sizes = [8, 8, 32], strides = [1, 1, 1]} : vector<8x9x32xbf16> to vector<8x8x32xbf16>
    %33 = vector.shape_cast %32 : vector<8x8x32xbf16> to vector<64x32xbf16>
    %c3 = arith.constant 3 : index
    %c0_17 = arith.constant 0 : index
    %c0_18 = arith.constant 0 : index
    %34 = vector.load %arg3[%c3, %c0_17, %c0_18] : memref<4x32x16xbf16, #tpu.memory_space<vmem>>, vector<1x32x16xbf16>
    %35 = vector.shape_cast %34 : vector<1x32x16xbf16> to vector<32x16xbf16>
    %cst_19 = arith.constant dense<0.000000e+00> : vector<64x16xf32>
    %36 = tpu.matmul %33, %35, %cst_19 {dimension_numbers = #tpu.dot_dimension_numbers<[1], [0], [0], [1], [0, 0, 1, 1], [], []>} : vector<64x32xbf16>, vector<32x16xbf16>, vector<64x16xf32> -> vector<64x16xf32>
    %37 = arith.addf %31, %36 : vector<64x16xf32>
    %cst_20 = arith.constant 0.000000e+00 : f32
    %38 = vector.broadcast %cst_20 : f32 to vector<64x16xf32>
    %39 = arith.cmpf ogt, %37, %38 : vector<64x16xf32>
    %cst_21 = arith.constant 2.000000e-01 : f32
    %40 = vector.broadcast %cst_21 : f32 to vector<64x16xf32>
    %41 = arith.mulf %40, %37 : vector<64x16xf32>
    %42 = arith.select %39, %37, %41 : vector<64x16xi1>, vector<64x16xf32>
    %43 = vector.shape_cast %42 : vector<64x16xf32> to vector<8x8x16xf32>
    %44 = arith.truncf %43 : vector<8x8x16xf32> to vector<8x8x16xbf16>
    %c0_22 = arith.constant 0 : index
    %c0_23 = arith.constant 0 : index
    %c0_24 = arith.constant 0 : index
    %c0_25 = arith.constant 0 : index
    %45 = vector.load %arg5[%c0_22, %c0_23, %c0_24, %c0_25] : memref<1x8x8x16xbf16, #tpu.memory_space<vmem>>, vector<1x8x8x16xbf16>
    %46 = vector.shape_cast %45 : vector<1x8x8x16xbf16> to vector<8x8x16xbf16>
    %47 = vector.shape_cast %44 : vector<8x8x16xbf16> to vector<1x8x8x16xbf16>
    tpu.vector_store %arg5[%c0_22, %c0_23, %c0_24, %c0_25], %47 {strides = array<i32>} : memref<1x8x8x16xbf16, #tpu.memory_space<vmem>>, vector<1x8x8x16xbf16>,
    return
  }
  func.func @transform_0(%arg0: i32, %arg1: i32) -> (i32, i32, i32, i32) {
    %c0_i32 = arith.constant 0 : i32
    %c0_i32_0 = arith.constant 0 : i32
    %c0_i32_1 = arith.constant 0 : i32
    %c0_i32_2 = arith.constant 0 : i32
    return %arg0, %c0_i32, %c0_i32_0, %c0_i32_1 : i32, i32, i32, i32
  }
  func.func @transform_1(%arg0: i32, %arg1: i32) -> (i32, i32, i32) {
    %c0_i32 = arith.constant 0 : i32
    %c0_i32_0 = arith.constant 0 : i32
    %c0_i32_1 = arith.constant 0 : i32
    %c0_i32_2 = arith.constant 0 : i32
    return %c0_i32, %c0_i32_0, %c0_i32_1 : i32, i32, i32
  }
  func.func @transform_2(%arg0: i32, %arg1: i32) -> (i32, i32) {
    %c0_i32 = arith.constant 0 : i32
    %c0_i32_0 = arith.constant 0 : i32
    %c0_i32_1 = arith.constant 0 : i32
    return %c0_i32, %c0_i32_0 : i32, i32
  }
  func.func @transform_3(%arg0: i32, %arg1: i32) -> (i32, i32, i32, i32) {
    %c0_i32 = arith.constant 0 : i32
    %c0_i32_0 = arith.constant 0 : i32
    %c0_i32_1 = arith.constant 0 : i32
    return %arg0, %arg1, %c0_i32, %c0_i32_0 : i32, i32, i32, i32
  }
}

module attributes {stable_mosaic.version = 11 : i64} {
  func.func @_conv_tap_kernel(%arg0: i32, %arg1: i32, %arg2: memref<1x5x5x64xbf16, #tpu.memory_space<vmem>>, %arg3: memref<4x64x32xbf16, #tpu.memory_space<vmem>>, %arg4: memref<1x32xf32, #tpu.memory_space<vmem>>, %arg5: memref<1x4x4x32xbf16, #tpu.memory_space<vmem>>) attributes {dimension_semantics = [#tpu.dimension_semantics<parallel>, #tpu.dimension_semantics<parallel>], iteration_bounds = array<i64: 2, 1>, scalar_prefetch = 0 : i64, scratch_operands = 0 : i64, tpu.core_type = #tpu.core_type<tc>, window_params = [{transform_indices = @transform_0, window_bounds = array<i64: 1, 5, 5, 64>}, {pipeline_mode = #tpu.pipeline_mode<synchronous>, transform_indices = @transform_1, window_bounds = array<i64: 4, 64, 32>}, {pipeline_mode = #tpu.pipeline_mode<synchronous>, transform_indices = @transform_2, window_bounds = array<i64: 1, 32>}, {transform_indices = @transform_3, window_bounds = array<i64: 1, 4, 4, 32>}]} {
    %c4_i32 = arith.constant 4 : i32
    %0 = arith.muli %arg1, %c4_i32 : i32
    %1 = tpu.assume_multiple %0, 4 : i32
    %cst = arith.constant 0.000000e+00 : f32
    %2 = vector.broadcast %cst : f32 to vector<16x32xf32>
    %c0 = arith.constant 0 : index
    %c0_0 = arith.constant 0 : index
    %3 = vector.load %arg4[%c0, %c0_0] : memref<1x32xf32, #tpu.memory_space<vmem>>, vector<1x32xf32>
    %4 = vector.broadcast %3 : vector<1x32xf32> to vector<16x32xf32>
    %5 = arith.addf %2, %4 : vector<16x32xf32>
    %c0_i32 = arith.constant 0 : i32
    %6 = arith.addi %1, %c0_i32 : i32
    %c0_1 = arith.constant 0 : index
    %7 = arith.index_cast %6 : i32 to index
    %c0_2 = arith.constant 0 : index
    %c0_3 = arith.constant 0 : index
    %8 = vector.load %arg2[%c0_1, %7, %c0_2, %c0_3] : memref<1x5x5x64xbf16, #tpu.memory_space<vmem>>, vector<1x4x5x64xbf16>
    %9 = vector.shape_cast %8 : vector<1x4x5x64xbf16> to vector<4x5x64xbf16>
    %10 = vector.extract_strided_slice %9 {offsets = [0, 0, 0], sizes = [4, 4, 64], strides = [1, 1, 1]} : vector<4x5x64xbf16> to vector<4x4x64xbf16>
    %11 = vector.shape_cast %10 : vector<4x4x64xbf16> to vector<16x64xbf16>
    %c0_4 = arith.constant 0 : index
    %c0_5 = arith.constant 0 : index
    %c0_6 = arith.constant 0 : index
    %12 = vector.load %arg3[%c0_4, %c0_5, %c0_6] : memref<4x64x32xbf16, #tpu.memory_space<vmem>>, vector<1x64x32xbf16>
    %13 = vector.shape_cast %12 : vector<1x64x32xbf16> to vector<64x32xbf16>
    %cst_7 = arith.constant dense<0.000000e+00> : vector<16x32xf32>
    %14 = tpu.matmul %11, %13, %cst_7 {dimension_numbers = #tpu.dot_dimension_numbers<[1], [0], [0], [1], [0, 0, 1, 1], [], []>} : vector<16x64xbf16>, vector<64x32xbf16>, vector<16x32xf32> -> vector<16x32xf32>
    %15 = arith.addf %5, %14 : vector<16x32xf32>
    %16 = vector.extract_strided_slice %9 {offsets = [0, 1, 0], sizes = [4, 4, 64], strides = [1, 1, 1]} : vector<4x5x64xbf16> to vector<4x4x64xbf16>
    %17 = vector.shape_cast %16 : vector<4x4x64xbf16> to vector<16x64xbf16>
    %c1 = arith.constant 1 : index
    %c0_8 = arith.constant 0 : index
    %c0_9 = arith.constant 0 : index
    %18 = vector.load %arg3[%c1, %c0_8, %c0_9] : memref<4x64x32xbf16, #tpu.memory_space<vmem>>, vector<1x64x32xbf16>
    %19 = vector.shape_cast %18 : vector<1x64x32xbf16> to vector<64x32xbf16>
    %cst_10 = arith.constant dense<0.000000e+00> : vector<16x32xf32>
    %20 = tpu.matmul %17, %19, %cst_10 {dimension_numbers = #tpu.dot_dimension_numbers<[1], [0], [0], [1], [0, 0, 1, 1], [], []>} : vector<16x64xbf16>, vector<64x32xbf16>, vector<16x32xf32> -> vector<16x32xf32>
    %21 = arith.addf %15, %20 : vector<16x32xf32>
    %c1_i32 = arith.constant 1 : i32
    %22 = arith.addi %1, %c1_i32 : i32
    %c0_11 = arith.constant 0 : index
    %23 = arith.index_cast %22 : i32 to index
    %c0_12 = arith.constant 0 : index
    %c0_13 = arith.constant 0 : index
    %24 = vector.load %arg2[%c0_11, %23, %c0_12, %c0_13] : memref<1x5x5x64xbf16, #tpu.memory_space<vmem>>, vector<1x4x5x64xbf16>
    %25 = vector.shape_cast %24 : vector<1x4x5x64xbf16> to vector<4x5x64xbf16>
    %26 = vector.extract_strided_slice %25 {offsets = [0, 0, 0], sizes = [4, 4, 64], strides = [1, 1, 1]} : vector<4x5x64xbf16> to vector<4x4x64xbf16>
    %27 = vector.shape_cast %26 : vector<4x4x64xbf16> to vector<16x64xbf16>
    %c2 = arith.constant 2 : index
    %c0_14 = arith.constant 0 : index
    %c0_15 = arith.constant 0 : index
    %28 = vector.load %arg3[%c2, %c0_14, %c0_15] : memref<4x64x32xbf16, #tpu.memory_space<vmem>>, vector<1x64x32xbf16>
    %29 = vector.shape_cast %28 : vector<1x64x32xbf16> to vector<64x32xbf16>
    %cst_16 = arith.constant dense<0.000000e+00> : vector<16x32xf32>
    %30 = tpu.matmul %27, %29, %cst_16 {dimension_numbers = #tpu.dot_dimension_numbers<[1], [0], [0], [1], [0, 0, 1, 1], [], []>} : vector<16x64xbf16>, vector<64x32xbf16>, vector<16x32xf32> -> vector<16x32xf32>
    %31 = arith.addf %21, %30 : vector<16x32xf32>
    %32 = vector.extract_strided_slice %25 {offsets = [0, 1, 0], sizes = [4, 4, 64], strides = [1, 1, 1]} : vector<4x5x64xbf16> to vector<4x4x64xbf16>
    %33 = vector.shape_cast %32 : vector<4x4x64xbf16> to vector<16x64xbf16>
    %c3 = arith.constant 3 : index
    %c0_17 = arith.constant 0 : index
    %c0_18 = arith.constant 0 : index
    %34 = vector.load %arg3[%c3, %c0_17, %c0_18] : memref<4x64x32xbf16, #tpu.memory_space<vmem>>, vector<1x64x32xbf16>
    %35 = vector.shape_cast %34 : vector<1x64x32xbf16> to vector<64x32xbf16>
    %cst_19 = arith.constant dense<0.000000e+00> : vector<16x32xf32>
    %36 = tpu.matmul %33, %35, %cst_19 {dimension_numbers = #tpu.dot_dimension_numbers<[1], [0], [0], [1], [0, 0, 1, 1], [], []>} : vector<16x64xbf16>, vector<64x32xbf16>, vector<16x32xf32> -> vector<16x32xf32>
    %37 = arith.addf %31, %36 : vector<16x32xf32>
    %cst_20 = arith.constant 0.000000e+00 : f32
    %38 = vector.broadcast %cst_20 : f32 to vector<16x32xf32>
    %39 = arith.cmpf ogt, %37, %38 : vector<16x32xf32>
    %cst_21 = arith.constant 2.000000e-01 : f32
    %40 = vector.broadcast %cst_21 : f32 to vector<16x32xf32>
    %41 = arith.mulf %40, %37 : vector<16x32xf32>
    %42 = arith.select %39, %37, %41 : vector<16x32xi1>, vector<16x32xf32>
    %43 = vector.shape_cast %42 : vector<16x32xf32> to vector<4x4x32xf32>
    %44 = arith.truncf %43 : vector<4x4x32xf32> to vector<4x4x32xbf16>
    %c0_22 = arith.constant 0 : index
    %c0_23 = arith.constant 0 : index
    %c0_24 = arith.constant 0 : index
    %c0_25 = arith.constant 0 : index
    %45 = vector.load %arg5[%c0_22, %c0_23, %c0_24, %c0_25] : memref<1x4x4x32xbf16, #tpu.memory_space<vmem>>, vector<1x4x4x32xbf16>
    %46 = vector.shape_cast %45 : vector<1x4x4x32xbf16> to vector<4x4x32xbf16>
    %47 = vector.shape_cast %44 : vector<4x4x32xbf16> to vector<1x4x4x32xbf16>
    tpu.vector_store %arg5[%c0_22, %c0_23, %c0_24, %c0_25], %47 {strides = array<i32>} : memref<1x4x4x32xbf16, #tpu.memory_space<vmem>>, vector<1x4x4x32xbf16>,
    return
  }
  func.func @transform_0(%arg0: i32, %arg1: i32) -> (i32, i32, i32, i32) {
    %c0_i32 = arith.constant 0 : i32
    %c0_i32_0 = arith.constant 0 : i32
    %c0_i32_1 = arith.constant 0 : i32
    %c0_i32_2 = arith.constant 0 : i32
    return %arg0, %c0_i32, %c0_i32_0, %c0_i32_1 : i32, i32, i32, i32
  }
  func.func @transform_1(%arg0: i32, %arg1: i32) -> (i32, i32, i32) {
    %c0_i32 = arith.constant 0 : i32
    %c0_i32_0 = arith.constant 0 : i32
    %c0_i32_1 = arith.constant 0 : i32
    %c0_i32_2 = arith.constant 0 : i32
    return %c0_i32, %c0_i32_0, %c0_i32_1 : i32, i32, i32
  }
  func.func @transform_2(%arg0: i32, %arg1: i32) -> (i32, i32) {
    %c0_i32 = arith.constant 0 : i32
    %c0_i32_0 = arith.constant 0 : i32
    %c0_i32_1 = arith.constant 0 : i32
    return %c0_i32, %c0_i32_0 : i32, i32
  }
  func.func @transform_3(%arg0: i32, %arg1: i32) -> (i32, i32, i32, i32) {
    %c0_i32 = arith.constant 0 : i32
    %c0_i32_0 = arith.constant 0 : i32
    %c0_i32_1 = arith.constant 0 : i32
    return %arg0, %arg1, %c0_i32, %c0_i32_0 : i32, i32, i32, i32
  }
}

module attributes {stable_mosaic.version = 11 : i64} {
  func.func @_conv_tap_kernel(%arg0: i32, %arg1: i32, %arg2: memref<1x6x6x32xbf16, #tpu.memory_space<vmem>>, %arg3: memref<16x32x64xbf16, #tpu.memory_space<vmem>>, %arg4: memref<1x64xf32, #tpu.memory_space<vmem>>, %arg5: memref<1x3x3x64xbf16, #tpu.memory_space<vmem>>) attributes {dimension_semantics = [#tpu.dimension_semantics<parallel>, #tpu.dimension_semantics<parallel>], iteration_bounds = array<i64: 2, 1>, scalar_prefetch = 0 : i64, scratch_operands = 0 : i64, tpu.core_type = #tpu.core_type<tc>, window_params = [{transform_indices = @transform_0, window_bounds = array<i64: 1, 6, 6, 32>}, {pipeline_mode = #tpu.pipeline_mode<synchronous>, transform_indices = @transform_1, window_bounds = array<i64: 16, 32, 64>}, {pipeline_mode = #tpu.pipeline_mode<synchronous>, transform_indices = @transform_2, window_bounds = array<i64: 1, 64>}, {transform_indices = @transform_3, window_bounds = array<i64: 1, 3, 3, 64>}]} {
    %c3_i32 = arith.constant 3 : i32
    %0 = arith.muli %arg1, %c3_i32 : i32
    %1 = tpu.assume_multiple %0, 3 : i32
    %cst = arith.constant 0.000000e+00 : f32
    %2 = vector.broadcast %cst : f32 to vector<9x64xf32>
    %c0 = arith.constant 0 : index
    %c0_0 = arith.constant 0 : index
    %3 = vector.load %arg4[%c0, %c0_0] : memref<1x64xf32, #tpu.memory_space<vmem>>, vector<1x64xf32>
    %4 = vector.broadcast %3 : vector<1x64xf32> to vector<9x64xf32>
    %5 = arith.addf %2, %4 : vector<9x64xf32>
    %c0_i32 = arith.constant 0 : i32
    %6 = arith.addi %1, %c0_i32 : i32
    %c0_1 = arith.constant 0 : index
    %7 = arith.index_cast %6 : i32 to index
    %c0_2 = arith.constant 0 : index
    %c0_3 = arith.constant 0 : index
    %8 = vector.load %arg2[%c0_1, %7, %c0_2, %c0_3] : memref<1x6x6x32xbf16, #tpu.memory_space<vmem>>, vector<1x3x6x32xbf16>
    %9 = vector.shape_cast %8 : vector<1x3x6x32xbf16> to vector<3x6x32xbf16>
    %10 = vector.extract_strided_slice %9 {offsets = [0, 0, 0], sizes = [3, 3, 32], strides = [1, 1, 1]} : vector<3x6x32xbf16> to vector<3x3x32xbf16>
    %11 = vector.shape_cast %10 : vector<3x3x32xbf16> to vector<9x32xbf16>
    %c0_4 = arith.constant 0 : index
    %c0_5 = arith.constant 0 : index
    %c0_6 = arith.constant 0 : index
    %12 = vector.load %arg3[%c0_4, %c0_5, %c0_6] : memref<16x32x64xbf16, #tpu.memory_space<vmem>>, vector<1x32x64xbf16>
    %13 = vector.shape_cast %12 : vector<1x32x64xbf16> to vector<32x64xbf16>
    %cst_7 = arith.constant dense<0.000000e+00> : vector<9x64xf32>
    %14 = tpu.matmul %11, %13, %cst_7 {dimension_numbers = #tpu.dot_dimension_numbers<[1], [0], [0], [1], [0, 0, 1, 1], [], []>} : vector<9x32xbf16>, vector<32x64xbf16>, vector<9x64xf32> -> vector<9x64xf32>
    %15 = arith.addf %5, %14 : vector<9x64xf32>
    %16 = vector.extract_strided_slice %9 {offsets = [0, 1, 0], sizes = [3, 3, 32], strides = [1, 1, 1]} : vector<3x6x32xbf16> to vector<3x3x32xbf16>
    %17 = vector.shape_cast %16 : vector<3x3x32xbf16> to vector<9x32xbf16>
    %c1 = arith.constant 1 : index
    %c0_8 = arith.constant 0 : index
    %c0_9 = arith.constant 0 : index
    %18 = vector.load %arg3[%c1, %c0_8, %c0_9] : memref<16x32x64xbf16, #tpu.memory_space<vmem>>, vector<1x32x64xbf16>
    %19 = vector.shape_cast %18 : vector<1x32x64xbf16> to vector<32x64xbf16>
    %cst_10 = arith.constant dense<0.000000e+00> : vector<9x64xf32>
    %20 = tpu.matmul %17, %19, %cst_10 {dimension_numbers = #tpu.dot_dimension_numbers<[1], [0], [0], [1], [0, 0, 1, 1], [], []>} : vector<9x32xbf16>, vector<32x64xbf16>, vector<9x64xf32> -> vector<9x64xf32>
    %21 = arith.addf %15, %20 : vector<9x64xf32>
    %22 = vector.extract_strided_slice %9 {offsets = [0, 2, 0], sizes = [3, 3, 32], strides = [1, 1, 1]} : vector<3x6x32xbf16> to vector<3x3x32xbf16>
    %23 = vector.shape_cast %22 : vector<3x3x32xbf16> to vector<9x32xbf16>
    %c2 = arith.constant 2 : index
    %c0_11 = arith.constant 0 : index
    %c0_12 = arith.constant 0 : index
    %24 = vector.load %arg3[%c2, %c0_11, %c0_12] : memref<16x32x64xbf16, #tpu.memory_space<vmem>>, vector<1x32x64xbf16>
    %25 = vector.shape_cast %24 : vector<1x32x64xbf16> to vector<32x64xbf16>
    %cst_13 = arith.constant dense<0.000000e+00> : vector<9x64xf32>
    %26 = tpu.matmul %23, %25, %cst_13 {dimension_numbers = #tpu.dot_dimension_numbers<[1], [0], [0], [1], [0, 0, 1, 1], [], []>} : vector<9x32xbf16>, vector<32x64xbf16>, vector<9x64xf32> -> vector<9x64xf32>
    %27 = arith.addf %21, %26 : vector<9x64xf32>
    %28 = vector.extract_strided_slice %9 {offsets = [0, 3, 0], sizes = [3, 3, 32], strides = [1, 1, 1]} : vector<3x6x32xbf16> to vector<3x3x32xbf16>
    %29 = vector.shape_cast %28 : vector<3x3x32xbf16> to vector<9x32xbf16>
    %c3 = arith.constant 3 : index
    %c0_14 = arith.constant 0 : index
    %c0_15 = arith.constant 0 : index
    %30 = vector.load %arg3[%c3, %c0_14, %c0_15] : memref<16x32x64xbf16, #tpu.memory_space<vmem>>, vector<1x32x64xbf16>
    %31 = vector.shape_cast %30 : vector<1x32x64xbf16> to vector<32x64xbf16>
    %cst_16 = arith.constant dense<0.000000e+00> : vector<9x64xf32>
    %32 = tpu.matmul %29, %31, %cst_16 {dimension_numbers = #tpu.dot_dimension_numbers<[1], [0], [0], [1], [0, 0, 1, 1], [], []>} : vector<9x32xbf16>, vector<32x64xbf16>, vector<9x64xf32> -> vector<9x64xf32>
    %33 = arith.addf %27, %32 : vector<9x64xf32>
    %c1_i32 = arith.constant 1 : i32
    %34 = arith.addi %1, %c1_i32 : i32
    %c0_17 = arith.constant 0 : index
    %35 = arith.index_cast %34 : i32 to index
    %c0_18 = arith.constant 0 : index
    %c0_19 = arith.constant 0 : index
    %36 = vector.load %arg2[%c0_17, %35, %c0_18, %c0_19] : memref<1x6x6x32xbf16, #tpu.memory_space<vmem>>, vector<1x3x6x32xbf16>
    %37 = vector.shape_cast %36 : vector<1x3x6x32xbf16> to vector<3x6x32xbf16>
    %38 = vector.extract_strided_slice %37 {offsets = [0, 0, 0], sizes = [3, 3, 32], strides = [1, 1, 1]} : vector<3x6x32xbf16> to vector<3x3x32xbf16>
    %39 = vector.shape_cast %38 : vector<3x3x32xbf16> to vector<9x32xbf16>
    %c4 = arith.constant 4 : index
    %c0_20 = arith.constant 0 : index
    %c0_21 = arith.constant 0 : index
    %40 = vector.load %arg3[%c4, %c0_20, %c0_21] : memref<16x32x64xbf16, #tpu.memory_space<vmem>>, vector<1x32x64xbf16>
    %41 = vector.shape_cast %40 : vector<1x32x64xbf16> to vector<32x64xbf16>
    %cst_22 = arith.constant dense<0.000000e+00> : vector<9x64xf32>
    %42 = tpu.matmul %39, %41, %cst_22 {dimension_numbers = #tpu.dot_dimension_numbers<[1], [0], [0], [1], [0, 0, 1, 1], [], []>} : vector<9x32xbf16>, vector<32x64xbf16>, vector<9x64xf32> -> vector<9x64xf32>
    %43 = arith.addf %33, %42 : vector<9x64xf32>
    %44 = vector.extract_strided_slice %37 {offsets = [0, 1, 0], sizes = [3, 3, 32], strides = [1, 1, 1]} : vector<3x6x32xbf16> to vector<3x3x32xbf16>
    %45 = vector.shape_cast %44 : vector<3x3x32xbf16> to vector<9x32xbf16>
    %c5 = arith.constant 5 : index
    %c0_23 = arith.constant 0 : index
    %c0_24 = arith.constant 0 : index
    %46 = vector.load %arg3[%c5, %c0_23, %c0_24] : memref<16x32x64xbf16, #tpu.memory_space<vmem>>, vector<1x32x64xbf16>
    %47 = vector.shape_cast %46 : vector<1x32x64xbf16> to vector<32x64xbf16>
    %cst_25 = arith.constant dense<0.000000e+00> : vector<9x64xf32>
    %48 = tpu.matmul %45, %47, %cst_25 {dimension_numbers = #tpu.dot_dimension_numbers<[1], [0], [0], [1], [0, 0, 1, 1], [], []>} : vector<9x32xbf16>, vector<32x64xbf16>, vector<9x64xf32> -> vector<9x64xf32>
    %49 = arith.addf %43, %48 : vector<9x64xf32>
    %50 = vector.extract_strided_slice %37 {offsets = [0, 2, 0], sizes = [3, 3, 32], strides = [1, 1, 1]} : vector<3x6x32xbf16> to vector<3x3x32xbf16>
    %51 = vector.shape_cast %50 : vector<3x3x32xbf16> to vector<9x32xbf16>
    %c6 = arith.constant 6 : index
    %c0_26 = arith.constant 0 : index
    %c0_27 = arith.constant 0 : index
    %52 = vector.load %arg3[%c6, %c0_26, %c0_27] : memref<16x32x64xbf16, #tpu.memory_space<vmem>>, vector<1x32x64xbf16>
    %53 = vector.shape_cast %52 : vector<1x32x64xbf16> to vector<32x64xbf16>
    %cst_28 = arith.constant dense<0.000000e+00> : vector<9x64xf32>
    %54 = tpu.matmul %51, %53, %cst_28 {dimension_numbers = #tpu.dot_dimension_numbers<[1], [0], [0], [1], [0, 0, 1, 1], [], []>} : vector<9x32xbf16>, vector<32x64xbf16>, vector<9x64xf32> -> vector<9x64xf32>
    %55 = arith.addf %49, %54 : vector<9x64xf32>
    %56 = vector.extract_strided_slice %37 {offsets = [0, 3, 0], sizes = [3, 3, 32], strides = [1, 1, 1]} : vector<3x6x32xbf16> to vector<3x3x32xbf16>
    %57 = vector.shape_cast %56 : vector<3x3x32xbf16> to vector<9x32xbf16>
    %c7 = arith.constant 7 : index
    %c0_29 = arith.constant 0 : index
    %c0_30 = arith.constant 0 : index
    %58 = vector.load %arg3[%c7, %c0_29, %c0_30] : memref<16x32x64xbf16, #tpu.memory_space<vmem>>, vector<1x32x64xbf16>
    %59 = vector.shape_cast %58 : vector<1x32x64xbf16> to vector<32x64xbf16>
    %cst_31 = arith.constant dense<0.000000e+00> : vector<9x64xf32>
    %60 = tpu.matmul %57, %59, %cst_31 {dimension_numbers = #tpu.dot_dimension_numbers<[1], [0], [0], [1], [0, 0, 1, 1], [], []>} : vector<9x32xbf16>, vector<32x64xbf16>, vector<9x64xf32> -> vector<9x64xf32>
    %61 = arith.addf %55, %60 : vector<9x64xf32>
    %c2_i32 = arith.constant 2 : i32
    %62 = arith.addi %1, %c2_i32 : i32
    %c0_32 = arith.constant 0 : index
    %63 = arith.index_cast %62 : i32 to index
    %c0_33 = arith.constant 0 : index
    %c0_34 = arith.constant 0 : index
    %64 = vector.load %arg2[%c0_32, %63, %c0_33, %c0_34] : memref<1x6x6x32xbf16, #tpu.memory_space<vmem>>, vector<1x3x6x32xbf16>
    %65 = vector.shape_cast %64 : vector<1x3x6x32xbf16> to vector<3x6x32xbf16>
    %66 = vector.extract_strided_slice %65 {offsets = [0, 0, 0], sizes = [3, 3, 32], strides = [1, 1, 1]} : vector<3x6x32xbf16> to vector<3x3x32xbf16>
    %67 = vector.shape_cast %66 : vector<3x3x32xbf16> to vector<9x32xbf16>
    %c8 = arith.constant 8 : index
    %c0_35 = arith.constant 0 : index
    %c0_36 = arith.constant 0 : index
    %68 = vector.load %arg3[%c8, %c0_35, %c0_36] : memref<16x32x64xbf16, #tpu.memory_space<vmem>>, vector<1x32x64xbf16>
    %69 = vector.shape_cast %68 : vector<1x32x64xbf16> to vector<32x64xbf16>
    %cst_37 = arith.constant dense<0.000000e+00> : vector<9x64xf32>
    %70 = tpu.matmul %67, %69, %cst_37 {dimension_numbers = #tpu.dot_dimension_numbers<[1], [0], [0], [1], [0, 0, 1, 1], [], []>} : vector<9x32xbf16>, vector<32x64xbf16>, vector<9x64xf32> -> vector<9x64xf32>
    %71 = arith.addf %61, %70 : vector<9x64xf32>
    %72 = vector.extract_strided_slice %65 {offsets = [0, 1, 0], sizes = [3, 3, 32], strides = [1, 1, 1]} : vector<3x6x32xbf16> to vector<3x3x32xbf16>
    %73 = vector.shape_cast %72 : vector<3x3x32xbf16> to vector<9x32xbf16>
    %c9 = arith.constant 9 : index
    %c0_38 = arith.constant 0 : index
    %c0_39 = arith.constant 0 : index
    %74 = vector.load %arg3[%c9, %c0_38, %c0_39] : memref<16x32x64xbf16, #tpu.memory_space<vmem>>, vector<1x32x64xbf16>
    %75 = vector.shape_cast %74 : vector<1x32x64xbf16> to vector<32x64xbf16>
    %cst_40 = arith.constant dense<0.000000e+00> : vector<9x64xf32>
    %76 = tpu.matmul %73, %75, %cst_40 {dimension_numbers = #tpu.dot_dimension_numbers<[1], [0], [0], [1], [0, 0, 1, 1], [], []>} : vector<9x32xbf16>, vector<32x64xbf16>, vector<9x64xf32> -> vector<9x64xf32>
    %77 = arith.addf %71, %76 : vector<9x64xf32>
    %78 = vector.extract_strided_slice %65 {offsets = [0, 2, 0], sizes = [3, 3, 32], strides = [1, 1, 1]} : vector<3x6x32xbf16> to vector<3x3x32xbf16>
    %79 = vector.shape_cast %78 : vector<3x3x32xbf16> to vector<9x32xbf16>
    %c10 = arith.constant 10 : index
    %c0_41 = arith.constant 0 : index
    %c0_42 = arith.constant 0 : index
    %80 = vector.load %arg3[%c10, %c0_41, %c0_42] : memref<16x32x64xbf16, #tpu.memory_space<vmem>>, vector<1x32x64xbf16>
    %81 = vector.shape_cast %80 : vector<1x32x64xbf16> to vector<32x64xbf16>
    %cst_43 = arith.constant dense<0.000000e+00> : vector<9x64xf32>
    %82 = tpu.matmul %79, %81, %cst_43 {dimension_numbers = #tpu.dot_dimension_numbers<[1], [0], [0], [1], [0, 0, 1, 1], [], []>} : vector<9x32xbf16>, vector<32x64xbf16>, vector<9x64xf32> -> vector<9x64xf32>
    %83 = arith.addf %77, %82 : vector<9x64xf32>
    %84 = vector.extract_strided_slice %65 {offsets = [0, 3, 0], sizes = [3, 3, 32], strides = [1, 1, 1]} : vector<3x6x32xbf16> to vector<3x3x32xbf16>
    %85 = vector.shape_cast %84 : vector<3x3x32xbf16> to vector<9x32xbf16>
    %c11 = arith.constant 11 : index
    %c0_44 = arith.constant 0 : index
    %c0_45 = arith.constant 0 : index
    %86 = vector.load %arg3[%c11, %c0_44, %c0_45] : memref<16x32x64xbf16, #tpu.memory_space<vmem>>, vector<1x32x64xbf16>
    %87 = vector.shape_cast %86 : vector<1x32x64xbf16> to vector<32x64xbf16>
    %cst_46 = arith.constant dense<0.000000e+00> : vector<9x64xf32>
    %88 = tpu.matmul %85, %87, %cst_46 {dimension_numbers = #tpu.dot_dimension_numbers<[1], [0], [0], [1], [0, 0, 1, 1], [], []>} : vector<9x32xbf16>, vector<32x64xbf16>, vector<9x64xf32> -> vector<9x64xf32>
    %89 = arith.addf %83, %88 : vector<9x64xf32>
    %c3_i32_47 = arith.constant 3 : i32
    %90 = arith.addi %1, %c3_i32_47 : i32
    %c0_48 = arith.constant 0 : index
    %91 = arith.index_cast %90 : i32 to index
    %c0_49 = arith.constant 0 : index
    %c0_50 = arith.constant 0 : index
    %92 = vector.load %arg2[%c0_48, %91, %c0_49, %c0_50] : memref<1x6x6x32xbf16, #tpu.memory_space<vmem>>, vector<1x3x6x32xbf16>
    %93 = vector.shape_cast %92 : vector<1x3x6x32xbf16> to vector<3x6x32xbf16>
    %94 = vector.extract_strided_slice %93 {offsets = [0, 0, 0], sizes = [3, 3, 32], strides = [1, 1, 1]} : vector<3x6x32xbf16> to vector<3x3x32xbf16>
    %95 = vector.shape_cast %94 : vector<3x3x32xbf16> to vector<9x32xbf16>
    %c12 = arith.constant 12 : index
    %c0_51 = arith.constant 0 : index
    %c0_52 = arith.constant 0 : index
    %96 = vector.load %arg3[%c12, %c0_51, %c0_52] : memref<16x32x64xbf16, #tpu.memory_space<vmem>>, vector<1x32x64xbf16>
    %97 = vector.shape_cast %96 : vector<1x32x64xbf16> to vector<32x64xbf16>
    %cst_53 = arith.constant dense<0.000000e+00> : vector<9x64xf32>
    %98 = tpu.matmul %95, %97, %cst_53 {dimension_numbers = #tpu.dot_dimension_numbers<[1], [0], [0], [1], [0, 0, 1, 1], [], []>} : vector<9x32xbf16>, vector<32x64xbf16>, vector<9x64xf32> -> vector<9x64xf32>
    %99 = arith.addf %89, %98 : vector<9x64xf32>
    %100 = vector.extract_strided_slice %93 {offsets = [0, 1, 0], sizes = [3, 3, 32], strides = [1, 1, 1]} : vector<3x6x32xbf16> to vector<3x3x32xbf16>
    %101 = vector.shape_cast %100 : vector<3x3x32xbf16> to vector<9x32xbf16>
    %c13 = arith.constant 13 : index
    %c0_54 = arith.constant 0 : index
    %c0_55 = arith.constant 0 : index
    %102 = vector.load %arg3[%c13, %c0_54, %c0_55] : memref<16x32x64xbf16, #tpu.memory_space<vmem>>, vector<1x32x64xbf16>
    %103 = vector.shape_cast %102 : vector<1x32x64xbf16> to vector<32x64xbf16>
    %cst_56 = arith.constant dense<0.000000e+00> : vector<9x64xf32>
    %104 = tpu.matmul %101, %103, %cst_56 {dimension_numbers = #tpu.dot_dimension_numbers<[1], [0], [0], [1], [0, 0, 1, 1], [], []>} : vector<9x32xbf16>, vector<32x64xbf16>, vector<9x64xf32> -> vector<9x64xf32>
    %105 = arith.addf %99, %104 : vector<9x64xf32>
    %106 = vector.extract_strided_slice %93 {offsets = [0, 2, 0], sizes = [3, 3, 32], strides = [1, 1, 1]} : vector<3x6x32xbf16> to vector<3x3x32xbf16>
    %107 = vector.shape_cast %106 : vector<3x3x32xbf16> to vector<9x32xbf16>
    %c14 = arith.constant 14 : index
    %c0_57 = arith.constant 0 : index
    %c0_58 = arith.constant 0 : index
    %108 = vector.load %arg3[%c14, %c0_57, %c0_58] : memref<16x32x64xbf16, #tpu.memory_space<vmem>>, vector<1x32x64xbf16>
    %109 = vector.shape_cast %108 : vector<1x32x64xbf16> to vector<32x64xbf16>
    %cst_59 = arith.constant dense<0.000000e+00> : vector<9x64xf32>
    %110 = tpu.matmul %107, %109, %cst_59 {dimension_numbers = #tpu.dot_dimension_numbers<[1], [0], [0], [1], [0, 0, 1, 1], [], []>} : vector<9x32xbf16>, vector<32x64xbf16>, vector<9x64xf32> -> vector<9x64xf32>
    %111 = arith.addf %105, %110 : vector<9x64xf32>
    %112 = vector.extract_strided_slice %93 {offsets = [0, 3, 0], sizes = [3, 3, 32], strides = [1, 1, 1]} : vector<3x6x32xbf16> to vector<3x3x32xbf16>
    %113 = vector.shape_cast %112 : vector<3x3x32xbf16> to vector<9x32xbf16>
    %c15 = arith.constant 15 : index
    %c0_60 = arith.constant 0 : index
    %c0_61 = arith.constant 0 : index
    %114 = vector.load %arg3[%c15, %c0_60, %c0_61] : memref<16x32x64xbf16, #tpu.memory_space<vmem>>, vector<1x32x64xbf16>
    %115 = vector.shape_cast %114 : vector<1x32x64xbf16> to vector<32x64xbf16>
    %cst_62 = arith.constant dense<0.000000e+00> : vector<9x64xf32>
    %116 = tpu.matmul %113, %115, %cst_62 {dimension_numbers = #tpu.dot_dimension_numbers<[1], [0], [0], [1], [0, 0, 1, 1], [], []>} : vector<9x32xbf16>, vector<32x64xbf16>, vector<9x64xf32> -> vector<9x64xf32>
    %117 = arith.addf %111, %116 : vector<9x64xf32>
    %cst_63 = arith.constant 0.000000e+00 : f32
    %118 = vector.broadcast %cst_63 : f32 to vector<9x64xf32>
    %119 = arith.cmpf ogt, %117, %118 : vector<9x64xf32>
    %cst_64 = arith.constant 2.000000e-01 : f32
    %120 = vector.broadcast %cst_64 : f32 to vector<9x64xf32>
    %121 = arith.mulf %120, %117 : vector<9x64xf32>
    %122 = arith.select %119, %117, %121 : vector<9x64xi1>, vector<9x64xf32>
    %123 = vector.shape_cast %122 : vector<9x64xf32> to vector<3x3x64xf32>
    %124 = arith.truncf %123 : vector<3x3x64xf32> to vector<3x3x64xbf16>
    %c0_65 = arith.constant 0 : index
    %c0_66 = arith.constant 0 : index
    %c0_67 = arith.constant 0 : index
    %c0_68 = arith.constant 0 : index
    %125 = vector.load %arg5[%c0_65, %c0_66, %c0_67, %c0_68] : memref<1x3x3x64xbf16, #tpu.memory_space<vmem>>, vector<1x3x3x64xbf16>
    %126 = vector.shape_cast %125 : vector<1x3x3x64xbf16> to vector<3x3x64xbf16>
    %127 = vector.shape_cast %124 : vector<3x3x64xbf16> to vector<1x3x3x64xbf16>
    tpu.vector_store %arg5[%c0_65, %c0_66, %c0_67, %c0_68], %127 {strides = array<i32>} : memref<1x3x3x64xbf16, #tpu.memory_space<vmem>>, vector<1x3x3x64xbf16>,
    return
  }
  func.func @transform_0(%arg0: i32, %arg1: i32) -> (i32, i32, i32, i32) {
    %c0_i32 = arith.constant 0 : i32
    %c0_i32_0 = arith.constant 0 : i32
    %c0_i32_1 = arith.constant 0 : i32
    %c0_i32_2 = arith.constant 0 : i32
    return %arg0, %c0_i32, %c0_i32_0, %c0_i32_1 : i32, i32, i32, i32
  }
  func.func @transform_1(%arg0: i32, %arg1: i32) -> (i32, i32, i32) {
    %c0_i32 = arith.constant 0 : i32
    %c0_i32_0 = arith.constant 0 : i32
    %c0_i32_1 = arith.constant 0 : i32
    %c0_i32_2 = arith.constant 0 : i32
    return %c0_i32, %c0_i32_0, %c0_i32_1 : i32, i32, i32
  }
  func.func @transform_2(%arg0: i32, %arg1: i32) -> (i32, i32) {
    %c0_i32 = arith.constant 0 : i32
    %c0_i32_0 = arith.constant 0 : i32
    %c0_i32_1 = arith.constant 0 : i32
    return %c0_i32, %c0_i32_0 : i32, i32
  }
  func.func @transform_3(%arg0: i32, %arg1: i32) -> (i32, i32, i32, i32) {
    %c0_i32 = arith.constant 0 : i32
    %c0_i32_0 = arith.constant 0 : i32
    %c0_i32_1 = arith.constant 0 : i32
    return %arg0, %arg1, %c0_i32, %c0_i32_0 : i32, i32, i32, i32
  }
}

module attributes {stable_mosaic.version = 11 : i64} {
  func.func @_cam_fused_kernel(%arg0: i32, %arg1: i32, %arg2: memref<1x9x64xbf16, #tpu.memory_space<vmem>>, %arg3: memref<64x64xbf16, #tpu.memory_space<vmem>>, %arg4: memref<1x64xf32, #tpu.memory_space<vmem>>, %arg5: memref<1x64xf32, #tpu.memory_space<vmem>>, %arg6: memref<1x64xf32, #tpu.memory_space<vmem>>, %arg7: memref<1x9x64xbf16, #tpu.memory_space<vmem>>, %arg8: memref<1x1x128xf32, #tpu.memory_space<vmem>>, %arg9: memref<1x9x1xf32, #tpu.memory_space<vmem>>, %arg10: memref<1x64xf32, #tpu.memory_space<vmem>>, %arg11: memref<1x64xf32, #tpu.memory_space<vmem>>) attributes {dimension_semantics = [#tpu.dimension_semantics<parallel>, #tpu.dimension_semantics<arbitrary>], iteration_bounds = array<i64: 2, 1>, scalar_prefetch = 0 : i64, scratch_operands = 2 : i64, tpu.core_type = #tpu.core_type<tc>, window_params = [{transform_indices = @transform_0, window_bounds = array<i64: 1, 9, 64>}, {pipeline_mode = #tpu.pipeline_mode<synchronous>, transform_indices = @transform_1, window_bounds = array<i64: 64, 64>}, {pipeline_mode = #tpu.pipeline_mode<synchronous>, transform_indices = @transform_2, window_bounds = array<i64: 1, 64>}, {pipeline_mode = #tpu.pipeline_mode<synchronous>, transform_indices = @transform_3, window_bounds = array<i64: 1, 64>}, {pipeline_mode = #tpu.pipeline_mode<synchronous>, transform_indices = @transform_4, window_bounds = array<i64: 1, 64>}, {transform_indices = @transform_5, window_bounds = array<i64: 1, 9, 64>}, {transform_indices = @transform_6, window_bounds = array<i64: 1, 1, 128>}, {transform_indices = @transform_7, window_bounds = array<i64: 1, 9, 1>}]} {
    %c0_i32 = arith.constant 0 : i32
    %0 = arith.cmpi eq, %arg1, %c0_i32 : i32
    %1 = arith.extui %0 : i1 to i32
    %c0_i32_0 = arith.constant 0 : i32
    %2 = arith.cmpi ne, %1, %c0_i32_0 : i32
    scf.if %2 {
      %cst_28 = arith.constant 0.000000e+00 : f32
      %39 = vector.broadcast %cst_28 : f32 to vector<1x64xf32>
      %c0_29 = arith.constant 0 : index
      %c0_30 = arith.constant 0 : index
      %40 = vector.load %arg10[%c0_29, %c0_30] : memref<1x64xf32, #tpu.memory_space<vmem>>, vector<1x64xf32>
      tpu.vector_store %arg10[%c0_29, %c0_30], %39 {strides = array<i32>} : memref<1x64xf32, #tpu.memory_space<vmem>>, vector<1x64xf32>,
      %cst_31 = arith.constant 0xFF800000 : f32
      %41 = vector.broadcast %cst_31 : f32 to vector<1x64xf32>
      %c0_32 = arith.constant 0 : index
      %c0_33 = arith.constant 0 : index
      %42 = vector.load %arg11[%c0_32, %c0_33] : memref<1x64xf32, #tpu.memory_space<vmem>>, vector<1x64xf32>
      tpu.vector_store %arg11[%c0_32, %c0_33], %41 {strides = array<i32>} : memref<1x64xf32, #tpu.memory_space<vmem>>, vector<1x64xf32>,
    } else {
    }
    %c0 = arith.constant 0 : index
    %c0_1 = arith.constant 0 : index
    %c0_2 = arith.constant 0 : index
    %3 = vector.load %arg2[%c0, %c0_1, %c0_2] : memref<1x9x64xbf16, #tpu.memory_space<vmem>>, vector<1x9x64xbf16>
    %4 = vector.shape_cast %3 : vector<1x9x64xbf16> to vector<9x64xbf16>
    %c0_3 = arith.constant 0 : index
    %c0_4 = arith.constant 0 : index
    %5 = vector.load %arg10[%c0_3, %c0_4] : memref<1x64xf32, #tpu.memory_space<vmem>>, vector<1x64xf32>
    %6 = arith.extf %4 : vector<9x64xbf16> to vector<9x64xf32>
    %cst = arith.constant dense<0.000000e+00> : vector<64xf32>
    %7 = vector.multi_reduction <add>, %6, %cst [0] : vector<9x64xf32> to vector<64xf32>
    %8 = vector.shape_cast %7 : vector<64xf32> to vector<1x64xf32>
    %9 = arith.addf %5, %8 : vector<1x64xf32>
    %c0_5 = arith.constant 0 : index
    %c0_6 = arith.constant 0 : index
    %10 = vector.load %arg10[%c0_5, %c0_6] : memref<1x64xf32, #tpu.memory_space<vmem>>, vector<1x64xf32>
    tpu.vector_store %arg10[%c0_5, %c0_6], %9 {strides = array<i32>} : memref<1x64xf32, #tpu.memory_space<vmem>>, vector<1x64xf32>,
    %c0_7 = arith.constant 0 : index
    %c0_8 = arith.constant 0 : index
    %11 = vector.load %arg11[%c0_7, %c0_8] : memref<1x64xf32, #tpu.memory_space<vmem>>, vector<1x64xf32>
    %cst_9 = arith.constant dense<0xFF80> : vector<64xbf16>
    %12 = vector.multi_reduction <maximumf>, %4, %cst_9 [0] : vector<9x64xbf16> to vector<64xbf16>
    %13 = vector.shape_cast %12 : vector<64xbf16> to vector<1x64xbf16>
    %14 = arith.extf %13 : vector<1x64xbf16> to vector<1x64xf32>
    %15 = arith.maximumf %11, %14 : vector<1x64xf32>
    %c0_10 = arith.constant 0 : index
    %c0_11 = arith.constant 0 : index
    %16 = vector.load %arg11[%c0_10, %c0_11] : memref<1x64xf32, #tpu.memory_space<vmem>>, vector<1x64xf32>
    tpu.vector_store %arg11[%c0_10, %c0_11], %15 {strides = array<i32>} : memref<1x64xf32, #tpu.memory_space<vmem>>, vector<1x64xf32>,
    %c0_12 = arith.constant 0 : index
    %c0_13 = arith.constant 0 : index
    %17 = vector.load %arg3[%c0_12, %c0_13] : memref<64x64xbf16, #tpu.memory_space<vmem>>, vector<64x64xbf16>
    %cst_14 = arith.constant dense<0.000000e+00> : vector<9x64xf32>
    %18 = tpu.matmul %4, %17, %cst_14 {dimension_numbers = #tpu.dot_dimension_numbers<[1], [0], [0], [1], [0, 0, 1, 1], [], []>} : vector<9x64xbf16>, vector<64x64xbf16>, vector<9x64xf32> -> vector<9x64xf32>
    %c0_15 = arith.constant 0 : index
    %c0_16 = arith.constant 0 : index
    %19 = vector.load %arg4[%c0_15, %c0_16] : memref<1x64xf32, #tpu.memory_space<vmem>>, vector<1x64xf32>
    %20 = vector.broadcast %19 : vector<1x64xf32> to vector<9x64xf32>
    %21 = arith.addf %18, %20 : vector<9x64xf32>
    %cst_17 = arith.constant 0.000000e+00 : f32
    %22 = vector.broadcast %cst_17 : f32 to vector<9x64xf32>
    %23 = arith.cmpf ogt, %21, %22 : vector<9x64xf32>
    %cst_18 = arith.constant 2.000000e-01 : f32
    %24 = vector.broadcast %cst_18 : f32 to vector<9x64xf32>
    %25 = arith.mulf %24, %21 : vector<9x64xf32>
    %26 = arith.select %23, %21, %25 : vector<9x64xi1>, vector<9x64xf32>
    %27 = arith.truncf %26 : vector<9x64xf32> to vector<9x64xbf16>
    %c0_19 = arith.constant 0 : index
    %c0_20 = arith.constant 0 : index
    %c0_21 = arith.constant 0 : index
    %28 = vector.load %arg7[%c0_19, %c0_20, %c0_21] : memref<1x9x64xbf16, #tpu.memory_space<vmem>>, vector<1x9x64xbf16>
    %29 = vector.shape_cast %28 : vector<1x9x64xbf16> to vector<9x64xbf16>
    %30 = vector.shape_cast %27 : vector<9x64xbf16> to vector<1x9x64xbf16>
    tpu.vector_store %arg7[%c0_19, %c0_20, %c0_21], %30 {strides = array<i32>} : memref<1x9x64xbf16, #tpu.memory_space<vmem>>, vector<1x9x64xbf16>,
    %cst_22 = arith.constant dense<0.000000e+00> : vector<9xf32>
    %31 = vector.multi_reduction <add>, %26, %cst_22 [1] : vector<9x64xf32> to vector<9xf32>
    %32 = vector.shape_cast %31 : vector<9xf32> to vector<9x1xf32>
    %c0_23 = arith.constant 0 : index
    %c0_24 = arith.constant 0 : index
    %c0_25 = arith.constant 0 : index
    %33 = vector.load %arg9[%c0_23, %c0_24, %c0_25] : memref<1x9x1xf32, #tpu.memory_space<vmem>>, vector<1x9x1xf32>
    %34 = vector.shape_cast %33 : vector<1x9x1xf32> to vector<9x1xf32>
    %35 = vector.shape_cast %32 : vector<9x1xf32> to vector<1x9x1xf32>
    tpu.vector_store %arg9[%c0_23, %c0_24, %c0_25], %35 {strides = array<i32>} : memref<1x9x1xf32, #tpu.memory_space<vmem>>, vector<1x9x1xf32>,
    %c0_i32_26 = arith.constant 0 : i32
    %36 = arith.cmpi eq, %arg1, %c0_i32_26 : i32
    %37 = arith.extui %36 : i1 to i32
    %c0_i32_27 = arith.constant 0 : i32
    %38 = arith.cmpi ne, %37, %c0_i32_27 : i32
    scf.if %38 {
      %c0_28 = arith.constant 0 : index
      %c0_29 = arith.constant 0 : index
      %39 = vector.load %arg10[%c0_28, %c0_29] : memref<1x64xf32, #tpu.memory_space<vmem>>, vector<1x64xf32>
      %cst_30 = arith.constant 0.111111112 : f32
      %40 = vector.broadcast %cst_30 : f32 to vector<1x64xf32>
      %41 = arith.mulf %39, %40 : vector<1x64xf32>
      %c0_31 = arith.constant 0 : index
      %c0_32 = arith.constant 0 : index
      %42 = vector.load %arg5[%c0_31, %c0_32] : memref<1x64xf32, #tpu.memory_space<vmem>>, vector<1x64xf32>
      %43 = arith.mulf %41, %42 : vector<1x64xf32>
      %cst_33 = arith.constant dense<0.000000e+00> : vector<1xf32>
      %44 = vector.multi_reduction <add>, %43, %cst_33 [1] : vector<1x64xf32> to vector<1xf32>
      %45 = vector.shape_cast %44 : vector<1xf32> to vector<1x1xf32>
      %c0_34 = arith.constant 0 : index
      %c0_35 = arith.constant 0 : index
      %46 = vector.load %arg11[%c0_34, %c0_35] : memref<1x64xf32, #tpu.memory_space<vmem>>, vector<1x64xf32>
      %c0_36 = arith.constant 0 : index
      %c0_37 = arith.constant 0 : index
      %47 = vector.load %arg6[%c0_36, %c0_37] : memref<1x64xf32, #tpu.memory_space<vmem>>, vector<1x64xf32>
      %48 = arith.mulf %46, %47 : vector<1x64xf32>
      %cst_38 = arith.constant dense<0.000000e+00> : vector<1xf32>
      %49 = vector.multi_reduction <add>, %48, %cst_38 [1] : vector<1x64xf32> to vector<1xf32>
      %50 = vector.shape_cast %49 : vector<1xf32> to vector<1x1xf32>
      %51 = tpu.iota {dimensions = array<i32: 1>} : vector<1x128xi32>
      %c0_i32_39 = arith.constant 0 : i32
      %52 = vector.broadcast %c0_i32_39 : i32 to vector<1x128xi32>
      %53 = arith.cmpi eq, %51, %52 : vector<1x128xi32>
      %cst_40 = arith.constant 0.000000e+00 : f32
      %54 = vector.shape_cast %45 : vector<1x1xf32> to vector<1x1xf32>
      %55 = vector.broadcast %54 : vector<1x1xf32> to vector<1x128xf32>
      %56 = vector.broadcast %cst_40 : f32 to vector<1x128xf32>
      %57 = arith.select %53, %55, %56 : vector<1x128xi1>, vector<1x128xf32>
      %c1_i32 = arith.constant 1 : i32
      %58 = vector.broadcast %c1_i32 : i32 to vector<1x128xi32>
      %59 = arith.cmpi eq, %51, %58 : vector<1x128xi32>
      %cst_41 = arith.constant 0.000000e+00 : f32
      %60 = vector.shape_cast %50 : vector<1x1xf32> to vector<1x1xf32>
      %61 = vector.broadcast %60 : vector<1x1xf32> to vector<1x128xf32>
      %62 = vector.broadcast %cst_41 : f32 to vector<1x128xf32>
      %63 = arith.select %59, %61, %62 : vector<1x128xi1>, vector<1x128xf32>
      %64 = arith.addf %57, %63 : vector<1x128xf32>
      %c0_42 = arith.constant 0 : index
      %c0_43 = arith.constant 0 : index
      %c0_44 = arith.constant 0 : index
      %65 = vector.load %arg8[%c0_42, %c0_43, %c0_44] : memref<1x1x128xf32, #tpu.memory_space<vmem>>, vector<1x1x128xf32>
      %66 = vector.shape_cast %65 : vector<1x1x128xf32> to vector<1x128xf32>
      %67 = vector.shape_cast %64 : vector<1x128xf32> to vector<1x1x128xf32>
      tpu.vector_store %arg8[%c0_42, %c0_43, %c0_44], %67 {strides = array<i32>} : memref<1x1x128xf32, #tpu.memory_space<vmem>>, vector<1x1x128xf32>,
    } else {
    }
    return
  }
  func.func @transform_0(%arg0: i32, %arg1: i32) -> (i32, i32, i32) {
    %c0_i32 = arith.constant 0 : i32
    %c0_i32_0 = arith.constant 0 : i32
    return %arg0, %arg1, %c0_i32 : i32, i32, i32
  }
  func.func @transform_1(%arg0: i32, %arg1: i32) -> (i32, i32) {
    %c0_i32 = arith.constant 0 : i32
    %c0_i32_0 = arith.constant 0 : i32
    %c0_i32_1 = arith.constant 0 : i32
    return %c0_i32, %c0_i32_0 : i32, i32
  }
  func.func @transform_2(%arg0: i32, %arg1: i32) -> (i32, i32) {
    %c0_i32 = arith.constant 0 : i32
    %c0_i32_0 = arith.constant 0 : i32
    %c0_i32_1 = arith.constant 0 : i32
    return %c0_i32, %c0_i32_0 : i32, i32
  }
  func.func @transform_3(%arg0: i32, %arg1: i32) -> (i32, i32) {
    %c0_i32 = arith.constant 0 : i32
    %c0_i32_0 = arith.constant 0 : i32
    %c0_i32_1 = arith.constant 0 : i32
    return %c0_i32, %c0_i32_0 : i32, i32
  }
  func.func @transform_4(%arg0: i32, %arg1: i32) -> (i32, i32) {
    %c0_i32 = arith.constant 0 : i32
    %c0_i32_0 = arith.constant 0 : i32
    %c0_i32_1 = arith.constant 0 : i32
    return %c0_i32, %c0_i32_0 : i32, i32
  }
  func.func @transform_5(%arg0: i32, %arg1: i32) -> (i32, i32, i32) {
    %c0_i32 = arith.constant 0 : i32
    %c0_i32_0 = arith.constant 0 : i32
    return %arg0, %arg1, %c0_i32 : i32, i32, i32
  }
  func.func @transform_6(%arg0: i32, %arg1: i32) -> (i32, i32, i32) {
    %c0_i32 = arith.constant 0 : i32
    %c0_i32_0 = arith.constant 0 : i32
    %c0_i32_1 = arith.constant 0 : i32
    return %arg0, %c0_i32, %c0_i32_0 : i32, i32, i32
  }
  func.func @transform_7(%arg0: i32, %arg1: i32) -> (i32, i32, i32) {
    %c0_i32 = arith.constant 0 : i32
    %c0_i32_0 = arith.constant 0 : i32
    return %arg0, %arg1, %c0_i32 : i32, i32, i32
  }
}

module attributes {stable_mosaic.version = 11 : i64} {
  func.func @_outmap_kernel(%arg0: i32, %arg1: i32, %arg2: memref<1x5x5x64xbf16, #tpu.memory_space<vmem>>, %arg3: memref<16x64xf32, #tpu.memory_space<vmem>>, %arg4: memref<1x1xf32, #tpu.memory_space<vmem>>, %arg5: memref<1x2x2xf32, #tpu.memory_space<vmem>>) attributes {dimension_semantics = [#tpu.dimension_semantics<parallel>, #tpu.dimension_semantics<parallel>], iteration_bounds = array<i64: 2, 1>, scalar_prefetch = 0 : i64, scratch_operands = 0 : i64, tpu.core_type = #tpu.core_type<tc>, window_params = [{transform_indices = @transform_0, window_bounds = array<i64: 1, 5, 5, 64>}, {pipeline_mode = #tpu.pipeline_mode<synchronous>, transform_indices = @transform_1, window_bounds = array<i64: 16, 64>}, {pipeline_mode = #tpu.pipeline_mode<synchronous>, transform_indices = @transform_2, window_bounds = array<i64: 1, 1>}, {transform_indices = @transform_3, window_bounds = array<i64: 1, 2, 2>}]} {
    %c2_i32 = arith.constant 2 : i32
    %0 = arith.muli %arg1, %c2_i32 : i32
    %1 = tpu.assume_multiple %0, 2 : i32
    %cst = arith.constant 0.000000e+00 : f32
    %2 = vector.broadcast %cst : f32 to vector<2x2xf32>
    %c0_i32 = arith.constant 0 : i32
    %3 = arith.addi %1, %c0_i32 : i32
    %c0 = arith.constant 0 : index
    %4 = arith.index_cast %3 : i32 to index
    %c0_0 = arith.constant 0 : index
    %c0_1 = arith.constant 0 : index
    %5 = vector.load %arg2[%c0, %4, %c0_0, %c0_1] : memref<1x5x5x64xbf16, #tpu.memory_space<vmem>>, vector<1x2x5x64xbf16>
    %6 = vector.shape_cast %5 : vector<1x2x5x64xbf16> to vector<2x5x64xbf16>
    %7 = arith.extf %6 : vector<2x5x64xbf16> to vector<2x5x64xf32>
    %8 = vector.extract_strided_slice %7 {offsets = [0, 0, 0], sizes = [2, 2, 64], strides = [1, 1, 1]} : vector<2x5x64xf32> to vector<2x2x64xf32>
    %c0_2 = arith.constant 0 : index
    %c0_3 = arith.constant 0 : index
    %9 = vector.load %arg3[%c0_2, %c0_3] : memref<16x64xf32, #tpu.memory_space<vmem>>, vector<1x64xf32>
    %10 = vector.shape_cast %9 : vector<1x64xf32> to vector<64xf32>
    %11 = vector.shape_cast %10 : vector<64xf32> to vector<1x1x64xf32>
    %12 = vector.broadcast %11 : vector<1x1x64xf32> to vector<2x2x64xf32>
    %13 = arith.mulf %8, %12 : vector<2x2x64xf32>
    %cst_4 = arith.constant dense<0.000000e+00> : vector<2x2xf32>
    %14 = vector.multi_reduction <add>, %13, %cst_4 [2] : vector<2x2x64xf32> to vector<2x2xf32>
    %15 = arith.addf %2, %14 : vector<2x2xf32>
    %16 = vector.extract_strided_slice %7 {offsets = [0, 1, 0], sizes = [2, 2, 64], strides = [1, 1, 1]} : vector<2x5x64xf32> to vector<2x2x64xf32>
    %c1 = arith.constant 1 : index
    %c0_5 = arith.constant 0 : index
    %17 = vector.load %arg3[%c1, %c0_5] : memref<16x64xf32, #tpu.memory_space<vmem>>, vector<1x64xf32>
    %18 = vector.shape_cast %17 : vector<1x64xf32> to vector<64xf32>
    %19 = vector.shape_cast %18 : vector<64xf32> to vector<1x1x64xf32>
    %20 = vector.broadcast %19 : vector<1x1x64xf32> to vector<2x2x64xf32>
    %21 = arith.mulf %16, %20 : vector<2x2x64xf32>
    %cst_6 = arith.constant dense<0.000000e+00> : vector<2x2xf32>
    %22 = vector.multi_reduction <add>, %21, %cst_6 [2] : vector<2x2x64xf32> to vector<2x2xf32>
    %23 = arith.addf %15, %22 : vector<2x2xf32>
    %24 = vector.extract_strided_slice %7 {offsets = [0, 2, 0], sizes = [2, 2, 64], strides = [1, 1, 1]} : vector<2x5x64xf32> to vector<2x2x64xf32>
    %c2 = arith.constant 2 : index
    %c0_7 = arith.constant 0 : index
    %25 = vector.load %arg3[%c2, %c0_7] : memref<16x64xf32, #tpu.memory_space<vmem>>, vector<1x64xf32>
    %26 = vector.shape_cast %25 : vector<1x64xf32> to vector<64xf32>
    %27 = vector.shape_cast %26 : vector<64xf32> to vector<1x1x64xf32>
    %28 = vector.broadcast %27 : vector<1x1x64xf32> to vector<2x2x64xf32>
    %29 = arith.mulf %24, %28 : vector<2x2x64xf32>
    %cst_8 = arith.constant dense<0.000000e+00> : vector<2x2xf32>
    %30 = vector.multi_reduction <add>, %29, %cst_8 [2] : vector<2x2x64xf32> to vector<2x2xf32>
    %31 = arith.addf %23, %30 : vector<2x2xf32>
    %32 = vector.extract_strided_slice %7 {offsets = [0, 3, 0], sizes = [2, 2, 64], strides = [1, 1, 1]} : vector<2x5x64xf32> to vector<2x2x64xf32>
    %c3 = arith.constant 3 : index
    %c0_9 = arith.constant 0 : index
    %33 = vector.load %arg3[%c3, %c0_9] : memref<16x64xf32, #tpu.memory_space<vmem>>, vector<1x64xf32>
    %34 = vector.shape_cast %33 : vector<1x64xf32> to vector<64xf32>
    %35 = vector.shape_cast %34 : vector<64xf32> to vector<1x1x64xf32>
    %36 = vector.broadcast %35 : vector<1x1x64xf32> to vector<2x2x64xf32>
    %37 = arith.mulf %32, %36 : vector<2x2x64xf32>
    %cst_10 = arith.constant dense<0.000000e+00> : vector<2x2xf32>
    %38 = vector.multi_reduction <add>, %37, %cst_10 [2] : vector<2x2x64xf32> to vector<2x2xf32>
    %39 = arith.addf %31, %38 : vector<2x2xf32>
    %c1_i32 = arith.constant 1 : i32
    %40 = arith.addi %1, %c1_i32 : i32
    %c0_11 = arith.constant 0 : index
    %41 = arith.index_cast %40 : i32 to index
    %c0_12 = arith.constant 0 : index
    %c0_13 = arith.constant 0 : index
    %42 = vector.load %arg2[%c0_11, %41, %c0_12, %c0_13] : memref<1x5x5x64xbf16, #tpu.memory_space<vmem>>, vector<1x2x5x64xbf16>
    %43 = vector.shape_cast %42 : vector<1x2x5x64xbf16> to vector<2x5x64xbf16>
    %44 = arith.extf %43 : vector<2x5x64xbf16> to vector<2x5x64xf32>
    %45 = vector.extract_strided_slice %44 {offsets = [0, 0, 0], sizes = [2, 2, 64], strides = [1, 1, 1]} : vector<2x5x64xf32> to vector<2x2x64xf32>
    %c4 = arith.constant 4 : index
    %c0_14 = arith.constant 0 : index
    %46 = vector.load %arg3[%c4, %c0_14] : memref<16x64xf32, #tpu.memory_space<vmem>>, vector<1x64xf32>
    %47 = vector.shape_cast %46 : vector<1x64xf32> to vector<64xf32>
    %48 = vector.shape_cast %47 : vector<64xf32> to vector<1x1x64xf32>
    %49 = vector.broadcast %48 : vector<1x1x64xf32> to vector<2x2x64xf32>
    %50 = arith.mulf %45, %49 : vector<2x2x64xf32>
    %cst_15 = arith.constant dense<0.000000e+00> : vector<2x2xf32>
    %51 = vector.multi_reduction <add>, %50, %cst_15 [2] : vector<2x2x64xf32> to vector<2x2xf32>
    %52 = arith.addf %39, %51 : vector<2x2xf32>
    %53 = vector.extract_strided_slice %44 {offsets = [0, 1, 0], sizes = [2, 2, 64], strides = [1, 1, 1]} : vector<2x5x64xf32> to vector<2x2x64xf32>
    %c5 = arith.constant 5 : index
    %c0_16 = arith.constant 0 : index
    %54 = vector.load %arg3[%c5, %c0_16] : memref<16x64xf32, #tpu.memory_space<vmem>>, vector<1x64xf32>
    %55 = vector.shape_cast %54 : vector<1x64xf32> to vector<64xf32>
    %56 = vector.shape_cast %55 : vector<64xf32> to vector<1x1x64xf32>
    %57 = vector.broadcast %56 : vector<1x1x64xf32> to vector<2x2x64xf32>
    %58 = arith.mulf %53, %57 : vector<2x2x64xf32>
    %cst_17 = arith.constant dense<0.000000e+00> : vector<2x2xf32>
    %59 = vector.multi_reduction <add>, %58, %cst_17 [2] : vector<2x2x64xf32> to vector<2x2xf32>
    %60 = arith.addf %52, %59 : vector<2x2xf32>
    %61 = vector.extract_strided_slice %44 {offsets = [0, 2, 0], sizes = [2, 2, 64], strides = [1, 1, 1]} : vector<2x5x64xf32> to vector<2x2x64xf32>
    %c6 = arith.constant 6 : index
    %c0_18 = arith.constant 0 : index
    %62 = vector.load %arg3[%c6, %c0_18] : memref<16x64xf32, #tpu.memory_space<vmem>>, vector<1x64xf32>
    %63 = vector.shape_cast %62 : vector<1x64xf32> to vector<64xf32>
    %64 = vector.shape_cast %63 : vector<64xf32> to vector<1x1x64xf32>
    %65 = vector.broadcast %64 : vector<1x1x64xf32> to vector<2x2x64xf32>
    %66 = arith.mulf %61, %65 : vector<2x2x64xf32>
    %cst_19 = arith.constant dense<0.000000e+00> : vector<2x2xf32>
    %67 = vector.multi_reduction <add>, %66, %cst_19 [2] : vector<2x2x64xf32> to vector<2x2xf32>
    %68 = arith.addf %60, %67 : vector<2x2xf32>
    %69 = vector.extract_strided_slice %44 {offsets = [0, 3, 0], sizes = [2, 2, 64], strides = [1, 1, 1]} : vector<2x5x64xf32> to vector<2x2x64xf32>
    %c7 = arith.constant 7 : index
    %c0_20 = arith.constant 0 : index
    %70 = vector.load %arg3[%c7, %c0_20] : memref<16x64xf32, #tpu.memory_space<vmem>>, vector<1x64xf32>
    %71 = vector.shape_cast %70 : vector<1x64xf32> to vector<64xf32>
    %72 = vector.shape_cast %71 : vector<64xf32> to vector<1x1x64xf32>
    %73 = vector.broadcast %72 : vector<1x1x64xf32> to vector<2x2x64xf32>
    %74 = arith.mulf %69, %73 : vector<2x2x64xf32>
    %cst_21 = arith.constant dense<0.000000e+00> : vector<2x2xf32>
    %75 = vector.multi_reduction <add>, %74, %cst_21 [2] : vector<2x2x64xf32> to vector<2x2xf32>
    %76 = arith.addf %68, %75 : vector<2x2xf32>
    %c2_i32_22 = arith.constant 2 : i32
    %77 = arith.addi %1, %c2_i32_22 : i32
    %c0_23 = arith.constant 0 : index
    %78 = arith.index_cast %77 : i32 to index
    %c0_24 = arith.constant 0 : index
    %c0_25 = arith.constant 0 : index
    %79 = vector.load %arg2[%c0_23, %78, %c0_24, %c0_25] : memref<1x5x5x64xbf16, #tpu.memory_space<vmem>>, vector<1x2x5x64xbf16>
    %80 = vector.shape_cast %79 : vector<1x2x5x64xbf16> to vector<2x5x64xbf16>
    %81 = arith.extf %80 : vector<2x5x64xbf16> to vector<2x5x64xf32>
    %82 = vector.extract_strided_slice %81 {offsets = [0, 0, 0], sizes = [2, 2, 64], strides = [1, 1, 1]} : vector<2x5x64xf32> to vector<2x2x64xf32>
    %c8 = arith.constant 8 : index
    %c0_26 = arith.constant 0 : index
    %83 = vector.load %arg3[%c8, %c0_26] : memref<16x64xf32, #tpu.memory_space<vmem>>, vector<1x64xf32>
    %84 = vector.shape_cast %83 : vector<1x64xf32> to vector<64xf32>
    %85 = vector.shape_cast %84 : vector<64xf32> to vector<1x1x64xf32>
    %86 = vector.broadcast %85 : vector<1x1x64xf32> to vector<2x2x64xf32>
    %87 = arith.mulf %82, %86 : vector<2x2x64xf32>
    %cst_27 = arith.constant dense<0.000000e+00> : vector<2x2xf32>
    %88 = vector.multi_reduction <add>, %87, %cst_27 [2] : vector<2x2x64xf32> to vector<2x2xf32>
    %89 = arith.addf %76, %88 : vector<2x2xf32>
    %90 = vector.extract_strided_slice %81 {offsets = [0, 1, 0], sizes = [2, 2, 64], strides = [1, 1, 1]} : vector<2x5x64xf32> to vector<2x2x64xf32>
    %c9 = arith.constant 9 : index
    %c0_28 = arith.constant 0 : index
    %91 = vector.load %arg3[%c9, %c0_28] : memref<16x64xf32, #tpu.memory_space<vmem>>, vector<1x64xf32>
    %92 = vector.shape_cast %91 : vector<1x64xf32> to vector<64xf32>
    %93 = vector.shape_cast %92 : vector<64xf32> to vector<1x1x64xf32>
    %94 = vector.broadcast %93 : vector<1x1x64xf32> to vector<2x2x64xf32>
    %95 = arith.mulf %90, %94 : vector<2x2x64xf32>
    %cst_29 = arith.constant dense<0.000000e+00> : vector<2x2xf32>
    %96 = vector.multi_reduction <add>, %95, %cst_29 [2] : vector<2x2x64xf32> to vector<2x2xf32>
    %97 = arith.addf %89, %96 : vector<2x2xf32>
    %98 = vector.extract_strided_slice %81 {offsets = [0, 2, 0], sizes = [2, 2, 64], strides = [1, 1, 1]} : vector<2x5x64xf32> to vector<2x2x64xf32>
    %c10 = arith.constant 10 : index
    %c0_30 = arith.constant 0 : index
    %99 = vector.load %arg3[%c10, %c0_30] : memref<16x64xf32, #tpu.memory_space<vmem>>, vector<1x64xf32>
    %100 = vector.shape_cast %99 : vector<1x64xf32> to vector<64xf32>
    %101 = vector.shape_cast %100 : vector<64xf32> to vector<1x1x64xf32>
    %102 = vector.broadcast %101 : vector<1x1x64xf32> to vector<2x2x64xf32>
    %103 = arith.mulf %98, %102 : vector<2x2x64xf32>
    %cst_31 = arith.constant dense<0.000000e+00> : vector<2x2xf32>
    %104 = vector.multi_reduction <add>, %103, %cst_31 [2] : vector<2x2x64xf32> to vector<2x2xf32>
    %105 = arith.addf %97, %104 : vector<2x2xf32>
    %106 = vector.extract_strided_slice %81 {offsets = [0, 3, 0], sizes = [2, 2, 64], strides = [1, 1, 1]} : vector<2x5x64xf32> to vector<2x2x64xf32>
    %c11 = arith.constant 11 : index
    %c0_32 = arith.constant 0 : index
    %107 = vector.load %arg3[%c11, %c0_32] : memref<16x64xf32, #tpu.memory_space<vmem>>, vector<1x64xf32>
    %108 = vector.shape_cast %107 : vector<1x64xf32> to vector<64xf32>
    %109 = vector.shape_cast %108 : vector<64xf32> to vector<1x1x64xf32>
    %110 = vector.broadcast %109 : vector<1x1x64xf32> to vector<2x2x64xf32>
    %111 = arith.mulf %106, %110 : vector<2x2x64xf32>
    %cst_33 = arith.constant dense<0.000000e+00> : vector<2x2xf32>
    %112 = vector.multi_reduction <add>, %111, %cst_33 [2] : vector<2x2x64xf32> to vector<2x2xf32>
    %113 = arith.addf %105, %112 : vector<2x2xf32>
    %c3_i32 = arith.constant 3 : i32
    %114 = arith.addi %1, %c3_i32 : i32
    %c0_34 = arith.constant 0 : index
    %115 = arith.index_cast %114 : i32 to index
    %c0_35 = arith.constant 0 : index
    %c0_36 = arith.constant 0 : index
    %116 = vector.load %arg2[%c0_34, %115, %c0_35, %c0_36] : memref<1x5x5x64xbf16, #tpu.memory_space<vmem>>, vector<1x2x5x64xbf16>
    %117 = vector.shape_cast %116 : vector<1x2x5x64xbf16> to vector<2x5x64xbf16>
    %118 = arith.extf %117 : vector<2x5x64xbf16> to vector<2x5x64xf32>
    %119 = vector.extract_strided_slice %118 {offsets = [0, 0, 0], sizes = [2, 2, 64], strides = [1, 1, 1]} : vector<2x5x64xf32> to vector<2x2x64xf32>
    %c12 = arith.constant 12 : index
    %c0_37 = arith.constant 0 : index
    %120 = vector.load %arg3[%c12, %c0_37] : memref<16x64xf32, #tpu.memory_space<vmem>>, vector<1x64xf32>
    %121 = vector.shape_cast %120 : vector<1x64xf32> to vector<64xf32>
    %122 = vector.shape_cast %121 : vector<64xf32> to vector<1x1x64xf32>
    %123 = vector.broadcast %122 : vector<1x1x64xf32> to vector<2x2x64xf32>
    %124 = arith.mulf %119, %123 : vector<2x2x64xf32>
    %cst_38 = arith.constant dense<0.000000e+00> : vector<2x2xf32>
    %125 = vector.multi_reduction <add>, %124, %cst_38 [2] : vector<2x2x64xf32> to vector<2x2xf32>
    %126 = arith.addf %113, %125 : vector<2x2xf32>
    %127 = vector.extract_strided_slice %118 {offsets = [0, 1, 0], sizes = [2, 2, 64], strides = [1, 1, 1]} : vector<2x5x64xf32> to vector<2x2x64xf32>
    %c13 = arith.constant 13 : index
    %c0_39 = arith.constant 0 : index
    %128 = vector.load %arg3[%c13, %c0_39] : memref<16x64xf32, #tpu.memory_space<vmem>>, vector<1x64xf32>
    %129 = vector.shape_cast %128 : vector<1x64xf32> to vector<64xf32>
    %130 = vector.shape_cast %129 : vector<64xf32> to vector<1x1x64xf32>
    %131 = vector.broadcast %130 : vector<1x1x64xf32> to vector<2x2x64xf32>
    %132 = arith.mulf %127, %131 : vector<2x2x64xf32>
    %cst_40 = arith.constant dense<0.000000e+00> : vector<2x2xf32>
    %133 = vector.multi_reduction <add>, %132, %cst_40 [2] : vector<2x2x64xf32> to vector<2x2xf32>
    %134 = arith.addf %126, %133 : vector<2x2xf32>
    %135 = vector.extract_strided_slice %118 {offsets = [0, 2, 0], sizes = [2, 2, 64], strides = [1, 1, 1]} : vector<2x5x64xf32> to vector<2x2x64xf32>
    %c14 = arith.constant 14 : index
    %c0_41 = arith.constant 0 : index
    %136 = vector.load %arg3[%c14, %c0_41] : memref<16x64xf32, #tpu.memory_space<vmem>>, vector<1x64xf32>
    %137 = vector.shape_cast %136 : vector<1x64xf32> to vector<64xf32>
    %138 = vector.shape_cast %137 : vector<64xf32> to vector<1x1x64xf32>
    %139 = vector.broadcast %138 : vector<1x1x64xf32> to vector<2x2x64xf32>
    %140 = arith.mulf %135, %139 : vector<2x2x64xf32>
    %cst_42 = arith.constant dense<0.000000e+00> : vector<2x2xf32>
    %141 = vector.multi_reduction <add>, %140, %cst_42 [2] : vector<2x2x64xf32> to vector<2x2xf32>
    %142 = arith.addf %134, %141 : vector<2x2xf32>
    %143 = vector.extract_strided_slice %118 {offsets = [0, 3, 0], sizes = [2, 2, 64], strides = [1, 1, 1]} : vector<2x5x64xf32> to vector<2x2x64xf32>
    %c15 = arith.constant 15 : index
    %c0_43 = arith.constant 0 : index
    %144 = vector.load %arg3[%c15, %c0_43] : memref<16x64xf32, #tpu.memory_space<vmem>>, vector<1x64xf32>
    %145 = vector.shape_cast %144 : vector<1x64xf32> to vector<64xf32>
    %146 = vector.shape_cast %145 : vector<64xf32> to vector<1x1x64xf32>
    %147 = vector.broadcast %146 : vector<1x1x64xf32> to vector<2x2x64xf32>
    %148 = arith.mulf %143, %147 : vector<2x2x64xf32>
    %cst_44 = arith.constant dense<0.000000e+00> : vector<2x2xf32>
    %149 = vector.multi_reduction <add>, %148, %cst_44 [2] : vector<2x2x64xf32> to vector<2x2xf32>
    %150 = arith.addf %142, %149 : vector<2x2xf32>
    %c0_45 = arith.constant 0 : index
    %c0_46 = arith.constant 0 : index
    %151 = vector.load %arg4[%c0_45, %c0_46] : memref<1x1xf32, #tpu.memory_space<vmem>>, vector<1x1xf32>
    %152 = vector.broadcast %151 : vector<1x1xf32> to vector<2x2xf32>
    %153 = arith.addf %150, %152 : vector<2x2xf32>
    %154 = math.tanh %153 : vector<2x2xf32>
    %c0_47 = arith.constant 0 : index
    %c0_48 = arith.constant 0 : index
    %c0_49 = arith.constant 0 : index
    %155 = vector.load %arg5[%c0_47, %c0_48, %c0_49] : memref<1x2x2xf32, #tpu.memory_space<vmem>>, vector<1x2x2xf32>
    %156 = vector.shape_cast %155 : vector<1x2x2xf32> to vector<2x2xf32>
    %157 = vector.shape_cast %154 : vector<2x2xf32> to vector<1x2x2xf32>
    tpu.vector_store %arg5[%c0_47, %c0_48, %c0_49], %157 {strides = array<i32>} : memref<1x2x2xf32, #tpu.memory_space<vmem>>, vector<1x2x2xf32>,
    return
  }
  func.func @transform_0(%arg0: i32, %arg1: i32) -> (i32, i32, i32, i32) {
    %c0_i32 = arith.constant 0 : i32
    %c0_i32_0 = arith.constant 0 : i32
    %c0_i32_1 = arith.constant 0 : i32
    %c0_i32_2 = arith.constant 0 : i32
    return %arg0, %c0_i32, %c0_i32_0, %c0_i32_1 : i32, i32, i32, i32
  }
  func.func @transform_1(%arg0: i32, %arg1: i32) -> (i32, i32) {
    %c0_i32 = arith.constant 0 : i32
    %c0_i32_0 = arith.constant 0 : i32
    %c0_i32_1 = arith.constant 0 : i32
    return %c0_i32, %c0_i32_0 : i32, i32
  }
  func.func @transform_2(%arg0: i32, %arg1: i32) -> (i32, i32) {
    %c0_i32 = arith.constant 0 : i32
    %c0_i32_0 = arith.constant 0 : i32
    %c0_i32_1 = arith.constant 0 : i32
    return %c0_i32, %c0_i32_0 : i32, i32
  }
  func.func @transform_3(%arg0: i32, %arg1: i32) -> (i32, i32, i32) {
    %c0_i32 = arith.constant 0 : i32
    %c0_i32_0 = arith.constant 0 : i32
    return %arg0, %arg1, %c0_i32 : i32, i32, i32
  }
}

</mosaic_0001>

<llo_original>
// kernel: discriminator_forward.6
$region0: #{discriminator_forward.6}
  #allocation0 [shape = 'u32[]', space=smem, size = 0x4, offset = 0x4, fixed_abs, tag = 'smem constant byte address 0x4 - core index']
  #allocation1 [shape = 'u32[144,128]{1,0:T(1,128)}', space=vmem, size = 0x12000, scoped, tag = 'internal scratch']
  %s0 = inlined_call_operand.vmem [shape: bf16[2,17,17,12], index: 0, kind: input, shape index: {}]
  %s1 = inlined_call_operand.vmem [shape: bf16[4,12,8], index: 1, kind: input, shape index: {}]
  %s2 = inlined_call_operand.vmem [shape: f32[1,8], index: 2, kind: input, shape index: {}]
  %s3 = inlined_call_operand.vmem [shape: bf16[2,16,16,8], index: 3, kind: output, shape index: {}]
  %s4 = sld [smem:[#allocation0]]
  $region45: #{discriminator_forward.6} parent=0
    _
  %s6 = ssub.s32 1, %s4
  %s7 = scalar_select 0, %s6, %s4
  loop: start=0, step=1, limit=4
  $region2: #{discriminator_forward.6} parent=0 // loop_pre_header
    _
  $region3: #{discriminator_forward.6} parent=0 // loop_header
    %s9 = sphi 0, %s13
    %p10 = scmp.ge.s32.totalorder %s9, 4
    %s16 = sphi 0, %s28
    %s17 = sphi 0, %s24
    %s18 = sphi 0, %s16
    %s19 = sphi 0, %s17
    %s20 = sphi 0, %s18
    %s21 = sphi 0, %s19
    %s31 = sphi 0, %s33
    %s34 = sphi 0, %s31
    %s35 = sphi 0, %s34
    %s51 = sphi 0, %s35
    %s55 = sphi 0, %s55
    %s57 = sphi 0, %s55
    %s58 = sphi 0, %s57
    %s72 = sphi 0, %s58
    %s76 = sphi 0, %s76
    %s78 = sphi 0, %s76
    %s79 = sphi 0, %s78
    %s93 = sphi 0, %s79
    %s101 = sphi 0, %s103
    %s104 = sphi 0, %s101
    %s105 = sphi 0, %s104
    %s121 = sphi 0, %s105
  $region4: #{discriminator_forward.6} parent=0 // loop_header_branch
    %12 = sbr.rel (%p10) target = $region8
  $region5: #{discriminator_forward.6} parent=0 // loop_body
    %s14 = ssub.s32 %s9, 1
    %s15 = ssub.s32 %s9, 2
    %s22 = sadd.s32 1, %s17
    %p23 = scmp.ge.s32.totalorder %s22, 1
    %s24 = scalar_select %p23, 0, %s22
    %s25 = sadd.s32 1, %s16
    %s26 = scalar_select %p23, %s25, %s16
    %p27 = scmp.ge.s32.totalorder %s26, 2
    %s28 = scalar_select %p27, 0, %s26
    %s29 = ssub.s32 %s16, %s28
    %p30 = scmp.eq.s32.totalorder %s29, 0
    %s32 = sadd.s32 %s31, 1
    %s33 = scalar_select %p30, %s31, %s32
    %p36 = pneg %p30
    %p37 = scmp.eq.s32.totalorder %s9, 1
    %p38 = por %p36, %p37
    %p39 = scmp.ne.s32.totalorder %s31, %s34
    %p40 = scmp.eq.s32.totalorder %s9, 0
    %p41 = por %p39, %p40
    %p42 = scmp.ne.s32.totalorder %s31, %s34
    %p43 = scmp.eq.s32.totalorder %s14, 1
    %p44 = por %p42, %p43
    %p45 = scmp.ne.s32.totalorder %s34, %s35
    %p46 = scmp.eq.s32.totalorder %s14, 0
    %p47 = por %p45, %p46
    %p48 = scmp.ne.s32.totalorder %s34, %s35
    %p49 = scmp.eq.s32.totalorder %s15, 1
    %p50 = por %p48, %p49
    %p52 = scmp.ne.s32.totalorder %s35, %s51
    %p53 = scmp.eq.s32.totalorder %s15, 0
    %p54 = por %p52, %p53
    %s56 = sadd.s32 %s55, 1
    %p59 = scmp.eq.s32.totalorder %s9, 1
    %p60 = scmp.ne.s32.totalorder %s55, %s57
    %p61 = scmp.eq.s32.totalorder %s9, 0
    %p62 = por %p60, %p61
    %p63 = scmp.ne.s32.totalorder %s55, %s57
    %p64 = scmp.eq.s32.totalorder %s14, 1
    %p65 = por %p63, %p64
    %p66 = scmp.ne.s32.totalorder %s57, %s58
    %p67 = scmp.eq.s32.totalorder %s14, 0
    %p68 = por %p66, %p67
    %p69 = scmp.ne.s32.totalorder %s57, %s58
    %p70 = scmp.eq.s32.totalorder %s15, 1
    %p71 = por %p69, %p70
    %p73 = scmp.ne.s32.totalorder %s58, %s72
    %p74 = scmp.eq.s32.totalorder %s15, 0
    %p75 = por %p73, %p74
    %s77 = sadd.s32 %s76, 1
    %p80 = scmp.eq.s32.totalorder %s9, 1
    %p81 = scmp.ne.s32.totalorder %s76, %s78
    %p82 = scmp.eq.s32.totalorder %s9, 0
    %p83 = por %p81, %p82
    %p84 = scmp.ne.s32.totalorder %s76, %s78
    %p85 = scmp.eq.s32.totalorder %s14, 1
    %p86 = por %p84, %p85
    %p87 = scmp.ne.s32.totalorder %s78, %s79
    %p88 = scmp.eq.s32.totalorder %s14, 0
    %p89 = por %p87, %p88
    %p90 = scmp.ne.s32.totalorder %s78, %s79
    %p91 = scmp.eq.s32.totalorder %s15, 1
    %p92 = por %p90, %p91
    %p94 = scmp.ne.s32.totalorder %s79, %s93
    %p95 = scmp.eq.s32.totalorder %s15, 0
    %p96 = por %p94, %p95
    %s97 = ssub.s32 %s16, %s28
    %s98 = ssub.s32 %s17, %s24
    %s99 = sor.u32 %s97, %s98
    %p100 = scmp.eq.s32.totalorder %s99, 0
    %s102 = sadd.s32 %s101, 1
    %s103 = scalar_select %p100, %s101, %s102
    %p106 = pneg %p100
    %p107 = scmp.eq.s32.totalorder %s9, 1
    %p108 = por %p106, %p107
    %p109 = scmp.ne.s32.totalorder %s101, %s104
    %p110 = scmp.eq.s32.totalorder %s9, 0
    %p111 = por %p109, %p110
    %p112 = scmp.ne.s32.totalorder %s101, %s104
    %p113 = scmp.eq.s32.totalorder %s14, 1
    %p114 = por %p112, %p113
    %p115 = scmp.ne.s32.totalorder %s104, %s105
    %p116 = scmp.eq.s32.totalorder %s14, 0
    %p117 = por %p115, %p116
    %p118 = scmp.ne.s32.totalorder %s104, %s105
    %p119 = scmp.eq.s32.totalorder %s15, 1
    %p120 = por %p118, %p119
    %p122 = scmp.ne.s32.totalorder %s105, %s121
    %p123 = scmp.eq.s32.totalorder %s15, 0
    %p124 = por %p122, %p123
    %p125 = scmp.le.s32.totalorder 1, %s9
    %p126 = scmp.lt.s32.totalorder %s9, 3
    %p127 = pnand %p125, %p126
    %p128 = pneg %p127
    // Predicated region
    $region9: #{discriminator_forward.6} parent=5 // pred_check
      _
    $region10: #{discriminator_forward.6} parent=5 // pred_check_branch
      %130 = sbr.rel (%p127) target = $region12
    $region11: #{discriminator_forward.6} parent=5 // pred_region
      %s131 = ssub.s32 %s9, 1
      // Predicated region
      $region13: #{discriminator_forward.6} parent=11 // pred_check
        %p132 = pneg %p68
      $region14: #{discriminator_forward.6} parent=11 // pred_check_branch
        %134 = sbr.rel (%p132) target = $region16
      $region15: #{discriminator_forward.6} parent=11 // pred_region
        _
      $region16: #{discriminator_forward.6} parent=11 // pred_fallthru
        _
      // Predicated region
      $region17: #{discriminator_forward.6} parent=11 // pred_check
        %p135 = pneg %p89
      $region18: #{discriminator_forward.6} parent=11 // pred_check_branch
        %137 = sbr.rel (%p135) target = $region20
      $region19: #{discriminator_forward.6} parent=11 // pred_region
        _
      $region20: #{discriminator_forward.6} parent=11 // pred_fallthru
        _
    $region12: #{discriminator_forward.6} parent=5 // pred_fallthru
      _
    %p138 = scmp.lt.s32.totalorder %s9, 2
    // Predicated region
    $region21: #{discriminator_forward.6} parent=5 // pred_check
      %p139 = pneg %p138
    $region22: #{discriminator_forward.6} parent=5 // pred_check_branch
      %141 = sbr.rel (%p139) target = $region24
    $region23: #{discriminator_forward.6} parent=5 // pred_region
      // Predicated region
      $region25: #{discriminator_forward.6} parent=23 // pred_check
        %p142 = pneg %p41
      $region26: #{discriminator_forward.6} parent=23 // pred_check_branch
        %144 = sbr.rel (%p142) target = $region28
      $region27: #{discriminator_forward.6} parent=23 // pred_region
        %p145 = scmp.lt.s32.totalorder %s16, 1
        %s146 = scalar_select %p145, %s16, 1
        %s147 = smul.addr %s146, 51
        %s148 = smul.addr %s147, 4
        %s149 = scalar_lea.vmem %s0, %s148
      $region28: #{discriminator_forward.6} parent=23 // pred_fallthru
        _
    $region24: #{discriminator_forward.6} parent=5 // pred_fallthru
      _
    %p150 = scmp.le.s32.totalorder 1, %s9
    %p151 = scmp.lt.s32.totalorder %s9, 3
    %p152 = pnand %p150, %p151
    %p153 = pneg %p152
    // Predicated region
    $region29: #{discriminator_forward.6} parent=5 // pred_check
      _
    $region30: #{discriminator_forward.6} parent=5 // pred_check_branch
      %155 = sbr.rel (%p152) target = $region32
    $region31: #{discriminator_forward.6} parent=5 // pred_region
      %s156 = ssub.s32 %s9, 1
      %p157 = scmp.lt.s32.totalorder %s18, 1
      %s158 = scalar_select %p157, %s18, 1
      %s159 = smul.addr %s158, 51
      %s160 = smul.addr %s159, 4
      %s161 = scalar_lea.vmem %s0, %s160
      %p162 = pneg %p47
      %p163 = pneg %p44
      %p164 = pneg %p68
      %p165 = pneg %p65
      %p166 = pneg %p89
      %p167 = pneg %p86
      %p168 = pneg %p117
      %p169 = pneg %p114
      %s170 = smul.u32 16, %s19
      %p171 = scmp.lt.s32.totalorder %s18, 1
      %s172 = scalar_select %p171, %s18, 1
      %p173 = scmp.lt.s32.totalorder %s170, 15
      %s174 = scalar_select %p173, %s170, 15
      %s175 = smul.addr %s174, 2
      %s176 = smul.addr %s172, 32
      %s177 = sadd.s32 %s175, %s176
      %s178 = smul.addr %s177, 4
      %s179 = scalar_lea.vmem %s3, %s178
      %p180 = scmp.lt.s32.totalorder %s18, 1
      %s181 = scalar_select %p180, %s18, 1
      %s182 = smul.addr %s181, 51
      %s183 = smul.addr %s182, 4
      %s184 = scalar_lea.vmem %s0, %s183
      %s185 = smul.u32 16, %s19
      %p186 = scmp.lt.s32.totalorder %s18, 1
      %s187 = scalar_select %p186, %s18, 1
      %p188 = scmp.lt.s32.totalorder %s185, 15
      %s189 = scalar_select %p188, %s185, 15
      %s190 = smul.addr %s189, 2
      %s191 = smul.addr %s187, 32
      %s192 = sadd.s32 %s190, %s191
      %s193 = smul.addr %s192, 4
      %s194 = scalar_lea.vmem %s3, %s193
      %s195 = smul.u32 16, %s19
      %s197 = smul.u32 %s19, 16
      %v198 = vld [vmem:[%s2] sm:$0x1]
      %v200 = vlaneseq
      %v201 = vshrl.u32 %v200, 7
      %v202 = vsub.s32 0, %v201
      %v203 = vrot.slane %v198, %v202
      %v205 = vadd.f32 %v203, 0.0
      %s206 = smul.u32 %s197, 3
      %s207 = smul.addr %s206, 4
      %s208 = scalar_lea.vmem %s184, %s207
      %v209 = vld [vmem:[%s208] sm:$0xf]
      %v210 = vld [vmem:[%s208 + $0x4] sm:$0xf]
      %v211 = vld [vmem:[%s208 + $0x8] sm:$0x1]
      %v212 = vld [vmem:[%s208 + $0xc] sm:$0xf]
      %v213 = vld [vmem:[%s208 + $0x10] sm:$0xf]
      %v214 = vld [vmem:[%s208 + $0x14] sm:$0x1]
      %v215 = vld [vmem:[%s208 + $0x18] sm:$0xf]
      %v216 = vld [vmem:[%s208 + $0x1c] sm:$0xf]
      %v217 = vld [vmem:[%s208 + $0x20] sm:$0x1]
      %v218 = vld [vmem:[%s208 + $0x24] sm:$0xf]
      %v219 = vld [vmem:[%s208 + $0x28] sm:$0xf]
      %v220 = vld [vmem:[%s208 + $0x2c] sm:$0x1]
      %v221 = vld [vmem:[%s208 + $0x30] sm:$0xf]
      %v222 = vld [vmem:[%s208 + $0x34] sm:$0xf]
      %v223 = vld [vmem:[%s208 + $0x38] sm:$0x1]
      %v224 = vld [vmem:[%s208 + $0x3c] sm:$0xf]
      %v225 = vld [vmem:[%s208 + $0x40] sm:$0xf]
      %v226 = vld [vmem:[%s208 + $0x44] sm:$0x1]
      %v227 = vld [vmem:[%s208 + $0x48] sm:$0xf]
      %v228 = vld [vmem:[%s208 + $0x4c] sm:$0xf]
      %v229 = vld [vmem:[%s208 + $0x50] sm:$0x1]
      %v230 = vld [vmem:[%s208 + $0x54] sm:$0xf]
      %v231 = vld [vmem:[%s208 + $0x58] sm:$0xf]
      %v232 = vld [vmem:[%s208 + $0x5c] sm:$0x1]
      %v233 = vld [vmem:[%s208 + $0x60] sm:$0xf]
      %v234 = vld [vmem:[%s208 + $0x64] sm:$0xf]
      %v235 = vld [vmem:[%s208 + $0x68] sm:$0x1]
      %v236 = vld [vmem:[%s208 + $0x6c] sm:$0xf]
      %v237 = vld [vmem:[%s208 + $0x70] sm:$0xf]
      %v238 = vld [vmem:[%s208 + $0x74] sm:$0x1]
      %v239 = vld [vmem:[%s208 + $0x78] sm:$0xf]
      %v240 = vld [vmem:[%s208 + $0x7c] sm:$0xf]
      %v241 = vld [vmem:[%s208 + $0x80] sm:$0x1]
      %v242 = vld [vmem:[%s208 + $0x84] sm:$0xf]
      %v243 = vld [vmem:[%s208 + $0x88] sm:$0xf]
      %v244 = vld [vmem:[%s208 + $0x8c] sm:$0x1]
      %v245 = vld [vmem:[%s208 + $0x90] sm:$0xf]
      %v246 = vld [vmem:[%s208 + $0x94] sm:$0xf]
      %v247 = vld [vmem:[%s208 + $0x98] sm:$0x1]
      %v248 = vld [vmem:[%s208 + $0x9c] sm:$0xf]
      %v249 = vld [vmem:[%s208 + $0xa0] sm:$0xf]
      %v250 = vld [vmem:[%s208 + $0xa4] sm:$0x1]
      %v251 = vld [vmem:[%s208 + $0xa8] sm:$0xf]
      %v252 = vld [vmem:[%s208 + $0xac] sm:$0xf]
      %v253 = vld [vmem:[%s208 + $0xb0] sm:$0x1]
      %v254 = vld [vmem:[%s208 + $0xb4] sm:$0xf]
      %v255 = vld [vmem:[%s208 + $0xb8] sm:$0xf]
      %v256 = vld [vmem:[%s208 + $0xbc] sm:$0x1]
      %v257 = vld [vmem:[%s1] sm:$0xf]
      %v258 = vld [vmem:[%s1 + $0x4] sm:$0x3]
      %v291 = vunpack.c.l.b16 %v209
      %v292 = vunpack.c.l.b16 %v210
      %v293 = vunpack.c.l.b16 %v212
      %v294 = vunpack.c.l.b16 %v213
      %v295 = vunpack.c.l.b16 %v215
      %v296 = vunpack.c.l.b16 %v216
      %v297 = vunpack.c.l.b16 %v218
      %v298 = vunpack.c.l.b16 %v219
      %v299 = vunpack.c.l.b16 %v221
      %v300 = vunpack.c.l.b16 %v222
      %v301 = vunpack.c.l.b16 %v224
      %v302 = vunpack.c.l.b16 %v225
      %v303 = vunpack.c.l.b16 %v227
      %v304 = vunpack.c.l.b16 %v228
      %v305 = vunpack.c.l.b16 %v230
      %v306 = vunpack.c.l.b16 %v231
      %v307 = vunpack.c.l.b16 %v233
      %v308 = vunpack.c.l.b16 %v234
      %v309 = vunpack.c.l.b16 %v236
      %v310 = vunpack.c.l.b16 %v237
      %v311 = vunpack.c.l.b16 %v239
      %v312 = vunpack.c.l.b16 %v240
      %v313 = vunpack.c.l.b16 %v242
      %v314 = vunpack.c.l.b16 %v243
      %v315 = vunpack.c.l.b16 %v245
      %v316 = vunpack.c.l.b16 %v246
      %v317 = vunpack.c.l.b16 %v248
      %v318 = vunpack.c.l.b16 %v249
      %v319 = vunpack.c.l.b16 %v251
      %v320 = vunpack.c.l.b16 %v252
      %v321 = vunpack.c.l.b16 %v254
      %v322 = vunpack.c.l.b16 %v255
      %v323 = vpack.c.b16 %v292, %v291
      %v324 = vpack.c.b16 %v294, %v293
      %v325 = vpack.c.b16 %v296, %v295
      %v326 = vpack.c.b16 %v298, %v297
      %v327 = vpack.c.b16 %v300, %v299
      %v328 = vpack.c.b16 %v302, %v301
      %v329 = vpack.c.b16 %v304, %v303
      %v330 = vpack.c.b16 %v306, %v305
      %v331 = vpack.c.b16 %v308, %v307
      %v332 = vpack.c.b16 %v310, %v309
      %v333 = vpack.c.b16 %v312, %v311
      %v334 = vpack.c.b16 %v314, %v313
      %v335 = vpack.c.b16 %v316, %v315
      %v336 = vpack.c.b16 %v318, %v317
      %v337 = vpack.c.b16 %v320, %v319
      %v338 = vpack.c.b16 %v322, %v321
      %v341 = vunpack.c.l.b16 %v257
      %v342 = vunpack.c.l.b16 %v258
      %v343 = vpack.c.b16 %v342, %v341
      %vm344 = vcmask 97280
      %v346 = vsel %vm344, %v323, 0
      %v349 = vsel %vm344, %v324, 0
      %v352 = vsel %vm344, %v325, 0
      %v355 = vsel %vm344, %v326, 0
      %v358 = vsel %vm344, %v327, 0
      %v361 = vsel %vm344, %v328, 0
      %v364 = vsel %vm344, %v329, 0
      %v367 = vsel %vm344, %v330, 0
      %v370 = vsel %vm344, %v331, 0
      %v373 = vsel %vm344, %v332, 0
      %v376 = vsel %vm344, %v333, 0
      %v379 = vsel %vm344, %v334, 0
      %v382 = vsel %vm344, %v335, 0
      %v385 = vsel %vm344, %v336, 0
      %v388 = vsel %vm344, %v337, 0
      %v391 = vsel %vm344, %v338, 0
      %vm393 = vcmask 1045504
      %v395 = vsel %vm393, %v343, 0
      %397 = vmatprep.subr.bf16.mxu0 0
      %398 = vmatpush1.bf16.msra.mxu0 %v395
      %399 = vmatprep.subr.bf16.mxu0 0
      %400 = vmatpush1.bf16.msra.mxu0 0
      %401 = vmatprep.subr.bf16.mxu0 0
      %402 = vmatpush1.bf16.msra.mxu0 0
      %403 = vmatprep.subr.bf16.mxu0 0
      %404 = vmatpush1.bf16.msra.mxu0 0
      %405 = vmatprep.subr.bf16.mxu0 0
      %406 = vmatpush1.bf16.msra.mxu0 0
      %407 = vmatprep.subr.bf16.mxu0 0
      %408 = vmatpush1.bf16.msra.mxu0 0
      %409 = vmatprep.subr.bf16.mxu0 0
      %410 = vmatpush1.bf16.msra.mxu0 0
      %411 = vmatprep.subr.bf16.mxu0 0
      %412 = vmatpush1.bf16.msra.mxu0 0
      %413 = vmatprep.subr.bf16.mxu0 0
      %414 = vmatpush1.bf16.msra.mxu0 0
      %415 = vmatprep.subr.bf16.mxu0 0
      %416 = vmatpush1.bf16.msra.mxu0 0
      %417 = vmatprep.subr.bf16.mxu0 0
      %418 = vmatpush1.bf16.msra.mxu0 0
      %419 = vmatprep.subr.bf16.mxu0 0
      %420 = vmatpush1.bf16.msra.mxu0 0
      %421 = vmatprep.subr.bf16.mxu0 0
      %422 = vmatpush1.bf16.msra.mxu0 0
      %423 = vmatprep.subr.bf16.mxu0 0
      %424 = vmatpush1.bf16.msra.mxu0 0
      %425 = vmatprep.subr.bf16.mxu0 0
      %426 = vmatpush1.bf16.msra.mxu0 0
      %427 = vmatprep.subr.bf16.mxu0 0
      %428 = vmatpush1.bf16.msra.mxu0 0
      %429 = vmatprep.mubr.bf16.mxu0 0
      %430 = vmatmul.mubr.bf16.gmra.mrb[0].mxu0 %v346
      %v431 = vpop.f32.mrb[0].mxu0
      %v432 = vadd.f32 0.0, %v431
      %v433 = vpop.f32.mrb[0].mxu0
      %v434 = vpop.f32.mrb[0].mxu0
      %v435 = vadd.f32 0.0, %v434
      %v436 = vpop.f32.mrb[0].mxu0
      %437 = vmatprep.mubr.bf16.mxu0 0
      %438 = vmatmul.mubr.bf16.gmra.mrb[0].mxu0 %v349
      %v439 = vpop.f32.mrb[0].mxu0
      %v440 = vadd.f32 0.0, %v439
      %v441 = vpop.f32.mrb[0].mxu0
      %v442 = vpop.f32.mrb[0].mxu0
      %v443 = vadd.f32 0.0, %v442
      %v444 = vpop.f32.mrb[0].mxu0
      %445 = vmatprep.mubr.bf16.mxu0 0
      %446 = vmatmul.mubr.bf16.gmra.mrb[0].mxu0 %v352
      %v447 = vpop.f32.mrb[0].mxu0
      %v448 = vadd.f32 0.0, %v447
      %v449 = vpop.f32.mrb[0].mxu0
      %v450 = vpop.f32.mrb[0].mxu0
      %v451 = vadd.f32 0.0, %v450
      %v452 = vpop.f32.mrb[0].mxu0
      %453 = vmatprep.mubr.bf16.mxu0 0
      %454 = vmatmul.mubr.bf16.gmra.mrb[0].mxu0 %v355
      %v455 = vpop.f32.mrb[0].mxu0
      %v456 = vadd.f32 0.0, %v455
      %v457 = vpop.f32.mrb[0].mxu0
      %v458 = vpop.f32.mrb[0].mxu0
      %v459 = vadd.f32 0.0, %v458
      %v460 = vpop.f32.mrb[0].mxu0
      %461 = vmatprep.mubr.bf16.mxu0 0
      %462 = vmatmul.mubr.bf16.gmra.mrb[0].mxu0 %v358
      %v463 = vpop.f32.mrb[0].mxu0
      %v464 = vadd.f32 0.0, %v463
      %v465 = vpop.f32.mrb[0].mxu0
      %v466 = vpop.f32.mrb[0].mxu0
      %v467 = vadd.f32 0.0, %v466
      %v468 = vpop.f32.mrb[0].mxu0
      %469 = vmatprep.mubr.bf16.mxu0 0
      %470 = vmatmul.mubr.bf16.gmra.mrb[0].mxu0 %v361
      %v471 = vpop.f32.mrb[0].mxu0
      %v472 = vadd.f32 0.0, %v471
      %v473 = vpop.f32.mrb[0].mxu0
      %v474 = vpop.f32.mrb[0].mxu0
      %v475 = vadd.f32 0.0, %v474
      %v476 = vpop.f32.mrb[0].mxu0
      %477 = vmatprep.mubr.bf16.mxu0 0
      %478 = vmatmul.mubr.bf16.gmra.mrb[0].mxu0 %v364
      %v479 = vpop.f32.mrb[0].mxu0
      %v480 = vadd.f32 0.0, %v479
      %v481 = vpop.f32.mrb[0].mxu0
      %v482 = vpop.f32.mrb[0].mxu0
      %v483 = vadd.f32 0.0, %v482
      %v484 = vpop.f32.mrb[0].mxu0
      %485 = vmatprep.mubr.bf16.mxu0 0
      %486 = vmatmul.mubr.bf16.gmra.mrb[0].mxu0 %v367
      %v487 = vpop.f32.mrb[0].mxu0
      %v488 = vadd.f32 0.0, %v487
      %v489 = vpop.f32.mrb[0].mxu0
      %v490 = vpop.f32.mrb[0].mxu0
      %v491 = vadd.f32 0.0, %v490
      %v492 = vpop.f32.mrb[0].mxu0
      %493 = vmatprep.mubr.bf16.mxu0 0
      %494 = vmatmul.mubr.bf16.gmra.mrb[0].mxu0 %v370
      %v495 = vpop.f32.mrb[0].mxu0
      %v496 = vadd.f32 0.0, %v495
      %v497 = vpop.f32.mrb[0].mxu0
      %v498 = vpop.f32.mrb[0].mxu0
      %v499 = vadd.f32 0.0, %v498
      %v500 = vpop.f32.mrb[0].mxu0
      %501 = vmatprep.mubr.bf16.mxu0 0
      %502 = vmatmul.mubr.bf16.gmra.mrb[0].mxu0 %v373
      %v503 = vpop.f32.mrb[0].mxu0
      %v504 = vadd.f32 0.0, %v503
      %v505 = vpop.f32.mrb[0].mxu0
      %v506 = vpop.f32.mrb[0].mxu0
      %v507 = vadd.f32 0.0, %v506
      %v508 = vpop.f32.mrb[0].mxu0
      %509 = vmatprep.mubr.bf16.mxu0 0
      %510 = vmatmul.mubr.bf16.gmra.mrb[0].mxu0 %v376
      %v511 = vpop.f32.mrb[0].mxu0
      %v512 = vadd.f32 0.0, %v511
      %v513 = vpop.f32.mrb[0].mxu0
      %v514 = vpop.f32.mrb[0].mxu0
      %v515 = vadd.f32 0.0, %v514
      %v516 = vpop.f32.mrb[0].mxu0
      %517 = vmatprep.mubr.bf16.mxu0 0
      %518 = vmatmul.mubr.bf16.gmra.mrb[0].mxu0 %v379
      %v519 = vpop.f32.mrb[0].mxu0
      %v520 = vadd.f32 0.0, %v519
      %v521 = vpop.f32.mrb[0].mxu0
      %v522 = vpop.f32.mrb[0].mxu0
      %v523 = vadd.f32 0.0, %v522
      %v524 = vpop.f32.mrb[0].mxu0
      %525 = vmatprep.mubr.bf16.mxu0 0
      %526 = vmatmul.mubr.bf16.gmra.mrb[0].mxu0 %v382
      %v527 = vpop.f32.mrb[0].mxu0
      %v528 = vadd.f32 0.0, %v527
      %v529 = vpop.f32.mrb[0].mxu0
      %v530 = vpop.f32.mrb[0].mxu0
      %v531 = vadd.f32 0.0, %v530
      %v532 = vpop.f32.mrb[0].mxu0
      %533 = vmatprep.mubr.bf16.mxu0 0
      %534 = vmatmul.mubr.bf16.gmra.mrb[0].mxu0 %v385
      %v535 = vpop.f32.mrb[0].mxu0
      %v536 = vadd.f32 0.0, %v535
      %v537 = vpop.f32.mrb[0].mxu0
      %v538 = vpop.f32.mrb[0].mxu0
      %v539 = vadd.f32 0.0, %v538
      %v540 = vpop.f32.mrb[0].mxu0
      %541 = vmatprep.mubr.bf16.mxu0 0
      %542 = vmatmul.mubr.bf16.gmra.mrb[0].mxu0 %v388
      %v543 = vpop.f32.mrb[0].mxu0
      %v544 = vadd.f32 0.0, %v543
      %v545 = vpop.f32.mrb[0].mxu0
      %v546 = vpop.f32.mrb[0].mxu0
      %v547 = vadd.f32 0.0, %v546
      %v548 = vpop.f32.mrb[0].mxu0
      %549 = vmatprep.mubr.bf16.mxu0 0
      %550 = vmatmul.mubr.bf16.gmra.mrb[0].mxu0 %v391
      %v551 = vpop.f32.mrb[0].mxu0
      %v552 = vadd.f32 0.0, %v551
      %v553 = vpop.f32.mrb[0].mxu0
      %v554 = vpop.f32.mrb[0].mxu0
      %v555 = vadd.f32 0.0, %v554
      %v556 = vpop.f32.mrb[0].mxu0
      %557 = vdwg.mxu0
      %v558 = vadd.f32 %v205, %v432
      %v559 = vadd.f32 %v205, %v435
      %v560 = vadd.f32 %v205, %v440
      %v561 = vadd.f32 %v205, %v443
      %v562 = vadd.f32 %v205, %v448
      %v563 = vadd.f32 %v205, %v451
      %v564 = vadd.f32 %v205, %v456
      %v565 = vadd.f32 %v205, %v459
      %v566 = vadd.f32 %v205, %v464
      %v567 = vadd.f32 %v205, %v467
      %v568 = vadd.f32 %v205, %v472
      %v569 = vadd.f32 %v205, %v475
      %v570 = vadd.f32 %v205, %v480
      %v571 = vadd.f32 %v205, %v483
      %v572 = vadd.f32 %v205, %v488
      %v573 = vadd.f32 %v205, %v491
      %v574 = vadd.f32 %v205, %v496
      %v575 = vadd.f32 %v205, %v499
      %v576 = vadd.f32 %v205, %v504
      %v577 = vadd.f32 %v205, %v507
      %v578 = vadd.f32 %v205, %v512
      %v579 = vadd.f32 %v205, %v515
      %v580 = vadd.f32 %v205, %v520
      %v581 = vadd.f32 %v205, %v523
      %v582 = vadd.f32 %v205, %v528
      %v583 = vadd.f32 %v205, %v531
      %v584 = vadd.f32 %v205, %v536
      %v585 = vadd.f32 %v205, %v539
      %v586 = vadd.f32 %v205, %v544
      %v587 = vadd.f32 %v205, %v547
      %v588 = vadd.f32 %v205, %v552
      %v589 = vadd.f32 %v205, %v555
      %vm590 = vsmask.f32 3328
      %vm591 = vsmask.f32 7440
      %vm592 = vmor %vm590, %vm591
      %v594 = vshrl.u32 %v209, 16
      %v596 = vrot.slane %v594, 4
      %v597 = vshll.u32 %v209, 16
      %v599 = vrot.slane %v597, 5
      %v600 = vor.u32 %v596, %v599
      %v601 = vrot.slane %v600, 4
      %v603 = vshll.u32 %v210, 16
      %v605 = vrot.slane %v603, 5
      %v606 = vsel %vm592, %v601, %v605
      %v607 = vshrl.u32 %v210, 16
      %v609 = vrot.slane %v607, 4
      %v610 = vor.u32 %v609, %v605
      %v611 = vrot.slane %v610, 4
      %v613 = vshll.u32 %v211, 16
      %v615 = vrot.slane %v613, 5
      %v616 = vsel %vm592, %v611, %v615
      %v618 = vshrl.u32 %v212, 16
      %v620 = vrot.slane %v618, 4
      %v621 = vshll.u32 %v212, 16
      %v623 = vrot.slane %v621, 5
      %v624 = vor.u32 %v620, %v623
      %v625 = vrot.slane %v624, 4
      %v627 = vshll.u32 %v213, 16
      %v629 = vrot.slane %v627, 5
      %v630 = vsel %vm592, %v625, %v629
      %v631 = vshrl.u32 %v213, 16
      %v633 = vrot.slane %v631, 4
      %v634 = vor.u32 %v633, %v629
      %v635 = vrot.slane %v634, 4
      %v637 = vshll.u32 %v214, 16
      %v639 = vrot.slane %v637, 5
      %v640 = vsel %vm592, %v635, %v639
      %v642 = vshrl.u32 %v215, 16
      %v644 = vrot.slane %v642, 4
      %v645 = vshll.u32 %v215, 16
      %v647 = vrot.slane %v645, 5
      %v648 = vor.u32 %v644, %v647
      %v649 = vrot.slane %v648, 4
      %v651 = vshll.u32 %v216, 16
      %v653 = vrot.slane %v651, 5
      %v654 = vsel %vm592, %v649, %v653
      %v655 = vshrl.u32 %v216, 16
      %v657 = vrot.slane %v655, 4
      %v658 = vor.u32 %v657, %v653
      %v659 = vrot.slane %v658, 4
      %v661 = vshll.u32 %v217, 16
      %v663 = vrot.slane %v661, 5
      %v664 = vsel %vm592, %v659, %v663
      %v666 = vshrl.u32 %v218, 16
      %v668 = vrot.slane %v666, 4
      %v669 = vshll.u32 %v218, 16
      %v671 = vrot.slane %v669, 5
      %v672 = vor.u32 %v668, %v671
      %v673 = vrot.slane %v672, 4
      %v675 = vshll.u32 %v219, 16
      %v677 = vrot.slane %v675, 5
      %v678 = vsel %vm592, %v673, %v677
      %v679 = vshrl.u32 %v219, 16
      %v681 = vrot.slane %v679, 4
      %v682 = vor.u32 %v681, %v677
      %v683 = vrot.slane %v682, 4
      %v685 = vshll.u32 %v220, 16
      %v687 = vrot.slane %v685, 5
      %v688 = vsel %vm592, %v683, %v687
      %v690 = vshrl.u32 %v221, 16
      %v692 = vrot.slane %v690, 4
      %v693 = vshll.u32 %v221, 16
      %v695 = vrot.slane %v693, 5
      %v696 = vor.u32 %v692, %v695
      %v697 = vrot.slane %v696, 4
      %v699 = vshll.u32 %v222, 16
      %v701 = vrot.slane %v699, 5
      %v702 = vsel %vm592, %v697, %v701
      %v703 = vshrl.u32 %v222, 16
      %v705 = vrot.slane %v703, 4
      %v706 = vor.u32 %v705, %v701
      %v707 = vrot.slane %v706, 4
      %v709 = vshll.u32 %v223, 16
      %v711 = vrot.slane %v709, 5
      %v712 = vsel %vm592, %v707, %v711
      %v714 = vshrl.u32 %v224, 16
      %v716 = vrot.slane %v714, 4
      %v717 = vshll.u32 %v224, 16
      %v719 = vrot.slane %v717, 5
      %v720 = vor.u32 %v716, %v719
      %v721 = vrot.slane %v720, 4
      %v723 = vshll.u32 %v225, 16
      %v725 = vrot.slane %v723, 5
      %v726 = vsel %vm592, %v721, %v725
      %v727 = vshrl.u32 %v225, 16
      %v729 = vrot.slane %v727, 4
      %v730 = vor.u32 %v729, %v725
      %v731 = vrot.slane %v730, 4
      %v733 = vshll.u32 %v226, 16
      %v735 = vrot.slane %v733, 5
      %v736 = vsel %vm592, %v731, %v735
      %v738 = vshrl.u32 %v227, 16
      %v740 = vrot.slane %v738, 4
      %v741 = vshll.u32 %v227, 16
      %v743 = vrot.slane %v741, 5
      %v744 = vor.u32 %v740, %v743
      %v745 = vrot.slane %v744, 4
      %v747 = vshll.u32 %v228, 16
      %v749 = vrot.slane %v747, 5
      %v750 = vsel %vm592, %v745, %v749
      %v751 = vshrl.u32 %v228, 16
      %v753 = vrot.slane %v751, 4
      %v754 = vor.u32 %v753, %v749
      %v755 = vrot.slane %v754, 4
      %v757 = vshll.u32 %v229, 16
      %v759 = vrot.slane %v757, 5
      %v760 = vsel %vm592, %v755, %v759
      %v762 = vshrl.u32 %v230, 16
      %v764 = vrot.slane %v762, 4
      %v765 = vshll.u32 %v230, 16
      %v767 = vrot.slane %v765, 5
      %v768 = vor.u32 %v764, %v767
      %v769 = vrot.slane %v768, 4
      %v771 = vshll.u32 %v231, 16
      %v773 = vrot.slane %v771, 5
      %v774 = vsel %vm592, %v769, %v773
      %v775 = vshrl.u32 %v231, 16
      %v777 = vrot.slane %v775, 4
      %v778 = vor.u32 %v777, %v773
      %v779 = vrot.slane %v778, 4
      %v781 = vshll.u32 %v232, 16
      %v783 = vrot.slane %v781, 5
      %v784 = vsel %vm592, %v779, %v783
      %v786 = vshrl.u32 %v233, 16
      %v788 = vrot.slane %v786, 4
      %v789 = vshll.u32 %v233, 16
      %v791 = vrot.slane %v789, 5
      %v792 = vor.u32 %v788, %v791
      %v793 = vrot.slane %v792, 4
      %v795 = vshll.u32 %v234, 16
      %v797 = vrot.slane %v795, 5
      %v798 = vsel %vm592, %v793, %v797
      %v799 = vshrl.u32 %v234, 16
      %v801 = vrot.slane %v799, 4
      %v802 = vor.u32 %v801, %v797
      %v803 = vrot.slane %v802, 4
      %v805 = vshll.u32 %v235, 16
      %v807 = vrot.slane %v805, 5
      %v808 = vsel %vm592, %v803, %v807
      %v810 = vshrl.u32 %v236, 16
      %v812 = vrot.slane %v810, 4
      %v813 = vshll.u32 %v236, 16
      %v815 = vrot.slane %v813, 5
      %v816 = vor.u32 %v812, %v815
      %v817 = vrot.slane %v816, 4
      %v819 = vshll.u32 %v237, 16
      %v821 = vrot.slane %v819, 5
      %v822 = vsel %vm592, %v817, %v821
      %v823 = vshrl.u32 %v237, 16
      %v825 = vrot.slane %v823, 4
      %v826 = vor.u32 %v825, %v821
      %v827 = vrot.slane %v826, 4
      %v829 = vshll.u32 %v238, 16
      %v831 = vrot.slane %v829, 5
      %v832 = vsel %vm592, %v827, %v831
      %v834 = vshrl.u32 %v239, 16
      %v836 = vrot.slane %v834, 4
      %v837 = vshll.u32 %v239, 16
      %v839 = vrot.slane %v837, 5
      %v840 = vor.u32 %v836, %v839
      %v841 = vrot.slane %v840, 4
      %v843 = vshll.u32 %v240, 16
      %v845 = vrot.slane %v843, 5
      %v846 = vsel %vm592, %v841, %v845
      %v847 = vshrl.u32 %v240, 16
      %v849 = vrot.slane %v847, 4
      %v850 = vor.u32 %v849, %v845
      %v851 = vrot.slane %v850, 4
      %v853 = vshll.u32 %v241, 16
      %v855 = vrot.slane %v853, 5
      %v856 = vsel %vm592, %v851, %v855
      %v858 = vshrl.u32 %v242, 16
      %v860 = vrot.slane %v858, 4
      %v861 = vshll.u32 %v242, 16
      %v863 = vrot.slane %v861, 5
      %v864 = vor.u32 %v860, %v863
      %v865 = vrot.slane %v864, 4
      %v867 = vshll.u32 %v243, 16
      %v869 = vrot.slane %v867, 5
      %v870 = vsel %vm592, %v865, %v869
      %v871 = vshrl.u32 %v243, 16
      %v873 = vrot.slane %v871, 4
      %v874 = vor.u32 %v873, %v869
      %v875 = vrot.slane %v874, 4
      %v877 = vshll.u32 %v244, 16
      %v879 = vrot.slane %v877, 5
      %v880 = vsel %vm592, %v875, %v879
      %v882 = vshrl.u32 %v245, 16
      %v884 = vrot.slane %v882, 4
      %v885 = vshll.u32 %v245, 16
      %v887 = vrot.slane %v885, 5
      %v888 = vor.u32 %v884, %v887
      %v889 = vrot.slane %v888, 4
      %v891 = vshll.u32 %v246, 16
      %v893 = vrot.slane %v891, 5
      %v894 = vsel %vm592, %v889, %v893
      %v895 = vshrl.u32 %v246, 16
      %v897 = vrot.slane %v895, 4
      %v898 = vor.u32 %v897, %v893
      %v899 = vrot.slane %v898, 4
      %v901 = vshll.u32 %v247, 16
      %v903 = vrot.slane %v901, 5
      %v904 = vsel %vm592, %v899, %v903
      %v906 = vshrl.u32 %v248, 16
      %v908 = vrot.slane %v906, 4
      %v909 = vshll.u32 %v248, 16
      %v911 = vrot.slane %v909, 5
      %v912 = vor.u32 %v908, %v911
      %v913 = vrot.slane %v912, 4
      %v915 = vshll.u32 %v249, 16
      %v917 = vrot.slane %v915, 5
      %v918 = vsel %vm592, %v913, %v917
      %v919 = vshrl.u32 %v249, 16
      %v921 = vrot.slane %v919, 4
      %v922 = vor.u32 %v921, %v917
      %v923 = vrot.slane %v922, 4
      %v925 = vshll.u32 %v250, 16
      %v927 = vrot.slane %v925, 5
      %v928 = vsel %vm592, %v923, %v927
      %v930 = vshrl.u32 %v251, 16
      %v932 = vrot.slane %v930, 4
      %v933 = vshll.u32 %v251, 16
      %v935 = vrot.slane %v933, 5
      %v936 = vor.u32 %v932, %v935
      %v937 = vrot.slane %v936, 4
      %v939 = vshll.u32 %v252, 16
      %v941 = vrot.slane %v939, 5
      %v942 = vsel %vm592, %v937, %v941
      %v943 = vshrl.u32 %v252, 16
      %v945 = vrot.slane %v943, 4
      %v946 = vor.u32 %v945, %v941
      %v947 = vrot.slane %v946, 4
      %v949 = vshll.u32 %v253, 16
      %v951 = vrot.slane %v949, 5
      %v952 = vsel %vm592, %v947, %v951
      %v954 = vshrl.u32 %v254, 16
      %v956 = vrot.slane %v954, 4
      %v957 = vshll.u32 %v254, 16
      %v959 = vrot.slane %v957, 5
      %v960 = vor.u32 %v956, %v959
      %v961 = vrot.slane %v960, 4
      %v963 = vshll.u32 %v255, 16
      %v965 = vrot.slane %v963, 5
      %v966 = vsel %vm592, %v961, %v965
      %v967 = vshrl.u32 %v255, 16
      %v969 = vrot.slane %v967, 4
      %v970 = vor.u32 %v969, %v965
      %v971 = vrot.slane %v970, 4
      %v973 = vshll.u32 %v256, 16
      %v975 = vrot.slane %v973, 5
      %v976 = vsel %vm592, %v971, %v975
      %s977 = scalar_lea.vmem %s1, 8
      %v978 = vld [vmem:[%s977] sm:$0xf]
      %v979 = vld [vmem:[%s977 + $0x4] sm:$0x3]
      %v980 = vunpack.c.l.b16 %v606
      %v981 = vunpack.c.l.b16 %v616
      %v982 = vunpack.c.l.b16 %v630
      %v983 = vunpack.c.l.b16 %v640
      %v984 = vunpack.c.l.b16 %v654
      %v985 = vunpack.c.l.b16 %v664
      %v986 = vunpack.c.l.b16 %v678
      %v987 = vunpack.c.l.b16 %v688
      %v988 = vunpack.c.l.b16 %v702
      %v989 = vunpack.c.l.b16 %v712
      %v990 = vunpack.c.l.b16 %v726
      %v991 = vunpack.c.l.b16 %v736
      %v992 = vunpack.c.l.b16 %v750
      %v993 = vunpack.c.l.b16 %v760
      %v994 = vunpack.c.l.b16 %v774
      %v995 = vunpack.c.l.b16 %v784
      %v996 = vunpack.c.l.b16 %v798
      %v997 = vunpack.c.l.b16 %v808
      %v998 = vunpack.c.l.b16 %v822
      %v999 = vunpack.c.l.b16 %v832
      %v1000 = vunpack.c.l.b16 %v846
      %v1001 = vunpack.c.l.b16 %v856
      %v1002 = vunpack.c.l.b16 %v870
      %v1003 = vunpack.c.l.b16 %v880
      %v1004 = vunpack.c.l.b16 %v894
      %v1005 = vunpack.c.l.b16 %v904
      %v1006 = vunpack.c.l.b16 %v918
      %v1007 = vunpack.c.l.b16 %v928
      %v1008 = vunpack.c.l.b16 %v942
      %v1009 = vunpack.c.l.b16 %v952
      %v1010 = vunpack.c.l.b16 %v966
      %v1011 = vunpack.c.l.b16 %v976
      %v1012 = vpack.c.b16 %v981, %v980
      %v1013 = vpack.c.b16 %v983, %v982
      %v1014 = vpack.c.b16 %v985, %v984
      %v1015 = vpack.c.b16 %v987, %v986
      %v1016 = vpack.c.b16 %v989, %v988
      %v1017 = vpack.c.b16 %v991, %v990
      %v1018 = vpack.c.b16 %v993, %v992
      %v1019 = vpack.c.b16 %v995, %v994
      %v1020 = vpack.c.b16 %v997, %v996
      %v1021 = vpack.c.b16 %v999, %v998
      %v1022 = vpack.c.b16 %v1001, %v1000
      %v1023 = vpack.c.b16 %v1003, %v1002
      %v1024 = vpack.c.b16 %v1005, %v1004
      %v1025 = vpack.c.b16 %v1007, %v1006
      %v1026 = vpack.c.b16 %v1009, %v1008
      %v1027 = vpack.c.b16 %v1011, %v1010
      %v1030 = vunpack.c.l.b16 %v978
      %v1031 = vunpack.c.l.b16 %v979
      %v1032 = vpack.c.b16 %v1031, %v1030
      %v1034 = vsel %vm344, %v1012, 0
      %v1037 = vsel %vm344, %v1013, 0
      %v1040 = vsel %vm344, %v1014, 0
      %v1043 = vsel %vm344, %v1015, 0
      %v1046 = vsel %vm344, %v1016, 0
      %v1049 = vsel %vm344, %v1017, 0
      %v1052 = vsel %vm344, %v1018, 0
      %v1055 = vsel %vm344, %v1019, 0
      %v1058 = vsel %vm344, %v1020, 0
      %v1061 = vsel %vm344, %v1021, 0
      %v1064 = vsel %vm344, %v1022, 0
      %v1067 = vsel %vm344, %v1023, 0
      %v1070 = vsel %vm344, %v1024, 0
      %v1073 = vsel %vm344, %v1025, 0
      %v1076 = vsel %vm344, %v1026, 0
      %v1079 = vsel %vm344, %v1027, 0
      %v1082 = vsel %vm393, %v1032, 0
      %1084 = vmatprep.subr.bf16.mxu0 0
      %1085 = vmatpush1.bf16.msra.mxu0 %v1082
      %1086 = vmatprep.subr.bf16.mxu0 0
      %1087 = vmatpush1.bf16.msra.mxu0 0
      %1088 = vmatprep.subr.bf16.mxu0 0
      %1089 = vmatpush1.bf16.msra.mxu0 0
      %1090 = vmatprep.subr.bf16.mxu0 0
      %1091 = vmatpush1.bf16.msra.mxu0 0
      %1092 = vmatprep.subr.bf16.mxu0 0
      %1093 = vmatpush1.bf16.msra.mxu0 0
      %1094 = vmatprep.subr.bf16.mxu0 0
      %1095 = vmatpush1.bf16.msra.mxu0 0
      %1096 = vmatprep.subr.bf16.mxu0 0
      %1097 = vmatpush1.bf16.msra.mxu0 0
      %1098 = vmatprep.subr.bf16.mxu0 0
      %1099 = vmatpush1.bf16.msra.mxu0 0
      %1100 = vmatprep.subr.bf16.mxu0 0
      %1101 = vmatpush1.bf16.msra.mxu0 0
      %1102 = vmatprep.subr.bf16.mxu0 0
      %1103 = vmatpush1.bf16.msra.mxu0 0
      %1104 = vmatprep.subr.bf16.mxu0 0
      %1105 = vmatpush1.bf16.msra.mxu0 0
      %1106 = vmatprep.subr.bf16.mxu0 0
      %1107 = vmatpush1.bf16.msra.mxu0 0
      %1108 = vmatprep.subr.bf16.mxu0 0
      %1109 = vmatpush1.bf16.msra.mxu0 0
      %1110 = vmatprep.subr.bf16.mxu0 0
      %1111 = vmatpush1.bf16.msra.mxu0 0
      %1112 = vmatprep.subr.bf16.mxu0 0
      %1113 = vmatpush1.bf16.msra.mxu0 0
      %1114 = vmatprep.subr.bf16.mxu0 0
      %1115 = vmatpush1.bf16.msra.mxu0 0
      %1116 = vmatprep.mubr.bf16.mxu0 0
      %1117 = vmatmul.mubr.bf16.gmra.mrb[0].mxu0 %v1034
      %v1118 = vpop.f32.mrb[0].mxu0
      %v1119 = vadd.f32 0.0, %v1118
      %v1120 = vpop.f32.mrb[0].mxu0
      %v1121 = vpop.f32.mrb[0].mxu0
      %v1122 = vadd.f32 0.0, %v1121
      %v1123 = vpop.f32.mrb[0].mxu0
      %1124 = vmatprep.mubr.bf16.mxu0 0
      %1125 = vmatmul.mubr.bf16.gmra.mrb[0].mxu0 %v1037
      %v1126 = vpop.f32.mrb[0].mxu0
      %v1127 = vadd.f32 0.0, %v1126
      %v1128 = vpop.f32.mrb[0].mxu0
      %v1129 = vpop.f32.mrb[0].mxu0
      %v1130 = vadd.f32 0.0, %v1129
      %v1131 = vpop.f32.mrb[0].mxu0
      %1132 = vmatprep.mubr.bf16.mxu0 0
      %1133 = vmatmul.mubr.bf16.gmra.mrb[0].mxu0 %v1040
      %v1134 = vpop.f32.mrb[0].mxu0
      %v1135 = vadd.f32 0.0, %v1134
      %v1136 = vpop.f32.mrb[0].mxu0
      %v1137 = vpop.f32.mrb[0].mxu0
      %v1138 = vadd.f32 0.0, %v1137
      %v1139 = vpop.f32.mrb[0].mxu0
      %1140 = vmatprep.mubr.bf16.mxu0 0
      %1141 = vmatmul.mubr.bf16.gmra.mrb[0].mxu0 %v1043
      %v1142 = vpop.f32.mrb[0].mxu0
      %v1143 = vadd.f32 0.0, %v1142
      %v1144 = vpop.f32.mrb[0].mxu0
      %v1145 = vpop.f32.mrb[0].mxu0
      %v1146 = vadd.f32 0.0, %v1145
      %v1147 = vpop.f32.mrb[0].mxu0
      %1148 = vmatprep.mubr.bf16.mxu0 0
      %1149 = vmatmul.mubr.bf16.gmra.mrb[0].mxu0 %v1046
      %v1150 = vpop.f32.mrb[0].mxu0
      %v1151 = vadd.f32 0.0, %v1150
      %v1152 = vpop.f32.mrb[0].mxu0
      %v1153 = vpop.f32.mrb[0].mxu0
      %v1154 = vadd.f32 0.0, %v1153
      %v1155 = vpop.f32.mrb[0].mxu0
      %1156 = vmatprep.mubr.bf16.mxu0 0
      %1157 = vmatmul.mubr.bf16.gmra.mrb[0].mxu0 %v1049
      %v1158 = vpop.f32.mrb[0].mxu0
      %v1159 = vadd.f32 0.0, %v1158
      %v1160 = vpop.f32.mrb[0].mxu0
      %v1161 = vpop.f32.mrb[0].mxu0
      %v1162 = vadd.f32 0.0, %v1161
      %v1163 = vpop.f32.mrb[0].mxu0
      %1164 = vmatprep.mubr.bf16.mxu0 0
      %1165 = vmatmul.mubr.bf16.gmra.mrb[0].mxu0 %v1052
      %v1166 = vpop.f32.mrb[0].mxu0
      %v1167 = vadd.f32 0.0, %v1166
      %v1168 = vpop.f32.mrb[0].mxu0
      %v1169 = vpop.f32.mrb[0].mxu0
      %v1170 = vadd.f32 0.0, %v1169
      %v1171 = vpop.f32.mrb[0].mxu0
      %1172 = vmatprep.mubr.bf16.mxu0 0
      %1173 = vmatmul.mubr.bf16.gmra.mrb[0].mxu0 %v1055
      %v1174 = vpop.f32.mrb[0].mxu0
      %v1175 = vadd.f32 0.0, %v1174
      %v1176 = vpop.f32.mrb[0].mxu0
      %v1177 = vpop.f32.mrb[0].mxu0
      %v1178 = vadd.f32 0.0, %v1177
      %v1179 = vpop.f32.mrb[0].mxu0
      %1180 = vmatprep.mubr.bf16.mxu0 0
      %1181 = vmatmul.mubr.bf16.gmra.mrb[0].mxu0 %v1058
      %v1182 = vpop.f32.mrb[0].mxu0
      %v1183 = vadd.f32 0.0, %v1182
      %v1184 = vpop.f32.mrb[0].mxu0
      %v1185 = vpop.f32.mrb[0].mxu0
      %v1186 = vadd.f32 0.0, %v1185
      %v1187 = vpop.f32.mrb[0].mxu0
      %1188 = vmatprep.mubr.bf16.mxu0 0
      %1189 = vmatmul.mubr.bf16.gmra.mrb[0].mxu0 %v1061
      %v1190 = vpop.f32.mrb[0].mxu0
      %v1191 = vadd.f32 0.0, %v1190
      %v1192 = vpop.f32.mrb[0].mxu0
      %v1193 = vpop.f32.mrb[0].mxu0
      %v1194 = vadd.f32 0.0, %v1193
      %v1195 = vpop.f32.mrb[0].mxu0
      %1196 = vmatprep.mubr.bf16.mxu0 0
      %1197 = vmatmul.mubr.bf16.gmra.mrb[0].mxu0 %v1064
      %v1198 = vpop.f32.mrb[0].mxu0
      %v1199 = vadd.f32 0.0, %v1198
      %v1200 = vpop.f32.mrb[0].mxu0
      %v1201 = vpop.f32.mrb[0].mxu0
      %v1202 = vadd.f32 0.0, %v1201
      %v1203 = vpop.f32.mrb[0].mxu0
      %1204 = vmatprep.mubr.bf16.mxu0 0
      %1205 = vmatmul.mubr.bf16.gmra.mrb[0].mxu0 %v1067
      %v1206 = vpop.f32.mrb[0].mxu0
      %v1207 = vadd.f32 0.0, %v1206
      %v1208 = vpop.f32.mrb[0].mxu0
      %v1209 = vpop.f32.mrb[0].mxu0
      %v1210 = vadd.f32 0.0, %v1209
      %v1211 = vpop.f32.mrb[0].mxu0
      %1212 = vmatprep.mubr.bf16.mxu0 0
      %1213 = vmatmul.mubr.bf16.gmra.mrb[0].mxu0 %v1070
      %v1214 = vpop.f32.mrb[0].mxu0
      %v1215 = vadd.f32 0.0, %v1214
      %v1216 = vpop.f32.mrb[0].mxu0
      %v1217 = vpop.f32.mrb[0].mxu0
      %v1218 = vadd.f32 0.0, %v1217
      %v1219 = vpop.f32.mrb[0].mxu0
      %1220 = vmatprep.mubr.bf16.mxu0 0
      %1221 = vmatmul.mubr.bf16.gmra.mrb[0].mxu0 %v1073
      %v1222 = vpop.f32.mrb[0].mxu0
      %v1223 = vadd.f32 0.0, %v1222
      %v1224 = vpop.f32.mrb[0].mxu0
      %v1225 = vpop.f32.mrb[0].mxu0
      %v1226 = vadd.f32 0.0, %v1225
      %v1227 = vpop.f32.mrb[0].mxu0
      %1228 = vmatprep.mubr.bf16.mxu0 0
      %1229 = vmatmul.mubr.bf16.gmra.mrb[0].mxu0 %v1076
      %v1230 = vpop.f32.mrb[0].mxu0
      %v1231 = vadd.f32 0.0, %v1230
      %v1232 = vpop.f32.mrb[0].mxu0
      %v1233 = vpop.f32.mrb[0].mxu0
      %v1234 = vadd.f32 0.0, %v1233
      %v1235 = vpop.f32.mrb[0].mxu0
      %1236 = vmatprep.mubr.bf16.mxu0 0
      %1237 = vmatmul.mubr.bf16.gmra.mrb[0].mxu0 %v1079
      %v1238 = vpop.f32.mrb[0].mxu0
      %v1239 = vadd.f32 0.0, %v1238
      %v1240 = vpop.f32.mrb[0].mxu0
      %v1241 = vpop.f32.mrb[0].mxu0
      %v1242 = vadd.f32 0.0, %v1241
      %v1243 = vpop.f32.mrb[0].mxu0
      %1244 = vdwg.mxu0
      %v1245 = vadd.f32 %v558, %v1119
      %v1246 = vadd.f32 %v559, %v1122
      %v1247 = vadd.f32 %v560, %v1127
      %v1248 = vadd.f32 %v561, %v1130
      %v1249 = vadd.f32 %v562, %v1135
      %v1250 = vadd.f32 %v563, %v1138
      %v1251 = vadd.f32 %v564, %v1143
      %v1252 = vadd.f32 %v565, %v1146
      %v1253 = vadd.f32 %v566, %v1151
      %v1254 = vadd.f32 %v567, %v1154
      %v1255 = vadd.f32 %v568, %v1159
      %v1256 = vadd.f32 %v569, %v1162
      %v1257 = vadd.f32 %v570, %v1167
      %v1258 = vadd.f32 %v571, %v1170
      %v1259 = vadd.f32 %v572, %v1175
      %v1260 = vadd.f32 %v573, %v1178
      %v1261 = vadd.f32 %v574, %v1183
      %v1262 = vadd.f32 %v575, %v1186
      %v1263 = vadd.f32 %v576, %v1191
      %v1264 = vadd.f32 %v577, %v1194
      %v1265 = vadd.f32 %v578, %v1199
      %v1266 = vadd.f32 %v579, %v1202
      %v1267 = vadd.f32 %v580, %v1207
      %v1268 = vadd.f32 %v581, %v1210
      %v1269 = vadd.f32 %v582, %v1215
      %v1270 = vadd.f32 %v583, %v1218
      %v1271 = vadd.f32 %v584, %v1223
      %v1272 = vadd.f32 %v585, %v1226
      %v1273 = vadd.f32 %v586, %v1231
      %v1274 = vadd.f32 %v587, %v1234
      %v1275 = vadd.f32 %v588, %v1239
      %v1276 = vadd.f32 %v589, %v1242
      %s1277 = sadd.s32 %s197, 1
      %s1278 = smul.u32 %s1277, 3
      %s1279 = smul.addr %s1278, 4
      %s1280 = scalar_lea.vmem %s184, %s1279
      %v1281 = vld [vmem:[%s1280] sm:$0xf]
      %v1282 = vld [vmem:[%s1280 + $0x4] sm:$0xf]
      %v1283 = vld [vmem:[%s1280 + $0x8] sm:$0x1]
      %v1284 = vld [vmem:[%s1280 + $0xc] sm:$0xf]
      %v1285 = vld [vmem:[%s1280 + $0x10] sm:$0xf]
      %v1286 = vld [vmem:[%s1280 + $0x14] sm:$0x1]
      %v1287 = vld [vmem:[%s1280 + $0x18] sm:$0xf]
      %v1288 = vld [vmem:[%s1280 + $0x1c] sm:$0xf]
      %v1289 = vld [vmem:[%s1280 + $0x20] sm:$0x1]
      %v1290 = vld [vmem:[%s1280 + $0x24] sm:$0xf]
      %v1291 = vld [vmem:[%s1280 + $0x28] sm:$0xf]
      %v1292 = vld [vmem:[%s1280 + $0x2c] sm:$0x1]
      %v1293 = vld [vmem:[%s1280 + $0x30] sm:$0xf]
      %v1294 = vld [vmem:[%s1280 + $0x34] sm:$0xf]
      %v1295 = vld [vmem:[%s1280 + $0x38] sm:$0x1]
      %v1296 = vld [vmem:[%s1280 + $0x3c] sm:$0xf]
      %v1297 = vld [vmem:[%s1280 + $0x40] sm:$0xf]
      %v1298 = vld [vmem:[%s1280 + $0x44] sm:$0x1]
      %v1299 = vld [vmem:[%s1280 + $0x48] sm:$0xf]
      %v1300 = vld [vmem:[%s1280 + $0x4c] sm:$0xf]
      %v1301 = vld [vmem:[%s1280 + $0x50] sm:$0x1]
      %v1302 = vld [vmem:[%s1280 + $0x54] sm:$0xf]
      %v1303 = vld [vmem:[%s1280 + $0x58] sm:$0xf]
      %v1304 = vld [vmem:[%s1280 + $0x5c] sm:$0x1]
      %v1305 = vld [vmem:[%s1280 + $0x60] sm:$0xf]
      %v1306 = vld [vmem:[%s1280 + $0x64] sm:$0xf]
      %v1307 = vld [vmem:[%s1280 + $0x68] sm:$0x1]
      %v1308 = vld [vmem:[%s1280 + $0x6c] sm:$0xf]
      %v1309 = vld [vmem:[%s1280 + $0x70] sm:$0xf]
      %v1310 = vld [vmem:[%s1280 + $0x74] sm:$0x1]
      %v1311 = vld [vmem:[%s1280 + $0x78] sm:$0xf]
      %v1312 = vld [vmem:[%s1280 + $0x7c] sm:$0xf]
      %v1313 = vld [vmem:[%s1280 + $0x80] sm:$0x1]
      %v1314 = vld [vmem:[%s1280 + $0x84] sm:$0xf]
      %v1315 = vld [vmem:[%s1280 + $0x88] sm:$0xf]
      %v1316 = vld [vmem:[%s1280 + $0x8c] sm:$0x1]
      %v1317 = vld [vmem:[%s1280 + $0x90] sm:$0xf]
      %v1318 = vld [vmem:[%s1280 + $0x94] sm:$0xf]
      %v1319 = vld [vmem:[%s1280 + $0x98] sm:$0x1]
      %v1320 = vld [vmem:[%s1280 + $0x9c] sm:$0xf]
      %v1321 = vld [vmem:[%s1280 + $0xa0] sm:$0xf]
      %v1322 = vld [vmem:[%s1280 + $0xa4] sm:$0x1]
      %v1323 = vld [vmem:[%s1280 + $0xa8] sm:$0xf]
      %v1324 = vld [vmem:[%s1280 + $0xac] sm:$0xf]
      %v1325 = vld [vmem:[%s1280 + $0xb0] sm:$0x1]
      %v1326 = vld [vmem:[%s1280 + $0xb4] sm:$0xf]
      %v1327 = vld [vmem:[%s1280 + $0xb8] sm:$0xf]
      %v1328 = vld [vmem:[%s1280 + $0xbc] sm:$0x1]
      %s1329 = scalar_lea.vmem %s1, 16
      %v1330 = vld [vmem:[%s1329] sm:$0xf]
      %v1331 = vld [vmem:[%s1329 + $0x4] sm:$0x3]
      %v1364 = vunpack.c.l.b16 %v1281
      %v1365 = vunpack.c.l.b16 %v1282
      %v1366 = vunpack.c.l.b16 %v1284
      %v1367 = vunpack.c.l.b16 %v1285
      %v1368 = vunpack.c.l.b16 %v1287
      %v1369 = vunpack.c.l.b16 %v1288
      %v1370 = vunpack.c.l.b16 %v1290
      %v1371 = vunpack.c.l.b16 %v1291
      %v1372 = vunpack.c.l.b16 %v1293
      %v1373 = vunpack.c.l.b16 %v1294
      %v1374 = vunpack.c.l.b16 %v1296
      %v1375 = vunpack.c.l.b16 %v1297
      %v1376 = vunpack.c.l.b16 %v1299
      %v1377 = vunpack.c.l.b16 %v1300
      %v1378 = vunpack.c.l.b16 %v1302
      %v1379 = vunpack.c.l.b16 %v1303
      %v1380 = vunpack.c.l.b16 %v1305
      %v1381 = vunpack.c.l.b16 %v1306
      %v1382 = vunpack.c.l.b16 %v1308
      %v1383 = vunpack.c.l.b16 %v1309
      %v1384 = vunpack.c.l.b16 %v1311
      %v1385 = vunpack.c.l.b16 %v1312
      %v1386 = vunpack.c.l.b16 %v1314
      %v1387 = vunpack.c.l.b16 %v1315
      %v1388 = vunpack.c.l.b16 %v1317
      %v1389 = vunpack.c.l.b16 %v1318
      %v1390 = vunpack.c.l.b16 %v1320
      %v1391 = vunpack.c.l.b16 %v1321
      %v1392 = vunpack.c.l.b16 %v1323
      %v1393 = vunpack.c.l.b16 %v1324
      %v1394 = vunpack.c.l.b16 %v1326
      %v1395 = vunpack.c.l.b16 %v1327
      %v1396 = vpack.c.b16 %v1365, %v1364
      %v1397 = vpack.c.b16 %v1367, %v1366
      %v1398 = vpack.c.b16 %v1369, %v1368
      %v1399 = vpack.c.b16 %v1371, %v1370
      %v1400 = vpack.c.b16 %v1373, %v1372
      %v1401 = vpack.c.b16 %v1375, %v1374
      %v1402 = vpack.c.b16 %v1377, %v1376
      %v1403 = vpack.c.b16 %v1379, %v1378
      %v1404 = vpack.c.b16 %v1381, %v1380
      %v1405 = vpack.c.b16 %v1383, %v1382
      %v1406 = vpack.c.b16 %v1385, %v1384
      %v1407 = vpack.c.b16 %v1387, %v1386
      %v1408 = vpack.c.b16 %v1389, %v1388
      %v1409 = vpack.c.b16 %v1391, %v1390
      %v1410 = vpack.c.b16 %v1393, %v1392
      %v1411 = vpack.c.b16 %v1395, %v1394
      %v1414 = vunpack.c.l.b16 %v1330
      %v1415 = vunpack.c.l.b16 %v1331
      %v1416 = vpack.c.b16 %v1415, %v1414
      %v1418 = vsel %vm344, %v1396, 0
      %v1421 = vsel %vm344, %v1397, 0
      %v1424 = vsel %vm344, %v1398, 0
      %v1427 = vsel %vm344, %v1399, 0
      %v1430 = vsel %vm344, %v1400, 0
      %v1433 = vsel %vm344, %v1401, 0
      %v1436 = vsel %vm344, %v1402, 0
      %v1439 = vsel %vm344, %v1403, 0
      %v1442 = vsel %vm344, %v1404, 0
      %v1445 = vsel %vm344, %v1405, 0
      %v1448 = vsel %vm344, %v1406, 0
      %v1451 = vsel %vm344, %v1407, 0
      %v1454 = vsel %vm344, %v1408, 0
      %v1457 = vsel %vm344, %v1409, 0
      %v1460 = vsel %vm344, %v1410, 0
      %v1463 = vsel %vm344, %v1411, 0
      %v1466 = vsel %vm393, %v1416, 0
      %1468 = vmatprep.subr.bf16.mxu0 0
      %1469 = vmatpush1.bf16.msra.mxu0 %v1466
      %1470 = vmatprep.subr.bf16.mxu0 0
      %1471 = vmatpush1.bf16.msra.mxu0 0
      %1472 = vmatprep.subr.bf16.mxu0 0
      %1473 = vmatpush1.bf16.msra.mxu0 0
      %1474 = vmatprep.subr.bf16.mxu0 0
      %1475 = vmatpush1.bf16.msra.mxu0 0
      %1476 = vmatprep.subr.bf16.mxu0 0
      %1477 = vmatpush1.bf16.msra.mxu0 0
      %1478 = vmatprep.subr.bf16.mxu0 0
      %1479 = vmatpush1.bf16.msra.mxu0 0
      %1480 = vmatprep.subr.bf16.mxu0 0
      %1481 = vmatpush1.bf16.msra.mxu0 0
      %1482 = vmatprep.subr.bf16.mxu0 0
      %1483 = vmatpush1.bf16.msra.mxu0 0
      %1484 = vmatprep.subr.bf16.mxu0 0
      %1485 = vmatpush1.bf16.msra.mxu0 0
      %1486 = vmatprep.subr.bf16.mxu0 0
      %1487 = vmatpush1.bf16.msra.mxu0 0
      %1488 = vmatprep.subr.bf16.mxu0 0
      %1489 = vmatpush1.bf16.msra.mxu0 0
      %1490 = vmatprep.subr.bf16.mxu0 0
      %1491 = vmatpush1.bf16.msra.mxu0 0
      %1492 = vmatprep.subr.bf16.mxu0 0
      %1493 = vmatpush1.bf16.msra.mxu0 0
      %1494 = vmatprep.subr.bf16.mxu0 0
      %1495 = vmatpush1.bf16.msra.mxu0 0
      %1496 = vmatprep.subr.bf16.mxu0 0
      %1497 = vmatpush1.bf16.msra.mxu0 0
      %1498 = vmatprep.subr.bf16.mxu0 0
      %1499 = vmatpush1.bf16.msra.mxu0 0
      %1500 = vmatprep.mubr.bf16.mxu0 0
      %1501 = vmatmul.mubr.bf16.gmra.mrb[0].mxu0 %v1418
      %v1502 = vpop.f32.mrb[0].mxu0
      %v1503 = vadd.f32 0.0, %v1502
      %v1504 = vpop.f32.mrb[0].mxu0
      %v1505 = vpop.f32.mrb[0].mxu0
      %v1506 = vadd.f32 0.0, %v1505
      %v1507 = vpop.f32.mrb[0].mxu0
      %1508 = vmatprep.mubr.bf16.mxu0 0
      %1509 = vmatmul.mubr.bf16.gmra.mrb[0].mxu0 %v1421
      %v1510 = vpop.f32.mrb[0].mxu0
      %v1511 = vadd.f32 0.0, %v1510
      %v1512 = vpop.f32.mrb[0].mxu0
      %v1513 = vpop.f32.mrb[0].mxu0
      %v1514 = vadd.f32 0.0, %v1513
      %v1515 = vpop.f32.mrb[0].mxu0
      %1516 = vmatprep.mubr.bf16.mxu0 0
      %1517 = vmatmul.mubr.bf16.gmra.mrb[0].mxu0 %v1424
      %v1518 = vpop.f32.mrb[0].mxu0
      %v1519 = vadd.f32 0.0, %v1518
      %v1520 = vpop.f32.mrb[0].mxu0
      %v1521 = vpop.f32.mrb[0].mxu0
      %v1522 = vadd.f32 0.0, %v1521
      %v1523 = vpop.f32.mrb[0].mxu0
      %1524 = vmatprep.mubr.bf16.mxu0 0
      %1525 = vmatmul.mubr.bf16.gmra.mrb[0].mxu0 %v1427
      %v1526 = vpop.f32.mrb[0].mxu0
      %v1527 = vadd.f32 0.0, %v1526
      %v1528 = vpop.f32.mrb[0].mxu0
      %v1529 = vpop.f32.mrb[0].mxu0
      %v1530 = vadd.f32 0.0, %v1529
      %v1531 = vpop.f32.mrb[0].mxu0
      %1532 = vmatprep.mubr.bf16.mxu0 0
      %1533 = vmatmul.mubr.bf16.gmra.mrb[0].mxu0 %v1430
      %v1534 = vpop.f32.mrb[0].mxu0
      %v1535 = vadd.f32 0.0, %v1534
      %v1536 = vpop.f32.mrb[0].mxu0
      %v1537 = vpop.f32.mrb[0].mxu0
      %v1538 = vadd.f32 0.0, %v1537
      %v1539 = vpop.f32.mrb[0].mxu0
      %1540 = vmatprep.mubr.bf16.mxu0 0
      %1541 = vmatmul.mubr.bf16.gmra.mrb[0].mxu0 %v1433
      %v1542 = vpop.f32.mrb[0].mxu0
      %v1543 = vadd.f32 0.0, %v1542
      %v1544 = vpop.f32.mrb[0].mxu0
      %v1545 = vpop.f32.mrb[0].mxu0
      %v1546 = vadd.f32 0.0, %v1545
      %v1547 = vpop.f32.mrb[0].mxu0
      %1548 = vmatprep.mubr.bf16.mxu0 0
      %1549 = vmatmul.mubr.bf16.gmra.mrb[0].mxu0 %v1436
      %v1550 = vpop.f32.mrb[0].mxu0
      %v1551 = vadd.f32 0.0, %v1550
      %v1552 = vpop.f32.mrb[0].mxu0
      %v1553 = vpop.f32.mrb[0].mxu0
      %v1554 = vadd.f32 0.0, %v1553
      %v1555 = vpop.f32.mrb[0].mxu0
      %1556 = vmatprep.mubr.bf16.mxu0 0
      %1557 = vmatmul.mubr.bf16.gmra.mrb[0].mxu0 %v1439
      %v1558 = vpop.f32.mrb[0].mxu0
      %v1559 = vadd.f32 0.0, %v1558
      %v1560 = vpop.f32.mrb[0].mxu0
      %v1561 = vpop.f32.mrb[0].mxu0
      %v1562 = vadd.f32 0.0, %v1561
      %v1563 = vpop.f32.mrb[0].mxu0
      %1564 = vmatprep.mubr.bf16.mxu0 0
      %1565 = vmatmul.mubr.bf16.gmra.mrb[0].mxu0 %v1442
      %v1566 = vpop.f32.mrb[0].mxu0
      %v1567 = vadd.f32 0.0, %v1566
      %v1568 = vpop.f32.mrb[0].mxu0
      %v1569 = vpop.f32.mrb[0].mxu0
      %v1570 = vadd.f32 0.0, %v1569
      %v1571 = vpop.f32.mrb[0].mxu0
      %1572 = vmatprep.mubr.bf16.mxu0 0
      %1573 = vmatmul.mubr.bf16.gmra.mrb[0].mxu0 %v1445
      %v1574 = vpop.f32.mrb[0].mxu0
      %v1575 = vadd.f32 0.0, %v1574
      %v1576 = vpop.f32.mrb[0].mxu0
      %v1577 = vpop.f32.mrb[0].mxu0
      %v1578 = vadd.f32 0.0, %v1577
      %v1579 = vpop.f32.mrb[0].mxu0
      %1580 = vmatprep.mubr.bf16.mxu0 0
      %1581 = vmatmul.mubr.bf16.gmra.mrb[0].mxu0 %v1448
      %v1582 = vpop.f32.mrb[0].mxu0
      %v1583 = vadd.f32 0.0, %v1582
      %v1584 = vpop.f32.mrb[0].mxu0
      %v1585 = vpop.f32.mrb[0].mxu0
      %v1586 = vadd.f32 0.0, %v1585
      %v1587 = vpop.f32.mrb[0].mxu0
      %1588 = vmatprep.mubr.bf16.mxu0 0
      %1589 = vmatmul.mubr.bf16.gmra.mrb[0].mxu0 %v1451
      %v1590 = vpop.f32.mrb[0].mxu0
      %v1591 = vadd.f32 0.0, %v1590
      %v1592 = vpop.f32.mrb[0].mxu0
      %v1593 = vpop.f32.mrb[0].mxu0
      %v1594 = vadd.f32 0.0, %v1593
      %v1595 = vpop.f32.mrb[0].mxu0
      %1596 = vmatprep.mubr.bf16.mxu0 0
      %1597 = vmatmul.mubr.bf16.gmra.mrb[0].mxu0 %v1454
      %v1598 = vpop.f32.mrb[0].mxu0
      %v1599 = vadd.f32 0.0, %v1598
      %v1600 = vpop.f32.mrb[0].mxu0
      %v1601 = vpop.f32.mrb[0].mxu0
      %v1602 = vadd.f32 0.0, %v1601
      %v1603 = vpop.f32.mrb[0].mxu0
      %1604 = vmatprep.mubr.bf16.mxu0 0
      %1605 = vmatmul.mubr.bf16.gmra.mrb[0].mxu0 %v1457
      %v1606 = vpop.f32.mrb[0].mxu0
      %v1607 = vadd.f32 0.0, %v1606
      %v1608 = vpop.f32.mrb[0].mxu0
      %v1609 = vpop.f32.mrb[0].mxu0
      %v1610 = vadd.f32 0.0, %v1609
      %v1611 = vpop.f32.mrb[0].mxu0
      %1612 = vmatprep.mubr.bf16.mxu0 0
      %1613 = vmatmul.mubr.bf16.gmra.mrb[0].mxu0 %v1460
      %v1614 = vpop.f32.mrb[0].mxu0
      %v1615 = vadd.f32 0.0, %v1614
      %v1616 = vpop.f32.mrb[0].mxu0
      %v1617 = vpop.f32.mrb[0].mxu0
      %v1618 = vadd.f32 0.0, %v1617
      %v1619 = vpop.f32.mrb[0].mxu0
      %1620 = vmatprep.mubr.bf16.mxu0 0
      %1621 = vmatmul.mubr.bf16.gmra.mrb[0].mxu0 %v1463
      %v1622 = vpop.f32.mrb[0].mxu0
      %v1623 = vadd.f32 0.0, %v1622
      %v1624 = vpop.f32.mrb[0].mxu0
      %v1625 = vpop.f32.mrb[0].mxu0
      %v1626 = vadd.f32 0.0, %v1625
      %v1627 = vpop.f32.mrb[0].mxu0
      %1628 = vdwg.mxu0
      %v1629 = vadd.f32 %v1245, %v1503
      %v1630 = vadd.f32 %v1246, %v1506
      %v1631 = vadd.f32 %v1247, %v1511
      %v1632 = vadd.f32 %v1248, %v1514
      %v1633 = vadd.f32 %v1249, %v1519
      %v1634 = vadd.f32 %v1250, %v1522
      %v1635 = vadd.f32 %v1251, %v1527
      %v1636 = vadd.f32 %v1252, %v1530
      %v1637 = vadd.f32 %v1253, %v1535
      %v1638 = vadd.f32 %v1254, %v1538
      %v1639 = vadd.f32 %v1255, %v1543
      %v1640 = vadd.f32 %v1256, %v1546
      %v1641 = vadd.f32 %v1257, %v1551
      %v1642 = vadd.f32 %v1258, %v1554
      %v1643 = vadd.f32 %v1259, %v1559
      %v1644 = vadd.f32 %v1260, %v1562
      %v1645 = vadd.f32 %v1261, %v1567
      %v1646 = vadd.f32 %v1262, %v1570
      %v1647 = vadd.f32 %v1263, %v1575
      %v1648 = vadd.f32 %v1264, %v1578
      %v1649 = vadd.f32 %v1265, %v1583
      %v1650 = vadd.f32 %v1266, %v1586
      %v1651 = vadd.f32 %v1267, %v1591
      %v1652 = vadd.f32 %v1268, %v1594
      %v1653 = vadd.f32 %v1269, %v1599
      %v1654 = vadd.f32 %v1270, %v1602
      %v1655 = vadd.f32 %v1271, %v1607
      %v1656 = vadd.f32 %v1272, %v1610
      %v1657 = vadd.f32 %v1273, %v1615
      %v1658 = vadd.f32 %v1274, %v1618
      %v1659 = vadd.f32 %v1275, %v1623
      %v1660 = vadd.f32 %v1276, %v1626
      %v1662 = vshrl.u32 %v1281, 16
      %v1664 = vrot.slane %v1662, 4
      %v1665 = vshll.u32 %v1281, 16
      %v1667 = vrot.slane %v1665, 5
      %v1668 = vor.u32 %v1664, %v1667
      %v1669 = vrot.slane %v1668, 4
      %v1671 = vshll.u32 %v1282, 16
      %v1673 = vrot.slane %v1671, 5
      %v1674 = vsel %vm592, %v1669, %v1673
      %v1675 = vshrl.u32 %v1282, 16
      %v1677 = vrot.slane %v1675, 4
      %v1678 = vor.u32 %v1677, %v1673
      %v1679 = vrot.slane %v1678, 4
      %v1681 = vshll.u32 %v1283, 16
      %v1683 = vrot.slane %v1681, 5
      %v1684 = vsel %vm592, %v1679, %v1683
      %v1686 = vshrl.u32 %v1284, 16
      %v1688 = vrot.slane %v1686, 4
      %v1689 = vshll.u32 %v1284, 16
      %v1691 = vrot.slane %v1689, 5
      %v1692 = vor.u32 %v1688, %v1691
      %v1693 = vrot.slane %v1692, 4
      %v1695 = vshll.u32 %v1285, 16
      %v1697 = vrot.slane %v1695, 5
      %v1698 = vsel %vm592, %v1693, %v1697
      %v1699 = vshrl.u32 %v1285, 16
      %v1701 = vrot.slane %v1699, 4
      %v1702 = vor.u32 %v1701, %v1697
      %v1703 = vrot.slane %v1702, 4
      %v1705 = vshll.u32 %v1286, 16
      %v1707 = vrot.slane %v1705, 5
      %v1708 = vsel %vm592, %v1703, %v1707
      %v1710 = vshrl.u32 %v1287, 16
      %v1712 = vrot.slane %v1710, 4
      %v1713 = vshll.u32 %v1287, 16
      %v1715 = vrot.slane %v1713, 5
      %v1716 = vor.u32 %v1712, %v1715
      %v1717 = vrot.slane %v1716, 4
      %v1719 = vshll.u32 %v1288, 16
      %v1721 = vrot.slane %v1719, 5
      %v1722 = vsel %vm592, %v1717, %v1721
      %v1723 = vshrl.u32 %v1288, 16
      %v1725 = vrot.slane %v1723, 4
      %v1726 = vor.u32 %v1725, %v1721
      %v1727 = vrot.slane %v1726, 4
      %v1729 = vshll.u32 %v1289, 16
      %v1731 = vrot.slane %v1729, 5
      %v1732 = vsel %vm592, %v1727, %v1731
      %v1734 = vshrl.u32 %v1290, 16
      %v1736 = vrot.slane %v1734, 4
      %v1737 = vshll.u32 %v1290, 16
      %v1739 = vrot.slane %v1737, 5
      %v1740 = vor.u32 %v1736, %v1739
      %v1741 = vrot.slane %v1740, 4
      %v1743 = vshll.u32 %v1291, 16
      %v1745 = vrot.slane %v1743, 5
      %v1746 = vsel %vm592, %v1741, %v1745
      %v1747 = vshrl.u32 %v1291, 16
      %v1749 = vrot.slane %v1747, 4
      %v1750 = vor.u32 %v1749, %v1745
      %v1751 = vrot.slane %v1750, 4
      %v1753 = vshll.u32 %v1292, 16
      %v1755 = vrot.slane %v1753, 5
      %v1756 = vsel %vm592, %v1751, %v1755
      %v1758 = vshrl.u32 %v1293, 16
      %v1760 = vrot.slane %v1758, 4
      %v1761 = vshll.u32 %v1293, 16
      %v1763 = vrot.slane %v1761, 5
      %v1764 = vor.u32 %v1760, %v1763
      %v1765 = vrot.slane %v1764, 4
      %v1767 = vshll.u32 %v1294, 16
      %v1769 = vrot.slane %v1767, 5
      %v1770 = vsel %vm592, %v1765, %v1769
      %v1771 = vshrl.u32 %v1294, 16
      %v1773 = vrot.slane %v1771, 4
      %v1774 = vor.u32 %v1773, %v1769
      %v1775 = vrot.slane %v1774, 4
      %v1777 = vshll.u32 %v1295, 16
      %v1779 = vrot.slane %v1777, 5
      %v1780 = vsel %vm592, %v1775, %v1779
      %v1782 = vshrl.u32 %v1296, 16
      %v1784 = vrot.slane %v1782, 4
      %v1785 = vshll.u32 %v1296, 16
      %v1787 = vrot.slane %v1785, 5
      %v1788 = vor.u32 %v1784, %v1787
      %v1789 = vrot.slane %v1788, 4
      %v1791 = vshll.u32 %v1297, 16
      %v1793 = vrot.slane %v1791, 5
      %v1794 = vsel %vm592, %v1789, %v1793
      %v1795 = vshrl.u32 %v1297, 16
      %v1797 = vrot.slane %v1795, 4
      %v1798 = vor.u32 %v1797, %v1793
      %v1799 = vrot.slane %v1798, 4
      %v1801 = vshll.u32 %v1298, 16
      %v1803 = vrot.slane %v1801, 5
      %v1804 = vsel %vm592, %v1799, %v1803
      %v1806 = vshrl.u32 %v1299, 16
      %v1808 = vrot.slane %v1806, 4
      %v1809 = vshll.u32 %v1299, 16
      %v1811 = vrot.slane %v1809, 5
      %v1812 = vor.u32 %v1808, %v1811
      %v1813 = vrot.slane %v1812, 4
      %v1815 = vshll.u32 %v1300, 16
      %v1817 = vrot.slane %v1815, 5
      %v1818 = vsel %vm592, %v1813, %v1817
      %v1819 = vshrl.u32 %v1300, 16
      %v1821 = vrot.slane %v1819, 4
      %v1822 = vor.u32 %v1821, %v1817
      %v1823 = vrot.slane %v1822, 4
      %v1825 = vshll.u32 %v1301, 16
      %v1827 = vrot.slane %v1825, 5
      %v1828 = vsel %vm592, %v1823, %v1827
      %v1830 = vshrl.u32 %v1302, 16
      %v1832 = vrot.slane %v1830, 4
      %v1833 = vshll.u32 %v1302, 16
      %v1835 = vrot.slane %v1833, 5
      %v1836 = vor.u32 %v1832, %v1835
      %v1837 = vrot.slane %v1836, 4
      %v1839 = vshll.u32 %v1303, 16
      %v1841 = vrot.slane %v1839, 5
      %v1842 = vsel %vm592, %v1837, %v1841
      %v1843 = vshrl.u32 %v1303, 16
      %v1845 = vrot.slane %v1843, 4
      %v1846 = vor.u32 %v1845, %v1841
      %v1847 = vrot.slane %v1846, 4
      %v1849 = vshll.u32 %v1304, 16
      %v1851 = vrot.slane %v1849, 5
      %v1852 = vsel %vm592, %v1847, %v1851
      %v1854 = vshrl.u32 %v1305, 16
      %v1856 = vrot.slane %v1854, 4
      %v1857 = vshll.u32 %v1305, 16
      %v1859 = vrot.slane %v1857, 5
      %v1860 = vor.u32 %v1856, %v1859
      %v1861 = vrot.slane %v1860, 4
      %v1863 = vshll.u32 %v1306, 16
      %v1865 = vrot.slane %v1863, 5
      %v1866 = vsel %vm592, %v1861, %v1865
      %v1867 = vshrl.u32 %v1306, 16
      %v1869 = vrot.slane %v1867, 4
      %v1870 = vor.u32 %v1869, %v1865
      %v1871 = vrot.slane %v1870, 4
      %v1873 = vshll.u32 %v1307, 16
      %v1875 = vrot.slane %v1873, 5
      %v1876 = vsel %vm592, %v1871, %v1875
      %v1878 = vshrl.u32 %v1308, 16
      %v1880 = vrot.slane %v1878, 4
      %v1881 = vshll.u32 %v1308, 16
      %v1883 = vrot.slane %v1881, 5
      %v1884 = vor.u32 %v1880, %v1883
      %v1885 = vrot.slane %v1884, 4
      %v1887 = vshll.u32 %v1309, 16
      %v1889 = vrot.slane %v1887, 5
      %v1890 = vsel %vm592, %v1885, %v1889
      %v1891 = vshrl.u32 %v1309, 16
      %v1893 = vrot.slane %v1891, 4
      %v1894 = vor.u32 %v1893, %v1889
      %v1895 = vrot.slane %v1894, 4
      %v1897 = vshll.u32 %v1310, 16
      %v1899 = vrot.slane %v1897, 5
      %v1900 = vsel %vm592, %v1895, %v1899
      %v1902 = vshrl.u32 %v1311, 16
      %v1904 = vrot.slane %v1902, 4
      %v1905 = vshll.u32 %v1311, 16
      %v1907 = vrot.slane %v1905, 5
      %v1908 = vor.u32 %v1904, %v1907
      %v1909 = vrot.slane %v1908, 4
      %v1911 = vshll.u32 %v1312, 16
      %v1913 = vrot.slane %v1911, 5
      %v1914 = vsel %vm592, %v1909, %v1913
      %v1915 = vshrl.u32 %v1312, 16
      %v1917 = vrot.slane %v1915, 4
      %v1918 = vor.u32 %v1917, %v1913
      %v1919 = vrot.slane %v1918, 4
      %v1921 = vshll.u32 %v1313, 16
      %v1923 = vrot.slane %v1921, 5
      %v1924 = vsel %vm592, %v1919, %v1923
      %v1926 = vshrl.u32 %v1314, 16
      %v1928 = vrot.slane %v1926, 4
      %v1929 = vshll.u32 %v1314, 16
      %v1931 = vrot.slane %v1929, 5
      %v1932 = vor.u32 %v1928, %v1931
      %v1933 = vrot.slane %v1932, 4
      %v1935 = vshll.u32 %v1315, 16
      %v1937 = vrot.slane %v1935, 5
      %v1938 = vsel %vm592, %v1933, %v1937
      %v1939 = vshrl.u32 %v1315, 16
      %v1941 = vrot.slane %v1939, 4
      %v1942 = vor.u32 %v1941, %v1937
      %v1943 = vrot.slane %v1942, 4
      %v1945 = vshll.u32 %v1316, 16
      %v1947 = vrot.slane %v1945, 5
      %v1948 = vsel %vm592, %v1943, %v1947
      %v1950 = vshrl.u32 %v1317, 16
      %v1952 = vrot.slane %v1950, 4
      %v1953 = vshll.u32 %v1317, 16
      %v1955 = vrot.slane %v1953, 5
      %v1956 = vor.u32 %v1952, %v1955
      %v1957 = vrot.slane %v1956, 4
      %v1959 = vshll.u32 %v1318, 16
      %v1961 = vrot.slane %v1959, 5
      %v1962 = vsel %vm592, %v1957, %v1961
      %v1963 = vshrl.u32 %v1318, 16
      %v1965 = vrot.slane %v1963, 4
      %v1966 = vor.u32 %v1965, %v1961
      %v1967 = vrot.slane %v1966, 4
      %v1969 = vshll.u32 %v1319, 16
      %v1971 = vrot.slane %v1969, 5
      %v1972 = vsel %vm592, %v1967, %v1971
      %v1974 = vshrl.u32 %v1320, 16
      %v1976 = vrot.slane %v1974, 4
      %v1977 = vshll.u32 %v1320, 16
      %v1979 = vrot.slane %v1977, 5
      %v1980 = vor.u32 %v1976, %v1979
      %v1981 = vrot.slane %v1980, 4
      %v1983 = vshll.u32 %v1321, 16
      %v1985 = vrot.slane %v1983, 5
      %v1986 = vsel %vm592, %v1981, %v1985
      %v1987 = vshrl.u32 %v1321, 16
      %v1989 = vrot.slane %v1987, 4
      %v1990 = vor.u32 %v1989, %v1985
      %v1991 = vrot.slane %v1990, 4
      %v1993 = vshll.u32 %v1322, 16
      %v1995 = vrot.slane %v1993, 5
      %v1996 = vsel %vm592, %v1991, %v1995
      %v1998 = vshrl.u32 %v1323, 16
      %v2000 = vrot.slane %v1998, 4
      %v2001 = vshll.u32 %v1323, 16
      %v2003 = vrot.slane %v2001, 5
      %v2004 = vor.u32 %v2000, %v2003
      %v2005 = vrot.slane %v2004, 4
      %v2007 = vshll.u32 %v1324, 16
      %v2009 = vrot.slane %v2007, 5
      %v2010 = vsel %vm592, %v2005, %v2009
      %v2011 = vshrl.u32 %v1324, 16
      %v2013 = vrot.slane %v2011, 4
      %v2014 = vor.u32 %v2013, %v2009
      %v2015 = vrot.slane %v2014, 4
      %v2017 = vshll.u32 %v1325, 16
      %v2019 = vrot.slane %v2017, 5
      %v2020 = vsel %vm592, %v2015, %v2019
      %v2022 = vshrl.u32 %v1326, 16
      %v2024 = vrot.slane %v2022, 4
      %v2025 = vshll.u32 %v1326, 16
      %v2027 = vrot.slane %v2025, 5
      %v2028 = vor.u32 %v2024, %v2027
      %v2029 = vrot.slane %v2028, 4
      %v2031 = vshll.u32 %v1327, 16
      %v2033 = vrot.slane %v2031, 5
      %v2034 = vsel %vm592, %v2029, %v2033
      %v2035 = vshrl.u32 %v1327, 16
      %v2037 = vrot.slane %v2035, 4
      %v2038 = vor.u32 %v2037, %v2033
      %v2039 = vrot.slane %v2038, 4
      %v2041 = vshll.u32 %v1328, 16
      %v2043 = vrot.slane %v2041, 5
      %v2044 = vsel %vm592, %v2039, %v2043
      %s2045 = scalar_lea.vmem %s1, 24
      %v2046 = vld [vmem:[%s2045] sm:$0xf]
      %v2047 = vld [vmem:[%s2045 + $0x4] sm:$0x3]
      %v2048 = vunpack.c.l.b16 %v1674
      %v2049 = vunpack.c.l.b16 %v1684
      %v2050 = vunpack.c.l.b16 %v1698
      %v2051 = vunpack.c.l.b16 %v1708
      %v2052 = vunpack.c.l.b16 %v1722
      %v2053 = vunpack.c.l.b16 %v1732
      %v2054 = vunpack.c.l.b16 %v1746
      %v2055 = vunpack.c.l.b16 %v1756
      %v2056 = vunpack.c.l.b16 %v1770
      %v2057 = vunpack.c.l.b16 %v1780
      %v2058 = vunpack.c.l.b16 %v1794
      %v2059 = vunpack.c.l.b16 %v1804
      %v2060 = vunpack.c.l.b16 %v1818
      %v2061 = vunpack.c.l.b16 %v1828
      %v2062 = vunpack.c.l.b16 %v1842
      %v2063 = vunpack.c.l.b16 %v1852
      %v2064 = vunpack.c.l.b16 %v1866
      %v2065 = vunpack.c.l.b16 %v1876
      %v2066 = vunpack.c.l.b16 %v1890
      %v2067 = vunpack.c.l.b16 %v1900
      %v2068 = vunpack.c.l.b16 %v1914
      %v2069 = vunpack.c.l.b16 %v1924
      %v2070 = vunpack.c.l.b16 %v1938
      %v2071 = vunpack.c.l.b16 %v1948
      %v2072 = vunpack.c.l.b16 %v1962
      %v2073 = vunpack.c.l.b16 %v1972
      %v2074 = vunpack.c.l.b16 %v1986
      %v2075 = vunpack.c.l.b16 %v1996
      %v2076 = vunpack.c.l.b16 %v2010
      %v2077 = vunpack.c.l.b16 %v2020
      %v2078 = vunpack.c.l.b16 %v2034
      %v2079 = vunpack.c.l.b16 %v2044
      %v2080 = vpack.c.b16 %v2049, %v2048
      %v2081 = vpack.c.b16 %v2051, %v2050
      %v2082 = vpack.c.b16 %v2053, %v2052
      %v2083 = vpack.c.b16 %v2055, %v2054
      %v2084 = vpack.c.b16 %v2057, %v2056
      %v2085 = vpack.c.b16 %v2059, %v2058
      %v2086 = vpack.c.b16 %v2061, %v2060
      %v2087 = vpack.c.b16 %v2063, %v2062
      %v2088 = vpack.c.b16 %v2065, %v2064
      %v2089 = vpack.c.b16 %v2067, %v2066
      %v2090 = vpack.c.b16 %v2069, %v2068
      %v2091 = vpack.c.b16 %v2071, %v2070
      %v2092 = vpack.c.b16 %v2073, %v2072
      %v2093 = vpack.c.b16 %v2075, %v2074
      %v2094 = vpack.c.b16 %v2077, %v2076
      %v2095 = vpack.c.b16 %v2079, %v2078
      %v2098 = vunpack.c.l.b16 %v2046
      %v2099 = vunpack.c.l.b16 %v2047
      %v2100 = vpack.c.b16 %v2099, %v2098
      %v2102 = vsel %vm344, %v2080, 0
      %v2105 = vsel %vm344, %v2081, 0
      %v2108 = vsel %vm344, %v2082, 0
      %v2111 = vsel %vm344, %v2083, 0
      %v2114 = vsel %vm344, %v2084, 0
      %v2117 = vsel %vm344, %v2085, 0
      %v2120 = vsel %vm344, %v2086, 0
      %v2123 = vsel %vm344, %v2087, 0
      %v2126 = vsel %vm344, %v2088, 0
      %v2129 = vsel %vm344, %v2089, 0
      %v2132 = vsel %vm344, %v2090, 0
      %v2135 = vsel %vm344, %v2091, 0
      %v2138 = vsel %vm344, %v2092, 0
      %v2141 = vsel %vm344, %v2093, 0
      %v2144 = vsel %vm344, %v2094, 0
      %v2147 = vsel %vm344, %v2095, 0
      %v2150 = vsel %vm393, %v2100, 0
      %2152 = vmatprep.subr.bf16.mxu0 0
      %2153 = vmatpush1.bf16.msra.mxu0 %v2150
      %2154 = vmatprep.subr.bf16.mxu0 0
      %2155 = vmatpush1.bf16.msra.mxu0 0
      %2156 = vmatprep.subr.bf16.mxu0 0
      %2157 = vmatpush1.bf16.msra.mxu0 0
      %2158 = vmatprep.subr.bf16.mxu0 0
      %2159 = vmatpush1.bf16.msra.mxu0 0
      %2160 = vmatprep.subr.bf16.mxu0 0
      %2161 = vmatpush1.bf16.msra.mxu0 0
      %2162 = vmatprep.subr.bf16.mxu0 0
      %2163 = vmatpush1.bf16.msra.mxu0 0
      %2164 = vmatprep.subr.bf16.mxu0 0
      %2165 = vmatpush1.bf16.msra.mxu0 0
      %2166 = vmatprep.subr.bf16.mxu0 0
      %2167 = vmatpush1.bf16.msra.mxu0 0
      %2168 = vmatprep.subr.bf16.mxu0 0
      %2169 = vmatpush1.bf16.msra.mxu0 0
      %2170 = vmatprep.subr.bf16.mxu0 0
      %2171 = vmatpush1.bf16.msra.mxu0 0
      %2172 = vmatprep.subr.bf16.mxu0 0
      %2173 = vmatpush1.bf16.msra.mxu0 0
      %2174 = vmatprep.subr.bf16.mxu0 0
      %2175 = vmatpush1.bf16.msra.mxu0 0
      %2176 = vmatprep.subr.bf16.mxu0 0
      %2177 = vmatpush1.bf16.msra.mxu0 0
      %2178 = vmatprep.subr.bf16.mxu0 0
      %2179 = vmatpush1.bf16.msra.mxu0 0
      %2180 = vmatprep.subr.bf16.mxu0 0
      %2181 = vmatpush1.bf16.msra.mxu0 0
      %2182 = vmatprep.subr.bf16.mxu0 0
      %2183 = vmatpush1.bf16.msra.mxu0 0
      %2184 = vmatprep.mubr.bf16.mxu0 0
      %2185 = vmatmul.mubr.bf16.gmra.mrb[0].mxu0 %v2102
      %v2186 = vpop.f32.mrb[0].mxu0
      %v2187 = vadd.f32 0.0, %v2186
      %v2188 = vpop.f32.mrb[0].mxu0
      %v2189 = vpop.f32.mrb[0].mxu0
      %v2190 = vadd.f32 0.0, %v2189
      %v2191 = vpop.f32.mrb[0].mxu0
      %2192 = vmatprep.mubr.bf16.mxu0 0
      %2193 = vmatmul.mubr.bf16.gmra.mrb[0].mxu0 %v2105
      %v2194 = vpop.f32.mrb[0].mxu0
      %v2195 = vadd.f32 0.0, %v2194
      %v2196 = vpop.f32.mrb[0].mxu0
      %v2197 = vpop.f32.mrb[0].mxu0
      %v2198 = vadd.f32 0.0, %v2197
      %v2199 = vpop.f32.mrb[0].mxu0
      %2200 = vmatprep.mubr.bf16.mxu0 0
      %2201 = vmatmul.mubr.bf16.gmra.mrb[0].mxu0 %v2108
      %v2202 = vpop.f32.mrb[0].mxu0
      %v2203 = vadd.f32 0.0, %v2202
      %v2204 = vpop.f32.mrb[0].mxu0
      %v2205 = vpop.f32.mrb[0].mxu0
      %v2206 = vadd.f32 0.0, %v2205
      %v2207 = vpop.f32.mrb[0].mxu0
      %2208 = vmatprep.mubr.bf16.mxu0 0
      %2209 = vmatmul.mubr.bf16.gmra.mrb[0].mxu0 %v2111
      %v2210 = vpop.f32.mrb[0].mxu0
      %v2211 = vadd.f32 0.0, %v2210
      %v2212 = vpop.f32.mrb[0].mxu0
      %v2213 = vpop.f32.mrb[0].mxu0
      %v2214 = vadd.f32 0.0, %v2213
      %v2215 = vpop.f32.mrb[0].mxu0
      %2216 = vmatprep.mubr.bf16.mxu0 0
      %2217 = vmatmul.mubr.bf16.gmra.mrb[0].mxu0 %v2114
      %v2218 = vpop.f32.mrb[0].mxu0
      %v2219 = vadd.f32 0.0, %v2218
      %v2220 = vpop.f32.mrb[0].mxu0
      %v2221 = vpop.f32.mrb[0].mxu0
      %v2222 = vadd.f32 0.0, %v2221
      %v2223 = vpop.f32.mrb[0].mxu0
      %2224 = vmatprep.mubr.bf16.mxu0 0
      %2225 = vmatmul.mubr.bf16.gmra.mrb[0].mxu0 %v2117
      %v2226 = vpop.f32.mrb[0].mxu0
      %v2227 = vadd.f32 0.0, %v2226
      %v2228 = vpop.f32.mrb[0].mxu0
      %v2229 = vpop.f32.mrb[0].mxu0
      %v2230 = vadd.f32 0.0, %v2229
      %v2231 = vpop.f32.mrb[0].mxu0
      %2232 = vmatprep.mubr.bf16.mxu0 0
      %2233 = vmatmul.mubr.bf16.gmra.mrb[0].mxu0 %v2120
      %v2234 = vpop.f32.mrb[0].mxu0
      %v2235 = vadd.f32 0.0, %v2234
      %v2236 = vpop.f32.mrb[0].mxu0
      %v2237 = vpop.f32.mrb[0].mxu0
      %v2238 = vadd.f32 0.0, %v2237
      %v2239 = vpop.f32.mrb[0].mxu0
      %2240 = vmatprep.mubr.bf16.mxu0 0
      %2241 = vmatmul.mubr.bf16.gmra.mrb[0].mxu0 %v2123
      %v2242 = vpop.f32.mrb[0].mxu0
      %v2243 = vadd.f32 0.0, %v2242
      %v2244 = vpop.f32.mrb[0].mxu0
      %v2245 = vpop.f32.mrb[0].mxu0
      %v2246 = vadd.f32 0.0, %v2245
      %v2247 = vpop.f32.mrb[0].mxu0
      %2248 = vmatprep.mubr.bf16.mxu0 0
      %2249 = vmatmul.mubr.bf16.gmra.mrb[0].mxu0 %v2126
      %v2250 = vpop.f32.mrb[0].mxu0
      %v2251 = vadd.f32 0.0, %v2250
      %v2252 = vpop.f32.mrb[0].mxu0
      %v2253 = vpop.f32.mrb[0].mxu0
      %v2254 = vadd.f32 0.0, %v2253
      %v2255 = vpop.f32.mrb[0].mxu0
      %2256 = vmatprep.mubr.bf16.mxu0 0
      %2257 = vmatmul.mubr.bf16.gmra.mrb[0].mxu0 %v2129
      %v2258 = vpop.f32.mrb[0].mxu0
      %v2259 = vadd.f32 0.0, %v2258
      %v2260 = vpop.f32.mrb[0].mxu0
      %v2261 = vpop.f32.mrb[0].mxu0
      %v2262 = vadd.f32 0.0, %v2261
      %v2263 = vpop.f32.mrb[0].mxu0
      %2264 = vmatprep.mubr.bf16.mxu0 0
      %2265 = vmatmul.mubr.bf16.gmra.mrb[0].mxu0 %v2132
      %v2266 = vpop.f32.mrb[0].mxu0
      %v2267 = vadd.f32 0.0, %v2266
      %v2268 = vpop.f32.mrb[0].mxu0
      %v2269 = vpop.f32.mrb[0].mxu0
      %v2270 = vadd.f32 0.0, %v2269
      %v2271 = vpop.f32.mrb[0].mxu0
      %2272 = vmatprep.mubr.bf16.mxu0 0
      %2273 = vmatmul.mubr.bf16.gmra.mrb[0].mxu0 %v2135
      %v2274 = vpop.f32.mrb[0].mxu0
      %v2275 = vadd.f32 0.0, %v2274
      %v2276 = vpop.f32.mrb[0].mxu0
      %v2277 = vpop.f32.mrb[0].mxu0
      %v2278 = vadd.f32 0.0, %v2277
      %v2279 = vpop.f32.mrb[0].mxu0
      %2280 = vmatprep.mubr.bf16.mxu0 0
      %2281 = vmatmul.mubr.bf16.gmra.mrb[0].mxu0 %v2138
      %v2282 = vpop.f32.mrb[0].mxu0
      %v2283 = vadd.f32 0.0, %v2282
      %v2284 = vpop.f32.mrb[0].mxu0
      %v2285 = vpop.f32.mrb[0].mxu0
      %v2286 = vadd.f32 0.0, %v2285
      %v2287 = vpop.f32.mrb[0].mxu0
      %2288 = vmatprep.mubr.bf16.mxu0 0
      %2289 = vmatmul.mubr.bf16.gmra.mrb[0].mxu0 %v2141
      %v2290 = vpop.f32.mrb[0].mxu0
      %v2291 = vadd.f32 0.0, %v2290
      %v2292 = vpop.f32.mrb[0].mxu0
      %v2293 = vpop.f32.mrb[0].mxu0
      %v2294 = vadd.f32 0.0, %v2293
      %v2295 = vpop.f32.mrb[0].mxu0
      %2296 = vmatprep.mubr.bf16.mxu0 0
      %2297 = vmatmul.mubr.bf16.gmra.mrb[0].mxu0 %v2144
      %v2298 = vpop.f32.mrb[0].mxu0
      %v2299 = vadd.f32 0.0, %v2298
      %v2300 = vpop.f32.mrb[0].mxu0
      %v2301 = vpop.f32.mrb[0].mxu0
      %v2302 = vadd.f32 0.0, %v2301
      %v2303 = vpop.f32.mrb[0].mxu0
      %2304 = vmatprep.mubr.bf16.mxu0 0
      %2305 = vmatmul.mubr.bf16.gmra.mrb[0].mxu0 %v2147
      %v2306 = vpop.f32.mrb[0].mxu0
      %v2307 = vadd.f32 0.0, %v2306
      %v2308 = vpop.f32.mrb[0].mxu0
      %v2309 = vpop.f32.mrb[0].mxu0
      %v2310 = vadd.f32 0.0, %v2309
      %v2311 = vpop.f32.mrb[0].mxu0
      %2312 = vdwg.mxu0
      %v2313 = vadd.f32 %v1629, %v2187
      %v2314 = vadd.f32 %v1630, %v2190
      %v2315 = vadd.f32 %v1631, %v2195
      %v2316 = vadd.f32 %v1632, %v2198
      %v2317 = vadd.f32 %v1633, %v2203
      %v2318 = vadd.f32 %v1634, %v2206
      %v2319 = vadd.f32 %v1635, %v2211
      %v2320 = vadd.f32 %v1636, %v2214
      %v2321 = vadd.f32 %v1637, %v2219
      %v2322 = vadd.f32 %v1638, %v2222
      %v2323 = vadd.f32 %v1639, %v2227
      %v2324 = vadd.f32 %v1640, %v2230
      %v2325 = vadd.f32 %v1641, %v2235
      %v2326 = vadd.f32 %v1642, %v2238
      %v2327 = vadd.f32 %v1643, %v2243
      %v2328 = vadd.f32 %v1644, %v2246
      %v2329 = vadd.f32 %v1645, %v2251
      %v2330 = vadd.f32 %v1646, %v2254
      %v2331 = vadd.f32 %v1647, %v2259
      %v2332 = vadd.f32 %v1648, %v2262
      %v2333 = vadd.f32 %v1649, %v2267
      %v2334 = vadd.f32 %v1650, %v2270
      %v2335 = vadd.f32 %v1651, %v2275
      %v2336 = vadd.f32 %v1652, %v2278
      %v2337 = vadd.f32 %v1653, %v2283
      %v2338 = vadd.f32 %v1654, %v2286
      %v2339 = vadd.f32 %v1655, %v2291
      %v2340 = vadd.f32 %v1656, %v2294
      %v2341 = vadd.f32 %v1657, %v2299
      %v2342 = vadd.f32 %v1658, %v2302
      %v2343 = vadd.f32 %v1659, %v2307
      %v2344 = vadd.f32 %v1660, %v2310
      %vm2345 = vcmp.gt.f32.partialorder %v2313, 0.0
      %vm2346 = vcmp.gt.f32.partialorder %v2314, 0.0
      %vm2347 = vcmp.gt.f32.partialorder %v2315, 0.0
      %vm2348 = vcmp.gt.f32.partialorder %v2316, 0.0
      %vm2349 = vcmp.gt.f32.partialorder %v2317, 0.0
      %vm2350 = vcmp.gt.f32.partialorder %v2318, 0.0
      %vm2351 = vcmp.gt.f32.partialorder %v2319, 0.0
      %vm2352 = vcmp.gt.f32.partialorder %v2320, 0.0
      %vm2353 = vcmp.gt.f32.partialorder %v2321, 0.0
      %vm2354 = vcmp.gt.f32.partialorder %v2322, 0.0
      %vm2355 = vcmp.gt.f32.partialorder %v2323, 0.0
      %vm2356 = vcmp.gt.f32.partialorder %v2324, 0.0
      %vm2357 = vcmp.gt.f32.partialorder %v2325, 0.0
      %vm2358 = vcmp.gt.f32.partialorder %v2326, 0.0
      %vm2359 = vcmp.gt.f32.partialorder %v2327, 0.0
      %vm2360 = vcmp.gt.f32.partialorder %v2328, 0.0
      %vm2361 = vcmp.gt.f32.partialorder %v2329, 0.0
      %vm2362 = vcmp.gt.f32.partialorder %v2330, 0.0
      %vm2363 = vcmp.gt.f32.partialorder %v2331, 0.0
      %vm2364 = vcmp.gt.f32.partialorder %v2332, 0.0
      %vm2365 = vcmp.gt.f32.partialorder %v2333, 0.0
      %vm2366 = vcmp.gt.f32.partialorder %v2334, 0.0
      %vm2367 = vcmp.gt.f32.partialorder %v2335, 0.0
      %vm2368 = vcmp.gt.f32.partialorder %v2336, 0.0
      %vm2369 = vcmp.gt.f32.partialorder %v2337, 0.0
      %vm2370 = vcmp.gt.f32.partialorder %v2338, 0.0
      %vm2371 = vcmp.gt.f32.partialorder %v2339, 0.0
      %vm2372 = vcmp.gt.f32.partialorder %v2340, 0.0
      %vm2373 = vcmp.gt.f32.partialorder %v2341, 0.0
      %vm2374 = vcmp.gt.f32.partialorder %v2342, 0.0
      %vm2375 = vcmp.gt.f32.partialorder %v2343, 0.0
      %vm2376 = vcmp.gt.f32.partialorder %v2344, 0.0
      %v2377 = vmul.f32 %v2313, 0.2
      %v2378 = vmul.f32 %v2314, 0.2
      %v2379 = vmul.f32 %v2315, 0.2
      %v2380 = vmul.f32 %v2316, 0.2
      %v2381 = vmul.f32 %v2317, 0.2
      %v2382 = vmul.f32 %v2318, 0.2
      %v2383 = vmul.f32 %v2319, 0.2
      %v2384 = vmul.f32 %v2320, 0.2
      %v2385 = vmul.f32 %v2321, 0.2
      %v2386 = vmul.f32 %v2322, 0.2
      %v2387 = vmul.f32 %v2323, 0.2
      %v2388 = vmul.f32 %v2324, 0.2
      %v2389 = vmul.f32 %v2325, 0.2
      %v2390 = vmul.f32 %v2326, 0.2
      %v2391 = vmul.f32 %v2327, 0.2
      %v2392 = vmul.f32 %v2328, 0.2
      %v2393 = vmul.f32 %v2329, 0.2
      %v2394 = vmul.f32 %v2330, 0.2
      %v2395 = vmul.f32 %v2331, 0.2
      %v2396 = vmul.f32 %v2332, 0.2
      %v2397 = vmul.f32 %v2333, 0.2
      %v2398 = vmul.f32 %v2334, 0.2
      %v2399 = vmul.f32 %v2335, 0.2
      %v2400 = vmul.f32 %v2336, 0.2
      %v2401 = vmul.f32 %v2337, 0.2
      %v2402 = vmul.f32 %v2338, 0.2
      %v2403 = vmul.f32 %v2339, 0.2
      %v2404 = vmul.f32 %v2340, 0.2
      %v2405 = vmul.f32 %v2341, 0.2
      %v2406 = vmul.f32 %v2342, 0.2
      %v2407 = vmul.f32 %v2343, 0.2
      %v2408 = vmul.f32 %v2344, 0.2
      %v2409 = vsel %vm2345, %v2313, %v2377
      %v2410 = vsel %vm2346, %v2314, %v2378
      %v2411 = vsel %vm2347, %v2315, %v2379
      %v2412 = vsel %vm2348, %v2316, %v2380
      %v2413 = vsel %vm2349, %v2317, %v2381
      %v2414 = vsel %vm2350, %v2318, %v2382
      %v2415 = vsel %vm2351, %v2319, %v2383
      %v2416 = vsel %vm2352, %v2320, %v2384
      %v2417 = vsel %vm2353, %v2321, %v2385
      %v2418 = vsel %vm2354, %v2322, %v2386
      %v2419 = vsel %vm2355, %v2323, %v2387
      %v2420 = vsel %vm2356, %v2324, %v2388
      %v2421 = vsel %vm2357, %v2325, %v2389
      %v2422 = vsel %vm2358, %v2326, %v2390
      %v2423 = vsel %vm2359, %v2327, %v2391
      %v2424 = vsel %vm2360, %v2328, %v2392
      %v2425 = vsel %vm2361, %v2329, %v2393
      %v2426 = vsel %vm2362, %v2330, %v2394
      %v2427 = vsel %vm2363, %v2331, %v2395
      %v2428 = vsel %vm2364, %v2332, %v2396
      %v2429 = vsel %vm2365, %v2333, %v2397
      %v2430 = vsel %vm2366, %v2334, %v2398
      %v2431 = vsel %vm2367, %v2335, %v2399
      %v2432 = vsel %vm2368, %v2336, %v2400
      %v2433 = vsel %vm2369, %v2337, %v2401
      %v2434 = vsel %vm2370, %v2338, %v2402
      %v2435 = vsel %vm2371, %v2339, %v2403
      %v2436 = vsel %vm2372, %v2340, %v2404
      %v2437 = vsel %vm2373, %v2341, %v2405
      %v2438 = vsel %vm2374, %v2342, %v2406
      %v2439 = vsel %vm2375, %v2343, %v2407
      %v2440 = vsel %vm2376, %v2344, %v2408
      %v2441 = vpack.c.bf16 %v2410, %v2409
      %v2442 = vpack.c.bf16 %v2412, %v2411
      %v2443 = vpack.c.bf16 %v2414, %v2413
      %v2444 = vpack.c.bf16 %v2416, %v2415
      %v2445 = vpack.c.bf16 %v2418, %v2417
      %v2446 = vpack.c.bf16 %v2420, %v2419
      %v2447 = vpack.c.bf16 %v2422, %v2421
      %v2448 = vpack.c.bf16 %v2424, %v2423
      %v2449 = vpack.c.bf16 %v2426, %v2425
      %v2450 = vpack.c.bf16 %v2428, %v2427
      %v2451 = vpack.c.bf16 %v2430, %v2429
      %v2452 = vpack.c.bf16 %v2432, %v2431
      %v2453 = vpack.c.bf16 %v2434, %v2433
      %v2454 = vpack.c.bf16 %v2436, %v2435
      %v2455 = vpack.c.bf16 %v2438, %v2437
      %v2456 = vpack.c.bf16 %v2440, %v2439
      %v2473 = vunpack.c.l.b16 %v2441
      %v2474 = vunpack.c.h.b16 %v2441
      %v2475 = vunpack.c.l.b16 %v2442
      %v2476 = vunpack.c.h.b16 %v2442
      %v2477 = vunpack.c.l.b16 %v2443
      %v2478 = vunpack.c.h.b16 %v2443
      %v2479 = vunpack.c.l.b16 %v2444
      %v2480 = vunpack.c.h.b16 %v2444
      %v2481 = vunpack.c.l.b16 %v2445
      %v2482 = vunpack.c.h.b16 %v2445
      %v2483 = vunpack.c.l.b16 %v2446
      %v2484 = vunpack.c.h.b16 %v2446
      %v2485 = vunpack.c.l.b16 %v2447
      %v2486 = vunpack.c.h.b16 %v2447
      %v2487 = vunpack.c.l.b16 %v2448
      %v2488 = vunpack.c.h.b16 %v2448
      %v2489 = vunpack.c.l.b16 %v2449
      %v2490 = vunpack.c.h.b16 %v2449
      %v2491 = vunpack.c.l.b16 %v2450
      %v2492 = vunpack.c.h.b16 %v2450
      %v2493 = vunpack.c.l.b16 %v2451
      %v2494 = vunpack.c.h.b16 %v2451
      %v2495 = vunpack.c.l.b16 %v2452
      %v2496 = vunpack.c.h.b16 %v2452
      %v2497 = vunpack.c.l.b16 %v2453
      %v2498 = vunpack.c.h.b16 %v2453
      %v2499 = vunpack.c.l.b16 %v2454
      %v2500 = vunpack.c.h.b16 %v2454
      %v2501 = vunpack.c.l.b16 %v2455
      %v2502 = vunpack.c.h.b16 %v2455
      %v2503 = vunpack.c.l.b16 %v2456
      %v2504 = vunpack.c.h.b16 %v2456
      %v2505 = vpack.c.b16 %v2473, %v2473
      %v2506 = vpack.c.b16 %v2474, %v2474
      %v2507 = vpack.c.b16 %v2475, %v2475
      %v2508 = vpack.c.b16 %v2476, %v2476
      %v2509 = vpack.c.b16 %v2477, %v2477
      %v2510 = vpack.c.b16 %v2478, %v2478
      %v2511 = vpack.c.b16 %v2479, %v2479
      %v2512 = vpack.c.b16 %v2480, %v2480
      %v2513 = vpack.c.b16 %v2481, %v2481
      %v2514 = vpack.c.b16 %v2482, %v2482
      %v2515 = vpack.c.b16 %v2483, %v2483
      %v2516 = vpack.c.b16 %v2484, %v2484
      %v2517 = vpack.c.b16 %v2485, %v2485
      %v2518 = vpack.c.b16 %v2486, %v2486
      %v2519 = vpack.c.b16 %v2487, %v2487
      %v2520 = vpack.c.b16 %v2488, %v2488
      %v2521 = vpack.c.b16 %v2489, %v2489
      %v2522 = vpack.c.b16 %v2490, %v2490
      %v2523 = vpack.c.b16 %v2491, %v2491
      %v2524 = vpack.c.b16 %v2492, %v2492
      %v2525 = vpack.c.b16 %v2493, %v2493
      %v2526 = vpack.c.b16 %v2494, %v2494
      %v2527 = vpack.c.b16 %v2495, %v2495
      %v2528 = vpack.c.b16 %v2496, %v2496
      %v2529 = vpack.c.b16 %v2497, %v2497
      %v2530 = vpack.c.b16 %v2498, %v2498
      %v2531 = vpack.c.b16 %v2499, %v2499
      %v2532 = vpack.c.b16 %v2500, %v2500
      %v2533 = vpack.c.b16 %v2501, %v2501
      %v2534 = vpack.c.b16 %v2502, %v2502
      %v2535 = vpack.c.b16 %v2503, %v2503
      %v2536 = vpack.c.b16 %v2504, %v2504
      %vm2569 = vcmask 60416
      %2570 = vst.msk [vmem:[%s194] sm:$0xf] %vm2569, %v2505
      %2571 = vst.msk [vmem:[%s194 + $0x4] sm:$0xf] %vm2569, %v2506
      %2572 = vst.msk [vmem:[%s194 + $0x8] sm:$0xf] %vm2569, %v2507
      %2573 = vst.msk [vmem:[%s194 + $0xc] sm:$0xf] %vm2569, %v2508
      %2574 = vst.msk [vmem:[%s194 + $0x10] sm:$0xf] %vm2569, %v2509
      %2575 = vst.msk [vmem:[%s194 + $0x14] sm:$0xf] %vm2569, %v2510
      %2576 = vst.msk [vmem:[%s194 + $0x18] sm:$0xf] %vm2569, %v2511
      %2577 = vst.msk [vmem:[%s194 + $0x1c] sm:$0xf] %vm2569, %v2512
      %2578 = vst.msk [vmem:[%s194 + $0x20] sm:$0xf] %vm2569, %v2513
      %2579 = vst.msk [vmem:[%s194 + $0x24] sm:$0xf] %vm2569, %v2514
      %2580 = vst.msk [vmem:[%s194 + $0x28] sm:$0xf] %vm2569, %v2515
      %2581 = vst.msk [vmem:[%s194 + $0x2c] sm:$0xf] %vm2569, %v2516
      %2582 = vst.msk [vmem:[%s194 + $0x30] sm:$0xf] %vm2569, %v2517
      %2583 = vst.msk [vmem:[%s194 + $0x34] sm:$0xf] %vm2569, %v2518
      %2584 = vst.msk [vmem:[%s194 + $0x38] sm:$0xf] %vm2569, %v2519
      %2585 = vst.msk [vmem:[%s194 + $0x3c] sm:$0xf] %vm2569, %v2520
      %2586 = vst.msk [vmem:[%s194 + $0x40] sm:$0xf] %vm2569, %v2521
      %2587 = vst.msk [vmem:[%s194 + $0x44] sm:$0xf] %vm2569, %v2522
      %2588 = vst.msk [vmem:[%s194 + $0x48] sm:$0xf] %vm2569, %v2523
      %2589 = vst.msk [vmem:[%s194 + $0x4c] sm:$0xf] %vm2569, %v2524
      %2590 = vst.msk [vmem:[%s194 + $0x50] sm:$0xf] %vm2569, %v2525
      %2591 = vst.msk [vmem:[%s194 + $0x54] sm:$0xf] %vm2569, %v2526
      %2592 = vst.msk [vmem:[%s194 + $0x58] sm:$0xf] %vm2569, %v2527
      %2593 = vst.msk [vmem:[%s194 + $0x5c] sm:$0xf] %vm2569, %v2528
      %2594 = vst.msk [vmem:[%s194 + $0x60] sm:$0xf] %vm2569, %v2529
      %2595 = vst.msk [vmem:[%s194 + $0x64] sm:$0xf] %vm2569, %v2530
      %2596 = vst.msk [vmem:[%s194 + $0x68] sm:$0xf] %vm2569, %v2531
      %2597 = vst.msk [vmem:[%s194 + $0x6c] sm:$0xf] %vm2569, %v2532
      %2598 = vst.msk [vmem:[%s194 + $0x70] sm:$0xf] %vm2569, %v2533
      %2599 = vst.msk [vmem:[%s194 + $0x74] sm:$0xf] %vm2569, %v2534
      %2600 = vst.msk [vmem:[%s194 + $0x78] sm:$0xf] %vm2569, %v2535
      %2601 = vst.msk [vmem:[%s194 + $0x7c] sm:$0xf] %vm2569, %v2536
      %s2602 = smul.u32 16, %s19
      %p2603 = scmp.lt.s32.totalorder %s18, 1
      %s2604 = scalar_select %p2603, %s18, 1
      %p2605 = scmp.lt.s32.totalorder %s2602, 15
      %s2606 = scalar_select %p2605, %s2602, 15
      %s2607 = smul.addr %s2606, 2
      %s2608 = smul.addr %s2604, 32
      %s2609 = sadd.s32 %s2607, %s2608
      %s2610 = smul.addr %s2609, 4
      %s2611 = scalar_lea.vmem %s3, %s2610
      // Predicated region
      $region33: #{discriminator_forward.6} parent=31 // pred_check
        %p2612 = pneg %p114
      $region34: #{discriminator_forward.6} parent=31 // pred_check_branch
        %2614 = sbr.rel (%p2612) target = $region36
      $region35: #{discriminator_forward.6} parent=31 // pred_region
        %s2615 = smul.u32 16, %s19
      $region36: #{discriminator_forward.6} parent=31 // pred_fallthru
        _
    $region32: #{discriminator_forward.6} parent=5 // pred_fallthru
      _
    %p2616 = scmp.le.s32.totalorder 2, %s9
    // Predicated region
    $region37: #{discriminator_forward.6} parent=5 // pred_check
      %p2617 = pneg %p2616
    $region38: #{discriminator_forward.6} parent=5 // pred_check_branch
      %2619 = sbr.rel (%p2617) target = $region40
    $region39: #{discriminator_forward.6} parent=5 // pred_region
      %s2620 = ssub.s32 %s9, 2
      // Predicated region
      $region41: #{discriminator_forward.6} parent=39 // pred_check
        %p2621 = pneg %p120
      $region42: #{discriminator_forward.6} parent=39 // pred_check_branch
        %2623 = sbr.rel (%p2621) target = $region44
      $region43: #{discriminator_forward.6} parent=39 // pred_region
        %s2624 = smul.u32 16, %s21
        %p2625 = scmp.lt.s32.totalorder %s20, 1
        %s2626 = scalar_select %p2625, %s20, 1
        %p2627 = scmp.lt.s32.totalorder %s2624, 15
        %s2628 = scalar_select %p2627, %s2624, 15
        %s2629 = smul.addr %s2628, 2
        %s2630 = smul.addr %s2626, 32
        %s2631 = sadd.s32 %s2629, %s2630
        %s2632 = smul.addr %s2631, 4
        %s2633 = scalar_lea.vmem %s3, %s2632
      $region44: #{discriminator_forward.6} parent=39 // pred_fallthru
        _
    $region40: #{discriminator_forward.6} parent=5 // pred_fallthru
      _
  $region6: #{discriminator_forward.6} parent=0 // loop_footer
    %s13 = sadd.s32 1, %s9
  $region7: #{discriminator_forward.6} parent=0 // loop_footer_branch
    %8 = sbr.rel target = $region3
  $region8: #{discriminator_forward.6} parent=0 // loop_exit
    _

// kernel: discriminator_forward.7
$region0: #{discriminator_forward.7}
  #allocation0 [shape = 'u32[]', space=smem, size = 0x4, offset = 0x4, fixed_abs, tag = 'smem constant byte address 0x4 - core index']
  #allocation1 [shape = 'u32[144,128]{1,0:T(1,128)}', space=vmem, size = 0x12000, scoped, tag = 'internal scratch']
  %s0 = inlined_call_operand.vmem [shape: bf16[2,9,9,32], index: 0, kind: input, shape index: {}]
  %s1 = inlined_call_operand.vmem [shape: bf16[4,32,16], index: 1, kind: input, shape index: {}]
  %s2 = inlined_call_operand.vmem [shape: f32[1,16], index: 2, kind: input, shape index: {}]
  %s3 = inlined_call_operand.vmem [shape: bf16[2,8,8,16], index: 3, kind: output, shape index: {}]
  %s4 = sld [smem:[#allocation0]]
  $region45: #{discriminator_forward.7} parent=0
    _
  %s6 = ssub.s32 1, %s4
  %s7 = scalar_select 0, %s6, %s4
  loop: start=0, step=1, limit=4
  $region2: #{discriminator_forward.7} parent=0 // loop_pre_header
    _
  $region3: #{discriminator_forward.7} parent=0 // loop_header
    %s9 = sphi 0, %s13
    %p10 = scmp.ge.s32.totalorder %s9, 4
    %s16 = sphi 0, %s28
    %s17 = sphi 0, %s24
    %s18 = sphi 0, %s16
    %s19 = sphi 0, %s17
    %s20 = sphi 0, %s18
    %s21 = sphi 0, %s19
    %s31 = sphi 0, %s33
    %s34 = sphi 0, %s31
    %s35 = sphi 0, %s34
    %s51 = sphi 0, %s35
    %s55 = sphi 0, %s55
    %s57 = sphi 0, %s55
    %s58 = sphi 0, %s57
    %s72 = sphi 0, %s58
    %s76 = sphi 0, %s76
    %s78 = sphi 0, %s76
    %s79 = sphi 0, %s78
    %s93 = sphi 0, %s79
    %s101 = sphi 0, %s103
    %s104 = sphi 0, %s101
    %s105 = sphi 0, %s104
    %s121 = sphi 0, %s105
  $region4: #{discriminator_forward.7} parent=0 // loop_header_branch
    %12 = sbr.rel (%p10) target = $region8
  $region5: #{discriminator_forward.7} parent=0 // loop_body
    %s14 = ssub.s32 %s9, 1
    %s15 = ssub.s32 %s9, 2
    %s22 = sadd.s32 1, %s17
    %p23 = scmp.ge.s32.totalorder %s22, 1
    %s24 = scalar_select %p23, 0, %s22
    %s25 = sadd.s32 1, %s16
    %s26 = scalar_select %p23, %s25, %s16
    %p27 = scmp.ge.s32.totalorder %s26, 2
    %s28 = scalar_select %p27, 0, %s26
    %s29 = ssub.s32 %s16, %s28
    %p30 = scmp.eq.s32.totalorder %s29, 0
    %s32 = sadd.s32 %s31, 1
    %s33 = scalar_select %p30, %s31, %s32
    %p36 = pneg %p30
    %p37 = scmp.eq.s32.totalorder %s9, 1
    %p38 = por %p36, %p37
    %p39 = scmp.ne.s32.totalorder %s31, %s34
    %p40 = scmp.eq.s32.totalorder %s9, 0
    %p41 = por %p39, %p40
    %p42 = scmp.ne.s32.totalorder %s31, %s34
    %p43 = scmp.eq.s32.totalorder %s14, 1
    %p44 = por %p42, %p43
    %p45 = scmp.ne.s32.totalorder %s34, %s35
    %p46 = scmp.eq.s32.totalorder %s14, 0
    %p47 = por %p45, %p46
    %p48 = scmp.ne.s32.totalorder %s34, %s35
    %p49 = scmp.eq.s32.totalorder %s15, 1
    %p50 = por %p48, %p49
    %p52 = scmp.ne.s32.totalorder %s35, %s51
    %p53 = scmp.eq.s32.totalorder %s15, 0
    %p54 = por %p52, %p53
    %s56 = sadd.s32 %s55, 1
    %p59 = scmp.eq.s32.totalorder %s9, 1
    %p60 = scmp.ne.s32.totalorder %s55, %s57
    %p61 = scmp.eq.s32.totalorder %s9, 0
    %p62 = por %p60, %p61
    %p63 = scmp.ne.s32.totalorder %s55, %s57
    %p64 = scmp.eq.s32.totalorder %s14, 1
    %p65 = por %p63, %p64
    %p66 = scmp.ne.s32.totalorder %s57, %s58
    %p67 = scmp.eq.s32.totalorder %s14, 0
    %p68 = por %p66, %p67
    %p69 = scmp.ne.s32.totalorder %s57, %s58
    %p70 = scmp.eq.s32.totalorder %s15, 1
    %p71 = por %p69, %p70
    %p73 = scmp.ne.s32.totalorder %s58, %s72
    %p74 = scmp.eq.s32.totalorder %s15, 0
    %p75 = por %p73, %p74
    %s77 = sadd.s32 %s76, 1
    %p80 = scmp.eq.s32.totalorder %s9, 1
    %p81 = scmp.ne.s32.totalorder %s76, %s78
    %p82 = scmp.eq.s32.totalorder %s9, 0
    %p83 = por %p81, %p82
    %p84 = scmp.ne.s32.totalorder %s76, %s78
    %p85 = scmp.eq.s32.totalorder %s14, 1
    %p86 = por %p84, %p85
    %p87 = scmp.ne.s32.totalorder %s78, %s79
    %p88 = scmp.eq.s32.totalorder %s14, 0
    %p89 = por %p87, %p88
    %p90 = scmp.ne.s32.totalorder %s78, %s79
    %p91 = scmp.eq.s32.totalorder %s15, 1
    %p92 = por %p90, %p91
    %p94 = scmp.ne.s32.totalorder %s79, %s93
    %p95 = scmp.eq.s32.totalorder %s15, 0
    %p96 = por %p94, %p95
    %s97 = ssub.s32 %s16, %s28
    %s98 = ssub.s32 %s17, %s24
    %s99 = sor.u32 %s97, %s98
    %p100 = scmp.eq.s32.totalorder %s99, 0
    %s102 = sadd.s32 %s101, 1
    %s103 = scalar_select %p100, %s101, %s102
    %p106 = pneg %p100
    %p107 = scmp.eq.s32.totalorder %s9, 1
    %p108 = por %p106, %p107
    %p109 = scmp.ne.s32.totalorder %s101, %s104
    %p110 = scmp.eq.s32.totalorder %s9, 0
    %p111 = por %p109, %p110
    %p112 = scmp.ne.s32.totalorder %s101, %s104
    %p113 = scmp.eq.s32.totalorder %s14, 1
    %p114 = por %p112, %p113
    %p115 = scmp.ne.s32.totalorder %s104, %s105
    %p116 = scmp.eq.s32.totalorder %s14, 0
    %p117 = por %p115, %p116
    %p118 = scmp.ne.s32.totalorder %s104, %s105
    %p119 = scmp.eq.s32.totalorder %s15, 1
    %p120 = por %p118, %p119
    %p122 = scmp.ne.s32.totalorder %s105, %s121
    %p123 = scmp.eq.s32.totalorder %s15, 0
    %p124 = por %p122, %p123
    %p125 = scmp.le.s32.totalorder 1, %s9
    %p126 = scmp.lt.s32.totalorder %s9, 3
    %p127 = pnand %p125, %p126
    %p128 = pneg %p127
    // Predicated region
    $region9: #{discriminator_forward.7} parent=5 // pred_check
      _
    $region10: #{discriminator_forward.7} parent=5 // pred_check_branch
      %130 = sbr.rel (%p127) target = $region12
    $region11: #{discriminator_forward.7} parent=5 // pred_region
      %s131 = ssub.s32 %s9, 1
      // Predicated region
      $region13: #{discriminator_forward.7} parent=11 // pred_check
        %p132 = pneg %p68
      $region14: #{discriminator_forward.7} parent=11 // pred_check_branch
        %134 = sbr.rel (%p132) target = $region16
      $region15: #{discriminator_forward.7} parent=11 // pred_region
        _
      $region16: #{discriminator_forward.7} parent=11 // pred_fallthru
        _
      // Predicated region
      $region17: #{discriminator_forward.7} parent=11 // pred_check
        %p135 = pneg %p89
      $region18: #{discriminator_forward.7} parent=11 // pred_check_branch
        %137 = sbr.rel (%p135) target = $region20
      $region19: #{discriminator_forward.7} parent=11 // pred_region
        _
      $region20: #{discriminator_forward.7} parent=11 // pred_fallthru
        _
    $region12: #{discriminator_forward.7} parent=5 // pred_fallthru
      _
    %p138 = scmp.lt.s32.totalorder %s9, 2
    // Predicated region
    $region21: #{discriminator_forward.7} parent=5 // pred_check
      %p139 = pneg %p138
    $region22: #{discriminator_forward.7} parent=5 // pred_check_branch
      %141 = sbr.rel (%p139) target = $region24
    $region23: #{discriminator_forward.7} parent=5 // pred_region
      // Predicated region
      $region25: #{discriminator_forward.7} parent=23 // pred_check
        %p142 = pneg %p41
      $region26: #{discriminator_forward.7} parent=23 // pred_check_branch
        %144 = sbr.rel (%p142) target = $region28
      $region27: #{discriminator_forward.7} parent=23 // pred_region
        %p145 = scmp.lt.s32.totalorder %s16, 1
        %s146 = scalar_select %p145, %s16, 1
        %s147 = smul.addr %s146, 18
        %s148 = smul.addr %s147, 4
        %s149 = scalar_lea.vmem %s0, %s148
      $region28: #{discriminator_forward.7} parent=23 // pred_fallthru
        _
    $region24: #{discriminator_forward.7} parent=5 // pred_fallthru
      _
    %p150 = scmp.le.s32.totalorder 1, %s9
    %p151 = scmp.lt.s32.totalorder %s9, 3
    %p152 = pnand %p150, %p151
    %p153 = pneg %p152
    // Predicated region
    $region29: #{discriminator_forward.7} parent=5 // pred_check
      _
    $region30: #{discriminator_forward.7} parent=5 // pred_check_branch
      %155 = sbr.rel (%p152) target = $region32
    $region31: #{discriminator_forward.7} parent=5 // pred_region
      %s156 = ssub.s32 %s9, 1
      %p157 = scmp.lt.s32.totalorder %s18, 1
      %s158 = scalar_select %p157, %s18, 1
      %s159 = smul.addr %s158, 18
      %s160 = smul.addr %s159, 4
      %s161 = scalar_lea.vmem %s0, %s160
      %p162 = pneg %p47
      %p163 = pneg %p44
      %p164 = pneg %p68
      %p165 = pneg %p65
      %p166 = pneg %p89
      %p167 = pneg %p86
      %p168 = pneg %p117
      %p169 = pneg %p114
      %s170 = smul.u32 8, %s19
      %p171 = scmp.lt.s32.totalorder %s18, 1
      %s172 = scalar_select %p171, %s18, 1
      %p173 = scmp.lt.s32.totalorder %s170, 7
      %s174 = scalar_select %p173, %s170, 7
      %s175 = smul.addr %s172, 8
      %s176 = sadd.s32 %s174, %s175
      %s177 = smul.addr %s176, 4
      %s178 = scalar_lea.vmem %s3, %s177
      %p179 = scmp.lt.s32.totalorder %s18, 1
      %s180 = scalar_select %p179, %s18, 1
      %s181 = smul.addr %s180, 18
      %s182 = smul.addr %s181, 4
      %s183 = scalar_lea.vmem %s0, %s182
      %s184 = smul.u32 8, %s19
      %p185 = scmp.lt.s32.totalorder %s18, 1
      %s186 = scalar_select %p185, %s18, 1
      %p187 = scmp.lt.s32.totalorder %s184, 7
      %s188 = scalar_select %p187, %s184, 7
      %s189 = smul.addr %s186, 8
      %s190 = sadd.s32 %s188, %s189
      %s191 = smul.addr %s190, 4
      %s192 = scalar_lea.vmem %s3, %s191
      %s193 = smul.u32 8, %s19
      %s195 = smul.u32 %s19, 8
      %v196 = vld [vmem:[%s2] sm:$0x1]
      %v198 = vlaneseq
      %v199 = vshrl.u32 %v198, 7
      %v200 = vsub.s32 0, %v199
      %v201 = vrot.slane %v196, %v200
      %v203 = vadd.f32 %v201, 0.0
      %s204 = smul.u32 %s195, 2
      %s205 = smul.addr %s204, 4
      %s206 = scalar_lea.vmem %s183, %s205
      %v207 = vld [vmem:[%s206] sm:$0xf]
      %v208 = vld [vmem:[%s206 + $0x4] sm:$0x1]
      %v209 = vld [vmem:[%s206 + $0x8] sm:$0xf]
      %v210 = vld [vmem:[%s206 + $0xc] sm:$0x1]
      %v211 = vld [vmem:[%s206 + $0x10] sm:$0xf]
      %v212 = vld [vmem:[%s206 + $0x14] sm:$0x1]
      %v213 = vld [vmem:[%s206 + $0x18] sm:$0xf]
      %v214 = vld [vmem:[%s206 + $0x1c] sm:$0x1]
      %v215 = vld [vmem:[%s206 + $0x20] sm:$0xf]
      %v216 = vld [vmem:[%s206 + $0x24] sm:$0x1]
      %v217 = vld [vmem:[%s206 + $0x28] sm:$0xf]
      %v218 = vld [vmem:[%s206 + $0x2c] sm:$0x1]
      %v219 = vld [vmem:[%s206 + $0x30] sm:$0xf]
      %v220 = vld [vmem:[%s206 + $0x34] sm:$0x1]
      %v221 = vld [vmem:[%s206 + $0x38] sm:$0xf]
      %v222 = vld [vmem:[%s206 + $0x3c] sm:$0x1]
      %v223 = vld [vmem:[%s1] sm:$0xf]
      %v224 = vld [vmem:[%s1 + $0x4] sm:$0xf]
      %v225 = vld [vmem:[%s1 + $0x8] sm:$0xf]
      %v226 = vld [vmem:[%s1 + $0xc] sm:$0xf]
      %v235 = vunpack.c.l.b16 %v207
      %v236 = vunpack.c.l.b16 %v209
      %v237 = vunpack.c.l.b16 %v211
      %v238 = vunpack.c.l.b16 %v213
      %v239 = vunpack.c.l.b16 %v215
      %v240 = vunpack.c.l.b16 %v217
      %v241 = vunpack.c.l.b16 %v219
      %v242 = vunpack.c.l.b16 %v221
      %v243 = vpack.c.b16 %v236, %v235
      %v244 = vpack.c.b16 %v238, %v237
      %v245 = vpack.c.b16 %v240, %v239
      %v246 = vpack.c.b16 %v242, %v241
      %v251 = vunpack.c.l.b16 %v223
      %v252 = vunpack.c.l.b16 %v224
      %v253 = vunpack.c.l.b16 %v225
      %v254 = vunpack.c.l.b16 %v226
      %v255 = vpack.c.b16 %v252, %v251
      %v256 = vpack.c.b16 %v254, %v253
      %vm259 = vcmask 261120
      %v261 = vsel %vm259, %v243, 0
      %v264 = vsel %vm259, %v244, 0
      %v267 = vsel %vm259, %v245, 0
      %v270 = vsel %vm259, %v246, 0
      %272 = vmatprep.subr.bf16.mxu0 0
      %273 = vmatpush1.bf16.msra.mxu0 %v255
      %274 = vmatprep.subr.bf16.mxu0 0
      %275 = vmatpush1.bf16.msra.mxu0 %v256
      %276 = vmatprep.subr.bf16.mxu0 0
      %277 = vmatpush1.bf16.msra.mxu0 0
      %278 = vmatprep.subr.bf16.mxu0 0
      %279 = vmatpush1.bf16.msra.mxu0 0
      %280 = vmatprep.subr.bf16.mxu0 0
      %281 = vmatpush1.bf16.msra.mxu0 0
      %282 = vmatprep.subr.bf16.mxu0 0
      %283 = vmatpush1.bf16.msra.mxu0 0
      %284 = vmatprep.subr.bf16.mxu0 0
      %285 = vmatpush1.bf16.msra.mxu0 0
      %286 = vmatprep.subr.bf16.mxu0 0
      %287 = vmatpush1.bf16.msra.mxu0 0
      %288 = vmatprep.subr.bf16.mxu0 0
      %289 = vmatpush1.bf16.msra.mxu0 0
      %290 = vmatprep.subr.bf16.mxu0 0
      %291 = vmatpush1.bf16.msra.mxu0 0
      %292 = vmatprep.subr.bf16.mxu0 0
      %293 = vmatpush1.bf16.msra.mxu0 0
      %294 = vmatprep.subr.bf16.mxu0 0
      %295 = vmatpush1.bf16.msra.mxu0 0
      %296 = vmatprep.subr.bf16.mxu0 0
      %297 = vmatpush1.bf16.msra.mxu0 0
      %298 = vmatprep.subr.bf16.mxu0 0
      %299 = vmatpush1.bf16.msra.mxu0 0
      %300 = vmatprep.subr.bf16.mxu0 0
      %301 = vmatpush1.bf16.msra.mxu0 0
      %302 = vmatprep.subr.bf16.mxu0 0
      %303 = vmatpush1.bf16.msra.mxu0 0
      %304 = vmatprep.mubr.bf16.mxu0 0
      %305 = vmatmul.mubr.bf16.gmra.mrb[0].mxu0 %v261
      %v306 = vpop.f32.mrb[0].mxu0
      %v307 = vadd.f32 0.0, %v306
      %v308 = vpop.f32.mrb[0].mxu0
      %v309 = vpop.f32.mrb[0].mxu0
      %v310 = vadd.f32 0.0, %v309
      %v311 = vpop.f32.mrb[0].mxu0
      %312 = vmatprep.mubr.bf16.mxu0 0
      %313 = vmatmul.mubr.bf16.gmra.mrb[0].mxu0 %v264
      %v314 = vpop.f32.mrb[0].mxu0
      %v315 = vadd.f32 0.0, %v314
      %v316 = vpop.f32.mrb[0].mxu0
      %v317 = vpop.f32.mrb[0].mxu0
      %v318 = vadd.f32 0.0, %v317
      %v319 = vpop.f32.mrb[0].mxu0
      %320 = vmatprep.mubr.bf16.mxu0 0
      %321 = vmatmul.mubr.bf16.gmra.mrb[0].mxu0 %v267
      %v322 = vpop.f32.mrb[0].mxu0
      %v323 = vadd.f32 0.0, %v322
      %v324 = vpop.f32.mrb[0].mxu0
      %v325 = vpop.f32.mrb[0].mxu0
      %v326 = vadd.f32 0.0, %v325
      %v327 = vpop.f32.mrb[0].mxu0
      %328 = vmatprep.mubr.bf16.mxu0 0
      %329 = vmatmul.mubr.bf16.gmra.mrb[0].mxu0 %v270
      %v330 = vpop.f32.mrb[0].mxu0
      %v331 = vadd.f32 0.0, %v330
      %v332 = vpop.f32.mrb[0].mxu0
      %v333 = vpop.f32.mrb[0].mxu0
      %v334 = vadd.f32 0.0, %v333
      %v335 = vpop.f32.mrb[0].mxu0
      %336 = vdwg.mxu0
      %v337 = vadd.f32 %v203, %v307
      %v338 = vadd.f32 %v203, %v310
      %v339 = vadd.f32 %v203, %v315
      %v340 = vadd.f32 %v203, %v318
      %v341 = vadd.f32 %v203, %v323
      %v342 = vadd.f32 %v203, %v326
      %v343 = vadd.f32 %v203, %v331
      %v344 = vadd.f32 %v203, %v334
      %vm345 = vsmask.f32 3328
      %vm346 = vsmask.f32 7440
      %vm347 = vmor %vm345, %vm346
      %v349 = vshrl.u32 %v207, 16
      %v351 = vrot.slane %v349, 4
      %v352 = vshll.u32 %v207, 16
      %v354 = vrot.slane %v352, 5
      %v355 = vor.u32 %v351, %v354
      %v356 = vrot.slane %v355, 4
      %v358 = vshll.u32 %v208, 16
      %v360 = vrot.slane %v358, 5
      %v361 = vsel %vm347, %v356, %v360
      %v363 = vshrl.u32 %v209, 16
      %v365 = vrot.slane %v363, 4
      %v366 = vshll.u32 %v209, 16
      %v368 = vrot.slane %v366, 5
      %v369 = vor.u32 %v365, %v368
      %v370 = vrot.slane %v369, 4
      %v372 = vshll.u32 %v210, 16
      %v374 = vrot.slane %v372, 5
      %v375 = vsel %vm347, %v370, %v374
      %v377 = vshrl.u32 %v211, 16
      %v379 = vrot.slane %v377, 4
      %v380 = vshll.u32 %v211, 16
      %v382 = vrot.slane %v380, 5
      %v383 = vor.u32 %v379, %v382
      %v384 = vrot.slane %v383, 4
      %v386 = vshll.u32 %v212, 16
      %v388 = vrot.slane %v386, 5
      %v389 = vsel %vm347, %v384, %v388
      %v391 = vshrl.u32 %v213, 16
      %v393 = vrot.slane %v391, 4
      %v394 = vshll.u32 %v213, 16
      %v396 = vrot.slane %v394, 5
      %v397 = vor.u32 %v393, %v396
      %v398 = vrot.slane %v397, 4
      %v400 = vshll.u32 %v214, 16
      %v402 = vrot.slane %v400, 5
      %v403 = vsel %vm347, %v398, %v402
      %v405 = vshrl.u32 %v215, 16
      %v407 = vrot.slane %v405, 4
      %v408 = vshll.u32 %v215, 16
      %v410 = vrot.slane %v408, 5
      %v411 = vor.u32 %v407, %v410
      %v412 = vrot.slane %v411, 4
      %v414 = vshll.u32 %v216, 16
      %v416 = vrot.slane %v414, 5
      %v417 = vsel %vm347, %v412, %v416
      %v419 = vshrl.u32 %v217, 16
      %v421 = vrot.slane %v419, 4
      %v422 = vshll.u32 %v217, 16
      %v424 = vrot.slane %v422, 5
      %v425 = vor.u32 %v421, %v424
      %v426 = vrot.slane %v425, 4
      %v428 = vshll.u32 %v218, 16
      %v430 = vrot.slane %v428, 5
      %v431 = vsel %vm347, %v426, %v430
      %v433 = vshrl.u32 %v219, 16
      %v435 = vrot.slane %v433, 4
      %v436 = vshll.u32 %v219, 16
      %v438 = vrot.slane %v436, 5
      %v439 = vor.u32 %v435, %v438
      %v440 = vrot.slane %v439, 4
      %v442 = vshll.u32 %v220, 16
      %v444 = vrot.slane %v442, 5
      %v445 = vsel %vm347, %v440, %v444
      %v447 = vshrl.u32 %v221, 16
      %v449 = vrot.slane %v447, 4
      %v450 = vshll.u32 %v221, 16
      %v452 = vrot.slane %v450, 5
      %v453 = vor.u32 %v449, %v452
      %v454 = vrot.slane %v453, 4
      %v456 = vshll.u32 %v222, 16
      %v458 = vrot.slane %v456, 5
      %v459 = vsel %vm347, %v454, %v458
      %s460 = scalar_lea.vmem %s1, 16
      %v461 = vld [vmem:[%s460] sm:$0xf]
      %v462 = vld [vmem:[%s460 + $0x4] sm:$0xf]
      %v463 = vld [vmem:[%s460 + $0x8] sm:$0xf]
      %v464 = vld [vmem:[%s460 + $0xc] sm:$0xf]
      %v465 = vunpack.c.l.b16 %v361
      %v466 = vunpack.c.l.b16 %v375
      %v467 = vunpack.c.l.b16 %v389
      %v468 = vunpack.c.l.b16 %v403
      %v469 = vunpack.c.l.b16 %v417
      %v470 = vunpack.c.l.b16 %v431
      %v471 = vunpack.c.l.b16 %v445
      %v472 = vunpack.c.l.b16 %v459
      %v473 = vpack.c.b16 %v466, %v465
      %v474 = vpack.c.b16 %v468, %v467
      %v475 = vpack.c.b16 %v470, %v469
      %v476 = vpack.c.b16 %v472, %v471
      %v481 = vunpack.c.l.b16 %v461
      %v482 = vunpack.c.l.b16 %v462
      %v483 = vunpack.c.l.b16 %v463
      %v484 = vunpack.c.l.b16 %v464
      %v485 = vpack.c.b16 %v482, %v481
      %v486 = vpack.c.b16 %v484, %v483
      %v490 = vsel %vm259, %v473, 0
      %v493 = vsel %vm259, %v474, 0
      %v496 = vsel %vm259, %v475, 0
      %v499 = vsel %vm259, %v476, 0
      %501 = vmatprep.subr.bf16.mxu0 0
      %502 = vmatpush1.bf16.msra.mxu0 %v485
      %503 = vmatprep.subr.bf16.mxu0 0
      %504 = vmatpush1.bf16.msra.mxu0 %v486
      %505 = vmatprep.subr.bf16.mxu0 0
      %506 = vmatpush1.bf16.msra.mxu0 0
      %507 = vmatprep.subr.bf16.mxu0 0
      %508 = vmatpush1.bf16.msra.mxu0 0
      %509 = vmatprep.subr.bf16.mxu0 0
      %510 = vmatpush1.bf16.msra.mxu0 0
      %511 = vmatprep.subr.bf16.mxu0 0
      %512 = vmatpush1.bf16.msra.mxu0 0
      %513 = vmatprep.subr.bf16.mxu0 0
      %514 = vmatpush1.bf16.msra.mxu0 0
      %515 = vmatprep.subr.bf16.mxu0 0
      %516 = vmatpush1.bf16.msra.mxu0 0
      %517 = vmatprep.subr.bf16.mxu0 0
      %518 = vmatpush1.bf16.msra.mxu0 0
      %519 = vmatprep.subr.bf16.mxu0 0
      %520 = vmatpush1.bf16.msra.mxu0 0
      %521 = vmatprep.subr.bf16.mxu0 0
      %522 = vmatpush1.bf16.msra.mxu0 0
      %523 = vmatprep.subr.bf16.mxu0 0
      %524 = vmatpush1.bf16.msra.mxu0 0
      %525 = vmatprep.subr.bf16.mxu0 0
      %526 = vmatpush1.bf16.msra.mxu0 0
      %527 = vmatprep.subr.bf16.mxu0 0
      %528 = vmatpush1.bf16.msra.mxu0 0
      %529 = vmatprep.subr.bf16.mxu0 0
      %530 = vmatpush1.bf16.msra.mxu0 0
      %531 = vmatprep.subr.bf16.mxu0 0
      %532 = vmatpush1.bf16.msra.mxu0 0
      %533 = vmatprep.mubr.bf16.mxu0 0
      %534 = vmatmul.mubr.bf16.gmra.mrb[0].mxu0 %v490
      %v535 = vpop.f32.mrb[0].mxu0
      %v536 = vadd.f32 0.0, %v535
      %v537 = vpop.f32.mrb[0].mxu0
      %v538 = vpop.f32.mrb[0].mxu0
      %v539 = vadd.f32 0.0, %v538
      %v540 = vpop.f32.mrb[0].mxu0
      %541 = vmatprep.mubr.bf16.mxu0 0
      %542 = vmatmul.mubr.bf16.gmra.mrb[0].mxu0 %v493
      %v543 = vpop.f32.mrb[0].mxu0
      %v544 = vadd.f32 0.0, %v543
      %v545 = vpop.f32.mrb[0].mxu0
      %v546 = vpop.f32.mrb[0].mxu0
      %v547 = vadd.f32 0.0, %v546
      %v548 = vpop.f32.mrb[0].mxu0
      %549 = vmatprep.mubr.bf16.mxu0 0
      %550 = vmatmul.mubr.bf16.gmra.mrb[0].mxu0 %v496
      %v551 = vpop.f32.mrb[0].mxu0
      %v552 = vadd.f32 0.0, %v551
      %v553 = vpop.f32.mrb[0].mxu0
      %v554 = vpop.f32.mrb[0].mxu0
      %v555 = vadd.f32 0.0, %v554
      %v556 = vpop.f32.mrb[0].mxu0
      %557 = vmatprep.mubr.bf16.mxu0 0
      %558 = vmatmul.mubr.bf16.gmra.mrb[0].mxu0 %v499
      %v559 = vpop.f32.mrb[0].mxu0
      %v560 = vadd.f32 0.0, %v559
      %v561 = vpop.f32.mrb[0].mxu0
      %v562 = vpop.f32.mrb[0].mxu0
      %v563 = vadd.f32 0.0, %v562
      %v564 = vpop.f32.mrb[0].mxu0
      %565 = vdwg.mxu0
      %v566 = vadd.f32 %v337, %v536
      %v567 = vadd.f32 %v338, %v539
      %v568 = vadd.f32 %v339, %v544
      %v569 = vadd.f32 %v340, %v547
      %v570 = vadd.f32 %v341, %v552
      %v571 = vadd.f32 %v342, %v555
      %v572 = vadd.f32 %v343, %v560
      %v573 = vadd.f32 %v344, %v563
      %s574 = sadd.s32 %s195, 1
      %s575 = smul.u32 %s574, 2
      %s576 = smul.addr %s575, 4
      %s577 = scalar_lea.vmem %s183, %s576
      %v578 = vld [vmem:[%s577] sm:$0xf]
      %v579 = vld [vmem:[%s577 + $0x4] sm:$0x1]
      %v580 = vld [vmem:[%s577 + $0x8] sm:$0xf]
      %v581 = vld [vmem:[%s577 + $0xc] sm:$0x1]
      %v582 = vld [vmem:[%s577 + $0x10] sm:$0xf]
      %v583 = vld [vmem:[%s577 + $0x14] sm:$0x1]
      %v584 = vld [vmem:[%s577 + $0x18] sm:$0xf]
      %v585 = vld [vmem:[%s577 + $0x1c] sm:$0x1]
      %v586 = vld [vmem:[%s577 + $0x20] sm:$0xf]
      %v587 = vld [vmem:[%s577 + $0x24] sm:$0x1]
      %v588 = vld [vmem:[%s577 + $0x28] sm:$0xf]
      %v589 = vld [vmem:[%s577 + $0x2c] sm:$0x1]
      %v590 = vld [vmem:[%s577 + $0x30] sm:$0xf]
      %v591 = vld [vmem:[%s577 + $0x34] sm:$0x1]
      %v592 = vld [vmem:[%s577 + $0x38] sm:$0xf]
      %v593 = vld [vmem:[%s577 + $0x3c] sm:$0x1]
      %s594 = scalar_lea.vmem %s1, 32
      %v595 = vld [vmem:[%s594] sm:$0xf]
      %v596 = vld [vmem:[%s594 + $0x4] sm:$0xf]
      %v597 = vld [vmem:[%s594 + $0x8] sm:$0xf]
      %v598 = vld [vmem:[%s594 + $0xc] sm:$0xf]
      %v607 = vunpack.c.l.b16 %v578
      %v608 = vunpack.c.l.b16 %v580
      %v609 = vunpack.c.l.b16 %v582
      %v610 = vunpack.c.l.b16 %v584
      %v611 = vunpack.c.l.b16 %v586
      %v612 = vunpack.c.l.b16 %v588
      %v613 = vunpack.c.l.b16 %v590
      %v614 = vunpack.c.l.b16 %v592
      %v615 = vpack.c.b16 %v608, %v607
      %v616 = vpack.c.b16 %v610, %v609
      %v617 = vpack.c.b16 %v612, %v611
      %v618 = vpack.c.b16 %v614, %v613
      %v623 = vunpack.c.l.b16 %v595
      %v624 = vunpack.c.l.b16 %v596
      %v625 = vunpack.c.l.b16 %v597
      %v626 = vunpack.c.l.b16 %v598
      %v627 = vpack.c.b16 %v624, %v623
      %v628 = vpack.c.b16 %v626, %v625
      %v632 = vsel %vm259, %v615, 0
      %v635 = vsel %vm259, %v616, 0
      %v638 = vsel %vm259, %v617, 0
      %v641 = vsel %vm259, %v618, 0
      %643 = vmatprep.subr.bf16.mxu0 0
      %644 = vmatpush1.bf16.msra.mxu0 %v627
      %645 = vmatprep.subr.bf16.mxu0 0
      %646 = vmatpush1.bf16.msra.mxu0 %v628
      %647 = vmatprep.subr.bf16.mxu0 0
      %648 = vmatpush1.bf16.msra.mxu0 0
      %649 = vmatprep.subr.bf16.mxu0 0
      %650 = vmatpush1.bf16.msra.mxu0 0
      %651 = vmatprep.subr.bf16.mxu0 0
      %652 = vmatpush1.bf16.msra.mxu0 0
      %653 = vmatprep.subr.bf16.mxu0 0
      %654 = vmatpush1.bf16.msra.mxu0 0
      %655 = vmatprep.subr.bf16.mxu0 0
      %656 = vmatpush1.bf16.msra.mxu0 0
      %657 = vmatprep.subr.bf16.mxu0 0
      %658 = vmatpush1.bf16.msra.mxu0 0
      %659 = vmatprep.subr.bf16.mxu0 0
      %660 = vmatpush1.bf16.msra.mxu0 0
      %661 = vmatprep.subr.bf16.mxu0 0
      %662 = vmatpush1.bf16.msra.mxu0 0
      %663 = vmatprep.subr.bf16.mxu0 0
      %664 = vmatpush1.bf16.msra.mxu0 0
      %665 = vmatprep.subr.bf16.mxu0 0
      %666 = vmatpush1.bf16.msra.mxu0 0
      %667 = vmatprep.subr.bf16.mxu0 0
      %668 = vmatpush1.bf16.msra.mxu0 0
      %669 = vmatprep.subr.bf16.mxu0 0
      %670 = vmatpush1.bf16.msra.mxu0 0
      %671 = vmatprep.subr.bf16.mxu0 0
      %672 = vmatpush1.bf16.msra.mxu0 0
      %673 = vmatprep.subr.bf16.mxu0 0
      %674 = vmatpush1.bf16.msra.mxu0 0
      %675 = vmatprep.mubr.bf16.mxu0 0
      %676 = vmatmul.mubr.bf16.gmra.mrb[0].mxu0 %v632
      %v677 = vpop.f32.mrb[0].mxu0
      %v678 = vadd.f32 0.0, %v677
      %v679 = vpop.f32.mrb[0].mxu0
      %v680 = vpop.f32.mrb[0].mxu0
      %v681 = vadd.f32 0.0, %v680
      %v682 = vpop.f32.mrb[0].mxu0
      %683 = vmatprep.mubr.bf16.mxu0 0
      %684 = vmatmul.mubr.bf16.gmra.mrb[0].mxu0 %v635
      %v685 = vpop.f32.mrb[0].mxu0
      %v686 = vadd.f32 0.0, %v685
      %v687 = vpop.f32.mrb[0].mxu0
      %v688 = vpop.f32.mrb[0].mxu0
      %v689 = vadd.f32 0.0, %v688
      %v690 = vpop.f32.mrb[0].mxu0
      %691 = vmatprep.mubr.bf16.mxu0 0
      %692 = vmatmul.mubr.bf16.gmra.mrb[0].mxu0 %v638
      %v693 = vpop.f32.mrb[0].mxu0
      %v694 = vadd.f32 0.0, %v693
      %v695 = vpop.f32.mrb[0].mxu0
      %v696 = vpop.f32.mrb[0].mxu0
      %v697 = vadd.f32 0.0, %v696
      %v698 = vpop.f32.mrb[0].mxu0
      %699 = vmatprep.mubr.bf16.mxu0 0
      %700 = vmatmul.mubr.bf16.gmra.mrb[0].mxu0 %v641
      %v701 = vpop.f32.mrb[0].mxu0
      %v702 = vadd.f32 0.0, %v701
      %v703 = vpop.f32.mrb[0].mxu0
      %v704 = vpop.f32.mrb[0].mxu0
      %v705 = vadd.f32 0.0, %v704
      %v706 = vpop.f32.mrb[0].mxu0
      %707 = vdwg.mxu0
      %v708 = vadd.f32 %v566, %v678
      %v709 = vadd.f32 %v567, %v681
      %v710 = vadd.f32 %v568, %v686
      %v711 = vadd.f32 %v569, %v689
      %v712 = vadd.f32 %v570, %v694
      %v713 = vadd.f32 %v571, %v697
      %v714 = vadd.f32 %v572, %v702
      %v715 = vadd.f32 %v573, %v705
      %v717 = vshrl.u32 %v578, 16
      %v719 = vrot.slane %v717, 4
      %v720 = vshll.u32 %v578, 16
      %v722 = vrot.slane %v720, 5
      %v723 = vor.u32 %v719, %v722
      %v724 = vrot.slane %v723, 4
      %v726 = vshll.u32 %v579, 16
      %v728 = vrot.slane %v726, 5
      %v729 = vsel %vm347, %v724, %v728
      %v731 = vshrl.u32 %v580, 16
      %v733 = vrot.slane %v731, 4
      %v734 = vshll.u32 %v580, 16
      %v736 = vrot.slane %v734, 5
      %v737 = vor.u32 %v733, %v736
      %v738 = vrot.slane %v737, 4
      %v740 = vshll.u32 %v581, 16
      %v742 = vrot.slane %v740, 5
      %v743 = vsel %vm347, %v738, %v742
      %v745 = vshrl.u32 %v582, 16
      %v747 = vrot.slane %v745, 4
      %v748 = vshll.u32 %v582, 16
      %v750 = vrot.slane %v748, 5
      %v751 = vor.u32 %v747, %v750
      %v752 = vrot.slane %v751, 4
      %v754 = vshll.u32 %v583, 16
      %v756 = vrot.slane %v754, 5
      %v757 = vsel %vm347, %v752, %v756
      %v759 = vshrl.u32 %v584, 16
      %v761 = vrot.slane %v759, 4
      %v762 = vshll.u32 %v584, 16
      %v764 = vrot.slane %v762, 5
      %v765 = vor.u32 %v761, %v764
      %v766 = vrot.slane %v765, 4
      %v768 = vshll.u32 %v585, 16
      %v770 = vrot.slane %v768, 5
      %v771 = vsel %vm347, %v766, %v770
      %v773 = vshrl.u32 %v586, 16
      %v775 = vrot.slane %v773, 4
      %v776 = vshll.u32 %v586, 16
      %v778 = vrot.slane %v776, 5
      %v779 = vor.u32 %v775, %v778
      %v780 = vrot.slane %v779, 4
      %v782 = vshll.u32 %v587, 16
      %v784 = vrot.slane %v782, 5
      %v785 = vsel %vm347, %v780, %v784
      %v787 = vshrl.u32 %v588, 16
      %v789 = vrot.slane %v787, 4
      %v790 = vshll.u32 %v588, 16
      %v792 = vrot.slane %v790, 5
      %v793 = vor.u32 %v789, %v792
      %v794 = vrot.slane %v793, 4
      %v796 = vshll.u32 %v589, 16
      %v798 = vrot.slane %v796, 5
      %v799 = vsel %vm347, %v794, %v798
      %v801 = vshrl.u32 %v590, 16
      %v803 = vrot.slane %v801, 4
      %v804 = vshll.u32 %v590, 16
      %v806 = vrot.slane %v804, 5
      %v807 = vor.u32 %v803, %v806
      %v808 = vrot.slane %v807, 4
      %v810 = vshll.u32 %v591, 16
      %v812 = vrot.slane %v810, 5
      %v813 = vsel %vm347, %v808, %v812
      %v815 = vshrl.u32 %v592, 16
      %v817 = vrot.slane %v815, 4
      %v818 = vshll.u32 %v592, 16
      %v820 = vrot.slane %v818, 5
      %v821 = vor.u32 %v817, %v820
      %v822 = vrot.slane %v821, 4
      %v824 = vshll.u32 %v593, 16
      %v826 = vrot.slane %v824, 5
      %v827 = vsel %vm347, %v822, %v826
      %s828 = scalar_lea.vmem %s1, 48
      %v829 = vld [vmem:[%s828] sm:$0xf]
      %v830 = vld [vmem:[%s828 + $0x4] sm:$0xf]
      %v831 = vld [vmem:[%s828 + $0x8] sm:$0xf]
      %v832 = vld [vmem:[%s828 + $0xc] sm:$0xf]
      %v833 = vunpack.c.l.b16 %v729
      %v834 = vunpack.c.l.b16 %v743
      %v835 = vunpack.c.l.b16 %v757
      %v836 = vunpack.c.l.b16 %v771
      %v837 = vunpack.c.l.b16 %v785
      %v838 = vunpack.c.l.b16 %v799
      %v839 = vunpack.c.l.b16 %v813
      %v840 = vunpack.c.l.b16 %v827
      %v841 = vpack.c.b16 %v834, %v833
      %v842 = vpack.c.b16 %v836, %v835
      %v843 = vpack.c.b16 %v838, %v837
      %v844 = vpack.c.b16 %v840, %v839
      %v849 = vunpack.c.l.b16 %v829
      %v850 = vunpack.c.l.b16 %v830
      %v851 = vunpack.c.l.b16 %v831
      %v852 = vunpack.c.l.b16 %v832
      %v853 = vpack.c.b16 %v850, %v849
      %v854 = vpack.c.b16 %v852, %v851
      %v858 = vsel %vm259, %v841, 0
      %v861 = vsel %vm259, %v842, 0
      %v864 = vsel %vm259, %v843, 0
      %v867 = vsel %vm259, %v844, 0
      %869 = vmatprep.subr.bf16.mxu0 0
      %870 = vmatpush1.bf16.msra.mxu0 %v853
      %871 = vmatprep.subr.bf16.mxu0 0
      %872 = vmatpush1.bf16.msra.mxu0 %v854
      %873 = vmatprep.subr.bf16.mxu0 0
      %874 = vmatpush1.bf16.msra.mxu0 0
      %875 = vmatprep.subr.bf16.mxu0 0
      %876 = vmatpush1.bf16.msra.mxu0 0
      %877 = vmatprep.subr.bf16.mxu0 0
      %878 = vmatpush1.bf16.msra.mxu0 0
      %879 = vmatprep.subr.bf16.mxu0 0
      %880 = vmatpush1.bf16.msra.mxu0 0
      %881 = vmatprep.subr.bf16.mxu0 0
      %882 = vmatpush1.bf16.msra.mxu0 0
      %883 = vmatprep.subr.bf16.mxu0 0
      %884 = vmatpush1.bf16.msra.mxu0 0
      %885 = vmatprep.subr.bf16.mxu0 0
      %886 = vmatpush1.bf16.msra.mxu0 0
      %887 = vmatprep.subr.bf16.mxu0 0
      %888 = vmatpush1.bf16.msra.mxu0 0
      %889 = vmatprep.subr.bf16.mxu0 0
      %890 = vmatpush1.bf16.msra.mxu0 0
      %891 = vmatprep.subr.bf16.mxu0 0
      %892 = vmatpush1.bf16.msra.mxu0 0
      %893 = vmatprep.subr.bf16.mxu0 0
      %894 = vmatpush1.bf16.msra.mxu0 0
      %895 = vmatprep.subr.bf16.mxu0 0
      %896 = vmatpush1.bf16.msra.mxu0 0
      %897 = vmatprep.subr.bf16.mxu0 0
      %898 = vmatpush1.bf16.msra.mxu0 0
      %899 = vmatprep.subr.bf16.mxu0 0
      %900 = vmatpush1.bf16.msra.mxu0 0
      %901 = vmatprep.mubr.bf16.mxu0 0
      %902 = vmatmul.mubr.bf16.gmra.mrb[0].mxu0 %v858
      %v903 = vpop.f32.mrb[0].mxu0
      %v904 = vadd.f32 0.0, %v903
      %v905 = vpop.f32.mrb[0].mxu0
      %v906 = vpop.f32.mrb[0].mxu0
      %v907 = vadd.f32 0.0, %v906
      %v908 = vpop.f32.mrb[0].mxu0
      %909 = vmatprep.mubr.bf16.mxu0 0
      %910 = vmatmul.mubr.bf16.gmra.mrb[0].mxu0 %v861
      %v911 = vpop.f32.mrb[0].mxu0
      %v912 = vadd.f32 0.0, %v911
      %v913 = vpop.f32.mrb[0].mxu0
      %v914 = vpop.f32.mrb[0].mxu0
      %v915 = vadd.f32 0.0, %v914
      %v916 = vpop.f32.mrb[0].mxu0
      %917 = vmatprep.mubr.bf16.mxu0 0
      %918 = vmatmul.mubr.bf16.gmra.mrb[0].mxu0 %v864
      %v919 = vpop.f32.mrb[0].mxu0
      %v920 = vadd.f32 0.0, %v919
      %v921 = vpop.f32.mrb[0].mxu0
      %v922 = vpop.f32.mrb[0].mxu0
      %v923 = vadd.f32 0.0, %v922
      %v924 = vpop.f32.mrb[0].mxu0
      %925 = vmatprep.mubr.bf16.mxu0 0
      %926 = vmatmul.mubr.bf16.gmra.mrb[0].mxu0 %v867
      %v927 = vpop.f32.mrb[0].mxu0
      %v928 = vadd.f32 0.0, %v927
      %v929 = vpop.f32.mrb[0].mxu0
      %v930 = vpop.f32.mrb[0].mxu0
      %v931 = vadd.f32 0.0, %v930
      %v932 = vpop.f32.mrb[0].mxu0
      %933 = vdwg.mxu0
      %v934 = vadd.f32 %v708, %v904
      %v935 = vadd.f32 %v709, %v907
      %v936 = vadd.f32 %v710, %v912
      %v937 = vadd.f32 %v711, %v915
      %v938 = vadd.f32 %v712, %v920
      %v939 = vadd.f32 %v713, %v923
      %v940 = vadd.f32 %v714, %v928
      %v941 = vadd.f32 %v715, %v931
      %vm942 = vcmp.gt.f32.partialorder %v934, 0.0
      %vm943 = vcmp.gt.f32.partialorder %v935, 0.0
      %vm944 = vcmp.gt.f32.partialorder %v936, 0.0
      %vm945 = vcmp.gt.f32.partialorder %v937, 0.0
      %vm946 = vcmp.gt.f32.partialorder %v938, 0.0
      %vm947 = vcmp.gt.f32.partialorder %v939, 0.0
      %vm948 = vcmp.gt.f32.partialorder %v940, 0.0
      %vm949 = vcmp.gt.f32.partialorder %v941, 0.0
      %v950 = vmul.f32 %v934, 0.2
      %v951 = vmul.f32 %v935, 0.2
      %v952 = vmul.f32 %v936, 0.2
      %v953 = vmul.f32 %v937, 0.2
      %v954 = vmul.f32 %v938, 0.2
      %v955 = vmul.f32 %v939, 0.2
      %v956 = vmul.f32 %v940, 0.2
      %v957 = vmul.f32 %v941, 0.2
      %v958 = vsel %vm942, %v934, %v950
      %v959 = vsel %vm943, %v935, %v951
      %v960 = vsel %vm944, %v936, %v952
      %v961 = vsel %vm945, %v937, %v953
      %v962 = vsel %vm946, %v938, %v954
      %v963 = vsel %vm947, %v939, %v955
      %v964 = vsel %vm948, %v940, %v956
      %v965 = vsel %vm949, %v941, %v957
      %v966 = vpack.c.bf16 %v958, %v958
      %v967 = vpack.c.bf16 %v959, %v959
      %v968 = vpack.c.bf16 %v960, %v960
      %v969 = vpack.c.bf16 %v961, %v961
      %v970 = vpack.c.bf16 %v962, %v962
      %v971 = vpack.c.bf16 %v963, %v963
      %v972 = vpack.c.bf16 %v964, %v964
      %v973 = vpack.c.bf16 %v965, %v965
      %vm974 = vcmask 125952
      %975 = vst.msk [vmem:[%s192] sm:$0xf] %vm974, %v966
      %976 = vst.msk [vmem:[%s192 + $0x4] sm:$0xf] %vm974, %v967
      %977 = vst.msk [vmem:[%s192 + $0x8] sm:$0xf] %vm974, %v968
      %978 = vst.msk [vmem:[%s192 + $0xc] sm:$0xf] %vm974, %v969
      %979 = vst.msk [vmem:[%s192 + $0x10] sm:$0xf] %vm974, %v970
      %980 = vst.msk [vmem:[%s192 + $0x14] sm:$0xf] %vm974, %v971
      %981 = vst.msk [vmem:[%s192 + $0x18] sm:$0xf] %vm974, %v972
      %982 = vst.msk [vmem:[%s192 + $0x1c] sm:$0xf] %vm974, %v973
      %s983 = smul.u32 8, %s19
      %p984 = scmp.lt.s32.totalorder %s18, 1
      %s985 = scalar_select %p984, %s18, 1
      %p986 = scmp.lt.s32.totalorder %s983, 7
      %s987 = scalar_select %p986, %s983, 7
      %s988 = smul.addr %s985, 8
      %s989 = sadd.s32 %s987, %s988
      %s990 = smul.addr %s989, 4
      %s991 = scalar_lea.vmem %s3, %s990
      // Predicated region
      $region33: #{discriminator_forward.7} parent=31 // pred_check
        %p992 = pneg %p114
      $region34: #{discriminator_forward.7} parent=31 // pred_check_branch
        %994 = sbr.rel (%p992) target = $region36
      $region35: #{discriminator_forward.7} parent=31 // pred_region
        %s995 = smul.u32 8, %s19
      $region36: #{discriminator_forward.7} parent=31 // pred_fallthru
        _
    $region32: #{discriminator_forward.7} parent=5 // pred_fallthru
      _
    %p996 = scmp.le.s32.totalorder 2, %s9
    // Predicated region
    $region37: #{discriminator_forward.7} parent=5 // pred_check
      %p997 = pneg %p996
    $region38: #{discriminator_forward.7} parent=5 // pred_check_branch
      %999 = sbr.rel (%p997) target = $region40
    $region39: #{discriminator_forward.7} parent=5 // pred_region
      %s1000 = ssub.s32 %s9, 2
      // Predicated region
      $region41: #{discriminator_forward.7} parent=39 // pred_check
        %p1001 = pneg %p120
      $region42: #{discriminator_forward.7} parent=39 // pred_check_branch
        %1003 = sbr.rel (%p1001) target = $region44
      $region43: #{discriminator_forward.7} parent=39 // pred_region
        %s1004 = smul.u32 8, %s21
        %p1005 = scmp.lt.s32.totalorder %s20, 1
        %s1006 = scalar_select %p1005, %s20, 1
        %p1007 = scmp.lt.s32.totalorder %s1004, 7
        %s1008 = scalar_select %p1007, %s1004, 7
        %s1009 = smul.addr %s1006, 8
        %s1010 = sadd.s32 %s1008, %s1009
        %s1011 = smul.addr %s1010, 4
        %s1012 = scalar_lea.vmem %s3, %s1011
      $region44: #{discriminator_forward.7} parent=39 // pred_fallthru
        _
    $region40: #{discriminator_forward.7} parent=5 // pred_fallthru
      _
  $region6: #{discriminator_forward.7} parent=0 // loop_footer
    %s13 = sadd.s32 1, %s9
  $region7: #{discriminator_forward.7} parent=0 // loop_footer_branch
    %8 = sbr.rel target = $region3
  $region8: #{discriminator_forward.7} parent=0 // loop_exit
    _

// kernel: discriminator_forward.8
$region0: #{discriminator_forward.8}
  #allocation0 [shape = 'u32[]', space=smem, size = 0x4, offset = 0x4, fixed_abs, tag = 'smem constant byte address 0x4 - core index']
  #allocation1 [shape = 'u32[144,128]{1,0:T(1,128)}', space=vmem, size = 0x12000, scoped, tag = 'internal scratch']
  %s0 = inlined_call_operand.vmem [shape: bf16[2,5,5,64], index: 0, kind: input, shape index: {}]
  %s1 = inlined_call_operand.vmem [shape: bf16[4,64,32], index: 1, kind: input, shape index: {}]
  %s2 = inlined_call_operand.vmem [shape: f32[1,32], index: 2, kind: input, shape index: {}]
  %s3 = inlined_call_operand.vmem [shape: bf16[2,4,4,32], index: 3, kind: output, shape index: {}]
  %s4 = sld [smem:[#allocation0]]
  $region45: #{discriminator_forward.8} parent=0
    _
  %s6 = ssub.s32 1, %s4
  %s7 = scalar_select 0, %s6, %s4
  loop: start=0, step=1, limit=4
  $region2: #{discriminator_forward.8} parent=0 // loop_pre_header
    _
  $region3: #{discriminator_forward.8} parent=0 // loop_header
    %s9 = sphi 0, %s13
    %p10 = scmp.ge.s32.totalorder %s9, 4
    %s16 = sphi 0, %s28
    %s17 = sphi 0, %s24
    %s18 = sphi 0, %s16
    %s19 = sphi 0, %s17
    %s20 = sphi 0, %s18
    %s21 = sphi 0, %s19
    %s31 = sphi 0, %s33
    %s34 = sphi 0, %s31
    %s35 = sphi 0, %s34
    %s51 = sphi 0, %s35
    %s55 = sphi 0, %s55
    %s57 = sphi 0, %s55
    %s58 = sphi 0, %s57
    %s72 = sphi 0, %s58
    %s76 = sphi 0, %s76
    %s78 = sphi 0, %s76
    %s79 = sphi 0, %s78
    %s93 = sphi 0, %s79
    %s101 = sphi 0, %s103
    %s104 = sphi 0, %s101
    %s105 = sphi 0, %s104
    %s121 = sphi 0, %s105
  $region4: #{discriminator_forward.8} parent=0 // loop_header_branch
    %12 = sbr.rel (%p10) target = $region8
  $region5: #{discriminator_forward.8} parent=0 // loop_body
    %s14 = ssub.s32 %s9, 1
    %s15 = ssub.s32 %s9, 2
    %s22 = sadd.s32 1, %s17
    %p23 = scmp.ge.s32.totalorder %s22, 1
    %s24 = scalar_select %p23, 0, %s22
    %s25 = sadd.s32 1, %s16
    %s26 = scalar_select %p23, %s25, %s16
    %p27 = scmp.ge.s32.totalorder %s26, 2
    %s28 = scalar_select %p27, 0, %s26
    %s29 = ssub.s32 %s16, %s28
    %p30 = scmp.eq.s32.totalorder %s29, 0
    %s32 = sadd.s32 %s31, 1
    %s33 = scalar_select %p30, %s31, %s32
    %p36 = pneg %p30
    %p37 = scmp.eq.s32.totalorder %s9, 1
    %p38 = por %p36, %p37
    %p39 = scmp.ne.s32.totalorder %s31, %s34
    %p40 = scmp.eq.s32.totalorder %s9, 0
    %p41 = por %p39, %p40
    %p42 = scmp.ne.s32.totalorder %s31, %s34
    %p43 = scmp.eq.s32.totalorder %s14, 1
    %p44 = por %p42, %p43
    %p45 = scmp.ne.s32.totalorder %s34, %s35
    %p46 = scmp.eq.s32.totalorder %s14, 0
    %p47 = por %p45, %p46
    %p48 = scmp.ne.s32.totalorder %s34, %s35
    %p49 = scmp.eq.s32.totalorder %s15, 1
    %p50 = por %p48, %p49
    %p52 = scmp.ne.s32.totalorder %s35, %s51
    %p53 = scmp.eq.s32.totalorder %s15, 0
    %p54 = por %p52, %p53
    %s56 = sadd.s32 %s55, 1
    %p59 = scmp.eq.s32.totalorder %s9, 1
    %p60 = scmp.ne.s32.totalorder %s55, %s57
    %p61 = scmp.eq.s32.totalorder %s9, 0
    %p62 = por %p60, %p61
    %p63 = scmp.ne.s32.totalorder %s55, %s57
    %p64 = scmp.eq.s32.totalorder %s14, 1
    %p65 = por %p63, %p64
    %p66 = scmp.ne.s32.totalorder %s57, %s58
    %p67 = scmp.eq.s32.totalorder %s14, 0
    %p68 = por %p66, %p67
    %p69 = scmp.ne.s32.totalorder %s57, %s58
    %p70 = scmp.eq.s32.totalorder %s15, 1
    %p71 = por %p69, %p70
    %p73 = scmp.ne.s32.totalorder %s58, %s72
    %p74 = scmp.eq.s32.totalorder %s15, 0
    %p75 = por %p73, %p74
    %s77 = sadd.s32 %s76, 1
    %p80 = scmp.eq.s32.totalorder %s9, 1
    %p81 = scmp.ne.s32.totalorder %s76, %s78
    %p82 = scmp.eq.s32.totalorder %s9, 0
    %p83 = por %p81, %p82
    %p84 = scmp.ne.s32.totalorder %s76, %s78
    %p85 = scmp.eq.s32.totalorder %s14, 1
    %p86 = por %p84, %p85
    %p87 = scmp.ne.s32.totalorder %s78, %s79
    %p88 = scmp.eq.s32.totalorder %s14, 0
    %p89 = por %p87, %p88
    %p90 = scmp.ne.s32.totalorder %s78, %s79
    %p91 = scmp.eq.s32.totalorder %s15, 1
    %p92 = por %p90, %p91
    %p94 = scmp.ne.s32.totalorder %s79, %s93
    %p95 = scmp.eq.s32.totalorder %s15, 0
    %p96 = por %p94, %p95
    %s97 = ssub.s32 %s16, %s28
    %s98 = ssub.s32 %s17, %s24
    %s99 = sor.u32 %s97, %s98
    %p100 = scmp.eq.s32.totalorder %s99, 0
    %s102 = sadd.s32 %s101, 1
    %s103 = scalar_select %p100, %s101, %s102
    %p106 = pneg %p100
    %p107 = scmp.eq.s32.totalorder %s9, 1
    %p108 = por %p106, %p107
    %p109 = scmp.ne.s32.totalorder %s101, %s104
    %p110 = scmp.eq.s32.totalorder %s9, 0
    %p111 = por %p109, %p110
    %p112 = scmp.ne.s32.totalorder %s101, %s104
    %p113 = scmp.eq.s32.totalorder %s14, 1
    %p114 = por %p112, %p113
    %p115 = scmp.ne.s32.totalorder %s104, %s105
    %p116 = scmp.eq.s32.totalorder %s14, 0
    %p117 = por %p115, %p116
    %p118 = scmp.ne.s32.totalorder %s104, %s105
    %p119 = scmp.eq.s32.totalorder %s15, 1
    %p120 = por %p118, %p119
    %p122 = scmp.ne.s32.totalorder %s105, %s121
    %p123 = scmp.eq.s32.totalorder %s15, 0
    %p124 = por %p122, %p123
    %p125 = scmp.le.s32.totalorder 1, %s9
    %p126 = scmp.lt.s32.totalorder %s9, 3
    %p127 = pnand %p125, %p126
    %p128 = pneg %p127
    // Predicated region
    $region9: #{discriminator_forward.8} parent=5 // pred_check
      _
    $region10: #{discriminator_forward.8} parent=5 // pred_check_branch
      %130 = sbr.rel (%p127) target = $region12
    $region11: #{discriminator_forward.8} parent=5 // pred_region
      %s131 = ssub.s32 %s9, 1
      // Predicated region
      $region13: #{discriminator_forward.8} parent=11 // pred_check
        %p132 = pneg %p68
      $region14: #{discriminator_forward.8} parent=11 // pred_check_branch
        %134 = sbr.rel (%p132) target = $region16
      $region15: #{discriminator_forward.8} parent=11 // pred_region
        _
      $region16: #{discriminator_forward.8} parent=11 // pred_fallthru
        _
      // Predicated region
      $region17: #{discriminator_forward.8} parent=11 // pred_check
        %p135 = pneg %p89
      $region18: #{discriminator_forward.8} parent=11 // pred_check_branch
        %137 = sbr.rel (%p135) target = $region20
      $region19: #{discriminator_forward.8} parent=11 // pred_region
        _
      $region20: #{discriminator_forward.8} parent=11 // pred_fallthru
        _
    $region12: #{discriminator_forward.8} parent=5 // pred_fallthru
      _
    %p138 = scmp.lt.s32.totalorder %s9, 2
    // Predicated region
    $region21: #{discriminator_forward.8} parent=5 // pred_check
      %p139 = pneg %p138
    $region22: #{discriminator_forward.8} parent=5 // pred_check_branch
      %141 = sbr.rel (%p139) target = $region24
    $region23: #{discriminator_forward.8} parent=5 // pred_region
      // Predicated region
      $region25: #{discriminator_forward.8} parent=23 // pred_check
        %p142 = pneg %p41
      $region26: #{discriminator_forward.8} parent=23 // pred_check_branch
        %144 = sbr.rel (%p142) target = $region28
      $region27: #{discriminator_forward.8} parent=23 // pred_region
        %p145 = scmp.lt.s32.totalorder %s16, 1
        %s146 = scalar_select %p145, %s16, 1
        %s147 = smul.addr %s146, 5
        %s148 = smul.addr %s147, 4
        %s149 = scalar_lea.vmem %s0, %s148
      $region28: #{discriminator_forward.8} parent=23 // pred_fallthru
        _
    $region24: #{discriminator_forward.8} parent=5 // pred_fallthru
      _
    %p150 = scmp.le.s32.totalorder 1, %s9
    %p151 = scmp.lt.s32.totalorder %s9, 3
    %p152 = pnand %p150, %p151
    %p153 = pneg %p152
    // Predicated region
    $region29: #{discriminator_forward.8} parent=5 // pred_check
      _
    $region30: #{discriminator_forward.8} parent=5 // pred_check_branch
      %155 = sbr.rel (%p152) target = $region32
    $region31: #{discriminator_forward.8} parent=5 // pred_region
      %s156 = ssub.s32 %s9, 1
      %p157 = scmp.lt.s32.totalorder %s18, 1
      %s158 = scalar_select %p157, %s18, 1
      %s159 = smul.addr %s158, 5
      %s160 = smul.addr %s159, 4
      %s161 = scalar_lea.vmem %s0, %s160
      %p162 = pneg %p47
      %p163 = pneg %p44
      %p164 = pneg %p68
      %p165 = pneg %p65
      %p166 = pneg %p89
      %p167 = pneg %p86
      %p168 = pneg %p117
      %p169 = pneg %p114
      %s170 = smul.u32 4, %s19
      %p171 = scmp.lt.s32.totalorder %s18, 1
      %s172 = scalar_select %p171, %s18, 1
      %p173 = scmp.lt.s32.totalorder %s170, 3
      %s174 = scalar_select %p173, %s170, 3
      %s175 = smul.addr %s172, 4
      %s176 = sadd.s32 %s174, %s175
      %s177 = smul.addr %s176, 2
      %s178 = scalar_lea.vmem %s3, %s177
      %p179 = scmp.lt.s32.totalorder %s18, 1
      %s180 = scalar_select %p179, %s18, 1
      %s181 = smul.addr %s180, 5
      %s182 = smul.addr %s181, 4
      %s183 = scalar_lea.vmem %s0, %s182
      %s184 = smul.u32 4, %s19
      %p185 = scmp.lt.s32.totalorder %s18, 1
      %s186 = scalar_select %p185, %s18, 1
      %p187 = scmp.lt.s32.totalorder %s184, 3
      %s188 = scalar_select %p187, %s184, 3
      %s189 = smul.addr %s186, 4
      %s190 = sadd.s32 %s188, %s189
      %s191 = smul.addr %s190, 2
      %s192 = scalar_lea.vmem %s3, %s191
      %s193 = smul.u32 4, %s19
      %s195 = smul.u32 %s19, 4
      %v196 = vld [vmem:[%s2] sm:$0x1]
      %v198 = vlaneseq
      %v199 = vshrl.u32 %v198, 7
      %v200 = vsub.s32 0, %v199
      %v201 = vrot.slane %v196, %v200
      %v203 = vadd.f32 %v201, 0.0
      %s204 = smul.addr %s195, 4
      %s205 = scalar_lea.vmem %s183, %s204
      %v206 = vld [vmem:[%s205] sm:$0x7]
      %v207 = vld [vmem:[%s205 + $0x4] sm:$0x7]
      %v208 = vld [vmem:[%s205 + $0x8] sm:$0x7]
      %v209 = vld [vmem:[%s205 + $0xc] sm:$0x7]
      %v210 = vld [vmem:[%s1] sm:$0xf]
      %v211 = vld [vmem:[%s1 + $0x4] sm:$0xf]
      %v212 = vld [vmem:[%s1 + $0x8] sm:$0xf]
      %v213 = vld [vmem:[%s1 + $0xc] sm:$0xf]
      %v214 = vld [vmem:[%s1 + $0x10] sm:$0xf]
      %v215 = vld [vmem:[%s1 + $0x14] sm:$0xf]
      %v216 = vld [vmem:[%s1 + $0x18] sm:$0xf]
      %v217 = vld [vmem:[%s1 + $0x1c] sm:$0xf]
      %v222 = vcombine.low %v206, %v207
      %v223 = vcombine.low %v208, %v209
      %v225 = vunpack.c.l.s4 1983009808
      %v226 = vunpack.c.0.s8 %v225
      %v227 = vlaneseq
      %v228 = vshrl.u32 %v227, 7
      %v229 = vsub.s32 %v226, %v228
      %v230 = vrot.slane %v222, %v229
      %v232 = vunpack.c.l.s4 1983009808
      %v233 = vunpack.c.0.s8 %v232
      %v234 = vlaneseq
      %v235 = vshrl.u32 %v234, 7
      %v236 = vsub.s32 %v233, %v235
      %v237 = vrot.slane %v223, %v236
      %v238 = vcombine.low %v230, %v237
      %v247 = vunpack.c.l.b16 %v210
      %v248 = vunpack.c.l.b16 %v211
      %v249 = vunpack.c.l.b16 %v212
      %v250 = vunpack.c.l.b16 %v213
      %v251 = vunpack.c.l.b16 %v214
      %v252 = vunpack.c.l.b16 %v215
      %v253 = vunpack.c.l.b16 %v216
      %v254 = vunpack.c.l.b16 %v217
      %v255 = vpack.c.b16 %v248, %v247
      %v256 = vpack.c.b16 %v250, %v249
      %v257 = vpack.c.b16 %v252, %v251
      %v258 = vpack.c.b16 %v254, %v253
      %vm263 = vcmask 523264
      %v265 = vsel %vm263, %v238, 0
      %267 = vmatprep.subr.bf16.mxu0 0
      %268 = vmatpush1.bf16.msra.mxu0 %v255
      %269 = vmatprep.subr.bf16.mxu0 0
      %270 = vmatpush1.bf16.msra.mxu0 %v256
      %271 = vmatprep.subr.bf16.mxu0 0
      %272 = vmatpush1.bf16.msra.mxu0 %v257
      %273 = vmatprep.subr.bf16.mxu0 0
      %274 = vmatpush1.bf16.msra.mxu0 %v258
      %275 = vmatprep.subr.bf16.mxu0 0
      %276 = vmatpush1.bf16.msra.mxu0 0
      %277 = vmatprep.subr.bf16.mxu0 0
      %278 = vmatpush1.bf16.msra.mxu0 0
      %279 = vmatprep.subr.bf16.mxu0 0
      %280 = vmatpush1.bf16.msra.mxu0 0
      %281 = vmatprep.subr.bf16.mxu0 0
      %282 = vmatpush1.bf16.msra.mxu0 0
      %283 = vmatprep.subr.bf16.mxu0 0
      %284 = vmatpush1.bf16.msra.mxu0 0
      %285 = vmatprep.subr.bf16.mxu0 0
      %286 = vmatpush1.bf16.msra.mxu0 0
      %287 = vmatprep.subr.bf16.mxu0 0
      %288 = vmatpush1.bf16.msra.mxu0 0
      %289 = vmatprep.subr.bf16.mxu0 0
      %290 = vmatpush1.bf16.msra.mxu0 0
      %291 = vmatprep.subr.bf16.mxu0 0
      %292 = vmatpush1.bf16.msra.mxu0 0
      %293 = vmatprep.subr.bf16.mxu0 0
      %294 = vmatpush1.bf16.msra.mxu0 0
      %295 = vmatprep.subr.bf16.mxu0 0
      %296 = vmatpush1.bf16.msra.mxu0 0
      %297 = vmatprep.subr.bf16.mxu0 0
      %298 = vmatpush1.bf16.msra.mxu0 0
      %299 = vmatprep.mubr.bf16.mxu0 0
      %300 = vmatmul.mubr.bf16.gmra.mrb[0].mxu0 %v265
      %v301 = vpop.f32.mrb[0].mxu0
      %v302 = vadd.f32 0.0, %v301
      %v303 = vpop.f32.mrb[0].mxu0
      %v304 = vpop.f32.mrb[0].mxu0
      %v305 = vadd.f32 0.0, %v304
      %v306 = vpop.f32.mrb[0].mxu0
      %307 = vdwg.mxu0
      %v308 = vadd.f32 %v203, %v302
      %v309 = vadd.f32 %v203, %v305
      %v311 = vunpack.c.l.s4 1983009808
      %v312 = vunpack.c.0.s8 %v311
      %v313 = vlaneseq
      %v314 = vshrl.u32 %v313, 7
      %v315 = vsub.s32 %v312, %v314
      %v316 = vrot.slane %v206, %v315
      %v317 = vcombine.high %v316, %v316
      %v319 = vunpack.c.l.s4 1983009808
      %v320 = vunpack.c.0.s8 %v319
      %v321 = vlaneseq
      %v322 = vshrl.u32 %v321, 7
      %v323 = vsub.s32 %v320, %v322
      %v324 = vrot.slane %v207, %v323
      %v325 = vcombine.high %v324, %v324
      %v327 = vunpack.c.l.s4 1983009808
      %v328 = vunpack.c.0.s8 %v327
      %v329 = vlaneseq
      %v330 = vshrl.u32 %v329, 7
      %v331 = vsub.s32 %v328, %v330
      %v332 = vrot.slane %v208, %v331
      %v333 = vcombine.high %v332, %v332
      %v335 = vunpack.c.l.s4 1983009808
      %v336 = vunpack.c.0.s8 %v335
      %v337 = vlaneseq
      %v338 = vshrl.u32 %v337, 7
      %v339 = vsub.s32 %v336, %v338
      %v340 = vrot.slane %v209, %v339
      %v341 = vcombine.high %v340, %v340
      %vm342 = vsmask.f32 1280
      %vm343 = vsmask.f32 3336
      %vm344 = vmor %vm342, %vm343
      %vm345 = vsmask.f32 5392
      %vm346 = vmor %vm344, %vm345
      %vm347 = vsmask.f32 7448
      %vm348 = vmor %vm346, %vm347
      %v350 = vshrl.u32 %v316, 16
      %v352 = vrot.slane %v350, 6
      %v353 = vshll.u32 %v316, 16
      %v355 = vrot.slane %v353, 7
      %v356 = vor.u32 %v352, %v355
      %v357 = vrot.slane %v356, 2
      %v359 = vshll.u32 %v317, 16
      %v361 = vrot.slane %v359, 7
      %v362 = vsel %vm348, %v357, %v361
      %v364 = vshrl.u32 %v324, 16
      %v366 = vrot.slane %v364, 6
      %v367 = vshll.u32 %v324, 16
      %v369 = vrot.slane %v367, 7
      %v370 = vor.u32 %v366, %v369
      %v371 = vrot.slane %v370, 2
      %v373 = vshll.u32 %v325, 16
      %v375 = vrot.slane %v373, 7
      %v376 = vsel %vm348, %v371, %v375
      %v378 = vshrl.u32 %v332, 16
      %v380 = vrot.slane %v378, 6
      %v381 = vshll.u32 %v332, 16
      %v383 = vrot.slane %v381, 7
      %v384 = vor.u32 %v380, %v383
      %v385 = vrot.slane %v384, 2
      %v387 = vshll.u32 %v333, 16
      %v389 = vrot.slane %v387, 7
      %v390 = vsel %vm348, %v385, %v389
      %v392 = vshrl.u32 %v340, 16
      %v394 = vrot.slane %v392, 6
      %v395 = vshll.u32 %v340, 16
      %v397 = vrot.slane %v395, 7
      %v398 = vor.u32 %v394, %v397
      %v399 = vrot.slane %v398, 2
      %v401 = vshll.u32 %v341, 16
      %v403 = vrot.slane %v401, 7
      %v404 = vsel %vm348, %v399, %v403
      %s405 = scalar_lea.vmem %s1, 32
      %v406 = vld [vmem:[%s405] sm:$0xf]
      %v407 = vld [vmem:[%s405 + $0x4] sm:$0xf]
      %v408 = vld [vmem:[%s405 + $0x8] sm:$0xf]
      %v409 = vld [vmem:[%s405 + $0xc] sm:$0xf]
      %v410 = vld [vmem:[%s405 + $0x10] sm:$0xf]
      %v411 = vld [vmem:[%s405 + $0x14] sm:$0xf]
      %v412 = vld [vmem:[%s405 + $0x18] sm:$0xf]
      %v413 = vld [vmem:[%s405 + $0x1c] sm:$0xf]
      %v414 = vcombine.low %v362, %v376
      %v415 = vcombine.low %v390, %v404
      %v417 = vunpack.c.l.s4 1983009808
      %v418 = vunpack.c.0.s8 %v417
      %v419 = vlaneseq
      %v420 = vshrl.u32 %v419, 7
      %v421 = vsub.s32 %v418, %v420
      %v422 = vrot.slane %v414, %v421
      %v424 = vunpack.c.l.s4 1983009808
      %v425 = vunpack.c.0.s8 %v424
      %v426 = vlaneseq
      %v427 = vshrl.u32 %v426, 7
      %v428 = vsub.s32 %v425, %v427
      %v429 = vrot.slane %v415, %v428
      %v430 = vcombine.low %v422, %v429
      %v439 = vunpack.c.l.b16 %v406
      %v440 = vunpack.c.l.b16 %v407
      %v441 = vunpack.c.l.b16 %v408
      %v442 = vunpack.c.l.b16 %v409
      %v443 = vunpack.c.l.b16 %v410
      %v444 = vunpack.c.l.b16 %v411
      %v445 = vunpack.c.l.b16 %v412
      %v446 = vunpack.c.l.b16 %v413
      %v447 = vpack.c.b16 %v440, %v439
      %v448 = vpack.c.b16 %v442, %v441
      %v449 = vpack.c.b16 %v444, %v443
      %v450 = vpack.c.b16 %v446, %v445
      %v456 = vsel %vm263, %v430, 0
      %458 = vmatprep.subr.bf16.mxu0 0
      %459 = vmatpush1.bf16.msra.mxu0 %v447
      %460 = vmatprep.subr.bf16.mxu0 0
      %461 = vmatpush1.bf16.msra.mxu0 %v448
      %462 = vmatprep.subr.bf16.mxu0 0
      %463 = vmatpush1.bf16.msra.mxu0 %v449
      %464 = vmatprep.subr.bf16.mxu0 0
      %465 = vmatpush1.bf16.msra.mxu0 %v450
      %466 = vmatprep.subr.bf16.mxu0 0
      %467 = vmatpush1.bf16.msra.mxu0 0
      %468 = vmatprep.subr.bf16.mxu0 0
      %469 = vmatpush1.bf16.msra.mxu0 0
      %470 = vmatprep.subr.bf16.mxu0 0
      %471 = vmatpush1.bf16.msra.mxu0 0
      %472 = vmatprep.subr.bf16.mxu0 0
      %473 = vmatpush1.bf16.msra.mxu0 0
      %474 = vmatprep.subr.bf16.mxu0 0
      %475 = vmatpush1.bf16.msra.mxu0 0
      %476 = vmatprep.subr.bf16.mxu0 0
      %477 = vmatpush1.bf16.msra.mxu0 0
      %478 = vmatprep.subr.bf16.mxu0 0
      %479 = vmatpush1.bf16.msra.mxu0 0
      %480 = vmatprep.subr.bf16.mxu0 0
      %481 = vmatpush1.bf16.msra.mxu0 0
      %482 = vmatprep.subr.bf16.mxu0 0
      %483 = vmatpush1.bf16.msra.mxu0 0
      %484 = vmatprep.subr.bf16.mxu0 0
      %485 = vmatpush1.bf16.msra.mxu0 0
      %486 = vmatprep.subr.bf16.mxu0 0
      %487 = vmatpush1.bf16.msra.mxu0 0
      %488 = vmatprep.subr.bf16.mxu0 0
      %489 = vmatpush1.bf16.msra.mxu0 0
      %490 = vmatprep.mubr.bf16.mxu0 0
      %491 = vmatmul.mubr.bf16.gmra.mrb[0].mxu0 %v456
      %v492 = vpop.f32.mrb[0].mxu0
      %v493 = vadd.f32 0.0, %v492
      %v494 = vpop.f32.mrb[0].mxu0
      %v495 = vpop.f32.mrb[0].mxu0
      %v496 = vadd.f32 0.0, %v495
      %v497 = vpop.f32.mrb[0].mxu0
      %498 = vdwg.mxu0
      %v499 = vadd.f32 %v308, %v493
      %v500 = vadd.f32 %v309, %v496
      %s501 = sadd.s32 %s195, 1
      %s502 = smul.addr %s501, 4
      %s503 = scalar_lea.vmem %s183, %s502
      %v504 = vld [vmem:[%s503] sm:$0x7]
      %v505 = vld [vmem:[%s503 + $0x4] sm:$0x7]
      %v506 = vld [vmem:[%s503 + $0x8] sm:$0x7]
      %v507 = vld [vmem:[%s503 + $0xc] sm:$0x7]
      %s508 = scalar_lea.vmem %s1, 64
      %v509 = vld [vmem:[%s508] sm:$0xf]
      %v510 = vld [vmem:[%s508 + $0x4] sm:$0xf]
      %v511 = vld [vmem:[%s508 + $0x8] sm:$0xf]
      %v512 = vld [vmem:[%s508 + $0xc] sm:$0xf]
      %v513 = vld [vmem:[%s508 + $0x10] sm:$0xf]
      %v514 = vld [vmem:[%s508 + $0x14] sm:$0xf]
      %v515 = vld [vmem:[%s508 + $0x18] sm:$0xf]
      %v516 = vld [vmem:[%s508 + $0x1c] sm:$0xf]
      %v521 = vcombine.low %v504, %v505
      %v522 = vcombine.low %v506, %v507
      %v524 = vunpack.c.l.s4 1983009808
      %v525 = vunpack.c.0.s8 %v524
      %v526 = vlaneseq
      %v527 = vshrl.u32 %v526, 7
      %v528 = vsub.s32 %v525, %v527
      %v529 = vrot.slane %v521, %v528
      %v531 = vunpack.c.l.s4 1983009808
      %v532 = vunpack.c.0.s8 %v531
      %v533 = vlaneseq
      %v534 = vshrl.u32 %v533, 7
      %v535 = vsub.s32 %v532, %v534
      %v536 = vrot.slane %v522, %v535
      %v537 = vcombine.low %v529, %v536
      %v546 = vunpack.c.l.b16 %v509
      %v547 = vunpack.c.l.b16 %v510
      %v548 = vunpack.c.l.b16 %v511
      %v549 = vunpack.c.l.b16 %v512
      %v550 = vunpack.c.l.b16 %v513
      %v551 = vunpack.c.l.b16 %v514
      %v552 = vunpack.c.l.b16 %v515
      %v553 = vunpack.c.l.b16 %v516
      %v554 = vpack.c.b16 %v547, %v546
      %v555 = vpack.c.b16 %v549, %v548
      %v556 = vpack.c.b16 %v551, %v550
      %v557 = vpack.c.b16 %v553, %v552
      %v563 = vsel %vm263, %v537, 0
      %565 = vmatprep.subr.bf16.mxu0 0
      %566 = vmatpush1.bf16.msra.mxu0 %v554
      %567 = vmatprep.subr.bf16.mxu0 0
      %568 = vmatpush1.bf16.msra.mxu0 %v555
      %569 = vmatprep.subr.bf16.mxu0 0
      %570 = vmatpush1.bf16.msra.mxu0 %v556
      %571 = vmatprep.subr.bf16.mxu0 0
      %572 = vmatpush1.bf16.msra.mxu0 %v557
      %573 = vmatprep.subr.bf16.mxu0 0
      %574 = vmatpush1.bf16.msra.mxu0 0
      %575 = vmatprep.subr.bf16.mxu0 0
      %576 = vmatpush1.bf16.msra.mxu0 0
      %577 = vmatprep.subr.bf16.mxu0 0
      %578 = vmatpush1.bf16.msra.mxu0 0
      %579 = vmatprep.subr.bf16.mxu0 0
      %580 = vmatpush1.bf16.msra.mxu0 0
      %581 = vmatprep.subr.bf16.mxu0 0
      %582 = vmatpush1.bf16.msra.mxu0 0
      %583 = vmatprep.subr.bf16.mxu0 0
      %584 = vmatpush1.bf16.msra.mxu0 0
      %585 = vmatprep.subr.bf16.mxu0 0
      %586 = vmatpush1.bf16.msra.mxu0 0
      %587 = vmatprep.subr.bf16.mxu0 0
      %588 = vmatpush1.bf16.msra.mxu0 0
      %589 = vmatprep.subr.bf16.mxu0 0
      %590 = vmatpush1.bf16.msra.mxu0 0
      %591 = vmatprep.subr.bf16.mxu0 0
      %592 = vmatpush1.bf16.msra.mxu0 0
      %593 = vmatprep.subr.bf16.mxu0 0
      %594 = vmatpush1.bf16.msra.mxu0 0
      %595 = vmatprep.subr.bf16.mxu0 0
      %596 = vmatpush1.bf16.msra.mxu0 0
      %597 = vmatprep.mubr.bf16.mxu0 0
      %598 = vmatmul.mubr.bf16.gmra.mrb[0].mxu0 %v563
      %v599 = vpop.f32.mrb[0].mxu0
      %v600 = vadd.f32 0.0, %v599
      %v601 = vpop.f32.mrb[0].mxu0
      %v602 = vpop.f32.mrb[0].mxu0
      %v603 = vadd.f32 0.0, %v602
      %v604 = vpop.f32.mrb[0].mxu0
      %605 = vdwg.mxu0
      %v606 = vadd.f32 %v499, %v600
      %v607 = vadd.f32 %v500, %v603
      %v609 = vunpack.c.l.s4 1983009808
      %v610 = vunpack.c.0.s8 %v609
      %v611 = vlaneseq
      %v612 = vshrl.u32 %v611, 7
      %v613 = vsub.s32 %v610, %v612
      %v614 = vrot.slane %v504, %v613
      %v615 = vcombine.high %v614, %v614
      %v617 = vunpack.c.l.s4 1983009808
      %v618 = vunpack.c.0.s8 %v617
      %v619 = vlaneseq
      %v620 = vshrl.u32 %v619, 7
      %v621 = vsub.s32 %v618, %v620
      %v622 = vrot.slane %v505, %v621
      %v623 = vcombine.high %v622, %v622
      %v625 = vunpack.c.l.s4 1983009808
      %v626 = vunpack.c.0.s8 %v625
      %v627 = vlaneseq
      %v628 = vshrl.u32 %v627, 7
      %v629 = vsub.s32 %v626, %v628
      %v630 = vrot.slane %v506, %v629
      %v631 = vcombine.high %v630, %v630
      %v633 = vunpack.c.l.s4 1983009808
      %v634 = vunpack.c.0.s8 %v633
      %v635 = vlaneseq
      %v636 = vshrl.u32 %v635, 7
      %v637 = vsub.s32 %v634, %v636
      %v638 = vrot.slane %v507, %v637
      %v639 = vcombine.high %v638, %v638
      %v641 = vshrl.u32 %v614, 16
      %v643 = vrot.slane %v641, 6
      %v644 = vshll.u32 %v614, 16
      %v646 = vrot.slane %v644, 7
      %v647 = vor.u32 %v643, %v646
      %v648 = vrot.slane %v647, 2
      %v650 = vshll.u32 %v615, 16
      %v652 = vrot.slane %v650, 7
      %v653 = vsel %vm348, %v648, %v652
      %v655 = vshrl.u32 %v622, 16
      %v657 = vrot.slane %v655, 6
      %v658 = vshll.u32 %v622, 16
      %v660 = vrot.slane %v658, 7
      %v661 = vor.u32 %v657, %v660
      %v662 = vrot.slane %v661, 2
      %v664 = vshll.u32 %v623, 16
      %v666 = vrot.slane %v664, 7
      %v667 = vsel %vm348, %v662, %v666
      %v669 = vshrl.u32 %v630, 16
      %v671 = vrot.slane %v669, 6
      %v672 = vshll.u32 %v630, 16
      %v674 = vrot.slane %v672, 7
      %v675 = vor.u32 %v671, %v674
      %v676 = vrot.slane %v675, 2
      %v678 = vshll.u32 %v631, 16
      %v680 = vrot.slane %v678, 7
      %v681 = vsel %vm348, %v676, %v680
      %v683 = vshrl.u32 %v638, 16
      %v685 = vrot.slane %v683, 6
      %v686 = vshll.u32 %v638, 16
      %v688 = vrot.slane %v686, 7
      %v689 = vor.u32 %v685, %v688
      %v690 = vrot.slane %v689, 2
      %v692 = vshll.u32 %v639, 16
      %v694 = vrot.slane %v692, 7
      %v695 = vsel %vm348, %v690, %v694
      %s696 = scalar_lea.vmem %s1, 96
      %v697 = vld [vmem:[%s696] sm:$0xf]
      %v698 = vld [vmem:[%s696 + $0x4] sm:$0xf]
      %v699 = vld [vmem:[%s696 + $0x8] sm:$0xf]
      %v700 = vld [vmem:[%s696 + $0xc] sm:$0xf]
      %v701 = vld [vmem:[%s696 + $0x10] sm:$0xf]
      %v702 = vld [vmem:[%s696 + $0x14] sm:$0xf]
      %v703 = vld [vmem:[%s696 + $0x18] sm:$0xf]
      %v704 = vld [vmem:[%s696 + $0x1c] sm:$0xf]
      %v705 = vcombine.low %v653, %v667
      %v706 = vcombine.low %v681, %v695
      %v708 = vunpack.c.l.s4 1983009808
      %v709 = vunpack.c.0.s8 %v708
      %v710 = vlaneseq
      %v711 = vshrl.u32 %v710, 7
      %v712 = vsub.s32 %v709, %v711
      %v713 = vrot.slane %v705, %v712
      %v715 = vunpack.c.l.s4 1983009808
      %v716 = vunpack.c.0.s8 %v715
      %v717 = vlaneseq
      %v718 = vshrl.u32 %v717, 7
      %v719 = vsub.s32 %v716, %v718
      %v720 = vrot.slane %v706, %v719
      %v721 = vcombine.low %v713, %v720
      %v730 = vunpack.c.l.b16 %v697
      %v731 = vunpack.c.l.b16 %v698
      %v732 = vunpack.c.l.b16 %v699
      %v733 = vunpack.c.l.b16 %v700
      %v734 = vunpack.c.l.b16 %v701
      %v735 = vunpack.c.l.b16 %v702
      %v736 = vunpack.c.l.b16 %v703
      %v737 = vunpack.c.l.b16 %v704
      %v738 = vpack.c.b16 %v731, %v730
      %v739 = vpack.c.b16 %v733, %v732
      %v740 = vpack.c.b16 %v735, %v734
      %v741 = vpack.c.b16 %v737, %v736
      %v747 = vsel %vm263, %v721, 0
      %749 = vmatprep.subr.bf16.mxu0 0
      %750 = vmatpush1.bf16.msra.mxu0 %v738
      %751 = vmatprep.subr.bf16.mxu0 0
      %752 = vmatpush1.bf16.msra.mxu0 %v739
      %753 = vmatprep.subr.bf16.mxu0 0
      %754 = vmatpush1.bf16.msra.mxu0 %v740
      %755 = vmatprep.subr.bf16.mxu0 0
      %756 = vmatpush1.bf16.msra.mxu0 %v741
      %757 = vmatprep.subr.bf16.mxu0 0
      %758 = vmatpush1.bf16.msra.mxu0 0
      %759 = vmatprep.subr.bf16.mxu0 0
      %760 = vmatpush1.bf16.msra.mxu0 0
      %761 = vmatprep.subr.bf16.mxu0 0
      %762 = vmatpush1.bf16.msra.mxu0 0
      %763 = vmatprep.subr.bf16.mxu0 0
      %764 = vmatpush1.bf16.msra.mxu0 0
      %765 = vmatprep.subr.bf16.mxu0 0
      %766 = vmatpush1.bf16.msra.mxu0 0
      %767 = vmatprep.subr.bf16.mxu0 0
      %768 = vmatpush1.bf16.msra.mxu0 0
      %769 = vmatprep.subr.bf16.mxu0 0
      %770 = vmatpush1.bf16.msra.mxu0 0
      %771 = vmatprep.subr.bf16.mxu0 0
      %772 = vmatpush1.bf16.msra.mxu0 0
      %773 = vmatprep.subr.bf16.mxu0 0
      %774 = vmatpush1.bf16.msra.mxu0 0
      %775 = vmatprep.subr.bf16.mxu0 0
      %776 = vmatpush1.bf16.msra.mxu0 0
      %777 = vmatprep.subr.bf16.mxu0 0
      %778 = vmatpush1.bf16.msra.mxu0 0
      %779 = vmatprep.subr.bf16.mxu0 0
      %780 = vmatpush1.bf16.msra.mxu0 0
      %781 = vmatprep.mubr.bf16.mxu0 0
      %782 = vmatmul.mubr.bf16.gmra.mrb[0].mxu0 %v747
      %v783 = vpop.f32.mrb[0].mxu0
      %v784 = vadd.f32 0.0, %v783
      %v785 = vpop.f32.mrb[0].mxu0
      %v786 = vpop.f32.mrb[0].mxu0
      %v787 = vadd.f32 0.0, %v786
      %v788 = vpop.f32.mrb[0].mxu0
      %789 = vdwg.mxu0
      %v790 = vadd.f32 %v606, %v784
      %v791 = vadd.f32 %v607, %v787
      %vm792 = vcmp.gt.f32.partialorder %v790, 0.0
      %vm793 = vcmp.gt.f32.partialorder %v791, 0.0
      %v794 = vmul.f32 %v790, 0.2
      %v795 = vmul.f32 %v791, 0.2
      %v796 = vsel %vm792, %v790, %v794
      %v797 = vsel %vm793, %v791, %v795
      %v800 = vcombine.high %v796, %v796
      %v801 = vcombine.high %v797, %v797
      %v804 = vpack.c.bf16 %v796, %v796
      %v805 = vpack.c.bf16 %v800, %v800
      %v806 = vpack.c.bf16 %v797, %v797
      %v807 = vpack.c.bf16 %v801, %v801
      %vm808 = vcmask 254976
      %809 = vst.msk [vmem:[%s192] sm:$0x3] %vm808, %v804
      %810 = vst.msk [vmem:[%s192 + $0x2] sm:$0x3] %vm808, %v805
      %811 = vst.msk [vmem:[%s192 + $0x4] sm:$0x3] %vm808, %v806
      %812 = vst.msk [vmem:[%s192 + $0x6] sm:$0x3] %vm808, %v807
      %s813 = smul.u32 4, %s19
      %p814 = scmp.lt.s32.totalorder %s18, 1
      %s815 = scalar_select %p814, %s18, 1
      %p816 = scmp.lt.s32.totalorder %s813, 3
      %s817 = scalar_select %p816, %s813, 3
      %s818 = smul.addr %s815, 4
      %s819 = sadd.s32 %s817, %s818
      %s820 = smul.addr %s819, 2
      %s821 = scalar_lea.vmem %s3, %s820
      // Predicated region
      $region33: #{discriminator_forward.8} parent=31 // pred_check
        %p822 = pneg %p114
      $region34: #{discriminator_forward.8} parent=31 // pred_check_branch
        %824 = sbr.rel (%p822) target = $region36
      $region35: #{discriminator_forward.8} parent=31 // pred_region
        %s825 = smul.u32 4, %s19
      $region36: #{discriminator_forward.8} parent=31 // pred_fallthru
        _
    $region32: #{discriminator_forward.8} parent=5 // pred_fallthru
      _
    %p826 = scmp.le.s32.totalorder 2, %s9
    // Predicated region
    $region37: #{discriminator_forward.8} parent=5 // pred_check
      %p827 = pneg %p826
    $region38: #{discriminator_forward.8} parent=5 // pred_check_branch
      %829 = sbr.rel (%p827) target = $region40
    $region39: #{discriminator_forward.8} parent=5 // pred_region
      %s830 = ssub.s32 %s9, 2
      // Predicated region
      $region41: #{discriminator_forward.8} parent=39 // pred_check
        %p831 = pneg %p120
      $region42: #{discriminator_forward.8} parent=39 // pred_check_branch
        %833 = sbr.rel (%p831) target = $region44
      $region43: #{discriminator_forward.8} parent=39 // pred_region
        %s834 = smul.u32 4, %s21
        %p835 = scmp.lt.s32.totalorder %s20, 1
        %s836 = scalar_select %p835, %s20, 1
        %p837 = scmp.lt.s32.totalorder %s834, 3
        %s838 = scalar_select %p837, %s834, 3
        %s839 = smul.addr %s836, 4
        %s840 = sadd.s32 %s838, %s839
        %s841 = smul.addr %s840, 2
        %s842 = scalar_lea.vmem %s3, %s841
      $region44: #{discriminator_forward.8} parent=39 // pred_fallthru
        _
    $region40: #{discriminator_forward.8} parent=5 // pred_fallthru
      _
  $region6: #{discriminator_forward.8} parent=0 // loop_footer
    %s13 = sadd.s32 1, %s9
  $region7: #{discriminator_forward.8} parent=0 // loop_footer_branch
    %8 = sbr.rel target = $region3
  $region8: #{discriminator_forward.8} parent=0 // loop_exit
    _

// kernel: squeeze.4
$region0: #{squeeze.4}
  %s0 = inlined_call_operand.vmem [shape: f32[2,9], index: 0, kind: input, shape index: {}]
  %s1 = inlined_call_operand.vmem [shape: f32[2,3,3], index: 1, kind: output, shape index: {}]
  $region1: #{squeeze.4} parent=0
    #allocation0 [shape = 'u8[8192]{0}', space=vmem, size = 0x2000, scoped, tag = 'scoped mem for output reshape']
    #allocation1 [shape = 'u8[4096]{0}', space=vmem, size = 0x1000, scoped, tag = 'scoped mem for input reshape']
    %s3 = sshllo.u32 0, 2
    %v4 = vld [vmem:[%s0] sm:%s3]
    %5 = vst [vmem:[#allocation1] sm:%s3] %v4
    %v6 = vld [vmem:[#allocation1] sm:$0x3]
    %vm7 = vcmask 23552
    %8 = vst.msk [vmem:[#allocation0] ss:$8 sm:$0x3] %vm7, %v6
    %v9 = vld [vmem:[#allocation1] sm:$0x3]
    %10 = vrot.lane.b32.xlu0 %v9, 125
    %v11 = vpop.permute.xlu0 %10
    %vm12 = vcmask 23552
    %s13 = scalar_lea.vmem [#allocation0], 1
    %14 = vst.msk [vmem:[%s13] ss:$8 sm:$0x3] %vm12, %v11
    %v15 = vld [vmem:[#allocation1] sm:$0x3]
    %16 = vrot.lane.b32.xlu0 %v15, 122
    %v17 = vpop.permute.xlu0 %16
    %vm18 = vcmask 23552
    %s19 = scalar_lea.vmem [#allocation0], 2
    %20 = vst.msk [vmem:[%s19] ss:$8 sm:$0x3] %vm18, %v17
    %s22 = sshllo.u32 0, 4
    %v24 = vld [vmem:[#allocation0] sm:%s22]
    %s25 = sshllo.u32 0, 4
    %26 = vst [vmem:[%s1] sm:%s25] %v24
    %s27 = scalar_lea.vmem [#allocation0], 8
    %v28 = vld [vmem:[%s27] sm:%s22]
    %s29 = sshllo.u32 0, 4
    %s30 = scalar_lea.vmem %s1, 4
    %31 = vst [vmem:[%s30] sm:%s29] %v28

// kernel: discriminator_forward.10
$region0: #{discriminator_forward.10}
  #allocation0 [shape = 'u32[]', space=smem, size = 0x4, offset = 0x4, fixed_abs, tag = 'smem constant byte address 0x4 - core index']
  #allocation1 [shape = 'u32[144,128]{1,0:T(1,128)}', space=vmem, size = 0x12000, scoped, tag = 'internal scratch']
  #allocation2 [shape = 'f32[1,64]{1,0:T(1,128)}', space=vmem, size = 0x200, scoped, tag = 'scratch operand']
  #allocation3 [shape = 'f32[1,64]{1,0:T(1,128)}', space=vmem, size = 0x200, scoped, tag = 'scratch operand']
  %s0 = inlined_call_operand.vmem [shape: bf16[2,9,64], index: 0, kind: input, shape index: {}]
  %s1 = inlined_call_operand.vmem [shape: bf16[64,64], index: 1, kind: input, shape index: {}]
  %s2 = inlined_call_operand.vmem [shape: f32[1,64], index: 2, kind: input, shape index: {}]
  %s3 = inlined_call_operand.vmem [shape: f32[1,64], index: 3, kind: input, shape index: {}]
  %s4 = inlined_call_operand.vmem [shape: f32[1,64], index: 4, kind: input, shape index: {}]
  %s5 = inlined_call_operand.vmem [shape: bf16[2,9,64], index: 5, kind: output, shape index: {0}]
  %s6 = inlined_call_operand.hbm [shape: f32[2,1,128], index: 6, kind: output, shape index: {1}]
  %s7 = inlined_call_operand.vmem [shape: f32[2,9,1], index: 7, kind: output, shape index: {2}]
  %8 = xla_tuple %s5, %s6, %s7
  %s9 = sld [smem:[#allocation0]]
  $region77: #{discriminator_forward.10} parent=0
    _
  %s11 = ssub.s32 1, %s9
  %s12 = scalar_select 0, %s11, %s9
  $region1: #{discriminator_forward.10} parent=0
    #allocation4 [shape = 'u8[1024]{0}', space=vmem, size = 0x400, scoped, tag = 'output window, operand 1']
    #allocation5 [shape = 's32[2]{0}', space=sflag, size = 0x8, scoped, tag = 'scoped memory for discriminator_forward.10']
    %13 = vsyncpa [#allocation5], 0
    %s14 = scalar_lea.sflag [#allocation5], 1
    %15 = vsyncpa %s14, 0
    loop: start=0, step=1, limit=4
    $region2: #{discriminator_forward.10} parent=1 // loop_pre_header
      _
    $region3: #{discriminator_forward.10} parent=1 // loop_header
      %s17 = sphi 0, %s21
      %p18 = scmp.ge.s32.totalorder %s17, 4
      %s24 = sphi 0, %s36
      %s25 = sphi 0, %s32
      %s26 = sphi 0, %s24
      %s27 = sphi 0, %s25
      %s28 = sphi 0, %s26
      %s29 = sphi 0, %s27
      %s41 = sphi 0, %s43
      %s44 = sphi 0, %s41
      %s45 = sphi 0, %s44
      %s61 = sphi 0, %s45
      %s65 = sphi 0, %s65
      %s67 = sphi 0, %s65
      %s68 = sphi 0, %s67
      %s82 = sphi 0, %s68
      %s86 = sphi 0, %s86
      %s88 = sphi 0, %s86
      %s89 = sphi 0, %s88
      %s103 = sphi 0, %s89
      %s107 = sphi 0, %s107
      %s109 = sphi 0, %s107
      %s110 = sphi 0, %s109
      %s124 = sphi 0, %s110
      %s128 = sphi 0, %s128
      %s130 = sphi 0, %s128
      %s131 = sphi 0, %s130
      %s145 = sphi 0, %s131
      %s153 = sphi 0, %s155
      %s156 = sphi 0, %s153
      %s157 = sphi 0, %s156
      %s173 = sphi 0, %s157
      %s179 = sphi 0, %s181
      %s182 = sphi 0, %s179
      %s183 = sphi 0, %s182
      %s199 = sphi 0, %s183
      %s207 = sphi 0, %s209
      %s210 = sphi 0, %s207
      %s211 = sphi 0, %s210
      %s227 = sphi 0, %s211
    $region4: #{discriminator_forward.10} parent=1 // loop_header_branch
      %20 = sbr.rel (%p18) target = $region8
    $region5: #{discriminator_forward.10} parent=1 // loop_body
      %s22 = ssub.s32 %s17, 1
      %s23 = ssub.s32 %s17, 2
      %s30 = sadd.s32 1, %s25
      %p31 = scmp.ge.s32.totalorder %s30, 1
      %s32 = scalar_select %p31, 0, %s30
      %s33 = sadd.s32 1, %s24
      %s34 = scalar_select %p31, %s33, %s24
      %p35 = scmp.ge.s32.totalorder %s34, 2
      %s36 = scalar_select %p35, 0, %s34
      %s37 = ssub.s32 %s24, %s36
      %s38 = ssub.s32 %s25, %s32
      %s39 = sor.u32 %s37, %s38
      %p40 = scmp.eq.s32.totalorder %s39, 0
      %s42 = sadd.s32 %s41, 1
      %s43 = scalar_select %p40, %s41, %s42
      %p46 = pneg %p40
      %p47 = scmp.eq.s32.totalorder %s17, 1
      %p48 = por %p46, %p47
      %p49 = scmp.ne.s32.totalorder %s41, %s44
      %p50 = scmp.eq.s32.totalorder %s17, 0
      %p51 = por %p49, %p50
      %p52 = scmp.ne.s32.totalorder %s41, %s44
      %p53 = scmp.eq.s32.totalorder %s22, 1
      %p54 = por %p52, %p53
      %p55 = scmp.ne.s32.totalorder %s44, %s45
      %p56 = scmp.eq.s32.totalorder %s22, 0
      %p57 = por %p55, %p56
      %p58 = scmp.ne.s32.totalorder %s44, %s45
      %p59 = scmp.eq.s32.totalorder %s23, 1
      %p60 = por %p58, %p59
      %p62 = scmp.ne.s32.totalorder %s45, %s61
      %p63 = scmp.eq.s32.totalorder %s23, 0
      %p64 = por %p62, %p63
      %s66 = sadd.s32 %s65, 1
      %p69 = scmp.eq.s32.totalorder %s17, 1
      %p70 = scmp.ne.s32.totalorder %s65, %s67
      %p71 = scmp.eq.s32.totalorder %s17, 0
      %p72 = por %p70, %p71
      %p73 = scmp.ne.s32.totalorder %s65, %s67
      %p74 = scmp.eq.s32.totalorder %s22, 1
      %p75 = por %p73, %p74
      %p76 = scmp.ne.s32.totalorder %s67, %s68
      %p77 = scmp.eq.s32.totalorder %s22, 0
      %p78 = por %p76, %p77
      %p79 = scmp.ne.s32.totalorder %s67, %s68
      %p80 = scmp.eq.s32.totalorder %s23, 1
      %p81 = por %p79, %p80
      %p83 = scmp.ne.s32.totalorder %s68, %s82
      %p84 = scmp.eq.s32.totalorder %s23, 0
      %p85 = por %p83, %p84
      %s87 = sadd.s32 %s86, 1
      %p90 = scmp.eq.s32.totalorder %s17, 1
      %p91 = scmp.ne.s32.totalorder %s86, %s88
      %p92 = scmp.eq.s32.totalorder %s17, 0
      %p93 = por %p91, %p92
      %p94 = scmp.ne.s32.totalorder %s86, %s88
      %p95 = scmp.eq.s32.totalorder %s22, 1
      %p96 = por %p94, %p95
      %p97 = scmp.ne.s32.totalorder %s88, %s89
      %p98 = scmp.eq.s32.totalorder %s22, 0
      %p99 = por %p97, %p98
      %p100 = scmp.ne.s32.totalorder %s88, %s89
      %p101 = scmp.eq.s32.totalorder %s23, 1
      %p102 = por %p100, %p101
      %p104 = scmp.ne.s32.totalorder %s89, %s103
      %p105 = scmp.eq.s32.totalorder %s23, 0
      %p106 = por %p104, %p105
      %s108 = sadd.s32 %s107, 1
      %p111 = scmp.eq.s32.totalorder %s17, 1
      %p112 = scmp.ne.s32.totalorder %s107, %s109
      %p113 = scmp.eq.s32.totalorder %s17, 0
      %p114 = por %p112, %p113
      %p115 = scmp.ne.s32.totalorder %s107, %s109
      %p116 = scmp.eq.s32.totalorder %s22, 1
      %p117 = por %p115, %p116
      %p118 = scmp.ne.s32.totalorder %s109, %s110
      %p119 = scmp.eq.s32.totalorder %s22, 0
      %p120 = por %p118, %p119
      %p121 = scmp.ne.s32.totalorder %s109, %s110
      %p122 = scmp.eq.s32.totalorder %s23, 1
      %p123 = por %p121, %p122
      %p125 = scmp.ne.s32.totalorder %s110, %s124
      %p126 = scmp.eq.s32.totalorder %s23, 0
      %p127 = por %p125, %p126
      %s129 = sadd.s32 %s128, 1
      %p132 = scmp.eq.s32.totalorder %s17, 1
      %p133 = scmp.ne.s32.totalorder %s128, %s130
      %p134 = scmp.eq.s32.totalorder %s17, 0
      %p135 = por %p133, %p134
      %p136 = scmp.ne.s32.totalorder %s128, %s130
      %p137 = scmp.eq.s32.totalorder %s22, 1
      %p138 = por %p136, %p137
      %p139 = scmp.ne.s32.totalorder %s130, %s131
      %p140 = scmp.eq.s32.totalorder %s22, 0
      %p141 = por %p139, %p140
      %p142 = scmp.ne.s32.totalorder %s130, %s131
      %p143 = scmp.eq.s32.totalorder %s23, 1
      %p144 = por %p142, %p143
      %p146 = scmp.ne.s32.totalorder %s131, %s145
      %p147 = scmp.eq.s32.totalorder %s23, 0
      %p148 = por %p146, %p147
      %s149 = ssub.s32 %s24, %s36
      %s150 = ssub.s32 %s25, %s32
      %s151 = sor.u32 %s149, %s150
      %p152 = scmp.eq.s32.totalorder %s151, 0
      %s154 = sadd.s32 %s153, 1
      %s155 = scalar_select %p152, %s153, %s154
      %p158 = pneg %p152
      %p159 = scmp.eq.s32.totalorder %s17, 1
      %p160 = por %p158, %p159
      %p161 = scmp.ne.s32.totalorder %s153, %s156
      %p162 = scmp.eq.s32.totalorder %s17, 0
      %p163 = por %p161, %p162
      %p164 = scmp.ne.s32.totalorder %s153, %s156
      %p165 = scmp.eq.s32.totalorder %s22, 1
      %p166 = por %p164, %p165
      %p167 = scmp.ne.s32.totalorder %s156, %s157
      %p168 = scmp.eq.s32.totalorder %s22, 0
      %p169 = por %p167, %p168
      %p170 = scmp.ne.s32.totalorder %s156, %s157
      %p171 = scmp.eq.s32.totalorder %s23, 1
      %p172 = por %p170, %p171
      %p174 = scmp.ne.s32.totalorder %s157, %s173
      %p175 = scmp.eq.s32.totalorder %s23, 0
      %p176 = por %p174, %p175
      %s177 = ssub.s32 %s24, %s36
      %p178 = scmp.eq.s32.totalorder %s177, 0
      %s180 = sadd.s32 %s179, 1
      %s181 = scalar_select %p178, %s179, %s180
      %p184 = pneg %p178
      %p185 = scmp.eq.s32.totalorder %s17, 1
      %p186 = por %p184, %p185
      %p187 = scmp.ne.s32.totalorder %s179, %s182
      %p188 = scmp.eq.s32.totalorder %s17, 0
      %p189 = por %p187, %p188
      %p190 = scmp.ne.s32.totalorder %s179, %s182
      %p191 = scmp.eq.s32.totalorder %s22, 1
      %p192 = por %p190, %p191
      %p193 = scmp.ne.s32.totalorder %s182, %s183
      %p194 = scmp.eq.s32.totalorder %s22, 0
      %p195 = por %p193, %p194
      %p196 = scmp.ne.s32.totalorder %s182, %s183
      %p197 = scmp.eq.s32.totalorder %s23, 1
      %p198 = por %p196, %p197
      %p200 = scmp.ne.s32.totalorder %s183, %s199
      %p201 = scmp.eq.s32.totalorder %s23, 0
      %p202 = por %p200, %p201
      %s203 = ssub.s32 %s24, %s36
      %s204 = ssub.s32 %s25, %s32
      %s205 = sor.u32 %s203, %s204
      %p206 = scmp.eq.s32.totalorder %s205, 0
      %s208 = sadd.s32 %s207, 1
      %s209 = scalar_select %p206, %s207, %s208
      %p212 = pneg %p206
      %p213 = scmp.eq.s32.totalorder %s17, 1
      %p214 = por %p212, %p213
      %p215 = scmp.ne.s32.totalorder %s207, %s210
      %p216 = scmp.eq.s32.totalorder %s17, 0
      %p217 = por %p215, %p216
      %p218 = scmp.ne.s32.totalorder %s207, %s210
      %p219 = scmp.eq.s32.totalorder %s22, 1
      %p220 = por %p218, %p219
      %p221 = scmp.ne.s32.totalorder %s210, %s211
      %p222 = scmp.eq.s32.totalorder %s22, 0
      %p223 = por %p221, %p222
      %p224 = scmp.ne.s32.totalorder %s210, %s211
      %p225 = scmp.eq.s32.totalorder %s23, 1
      %p226 = por %p224, %p225
      %p228 = scmp.ne.s32.totalorder %s211, %s227
      %p229 = scmp.eq.s32.totalorder %s23, 0
      %p230 = por %p228, %p229
      %p231 = scmp.le.s32.totalorder 1, %s17
      %p232 = scmp.lt.s32.totalorder %s17, 3
      %p233 = pnand %p231, %p232
      %p234 = pneg %p233
      // Predicated region
      $region9: #{discriminator_forward.10} parent=5 // pred_check
        _
      $region10: #{discriminator_forward.10} parent=5 // pred_check_branch
        %236 = sbr.rel (%p233) target = $region12
      $region11: #{discriminator_forward.10} parent=5 // pred_region
        %s237 = ssub.s32 %s17, 1
        // Predicated region
        $region13: #{discriminator_forward.10} parent=11 // pred_check
          %p238 = pneg %p78
        $region14: #{discriminator_forward.10} parent=11 // pred_check_branch
          %240 = sbr.rel (%p238) target = $region16
        $region15: #{discriminator_forward.10} parent=11 // pred_region
          _
        $region16: #{discriminator_forward.10} parent=11 // pred_fallthru
          _
        // Predicated region
        $region17: #{discriminator_forward.10} parent=11 // pred_check
          %p241 = pneg %p99
        $region18: #{discriminator_forward.10} parent=11 // pred_check_branch
          %243 = sbr.rel (%p241) target = $region20
        $region19: #{discriminator_forward.10} parent=11 // pred_region
          _
        $region20: #{discriminator_forward.10} parent=11 // pred_fallthru
          _
        // Predicated region
        $region21: #{discriminator_forward.10} parent=11 // pred_check
          %p244 = pneg %p120
        $region22: #{discriminator_forward.10} parent=11 // pred_check_branch
          %246 = sbr.rel (%p244) target = $region24
        $region23: #{discriminator_forward.10} parent=11 // pred_region
          _
        $region24: #{discriminator_forward.10} parent=11 // pred_fallthru
          _
        // Predicated region
        $region25: #{discriminator_forward.10} parent=11 // pred_check
          %p247 = pneg %p141
        $region26: #{discriminator_forward.10} parent=11 // pred_check_branch
          %249 = sbr.rel (%p247) target = $region28
        $region27: #{discriminator_forward.10} parent=11 // pred_region
          _
        $region28: #{discriminator_forward.10} parent=11 // pred_fallthru
          _
      $region12: #{discriminator_forward.10} parent=5 // pred_fallthru
        _
      %p250 = scmp.lt.s32.totalorder %s17, 2
      // Predicated region
      $region29: #{discriminator_forward.10} parent=5 // pred_check
        %p251 = pneg %p250
      $region30: #{discriminator_forward.10} parent=5 // pred_check_branch
        %253 = sbr.rel (%p251) target = $region32
      $region31: #{discriminator_forward.10} parent=5 // pred_region
        // Predicated region
        $region33: #{discriminator_forward.10} parent=31 // pred_check
          %p254 = pneg %p51
        $region34: #{discriminator_forward.10} parent=31 // pred_check_branch
          %256 = sbr.rel (%p254) target = $region36
        $region35: #{discriminator_forward.10} parent=31 // pred_region
          %s257 = smul.u32 2, %s25
          %p258 = scmp.lt.s32.totalorder %s24, 1
          %s259 = scalar_select %p258, %s24, 1
          %p260 = scmp.lt.s32.totalorder %s257, 1
          %s261 = scalar_select %p260, %s257, 1
          %s262 = smul.addr %s259, 2
          %s263 = sadd.s32 %s261, %s262
          %s264 = smul.addr %s263, 4
          %s265 = scalar_lea.vmem %s0, %s264
          %s266 = smul.u32 2, %s25
        $region36: #{discriminator_forward.10} parent=31 // pred_fallthru
          _
      $region32: #{discriminator_forward.10} parent=5 // pred_fallthru
        _
      %p267 = scmp.le.s32.totalorder 1, %s17
      %p268 = scmp.lt.s32.totalorder %s17, 3
      %p269 = pnand %p267, %p268
      %p270 = pneg %p269
      // Predicated region
      $region37: #{discriminator_forward.10} parent=5 // pred_check
        _
      $region38: #{discriminator_forward.10} parent=5 // pred_check_branch
        %272 = sbr.rel (%p269) target = $region40
      $region39: #{discriminator_forward.10} parent=5 // pred_region
        %s273 = ssub.s32 %s17, 1
        %s274 = smul.u32 2, %s27
        %p275 = scmp.lt.s32.totalorder %s26, 1
        %s276 = scalar_select %p275, %s26, 1
        %p277 = scmp.lt.s32.totalorder %s274, 1
        %s278 = scalar_select %p277, %s274, 1
        %s279 = smul.addr %s276, 2
        %s280 = sadd.s32 %s278, %s279
        %s281 = smul.addr %s280, 4
        %s282 = scalar_lea.vmem %s0, %s281
        %p283 = pneg %p57
        %p284 = pneg %p54
        %p285 = pneg %p78
        %p286 = pneg %p75
        %p287 = pneg %p99
        %p288 = pneg %p96
        %p289 = pneg %p120
        %p290 = pneg %p117
        %p291 = pneg %p141
        %p292 = pneg %p138
        %p293 = pneg %p169
        %p294 = pneg %p166
        %s295 = smul.u32 2, %s27
        %p296 = scmp.lt.s32.totalorder %s26, 1
        %s297 = scalar_select %p296, %s26, 1
        %p298 = scmp.lt.s32.totalorder %s295, 1
        %s299 = scalar_select %p298, %s295, 1
        %s300 = smul.addr %s297, 2
        %s301 = sadd.s32 %s299, %s300
        %s302 = smul.addr %s301, 4
        %s303 = scalar_lea.vmem %s5, %s302
        %p304 = pneg %p195
        %p305 = pneg %p192
        %s306 = sand.u32 %s182, 1
        %s307 = scalar_lea.sflag [#allocation5], %s306
        %s308 = sand.u32 %s182, 1
        %s309 = scalar_lea.vmem [#allocation4], %s308
        %p310 = pneg %p223
        %p311 = pneg %p220
        %s312 = smul.u32 2, %s27
        %p313 = scmp.lt.s32.totalorder %s26, 1
        %s314 = scalar_select %p313, %s26, 1
        %p315 = scmp.lt.s32.totalorder %s312, 1
        %s316 = scalar_select %p315, %s312, 1
        %s317 = smul.addr %s314, 2
        %s318 = sadd.s32 %s316, %s317
        %s319 = smul.addr %s318, 8
        %s320 = scalar_lea.vmem %s7, %s319
        %s321 = smul.u32 2, %s27
        %p322 = scmp.lt.s32.totalorder %s26, 1
        %s323 = scalar_select %p322, %s26, 1
        %p324 = scmp.lt.s32.totalorder %s321, 1
        %s325 = scalar_select %p324, %s321, 1
        %s326 = smul.addr %s323, 2
        %s327 = sadd.s32 %s325, %s326
        %s328 = smul.addr %s327, 4
        %s329 = scalar_lea.vmem %s0, %s328
        %s330 = smul.u32 2, %s27
        %s331 = smul.u32 2, %s27
        %p332 = scmp.lt.s32.totalorder %s26, 1
        %s333 = scalar_select %p332, %s26, 1
        %p334 = scmp.lt.s32.totalorder %s331, 1
        %s335 = scalar_select %p334, %s331, 1
        %s336 = smul.addr %s333, 2
        %s337 = sadd.s32 %s335, %s336
        %s338 = smul.addr %s337, 4
        %s339 = scalar_lea.vmem %s5, %s338
        %s340 = smul.u32 2, %s27
        %s341 = smul.u32 2, %s27
        %p342 = scmp.lt.s32.totalorder %s26, 1
        %s343 = scalar_select %p342, %s26, 1
        %p344 = scmp.lt.s32.totalorder %s341, 1
        %s345 = scalar_select %p344, %s341, 1
        %s346 = smul.addr %s343, 2
        %s347 = sadd.s32 %s345, %s346
        %s348 = smul.addr %s347, 8
        %s349 = scalar_lea.vmem %s7, %s348
        %s350 = smul.u32 2, %s27
        %p353 = scmp.eq.s32.totalorder %s27, 0
        // Predicated region
        $region41: #{discriminator_forward.10} parent=39 // pred_check
          %p354 = pneg %p353
        $region42: #{discriminator_forward.10} parent=39 // pred_check_branch
          %356 = sbr.rel (%p354) target = $region44
        $region43: #{discriminator_forward.10} parent=39 // pred_region
          %vm357 = vcmask 516096
          %358 = vst.msk [vmem:[#allocation2] sm:$0x1] %vm357, 0.0
          %359 = vst.msk [vmem:[#allocation3] sm:$0x1] %vm357, -inf
        $region44: #{discriminator_forward.10} parent=39 // pred_fallthru
          _
        %v360 = vld [vmem:[%s329] sm:$0xf]
        %v361 = vld [vmem:[%s329 + $0x4] sm:$0x1]
        %v362 = vld [vmem:[#allocation2] sm:$0x1]
        %v363 = vunpack.c.l.bf16 %v360
        %v364 = vunpack.c.l.bf16 %v361
        %vm365 = vcmask 523264
        %v366 = vsel %vm365, %v363, 0.0
        %vm367 = vcmask 516096
        %v368 = vsel %vm367, %v364, 0.0
        %v369 = vadd.f32 %v366, %v368
        %v370 = vrot.slane %v369, 4
        %v371 = vadd.f32 %v369, %v370
        %v372 = vrot.slane %v371, 2
        %v373 = vadd.f32 %v371, %v372
        %v374 = vrot.slane %v373, 1
        %v375 = vadd.f32 %v373, %v374
        %v376 = vadd.f32 %v362, %v375
        %377 = vst.msk [vmem:[#allocation2] sm:$0x1] %vm367, %v376
        %v378 = vld [vmem:[#allocation3] sm:$0x1]
        %v381 = vunpack.c.l.b16 %v360
        %v382 = vunpack.c.l.b16 %v361
        %v383 = vpack.c.b16 %v382, %v381
        %vm385 = vcmask 520192
        %vm386 = vsmask.f32 4352
        %vm387 = vmand %vm385, %vm386
        %v388 = vsel %vm387, %v383, 4286644096
        %v389 = vunpack.i.l.bf16 %v388
        %v390 = vunpack.i.h.bf16 %v388
        %v391 = vmax.f32 %v389, %v390
        %v392 = vrot.slane %v391, 4
        %v393 = vmax.f32 %v391, %v392
        %v394 = vrot.slane %v393, 2
        %v395 = vmax.f32 %v393, %v394
        %v396 = vrot.slane %v395, 1
        %v397 = vmax.f32 %v395, %v396
        %v398 = vpack.i.bf16 %v397, %v397
        %v399 = vunpack.c.l.bf16 %v398
        %v400 = vmax.f32 %v378, %v399
        %401 = vst.msk [vmem:[#allocation3] sm:$0x1] %vm367, %v400
        %v402 = vld [vmem:[%s1] sm:$0xf]
        %v403 = vld [vmem:[%s1 + $0x4] sm:$0xf]
        %v404 = vld [vmem:[%s1 + $0x8] sm:$0xf]
        %v405 = vld [vmem:[%s1 + $0xc] sm:$0xf]
        %v406 = vld [vmem:[%s1 + $0x10] sm:$0xf]
        %v407 = vld [vmem:[%s1 + $0x14] sm:$0xf]
        %v408 = vld [vmem:[%s1 + $0x18] sm:$0xf]
        %v409 = vld [vmem:[%s1 + $0x1c] sm:$0xf]
        %v410 = vld [vmem:[%s2] sm:$0x1]
        %v412 = vlaneseq
        %v413 = vshrl.u32 %v412, 7
        %v414 = vsub.s32 0, %v413
        %v415 = vrot.slane %v410, %v414
        %v425 = vunpack.c.l.b16 %v402
        %v426 = vunpack.c.l.b16 %v403
        %v427 = vunpack.c.l.b16 %v404
        %v428 = vunpack.c.l.b16 %v405
        %v429 = vunpack.c.l.b16 %v406
        %v430 = vunpack.c.l.b16 %v407
        %v431 = vunpack.c.l.b16 %v408
        %v432 = vunpack.c.l.b16 %v409
        %v433 = vpack.c.b16 %v426, %v425
        %v434 = vpack.c.b16 %v428, %v427
        %v435 = vpack.c.b16 %v430, %v429
        %v436 = vpack.c.b16 %v432, %v431
        %v442 = vsel %vm365, %v383, 0
        %444 = vmatprep.subr.bf16.mxu0 0
        %445 = vmatpush1.bf16.msra.mxu0 %v433
        %446 = vmatprep.subr.bf16.mxu0 0
        %447 = vmatpush1.bf16.msra.mxu0 %v434
        %448 = vmatprep.subr.bf16.mxu0 0
        %449 = vmatpush1.bf16.msra.mxu0 %v435
        %450 = vmatprep.subr.bf16.mxu0 0
        %451 = vmatpush1.bf16.msra.mxu0 %v436
        %452 = vmatprep.subr.bf16.mxu0 0
        %453 = vmatpush1.bf16.msra.mxu0 0
        %454 = vmatprep.subr.bf16.mxu0 0
        %455 = vmatpush1.bf16.msra.mxu0 0
        %456 = vmatprep.subr.bf16.mxu0 0
        %457 = vmatpush1.bf16.msra.mxu0 0
        %458 = vmatprep.subr.bf16.mxu0 0
        %459 = vmatpush1.bf16.msra.mxu0 0
        %460 = vmatprep.subr.bf16.mxu0 0
        %461 = vmatpush1.bf16.msra.mxu0 0
        %462 = vmatprep.subr.bf16.mxu0 0
        %463 = vmatpush1.bf16.msra.mxu0 0
        %464 = vmatprep.subr.bf16.mxu0 0
        %465 = vmatpush1.bf16.msra.mxu0 0
        %466 = vmatprep.subr.bf16.mxu0 0
        %467 = vmatpush1.bf16.msra.mxu0 0
        %468 = vmatprep.subr.bf16.mxu0 0
        %469 = vmatpush1.bf16.msra.mxu0 0
        %470 = vmatprep.subr.bf16.mxu0 0
        %471 = vmatpush1.bf16.msra.mxu0 0
        %472 = vmatprep.subr.bf16.mxu0 0
        %473 = vmatpush1.bf16.msra.mxu0 0
        %474 = vmatprep.subr.bf16.mxu0 0
        %475 = vmatpush1.bf16.msra.mxu0 0
        %476 = vmatprep.mubr.bf16.mxu0 0
        %477 = vmatmul.mubr.bf16.gmra.mrb[0].mxu0 %v442
        %v478 = vpop.f32.mrb[0].mxu0
        %v479 = vadd.f32 %v415, %v478
        %v480 = vpop.f32.mrb[0].mxu0
        %v481 = vpop.f32.mrb[0].mxu0
        %v482 = vadd.f32 %v415, %v481
        %v483 = vpop.f32.mrb[0].mxu0
        %484 = vdwg.mxu0
        %vm485 = vcmp.gt.f32.partialorder %v479, 0.0
        %vm486 = vcmp.gt.f32.partialorder %v482, 0.0
        %v487 = vmul.f32 %v479, 0.2
        %v488 = vmul.f32 %v482, 0.2
        %v489 = vsel %vm485, %v479, %v487
        %v490 = vsel %vm486, %v482, %v488
        %v491 = vpack.c.bf16 %v490, %v489
        %v493 = vunpack.c.l.b16 %v491
        %v494 = vunpack.c.h.b16 %v491
        %v495 = vpack.c.b16 %v493, %v493
        %v496 = vpack.c.b16 %v494, %v494
        %vm499 = vcmask 519168
        %500 = vst.msk [vmem:[%s339] sm:$0xf] %vm499, %v495
        %vm501 = vcmask 516096
        %vm502 = vsmask.f32 256
        %vm503 = vmand %vm501, %vm502
        %v504 = vld [vmem:[%s339 + $0x4] sm:$0x1]
        %v505 = vsel %vm503, %v496, %v504
        %506 = vst [vmem:[%s339 + $0x4] sm:$0x1] %v505
        %v507 = vsel %vm365, %v489, 0.0
        %508 = vadd.xlane.f32.xlu0 %v507
        %v509 = vpop.xlane.xlu0 %508
        %v510 = vsel %vm367, %v490, 0.0
        %511 = vadd.xlane.f32.xlu0 %v510
        %v512 = vpop.xlane.xlu0 %511
        %vm513 = vcmask 7168
        %514 = vst.msk [vmem:[%s349] sm:$0xff] %vm513, %v509
        %vm515 = vcmask 0
        %516 = vst.msk [vmem:[%s349 + $0x8] sm:$0x1] %vm515, %v512
        // Predicated region
        $region45: #{discriminator_forward.10} parent=39 // pred_check
          %p517 = pneg %p353
        $region46: #{discriminator_forward.10} parent=39 // pred_check_branch
          %519 = sbr.rel (%p517) target = $region48
        $region47: #{discriminator_forward.10} parent=39 // pred_region
          %v520 = vld [vmem:[#allocation2] sm:$0x1]
          %v521 = vmul.f32 %v520, 0.11111111
          %v522 = vld [vmem:[%s3] sm:$0x1]
          %v523 = vmul.f32 %v521, %v522
          %v524 = vsel %vm367, %v523, 0.0
          %525 = vadd.xlane.f32.xlu0 %v524
          %v526 = vpop.xlane.xlu0 %525
          %v527 = vld [vmem:[#allocation3] sm:$0x1]
          %v528 = vld [vmem:[%s4] sm:$0x1]
          %v529 = vmul.f32 %v527, %v528
          %v530 = vsel %vm367, %v529, 0.0
          %531 = vadd.xlane.f32.xlu0 %v530
          %v532 = vpop.xlane.xlu0 %531
          %v533 = vlaneseq
          %v534 = vand.u32 %v533, 127
          %vm535 = vcmp.eq.s32.totalorder %v534, 0
          %v536 = vsel %vm535, %v526, 0.0
          %vm537 = vcmp.eq.s32.totalorder %v534, 1
          %v538 = vsel %vm537, %v532, 0.0
          %v539 = vadd.f32 %v536, %v538
          %540 = vst [vmem:[%s309] sm:$0x1] %v539
        $region48: #{discriminator_forward.10} parent=39 // pred_fallthru
          _
        %s541 = smul.u32 2, %s27
        %p542 = scmp.lt.s32.totalorder %s26, 1
        %s543 = scalar_select %p542, %s26, 1
        %p544 = scmp.lt.s32.totalorder %s541, 1
        %s545 = scalar_select %p544, %s541, 1
        %s546 = smul.addr %s543, 2
        %s547 = sadd.s32 %s545, %s546
        %s548 = smul.addr %s547, 4
        %s549 = scalar_lea.vmem %s5, %s548
        %s550 = sand.u32 %s182, 1
        %s551 = scalar_lea.sflag [#allocation5], %s550
        %s552 = sand.u32 %s182, 1
        %s553 = scalar_lea.vmem [#allocation4], %s552
        %s554 = smul.u32 2, %s27
        %p555 = scmp.lt.s32.totalorder %s26, 1
        %s556 = scalar_select %p555, %s26, 1
        %p557 = scmp.lt.s32.totalorder %s554, 1
        %s558 = scalar_select %p557, %s554, 1
        %s559 = smul.addr %s556, 2
        %s560 = sadd.s32 %s558, %s559
        %s561 = smul.addr %s560, 8
        %s562 = scalar_lea.vmem %s7, %s561
        // Predicated region
        $region49: #{discriminator_forward.10} parent=39 // pred_check
          %p563 = pneg %p166
        $region50: #{discriminator_forward.10} parent=39 // pred_check_branch
          %565 = sbr.rel (%p563) target = $region52
        $region51: #{discriminator_forward.10} parent=39 // pred_region
          %s566 = smul.u32 2, %s27
        $region52: #{discriminator_forward.10} parent=39 // pred_fallthru
          _
        // Predicated region
        $region53: #{discriminator_forward.10} parent=39 // pred_check
          %p567 = pneg %p192
        $region54: #{discriminator_forward.10} parent=39 // pred_check_branch
          %569 = sbr.rel (%p567) target = $region56
        $region55: #{discriminator_forward.10} parent=39 // pred_region
          %s571 = ssub.s32 16, 16
          %572 = vsyncadd %s551, %s571
          %s573 = smul.addr %s26, 16
          %s574 = scalar_lea.hbm %s6, %s573
          %s576 = sshll.u32 %s553, 4
          %s577 = int_to_ptr.vmem [resolvable:$true] %s576
          %579 = dma.vmem_to_hbm [thread:$0]  %s577, 16, %s574, %s551
        $region56: #{discriminator_forward.10} parent=39 // pred_fallthru
          _
        // Predicated region
        $region57: #{discriminator_forward.10} parent=39 // pred_check
          %p580 = pneg %p220
        $region58: #{discriminator_forward.10} parent=39 // pred_check_branch
          %582 = sbr.rel (%p580) target = $region60
        $region59: #{discriminator_forward.10} parent=39 // pred_region
          %s583 = smul.u32 2, %s27
        $region60: #{discriminator_forward.10} parent=39 // pred_fallthru
          _
      $region40: #{discriminator_forward.10} parent=5 // pred_fallthru
        _
      %p584 = scmp.le.s32.totalorder 2, %s17
      // Predicated region
      $region61: #{discriminator_forward.10} parent=5 // pred_check
        %p585 = pneg %p584
      $region62: #{discriminator_forward.10} parent=5 // pred_check_branch
        %587 = sbr.rel (%p585) target = $region64
      $region63: #{discriminator_forward.10} parent=5 // pred_region
        %s588 = ssub.s32 %s17, 2
        // Predicated region
        $region65: #{discriminator_forward.10} parent=63 // pred_check
          %p589 = pneg %p172
        $region66: #{discriminator_forward.10} parent=63 // pred_check_branch
          %591 = sbr.rel (%p589) target = $region68
        $region67: #{discriminator_forward.10} parent=63 // pred_region
          %s592 = smul.u32 2, %s29
          %p593 = scmp.lt.s32.totalorder %s28, 1
          %s594 = scalar_select %p593, %s28, 1
          %p595 = scmp.lt.s32.totalorder %s592, 1
          %s596 = scalar_select %p595, %s592, 1
          %s597 = smul.addr %s594, 2
          %s598 = sadd.s32 %s596, %s597
          %s599 = smul.addr %s598, 4
          %s600 = scalar_lea.vmem %s5, %s599
        $region68: #{discriminator_forward.10} parent=63 // pred_fallthru
          _
        // Predicated region
        $region69: #{discriminator_forward.10} parent=63 // pred_check
          %p601 = pneg %p198
        $region70: #{discriminator_forward.10} parent=63 // pred_check_branch
          %603 = sbr.rel (%p601) target = $region72
        $region71: #{discriminator_forward.10} parent=63 // pred_region
          %s604 = sand.u32 %s183, 1
          %s605 = scalar_lea.sflag [#allocation5], %s604
          %s606 = sand.u32 %s183, 1
          %s607 = scalar_lea.vmem [#allocation4], %s606
          %608 = dma.done %s605, 16
        $region72: #{discriminator_forward.10} parent=63 // pred_fallthru
          _
        // Predicated region
        $region73: #{discriminator_forward.10} parent=63 // pred_check
          %p609 = pneg %p226
        $region74: #{discriminator_forward.10} parent=63 // pred_check_branch
          %611 = sbr.rel (%p609) target = $region76
        $region75: #{discriminator_forward.10} parent=63 // pred_region
          %s612 = smul.u32 2, %s29
          %p613 = scmp.lt.s32.totalorder %s28, 1
          %s614 = scalar_select %p613, %s28, 1
          %p615 = scmp.lt.s32.totalorder %s612, 1
          %s616 = scalar_select %p615, %s612, 1
          %s617 = smul.addr %s614, 2
          %s618 = sadd.s32 %s616, %s617
          %s619 = smul.addr %s618, 8
          %s620 = scalar_lea.vmem %s7, %s619
        $region76: #{discriminator_forward.10} parent=63 // pred_fallthru
          _
      $region64: #{discriminator_forward.10} parent=5 // pred_fallthru
        _
    $region6: #{discriminator_forward.10} parent=1 // loop_footer
      %s21 = sadd.s32 1, %s17
    $region7: #{discriminator_forward.10} parent=1 // loop_footer_branch
      %16 = sbr.rel target = $region3
    $region8: #{discriminator_forward.10} parent=1 // loop_exit
      _
    %621 = vsyncpa [#allocation5], 1
    %s622 = scalar_lea.sflag [#allocation5], 1
    %623 = vsyncpa %s622, 1

// kernel: discriminator_forward.11
$region0: #{discriminator_forward.11}
  #allocation0 [shape = 'u32[]', space=smem, size = 0x4, offset = 0x4, fixed_abs, tag = 'smem constant byte address 0x4 - core index']
  #allocation1 [shape = 'u32[144,128]{1,0:T(1,128)}', space=vmem, size = 0x12000, scoped, tag = 'internal scratch']
  #allocation2 [shape = 'f32[1,1]{1,0:T(1,128)S(1)}', space=vmem, size = 0x200, scoped, tag = 'scoped memory for discriminator_forward.11']
  %s0 = inlined_call_operand.vmem [shape: bf16[2,5,5,64], index: 0, kind: input, shape index: {}]
  %s1 = inlined_call_operand.vmem [shape: f32[16,64], index: 1, kind: input, shape index: {}]
  %s2 = inlined_call_operand.<no memory space> [shape: f32[1,1], index: 2, kind: input, shape index: {}]
  %s3 = inlined_call_operand.hbm [shape: f32[2,2,2], index: 3, kind: output, shape index: {}]
  %s4 = sld [smem:[#allocation0]]
  $region45: #{discriminator_forward.11} parent=0
    _
  %s6 = ssub.s32 1, %s4
  %s7 = scalar_select 0, %s6, %s4
  %v8 = vstv %s2
  %9 = vst [vmem:[#allocation2] sm:$0x1] %v8
  $region1: #{discriminator_forward.11} parent=0
    #allocation3 [shape = 'u8[2048]{0}', space=vmem, size = 0x800, scoped, tag = 'output window, operand 0']
    #allocation4 [shape = 's32[2]{0}', space=sflag, size = 0x8, scoped, tag = 'scoped memory for discriminator_forward.11']
    %10 = vsyncpa [#allocation4], 0
    %s11 = scalar_lea.sflag [#allocation4], 1
    %12 = vsyncpa %s11, 0
    loop: start=0, step=1, limit=4
    $region2: #{discriminator_forward.11} parent=1 // loop_pre_header
      _
    $region3: #{discriminator_forward.11} parent=1 // loop_header
      %s14 = sphi 0, %s18
      %p15 = scmp.ge.s32.totalorder %s14, 4
      %s21 = sphi 0, %s33
      %s22 = sphi 0, %s29
      %s23 = sphi 0, %s21
      %s24 = sphi 0, %s22
      %s25 = sphi 0, %s23
      %s26 = sphi 0, %s24
      %s36 = sphi 0, %s38
      %s39 = sphi 0, %s36
      %s40 = sphi 0, %s39
      %s56 = sphi 0, %s40
      %s60 = sphi 0, %s60
      %s62 = sphi 0, %s60
      %s63 = sphi 0, %s62
      %s77 = sphi 0, %s63
      %s81 = sphi 0, %s81
      %s83 = sphi 0, %s81
      %s84 = sphi 0, %s83
      %s98 = sphi 0, %s84
      %s106 = sphi 0, %s108
      %s109 = sphi 0, %s106
      %s110 = sphi 0, %s109
      %s126 = sphi 0, %s110
    $region4: #{discriminator_forward.11} parent=1 // loop_header_branch
      %17 = sbr.rel (%p15) target = $region8
    $region5: #{discriminator_forward.11} parent=1 // loop_body
      %s19 = ssub.s32 %s14, 1
      %s20 = ssub.s32 %s14, 2
      %s27 = sadd.s32 1, %s22
      %p28 = scmp.ge.s32.totalorder %s27, 1
      %s29 = scalar_select %p28, 0, %s27
      %s30 = sadd.s32 1, %s21
      %s31 = scalar_select %p28, %s30, %s21
      %p32 = scmp.ge.s32.totalorder %s31, 2
      %s33 = scalar_select %p32, 0, %s31
      %s34 = ssub.s32 %s21, %s33
      %p35 = scmp.eq.s32.totalorder %s34, 0
      %s37 = sadd.s32 %s36, 1
      %s38 = scalar_select %p35, %s36, %s37
      %p41 = pneg %p35
      %p42 = scmp.eq.s32.totalorder %s14, 1
      %p43 = por %p41, %p42
      %p44 = scmp.ne.s32.totalorder %s36, %s39
      %p45 = scmp.eq.s32.totalorder %s14, 0
      %p46 = por %p44, %p45
      %p47 = scmp.ne.s32.totalorder %s36, %s39
      %p48 = scmp.eq.s32.totalorder %s19, 1
      %p49 = por %p47, %p48
      %p50 = scmp.ne.s32.totalorder %s39, %s40
      %p51 = scmp.eq.s32.totalorder %s19, 0
      %p52 = por %p50, %p51
      %p53 = scmp.ne.s32.totalorder %s39, %s40
      %p54 = scmp.eq.s32.totalorder %s20, 1
      %p55 = por %p53, %p54
      %p57 = scmp.ne.s32.totalorder %s40, %s56
      %p58 = scmp.eq.s32.totalorder %s20, 0
      %p59 = por %p57, %p58
      %s61 = sadd.s32 %s60, 1
      %p64 = scmp.eq.s32.totalorder %s14, 1
      %p65 = scmp.ne.s32.totalorder %s60, %s62
      %p66 = scmp.eq.s32.totalorder %s14, 0
      %p67 = por %p65, %p66
      %p68 = scmp.ne.s32.totalorder %s60, %s62
      %p69 = scmp.eq.s32.totalorder %s19, 1
      %p70 = por %p68, %p69
      %p71 = scmp.ne.s32.totalorder %s62, %s63
      %p72 = scmp.eq.s32.totalorder %s19, 0
      %p73 = por %p71, %p72
      %p74 = scmp.ne.s32.totalorder %s62, %s63
      %p75 = scmp.eq.s32.totalorder %s20, 1
      %p76 = por %p74, %p75
      %p78 = scmp.ne.s32.totalorder %s63, %s77
      %p79 = scmp.eq.s32.totalorder %s20, 0
      %p80 = por %p78, %p79
      %s82 = sadd.s32 %s81, 1
      %p85 = scmp.eq.s32.totalorder %s14, 1
      %p86 = scmp.ne.s32.totalorder %s81, %s83
      %p87 = scmp.eq.s32.totalorder %s14, 0
      %p88 = por %p86, %p87
      %p89 = scmp.ne.s32.totalorder %s81, %s83
      %p90 = scmp.eq.s32.totalorder %s19, 1
      %p91 = por %p89, %p90
      %p92 = scmp.ne.s32.totalorder %s83, %s84
      %p93 = scmp.eq.s32.totalorder %s19, 0
      %p94 = por %p92, %p93
      %p95 = scmp.ne.s32.totalorder %s83, %s84
      %p96 = scmp.eq.s32.totalorder %s20, 1
      %p97 = por %p95, %p96
      %p99 = scmp.ne.s32.totalorder %s84, %s98
      %p100 = scmp.eq.s32.totalorder %s20, 0
      %p101 = por %p99, %p100
      %s102 = ssub.s32 %s21, %s33
      %s103 = ssub.s32 %s22, %s29
      %s104 = sor.u32 %s102, %s103
      %p105 = scmp.eq.s32.totalorder %s104, 0
      %s107 = sadd.s32 %s106, 1
      %s108 = scalar_select %p105, %s106, %s107
      %p111 = pneg %p105
      %p112 = scmp.eq.s32.totalorder %s14, 1
      %p113 = por %p111, %p112
      %p114 = scmp.ne.s32.totalorder %s106, %s109
      %p115 = scmp.eq.s32.totalorder %s14, 0
      %p116 = por %p114, %p115
      %p117 = scmp.ne.s32.totalorder %s106, %s109
      %p118 = scmp.eq.s32.totalorder %s19, 1
      %p119 = por %p117, %p118
      %p120 = scmp.ne.s32.totalorder %s109, %s110
      %p121 = scmp.eq.s32.totalorder %s19, 0
      %p122 = por %p120, %p121
      %p123 = scmp.ne.s32.totalorder %s109, %s110
      %p124 = scmp.eq.s32.totalorder %s20, 1
      %p125 = por %p123, %p124
      %p127 = scmp.ne.s32.totalorder %s110, %s126
      %p128 = scmp.eq.s32.totalorder %s20, 0
      %p129 = por %p127, %p128
      %p130 = scmp.le.s32.totalorder 1, %s14
      %p131 = scmp.lt.s32.totalorder %s14, 3
      %p132 = pnand %p130, %p131
      %p133 = pneg %p132
      // Predicated region
      $region9: #{discriminator_forward.11} parent=5 // pred_check
        _
      $region10: #{discriminator_forward.11} parent=5 // pred_check_branch
        %135 = sbr.rel (%p132) target = $region12
      $region11: #{discriminator_forward.11} parent=5 // pred_region
        %s136 = ssub.s32 %s14, 1
        // Predicated region
        $region13: #{discriminator_forward.11} parent=11 // pred_check
          %p137 = pneg %p73
        $region14: #{discriminator_forward.11} parent=11 // pred_check_branch
          %139 = sbr.rel (%p137) target = $region16
        $region15: #{discriminator_forward.11} parent=11 // pred_region
          _
        $region16: #{discriminator_forward.11} parent=11 // pred_fallthru
          _
        // Predicated region
        $region17: #{discriminator_forward.11} parent=11 // pred_check
          %p140 = pneg %p94
        $region18: #{discriminator_forward.11} parent=11 // pred_check_branch
          %142 = sbr.rel (%p140) target = $region20
        $region19: #{discriminator_forward.11} parent=11 // pred_region
          _
        $region20: #{discriminator_forward.11} parent=11 // pred_fallthru
          _
      $region12: #{discriminator_forward.11} parent=5 // pred_fallthru
        _
      %p143 = scmp.lt.s32.totalorder %s14, 2
      // Predicated region
      $region21: #{discriminator_forward.11} parent=5 // pred_check
        %p144 = pneg %p143
      $region22: #{discriminator_forward.11} parent=5 // pred_check_branch
        %146 = sbr.rel (%p144) target = $region24
      $region23: #{discriminator_forward.11} parent=5 // pred_region
        // Predicated region
        $region25: #{discriminator_forward.11} parent=23 // pred_check
          %p147 = pneg %p46
        $region26: #{discriminator_forward.11} parent=23 // pred_check_branch
          %149 = sbr.rel (%p147) target = $region28
        $region27: #{discriminator_forward.11} parent=23 // pred_region
          %p150 = scmp.lt.s32.totalorder %s21, 1
          %s151 = scalar_select %p150, %s21, 1
          %s152 = smul.addr %s151, 5
          %s153 = smul.addr %s152, 4
          %s154 = scalar_lea.vmem %s0, %s153
        $region28: #{discriminator_forward.11} parent=23 // pred_fallthru
          _
      $region24: #{discriminator_forward.11} parent=5 // pred_fallthru
        _
      %p155 = scmp.le.s32.totalorder 1, %s14
      %p156 = scmp.lt.s32.totalorder %s14, 3
      %p157 = pnand %p155, %p156
      %p158 = pneg %p157
      // Predicated region
      $region29: #{discriminator_forward.11} parent=5 // pred_check
        _
      $region30: #{discriminator_forward.11} parent=5 // pred_check_branch
        %160 = sbr.rel (%p157) target = $region32
      $region31: #{discriminator_forward.11} parent=5 // pred_region
        %s161 = ssub.s32 %s14, 1
        %p162 = scmp.lt.s32.totalorder %s23, 1
        %s163 = scalar_select %p162, %s23, 1
        %s164 = smul.addr %s163, 5
        %s165 = smul.addr %s164, 4
        %s166 = scalar_lea.vmem %s0, %s165
        %p167 = pneg %p52
        %p168 = pneg %p49
        %p169 = pneg %p73
        %p170 = pneg %p70
        %p171 = pneg %p94
        %p172 = pneg %p91
        %p173 = pneg %p122
        %p174 = pneg %p119
        %s175 = sand.u32 %s109, 1
        %s176 = scalar_lea.sflag [#allocation4], %s175
        %s177 = sand.u32 %s109, 1
        %s178 = smul.addr %s177, 2
        %s179 = scalar_lea.vmem [#allocation3], %s178
        %p180 = scmp.lt.s32.totalorder %s23, 1
        %s181 = scalar_select %p180, %s23, 1
        %s182 = smul.addr %s181, 5
        %s183 = smul.addr %s182, 4
        %s184 = scalar_lea.vmem %s0, %s183
        %s185 = smul.u32 %s24, 2
        %s186 = smul.addr %s185, 4
        %s187 = scalar_lea.vmem %s184, %s186
        %v188 = vld [vmem:[%s187] sm:$0x7]
        %v189 = vld [vmem:[%s187 + $0x4] sm:$0x7]
        %v190 = vunpack.c.l.bf16 %v188
        %v191 = vunpack.c.l.bf16 %v189
        %v192 = vld [vmem:[%s1] sm:$0x1]
        %v193 = vlaneseq
        %v194 = vshrl.u32 %v193, 7
        %v195 = vsub.s32 0, %v194
        %v196 = vrot.slane %v192, %v195
        %v197 = vmul.f32 %v190, %v196
        %v198 = vmul.f32 %v191, %v196
        %vm199 = vcmask 517120
        %v200 = vsel %vm199, %v197, 0.0
        %201 = vadd.xlane.f32.xlu0 %v200
        %v202 = vpop.xlane.xlu0 %201
        %v203 = vsel %vm199, %v198, 0.0
        %204 = vadd.xlane.f32.xlu0 %v203
        %v205 = vpop.xlane.xlu0 %204
        %v206 = vadd.f32 %v202, 0.0
        %v207 = vadd.f32 %v205, 0.0
        %v208 = vld [vmem:[%s1 + $0x1] sm:$0x1]
        %v209 = vlaneseq
        %v210 = vshrl.u32 %v209, 7
        %v211 = vsub.s32 0, %v210
        %v212 = vrot.slane %v208, %v211
        %v213 = vmul.f32 %v190, %v212
        %v214 = vmul.f32 %v191, %v212
        %vm215 = vcmask 518145
        %v216 = vsel %vm215, %v213, 0.0
        %217 = vadd.xlane.f32.xlu0 %v216
        %v218 = vpop.xlane.xlu0 %217
        %v219 = vsel %vm215, %v214, 0.0
        %220 = vadd.xlane.f32.xlu0 %v219
        %v221 = vpop.xlane.xlu0 %220
        %v224 = vrot.slane %v218, 1
        %v225 = vrot.slane %v221, 1
        %v228 = vadd.f32 %v206, %v224
        %v229 = vadd.f32 %v207, %v225
        %v230 = vld [vmem:[%s1 + $0x2] sm:$0x1]
        %v231 = vlaneseq
        %v232 = vshrl.u32 %v231, 7
        %v233 = vsub.s32 0, %v232
        %v234 = vrot.slane %v230, %v233
        %v235 = vmul.f32 %v190, %v234
        %v236 = vmul.f32 %v191, %v234
        %vm237 = vcmask 519170
        %v238 = vsel %vm237, %v235, 0.0
        %239 = vadd.xlane.f32.xlu0 %v238
        %v240 = vpop.xlane.xlu0 %239
        %v241 = vsel %vm237, %v236, 0.0
        %242 = vadd.xlane.f32.xlu0 %v241
        %v243 = vpop.xlane.xlu0 %242
        %v246 = vrot.slane %v240, 2
        %v247 = vrot.slane %v243, 2
        %v250 = vadd.f32 %v228, %v246
        %v251 = vadd.f32 %v229, %v247
        %v252 = vld [vmem:[%s1 + $0x3] sm:$0x1]
        %v253 = vlaneseq
        %v254 = vshrl.u32 %v253, 7
        %v255 = vsub.s32 0, %v254
        %v256 = vrot.slane %v252, %v255
        %v257 = vmul.f32 %v190, %v256
        %v258 = vmul.f32 %v191, %v256
        %vm259 = vcmask 520195
        %v260 = vsel %vm259, %v257, 0.0
        %261 = vadd.xlane.f32.xlu0 %v260
        %v262 = vpop.xlane.xlu0 %261
        %v263 = vsel %vm259, %v258, 0.0
        %264 = vadd.xlane.f32.xlu0 %v263
        %v265 = vpop.xlane.xlu0 %264
        %v268 = vrot.slane %v262, 3
        %v269 = vrot.slane %v265, 3
        %v272 = vadd.f32 %v250, %v268
        %v273 = vadd.f32 %v251, %v269
        %s274 = sadd.s32 %s185, 1
        %s275 = smul.addr %s274, 4
        %s276 = scalar_lea.vmem %s184, %s275
        %v277 = vld [vmem:[%s276] sm:$0x7]
        %v278 = vld [vmem:[%s276 + $0x4] sm:$0x7]
        %v279 = vunpack.c.l.bf16 %v277
        %v280 = vunpack.c.l.bf16 %v278
        %v281 = vld [vmem:[%s1 + $0x4] sm:$0x1]
        %v282 = vlaneseq
        %v283 = vshrl.u32 %v282, 7
        %v284 = vsub.s32 0, %v283
        %v285 = vrot.slane %v281, %v284
        %v286 = vmul.f32 %v279, %v285
        %v287 = vmul.f32 %v280, %v285
        %v288 = vsel %vm199, %v286, 0.0
        %289 = vadd.xlane.f32.xlu0 %v288
        %v290 = vpop.xlane.xlu0 %289
        %v291 = vsel %vm199, %v287, 0.0
        %292 = vadd.xlane.f32.xlu0 %v291
        %v293 = vpop.xlane.xlu0 %292
        %v294 = vadd.f32 %v272, %v290
        %v295 = vadd.f32 %v273, %v293
        %v296 = vld [vmem:[%s1 + $0x5] sm:$0x1]
        %v297 = vlaneseq
        %v298 = vshrl.u32 %v297, 7
        %v299 = vsub.s32 0, %v298
        %v300 = vrot.slane %v296, %v299
        %v301 = vmul.f32 %v279, %v300
        %v302 = vmul.f32 %v280, %v300
        %v303 = vsel %vm215, %v301, 0.0
        %304 = vadd.xlane.f32.xlu0 %v303
        %v305 = vpop.xlane.xlu0 %304
        %v306 = vsel %vm215, %v302, 0.0
        %307 = vadd.xlane.f32.xlu0 %v306
        %v308 = vpop.xlane.xlu0 %307
        %v311 = vrot.slane %v305, 1
        %v312 = vrot.slane %v308, 1
        %v315 = vadd.f32 %v294, %v311
        %v316 = vadd.f32 %v295, %v312
        %v317 = vld [vmem:[%s1 + $0x6] sm:$0x1]
        %v318 = vlaneseq
        %v319 = vshrl.u32 %v318, 7
        %v320 = vsub.s32 0, %v319
        %v321 = vrot.slane %v317, %v320
        %v322 = vmul.f32 %v279, %v321
        %v323 = vmul.f32 %v280, %v321
        %v324 = vsel %vm237, %v322, 0.0
        %325 = vadd.xlane.f32.xlu0 %v324
        %v326 = vpop.xlane.xlu0 %325
        %v327 = vsel %vm237, %v323, 0.0
        %328 = vadd.xlane.f32.xlu0 %v327
        %v329 = vpop.xlane.xlu0 %328
        %v332 = vrot.slane %v326, 2
        %v333 = vrot.slane %v329, 2
        %v336 = vadd.f32 %v315, %v332
        %v337 = vadd.f32 %v316, %v333
        %v338 = vld [vmem:[%s1 + $0x7] sm:$0x1]
        %v339 = vlaneseq
        %v340 = vshrl.u32 %v339, 7
        %v341 = vsub.s32 0, %v340
        %v342 = vrot.slane %v338, %v341
        %v343 = vmul.f32 %v279, %v342
        %v344 = vmul.f32 %v280, %v342
        %v345 = vsel %vm259, %v343, 0.0
        %346 = vadd.xlane.f32.xlu0 %v345
        %v347 = vpop.xlane.xlu0 %346
        %v348 = vsel %vm259, %v344, 0.0
        %349 = vadd.xlane.f32.xlu0 %v348
        %v350 = vpop.xlane.xlu0 %349
        %v353 = vrot.slane %v347, 3
        %v354 = vrot.slane %v350, 3
        %v357 = vadd.f32 %v336, %v353
        %v358 = vadd.f32 %v337, %v354
        %s359 = sadd.s32 %s185, 2
        %s360 = smul.addr %s359, 4
        %s361 = scalar_lea.vmem %s184, %s360
        %v362 = vld [vmem:[%s361] sm:$0x7]
        %v363 = vld [vmem:[%s361 + $0x4] sm:$0x7]
        %v364 = vunpack.c.l.bf16 %v362
        %v365 = vunpack.c.l.bf16 %v363
        %v366 = vld [vmem:[%s1 + $0x8] sm:$0x1]
        %v367 = vlaneseq
        %v368 = vshrl.u32 %v367, 7
        %v369 = vsub.s32 0, %v368
        %v370 = vrot.slane %v366, %v369
        %v371 = vmul.f32 %v364, %v370
        %v372 = vmul.f32 %v365, %v370
        %v373 = vsel %vm199, %v371, 0.0
        %374 = vadd.xlane.f32.xlu0 %v373
        %v375 = vpop.xlane.xlu0 %374
        %v376 = vsel %vm199, %v372, 0.0
        %377 = vadd.xlane.f32.xlu0 %v376
        %v378 = vpop.xlane.xlu0 %377
        %v379 = vadd.f32 %v357, %v375
        %v380 = vadd.f32 %v358, %v378
        %v381 = vld [vmem:[%s1 + $0x9] sm:$0x1]
        %v382 = vlaneseq
        %v383 = vshrl.u32 %v382, 7
        %v384 = vsub.s32 0, %v383
        %v385 = vrot.slane %v381, %v384
        %v386 = vmul.f32 %v364, %v385
        %v387 = vmul.f32 %v365, %v385
        %v388 = vsel %vm215, %v386, 0.0
        %389 = vadd.xlane.f32.xlu0 %v388
        %v390 = vpop.xlane.xlu0 %389
        %v391 = vsel %vm215, %v387, 0.0
        %392 = vadd.xlane.f32.xlu0 %v391
        %v393 = vpop.xlane.xlu0 %392
        %v396 = vrot.slane %v390, 1
        %v397 = vrot.slane %v393, 1
        %v400 = vadd.f32 %v379, %v396
        %v401 = vadd.f32 %v380, %v397
        %v402 = vld [vmem:[%s1 + $0xa] sm:$0x1]
        %v403 = vlaneseq
        %v404 = vshrl.u32 %v403, 7
        %v405 = vsub.s32 0, %v404
        %v406 = vrot.slane %v402, %v405
        %v407 = vmul.f32 %v364, %v406
        %v408 = vmul.f32 %v365, %v406
        %v409 = vsel %vm237, %v407, 0.0
        %410 = vadd.xlane.f32.xlu0 %v409
        %v411 = vpop.xlane.xlu0 %410
        %v412 = vsel %vm237, %v408, 0.0
        %413 = vadd.xlane.f32.xlu0 %v412
        %v414 = vpop.xlane.xlu0 %413
        %v417 = vrot.slane %v411, 2
        %v418 = vrot.slane %v414, 2
        %v421 = vadd.f32 %v400, %v417
        %v422 = vadd.f32 %v401, %v418
        %v423 = vld [vmem:[%s1 + $0xb] sm:$0x1]
        %v424 = vlaneseq
        %v425 = vshrl.u32 %v424, 7
        %v426 = vsub.s32 0, %v425
        %v427 = vrot.slane %v423, %v426
        %v428 = vmul.f32 %v364, %v427
        %v429 = vmul.f32 %v365, %v427
        %v430 = vsel %vm259, %v428, 0.0
        %431 = vadd.xlane.f32.xlu0 %v430
        %v432 = vpop.xlane.xlu0 %431
        %v433 = vsel %vm259, %v429, 0.0
        %434 = vadd.xlane.f32.xlu0 %v433
        %v435 = vpop.xlane.xlu0 %434
        %v438 = vrot.slane %v432, 3
        %v439 = vrot.slane %v435, 3
        %v442 = vadd.f32 %v421, %v438
        %v443 = vadd.f32 %v422, %v439
        %s444 = sadd.s32 %s185, 3
        %s445 = smul.addr %s444, 4
        %s446 = scalar_lea.vmem %s184, %s445
        %v447 = vld [vmem:[%s446] sm:$0x7]
        %v448 = vld [vmem:[%s446 + $0x4] sm:$0x7]
        %v449 = vunpack.c.l.bf16 %v447
        %v450 = vunpack.c.l.bf16 %v448
        %v451 = vld [vmem:[%s1 + $0xc] sm:$0x1]
        %v452 = vlaneseq
        %v453 = vshrl.u32 %v452, 7
        %v454 = vsub.s32 0, %v453
        %v455 = vrot.slane %v451, %v454
        %v456 = vmul.f32 %v449, %v455
        %v457 = vmul.f32 %v450, %v455
        %v458 = vsel %vm199, %v456, 0.0
        %459 = vadd.xlane.f32.xlu0 %v458
        %v460 = vpop.xlane.xlu0 %459
        %v461 = vsel %vm199, %v457, 0.0
        %462 = vadd.xlane.f32.xlu0 %v461
        %v463 = vpop.xlane.xlu0 %462
        %v464 = vadd.f32 %v442, %v460
        %v465 = vadd.f32 %v443, %v463
        %v466 = vld [vmem:[%s1 + $0xd] sm:$0x1]
        %v467 = vlaneseq
        %v468 = vshrl.u32 %v467, 7
        %v469 = vsub.s32 0, %v468
        %v470 = vrot.slane %v466, %v469
        %v471 = vmul.f32 %v449, %v470
        %v472 = vmul.f32 %v450, %v470
        %v473 = vsel %vm215, %v471, 0.0
        %474 = vadd.xlane.f32.xlu0 %v473
        %v475 = vpop.xlane.xlu0 %474
        %v476 = vsel %vm215, %v472, 0.0
        %477 = vadd.xlane.f32.xlu0 %v476
        %v478 = vpop.xlane.xlu0 %477
        %v481 = vrot.slane %v475, 1
        %v482 = vrot.slane %v478, 1
        %v485 = vadd.f32 %v464, %v481
        %v486 = vadd.f32 %v465, %v482
        %v487 = vld [vmem:[%s1 + $0xe] sm:$0x1]
        %v488 = vlaneseq
        %v489 = vshrl.u32 %v488, 7
        %v490 = vsub.s32 0, %v489
        %v491 = vrot.slane %v487, %v490
        %v492 = vmul.f32 %v449, %v491
        %v493 = vmul.f32 %v450, %v491
        %v494 = vsel %vm237, %v492, 0.0
        %495 = vadd.xlane.f32.xlu0 %v494
        %v496 = vpop.xlane.xlu0 %495
        %v497 = vsel %vm237, %v493, 0.0
        %498 = vadd.xlane.f32.xlu0 %v497
        %v499 = vpop.xlane.xlu0 %498
        %v502 = vrot.slane %v496, 2
        %v503 = vrot.slane %v499, 2
        %v506 = vadd.f32 %v485, %v502
        %v507 = vadd.f32 %v486, %v503
        %v508 = vld [vmem:[%s1 + $0xf] sm:$0x1]
        %v509 = vlaneseq
        %v510 = vshrl.u32 %v509, 7
        %v511 = vsub.s32 0, %v510
        %v512 = vrot.slane %v508, %v511
        %v513 = vmul.f32 %v449, %v512
        %v514 = vmul.f32 %v450, %v512
        %v515 = vsel %vm259, %v513, 0.0
        %516 = vadd.xlane.f32.xlu0 %v515
        %v517 = vpop.xlane.xlu0 %516
        %v518 = vsel %vm259, %v514, 0.0
        %519 = vadd.xlane.f32.xlu0 %v518
        %v520 = vpop.xlane.xlu0 %519
        %v523 = vrot.slane %v517, 3
        %v524 = vrot.slane %v520, 3
        %v527 = vadd.f32 %v506, %v523
        %v528 = vadd.f32 %v507, %v524
        %v529 = vld [vmem:[#allocation2] sm:$0x1]
        %v531 = vlaneseq
        %v532 = vshrl.u32 %v531, 7
        %v533 = vsub.s32 0, %v532
        %v534 = vrot.slane %v529, %v533
        %535 = vset.pattern.permute.xlu0 0
        %536 = vperm.xlu0 %535, %v534
        %v537 = vpop.permute.xlu0 %536
        %v539 = vadd.f32 %v527, %v537
        %v540 = vadd.f32 %v528, %v537
        %v541 = vtanh.pop %v539
        %v542 = vtanh.pop %v540
        %545 = vset.pattern.permute.xlu0 0
        %546 = vperm.xlu0 %545, %v541
        %v547 = vpop.permute.xlu0 %546
        %548 = vset.pattern.permute.xlu0 0
        %549 = vperm.xlu0 %548, %v542
        %v550 = vpop.permute.xlu0 %549
        %v551 = vlaneseq
        %v552 = vand.u32 %v551, 127
        %v553 = vlaneseq
        %v554 = vshrl.u32 %v553, 7
        %v555 = vsub.s32 %v552, %v554
        %v556 = vrot.slane %v547, %v555
        %v557 = vlaneseq
        %v558 = vshrl.u32 %v557, 7
        %v559 = vsub.s32 %v552, %v558
        %v560 = vrot.slane %v550, %v559
        %vm561 = vcmask 1041409
        %v562 = vsel %vm561, %v560, %v556
        %vm564 = vcmask 9216
        %565 = vst.msk [vmem:[%s179] sm:$0x3] %vm564, %v562
        %s566 = sand.u32 %s109, 1
        %s567 = scalar_lea.sflag [#allocation4], %s566
        %s568 = sand.u32 %s109, 1
        %s569 = smul.addr %s568, 2
        %s570 = scalar_lea.vmem [#allocation3], %s569
        // Predicated region
        $region33: #{discriminator_forward.11} parent=31 // pred_check
          %p571 = pneg %p119
        $region34: #{discriminator_forward.11} parent=31 // pred_check_branch
          %573 = sbr.rel (%p571) target = $region36
        $region35: #{discriminator_forward.11} parent=31 // pred_region
          %s575 = ssub.s32 32, 32
          %576 = vsyncadd %s567, %s575
          %s577 = sadd.s32 %s24, %s23
          %s578 = smul.addr %s577, 32
          %s579 = scalar_lea.hbm %s3, %s578
          %s581 = sshll.u32 %s570, 4
          %s582 = int_to_ptr.vmem [resolvable:$true] %s581
          %584 = dma.vmem_to_hbm [thread:$0]  %s582, 32, %s579, %s567
        $region36: #{discriminator_forward.11} parent=31 // pred_fallthru
          _
      $region32: #{discriminator_forward.11} parent=5 // pred_fallthru
        _
      %p585 = scmp.le.s32.totalorder 2, %s14
      // Predicated region
      $region37: #{discriminator_forward.11} parent=5 // pred_check
        %p586 = pneg %p585
      $region38: #{discriminator_forward.11} parent=5 // pred_check_branch
        %588 = sbr.rel (%p586) target = $region40
      $region39: #{discriminator_forward.11} parent=5 // pred_region
        %s589 = ssub.s32 %s14, 2
        // Predicated region
        $region41: #{discriminator_forward.11} parent=39 // pred_check
          %p590 = pneg %p125
        $region42: #{discriminator_forward.11} parent=39 // pred_check_branch
          %592 = sbr.rel (%p590) target = $region44
        $region43: #{discriminator_forward.11} parent=39 // pred_region
          %s593 = sand.u32 %s110, 1
          %s594 = scalar_lea.sflag [#allocation4], %s593
          %s595 = sand.u32 %s110, 1
          %s596 = smul.addr %s595, 2
          %s597 = scalar_lea.vmem [#allocation3], %s596
          %598 = dma.done %s594, 32
        $region44: #{discriminator_forward.11} parent=39 // pred_fallthru
          _
      $region40: #{discriminator_forward.11} parent=5 // pred_fallthru
        _
    $region6: #{discriminator_forward.11} parent=1 // loop_footer
      %s18 = sadd.s32 1, %s14
    $region7: #{discriminator_forward.11} parent=1 // loop_footer_branch
      %13 = sbr.rel target = $region3
    $region8: #{discriminator_forward.11} parent=1 // loop_exit
      _
    %599 = vsyncpa [#allocation4], 1
    %s600 = scalar_lea.sflag [#allocation4], 1
    %601 = vsyncpa %s600, 1

// kernel: discriminator_forward.9
$region0: #{discriminator_forward.9}
  #allocation0 [shape = 'u32[]', space=smem, size = 0x4, offset = 0x4, fixed_abs, tag = 'smem constant byte address 0x4 - core index']
  #allocation1 [shape = 'u32[144,128]{1,0:T(1,128)}', space=vmem, size = 0x12000, scoped, tag = 'internal scratch']
  %s0 = inlined_call_operand.vmem [shape: bf16[2,6,6,32], index: 0, kind: input, shape index: {}]
  %s1 = inlined_call_operand.vmem [shape: bf16[16,32,64], index: 1, kind: input, shape index: {}]
  %s2 = inlined_call_operand.vmem [shape: f32[1,64], index: 2, kind: input, shape index: {}]
  %s3 = inlined_call_operand.vmem [shape: bf16[2,3,3,64], index: 3, kind: output, shape index: {}]
  %s4 = sld [smem:[#allocation0]]
  $region45: #{discriminator_forward.9} parent=0
    _
  %s6 = ssub.s32 1, %s4
  %s7 = scalar_select 0, %s6, %s4
  loop: start=0, step=1, limit=4
  $region2: #{discriminator_forward.9} parent=0 // loop_pre_header
    _
  $region3: #{discriminator_forward.9} parent=0 // loop_header
    %s9 = sphi 0, %s13
    %p10 = scmp.ge.s32.totalorder %s9, 4
    %s16 = sphi 0, %s28
    %s17 = sphi 0, %s24
    %s18 = sphi 0, %s16
    %s19 = sphi 0, %s17
    %s20 = sphi 0, %s18
    %s21 = sphi 0, %s19
    %s31 = sphi 0, %s33
    %s34 = sphi 0, %s31
    %s35 = sphi 0, %s34
    %s51 = sphi 0, %s35
    %s55 = sphi 0, %s55
    %s57 = sphi 0, %s55
    %s58 = sphi 0, %s57
    %s72 = sphi 0, %s58
    %s76 = sphi 0, %s76
    %s78 = sphi 0, %s76
    %s79 = sphi 0, %s78
    %s93 = sphi 0, %s79
    %s101 = sphi 0, %s103
    %s104 = sphi 0, %s101
    %s105 = sphi 0, %s104
    %s121 = sphi 0, %s105
  $region4: #{discriminator_forward.9} parent=0 // loop_header_branch
    %12 = sbr.rel (%p10) target = $region8
  $region5: #{discriminator_forward.9} parent=0 // loop_body
    %s14 = ssub.s32 %s9, 1
    %s15 = ssub.s32 %s9, 2
    %s22 = sadd.s32 1, %s17
    %p23 = scmp.ge.s32.totalorder %s22, 1
    %s24 = scalar_select %p23, 0, %s22
    %s25 = sadd.s32 1, %s16
    %s26 = scalar_select %p23, %s25, %s16
    %p27 = scmp.ge.s32.totalorder %s26, 2
    %s28 = scalar_select %p27, 0, %s26
    %s29 = ssub.s32 %s16, %s28
    %p30 = scmp.eq.s32.totalorder %s29, 0
    %s32 = sadd.s32 %s31, 1
    %s33 = scalar_select %p30, %s31, %s32
    %p36 = pneg %p30
    %p37 = scmp.eq.s32.totalorder %s9, 1
    %p38 = por %p36, %p37
    %p39 = scmp.ne.s32.totalorder %s31, %s34
    %p40 = scmp.eq.s32.totalorder %s9, 0
    %p41 = por %p39, %p40
    %p42 = scmp.ne.s32.totalorder %s31, %s34
    %p43 = scmp.eq.s32.totalorder %s14, 1
    %p44 = por %p42, %p43
    %p45 = scmp.ne.s32.totalorder %s34, %s35
    %p46 = scmp.eq.s32.totalorder %s14, 0
    %p47 = por %p45, %p46
    %p48 = scmp.ne.s32.totalorder %s34, %s35
    %p49 = scmp.eq.s32.totalorder %s15, 1
    %p50 = por %p48, %p49
    %p52 = scmp.ne.s32.totalorder %s35, %s51
    %p53 = scmp.eq.s32.totalorder %s15, 0
    %p54 = por %p52, %p53
    %s56 = sadd.s32 %s55, 1
    %p59 = scmp.eq.s32.totalorder %s9, 1
    %p60 = scmp.ne.s32.totalorder %s55, %s57
    %p61 = scmp.eq.s32.totalorder %s9, 0
    %p62 = por %p60, %p61
    %p63 = scmp.ne.s32.totalorder %s55, %s57
    %p64 = scmp.eq.s32.totalorder %s14, 1
    %p65 = por %p63, %p64
    %p66 = scmp.ne.s32.totalorder %s57, %s58
    %p67 = scmp.eq.s32.totalorder %s14, 0
    %p68 = por %p66, %p67
    %p69 = scmp.ne.s32.totalorder %s57, %s58
    %p70 = scmp.eq.s32.totalorder %s15, 1
    %p71 = por %p69, %p70
    %p73 = scmp.ne.s32.totalorder %s58, %s72
    %p74 = scmp.eq.s32.totalorder %s15, 0
    %p75 = por %p73, %p74
    %s77 = sadd.s32 %s76, 1
    %p80 = scmp.eq.s32.totalorder %s9, 1
    %p81 = scmp.ne.s32.totalorder %s76, %s78
    %p82 = scmp.eq.s32.totalorder %s9, 0
    %p83 = por %p81, %p82
    %p84 = scmp.ne.s32.totalorder %s76, %s78
    %p85 = scmp.eq.s32.totalorder %s14, 1
    %p86 = por %p84, %p85
    %p87 = scmp.ne.s32.totalorder %s78, %s79
    %p88 = scmp.eq.s32.totalorder %s14, 0
    %p89 = por %p87, %p88
    %p90 = scmp.ne.s32.totalorder %s78, %s79
    %p91 = scmp.eq.s32.totalorder %s15, 1
    %p92 = por %p90, %p91
    %p94 = scmp.ne.s32.totalorder %s79, %s93
    %p95 = scmp.eq.s32.totalorder %s15, 0
    %p96 = por %p94, %p95
    %s97 = ssub.s32 %s16, %s28
    %s98 = ssub.s32 %s17, %s24
    %s99 = sor.u32 %s97, %s98
    %p100 = scmp.eq.s32.totalorder %s99, 0
    %s102 = sadd.s32 %s101, 1
    %s103 = scalar_select %p100, %s101, %s102
    %p106 = pneg %p100
    %p107 = scmp.eq.s32.totalorder %s9, 1
    %p108 = por %p106, %p107
    %p109 = scmp.ne.s32.totalorder %s101, %s104
    %p110 = scmp.eq.s32.totalorder %s9, 0
    %p111 = por %p109, %p110
    %p112 = scmp.ne.s32.totalorder %s101, %s104
    %p113 = scmp.eq.s32.totalorder %s14, 1
    %p114 = por %p112, %p113
    %p115 = scmp.ne.s32.totalorder %s104, %s105
    %p116 = scmp.eq.s32.totalorder %s14, 0
    %p117 = por %p115, %p116
    %p118 = scmp.ne.s32.totalorder %s104, %s105
    %p119 = scmp.eq.s32.totalorder %s15, 1
    %p120 = por %p118, %p119
    %p122 = scmp.ne.s32.totalorder %s105, %s121
    %p123 = scmp.eq.s32.totalorder %s15, 0
    %p124 = por %p122, %p123
    %p125 = scmp.le.s32.totalorder 1, %s9
    %p126 = scmp.lt.s32.totalorder %s9, 3
    %p127 = pnand %p125, %p126
    %p128 = pneg %p127
    // Predicated region
    $region9: #{discriminator_forward.9} parent=5 // pred_check
      _
    $region10: #{discriminator_forward.9} parent=5 // pred_check_branch
      %130 = sbr.rel (%p127) target = $region12
    $region11: #{discriminator_forward.9} parent=5 // pred_region
      %s131 = ssub.s32 %s9, 1
      // Predicated region
      $region13: #{discriminator_forward.9} parent=11 // pred_check
        %p132 = pneg %p68
      $region14: #{discriminator_forward.9} parent=11 // pred_check_branch
        %134 = sbr.rel (%p132) target = $region16
      $region15: #{discriminator_forward.9} parent=11 // pred_region
        _
      $region16: #{discriminator_forward.9} parent=11 // pred_fallthru
        _
      // Predicated region
      $region17: #{discriminator_forward.9} parent=11 // pred_check
        %p135 = pneg %p89
      $region18: #{discriminator_forward.9} parent=11 // pred_check_branch
        %137 = sbr.rel (%p135) target = $region20
      $region19: #{discriminator_forward.9} parent=11 // pred_region
        _
      $region20: #{discriminator_forward.9} parent=11 // pred_fallthru
        _
    $region12: #{discriminator_forward.9} parent=5 // pred_fallthru
      _
    %p138 = scmp.lt.s32.totalorder %s9, 2
    // Predicated region
    $region21: #{discriminator_forward.9} parent=5 // pred_check
      %p139 = pneg %p138
    $region22: #{discriminator_forward.9} parent=5 // pred_check_branch
      %141 = sbr.rel (%p139) target = $region24
    $region23: #{discriminator_forward.9} parent=5 // pred_region
      // Predicated region
      $region25: #{discriminator_forward.9} parent=23 // pred_check
        %p142 = pneg %p41
      $region26: #{discriminator_forward.9} parent=23 // pred_check_branch
        %144 = sbr.rel (%p142) target = $region28
      $region27: #{discriminator_forward.9} parent=23 // pred_region
        %p145 = scmp.lt.s32.totalorder %s16, 1
        %s146 = scalar_select %p145, %s16, 1
        %s147 = smul.addr %s146, 6
        %s148 = smul.addr %s147, 4
        %s149 = scalar_lea.vmem %s0, %s148
      $region28: #{discriminator_forward.9} parent=23 // pred_fallthru
        _
    $region24: #{discriminator_forward.9} parent=5 // pred_fallthru
      _
    %p150 = scmp.le.s32.totalorder 1, %s9
    %p151 = scmp.lt.s32.totalorder %s9, 3
    %p152 = pnand %p150, %p151
    %p153 = pneg %p152
    // Predicated region
    $region29: #{discriminator_forward.9} parent=5 // pred_check
      _
    $region30: #{discriminator_forward.9} parent=5 // pred_check_branch
      %155 = sbr.rel (%p152) target = $region32
    $region31: #{discriminator_forward.9} parent=5 // pred_region
      %s156 = ssub.s32 %s9, 1
      %p157 = scmp.lt.s32.totalorder %s18, 1
      %s158 = scalar_select %p157, %s18, 1
      %s159 = smul.addr %s158, 6
      %s160 = smul.addr %s159, 4
      %s161 = scalar_lea.vmem %s0, %s160
      %p162 = pneg %p47
      %p163 = pneg %p44
      %p164 = pneg %p68
      %p165 = pneg %p65
      %p166 = pneg %p89
      %p167 = pneg %p86
      %p168 = pneg %p117
      %p169 = pneg %p114
      %s170 = smul.u32 3, %s19
      %p171 = scmp.lt.s32.totalorder %s18, 1
      %s172 = scalar_select %p171, %s18, 1
      %p173 = scmp.lt.s32.totalorder %s170, 2
      %s174 = scalar_select %p173, %s170, 2
      %s175 = smul.addr %s172, 3
      %s176 = sadd.s32 %s174, %s175
      %s177 = smul.addr %s176, 2
      %s178 = scalar_lea.vmem %s3, %s177
      %p179 = scmp.lt.s32.totalorder %s18, 1
      %s180 = scalar_select %p179, %s18, 1
      %s181 = smul.addr %s180, 6
      %s182 = smul.addr %s181, 4
      %s183 = scalar_lea.vmem %s0, %s182
      %s184 = smul.u32 3, %s19
      %p185 = scmp.lt.s32.totalorder %s18, 1
      %s186 = scalar_select %p185, %s18, 1
      %p187 = scmp.lt.s32.totalorder %s184, 2
      %s188 = scalar_select %p187, %s184, 2
      %s189 = smul.addr %s186, 3
      %s190 = sadd.s32 %s188, %s189
      %s191 = smul.addr %s190, 2
      %s192 = scalar_lea.vmem %s3, %s191
      %s193 = smul.u32 3, %s19
      %s195 = smul.u32 %s19, 3
      %v196 = vld [vmem:[%s2] sm:$0x1]
      %v198 = vlaneseq
      %v199 = vshrl.u32 %v198, 7
      %v200 = vsub.s32 0, %v199
      %v201 = vrot.slane %v196, %v200
      %v203 = vadd.f32 %v201, 0.0
      %s204 = smul.addr %s195, 4
      %s205 = scalar_lea.vmem %s183, %s204
      %v206 = vld [vmem:[%s205] sm:$0x7]
      %v207 = vld [vmem:[%s205 + $0x4] sm:$0x7]
      %v208 = vld [vmem:[%s205 + $0x8] sm:$0x7]
      %v213 = vunpack.c.l.s4 1966171168
      %v214 = vunpack.c.0.s8 %v213
      %v215 = vlaneseq
      %v216 = vshrl.u32 %v215, 7
      %v217 = vsub.s32 %v214, %v216
      %v218 = vrot.slane %v206, %v217
      %v219 = vcombine.high %v218, %v218
      %v221 = vunpack.c.l.s4 1966171168
      %v222 = vunpack.c.0.s8 %v221
      %v223 = vlaneseq
      %v224 = vshrl.u32 %v223, 7
      %v225 = vsub.s32 %v222, %v224
      %v226 = vrot.slane %v218, %v225
      %v228 = vunpack.c.l.s4 1966171168
      %v229 = vunpack.c.0.s8 %v228
      %v230 = vlaneseq
      %v231 = vshrl.u32 %v230, 7
      %v232 = vsub.s32 %v229, %v231
      %v233 = vrot.slane %v219, %v232
      %v235 = vunpack.c.l.s4 1966171168
      %v236 = vunpack.c.0.s8 %v235
      %v237 = vlaneseq
      %v238 = vshrl.u32 %v237, 7
      %v239 = vsub.s32 %v236, %v238
      %v240 = vrot.slane %v207, %v239
      %v241 = vcombine.high %v240, %v240
      %v243 = vunpack.c.l.s4 1966171168
      %v244 = vunpack.c.0.s8 %v243
      %v245 = vlaneseq
      %v246 = vshrl.u32 %v245, 7
      %v247 = vsub.s32 %v244, %v246
      %v248 = vrot.slane %v240, %v247
      %v250 = vunpack.c.l.s4 1966171168
      %v251 = vunpack.c.0.s8 %v250
      %v252 = vlaneseq
      %v253 = vshrl.u32 %v252, 7
      %v254 = vsub.s32 %v251, %v253
      %v255 = vrot.slane %v241, %v254
      %v257 = vunpack.c.l.s4 1966171168
      %v258 = vunpack.c.0.s8 %v257
      %v259 = vlaneseq
      %v260 = vshrl.u32 %v259, 7
      %v261 = vsub.s32 %v258, %v260
      %v262 = vrot.slane %v208, %v261
      %v263 = vcombine.high %v262, %v262
      %v265 = vunpack.c.l.s4 1966171168
      %v266 = vunpack.c.0.s8 %v265
      %v267 = vlaneseq
      %v268 = vshrl.u32 %v267, 7
      %v269 = vsub.s32 %v266, %v268
      %v270 = vrot.slane %v262, %v269
      %v272 = vunpack.c.l.s4 1966171168
      %v273 = vunpack.c.0.s8 %v272
      %v274 = vlaneseq
      %v275 = vshrl.u32 %v274, 7
      %v276 = vsub.s32 %v273, %v275
      %v277 = vrot.slane %v263, %v276
      %v278 = vunpack.i.l.s16 %v226
      %v279 = vunpack.i.h.s16 %v226
      %v280 = vunpack.i.l.s16 %v233
      %v281 = vunpack.i.l.s16 %v248
      %v282 = vunpack.i.h.s16 %v248
      %v283 = vunpack.i.l.s16 %v255
      %v284 = vunpack.i.l.s16 %v270
      %v285 = vunpack.i.h.s16 %v270
      %v286 = vunpack.i.l.s16 %v277
      %v287 = vld [vmem:[%s1] sm:$0xf]
      %v288 = vld [vmem:[%s1 + $0x4] sm:$0xf]
      %v289 = vld [vmem:[%s1 + $0x8] sm:$0xf]
      %v290 = vld [vmem:[%s1 + $0xc] sm:$0xf]
      %v291 = vpack.i.b16 %v279, %v278
      %v292 = vpack.i.b16 %v281, %v280
      %v293 = vpack.i.b16 %v283, %v282
      %v294 = vpack.i.b16 %v285, %v284
      %v296 = vcombine.low %v291, %v292
      %v297 = vcombine.low %v293, %v294
      %v299 = vunpack.c.l.s4 1966171168
      %v300 = vunpack.c.0.s8 %v299
      %v301 = vlaneseq
      %v302 = vshrl.u32 %v301, 7
      %v303 = vsub.s32 %v300, %v302
      %v304 = vrot.slane %v296, %v303
      %v306 = vunpack.c.l.s4 1966171168
      %v307 = vunpack.c.0.s8 %v306
      %v308 = vlaneseq
      %v309 = vshrl.u32 %v308, 7
      %v310 = vsub.s32 %v307, %v309
      %v311 = vrot.slane %v297, %v310
      %v313 = vunpack.c.l.s4 1966171168
      %v314 = vunpack.c.0.s8 %v313
      %v315 = vlaneseq
      %v316 = vshrl.u32 %v315, 7
      %v317 = vsub.s32 %v314, %v316
      %v318 = vrot.slane %v286, %v317
      %v319 = vcombine.low %v304, %v311
      %v321 = vunpack.c.l.s4 1966171168
      %v322 = vunpack.c.0.s8 %v321
      %v323 = vlaneseq
      %v324 = vshrl.u32 %v323, 7
      %v325 = vsub.s32 %v322, %v324
      %v326 = vrot.slane %v319, %v325
      %v328 = vunpack.c.l.s4 1966171168
      %v329 = vunpack.c.0.s8 %v328
      %v330 = vlaneseq
      %v331 = vshrl.u32 %v330, 7
      %v332 = vsub.s32 %v329, %v331
      %v333 = vrot.slane %v318, %v332
      %v334 = vcombine.low %v326, %v333
      %v339 = vunpack.c.l.b16 %v287
      %v340 = vunpack.c.l.b16 %v288
      %v341 = vunpack.c.l.b16 %v289
      %v342 = vunpack.c.l.b16 %v290
      %v343 = vpack.c.b16 %v340, %v339
      %v344 = vpack.c.b16 %v342, %v341
      %vm347 = vcmask 261120
      %v349 = vsel %vm347, %v334, 0
      %351 = vmatprep.subr.bf16.mxu0 0
      %352 = vmatpush1.bf16.msra.mxu0 %v343
      %353 = vmatprep.subr.bf16.mxu0 0
      %354 = vmatpush1.bf16.msra.mxu0 %v344
      %355 = vmatprep.subr.bf16.mxu0 0
      %356 = vmatpush1.bf16.msra.mxu0 0
      %357 = vmatprep.subr.bf16.mxu0 0
      %358 = vmatpush1.bf16.msra.mxu0 0
      %359 = vmatprep.subr.bf16.mxu0 0
      %360 = vmatpush1.bf16.msra.mxu0 0
      %361 = vmatprep.subr.bf16.mxu0 0
      %362 = vmatpush1.bf16.msra.mxu0 0
      %363 = vmatprep.subr.bf16.mxu0 0
      %364 = vmatpush1.bf16.msra.mxu0 0
      %365 = vmatprep.subr.bf16.mxu0 0
      %366 = vmatpush1.bf16.msra.mxu0 0
      %367 = vmatprep.subr.bf16.mxu0 0
      %368 = vmatpush1.bf16.msra.mxu0 0
      %369 = vmatprep.subr.bf16.mxu0 0
      %370 = vmatpush1.bf16.msra.mxu0 0
      %371 = vmatprep.subr.bf16.mxu0 0
      %372 = vmatpush1.bf16.msra.mxu0 0
      %373 = vmatprep.subr.bf16.mxu0 0
      %374 = vmatpush1.bf16.msra.mxu0 0
      %375 = vmatprep.subr.bf16.mxu0 0
      %376 = vmatpush1.bf16.msra.mxu0 0
      %377 = vmatprep.subr.bf16.mxu0 0
      %378 = vmatpush1.bf16.msra.mxu0 0
      %379 = vmatprep.subr.bf16.mxu0 0
      %380 = vmatpush1.bf16.msra.mxu0 0
      %381 = vmatprep.subr.bf16.mxu0 0
      %382 = vmatpush1.bf16.msra.mxu0 0
      %383 = vmatprep.mubr.bf16.mxu0 0
      %384 = vmatmul.mubr.bf16.gmra.mrb[0].mxu0 %v349
      %v385 = vpop.f32.mrb[0].mxu0
      %v386 = vadd.f32 0.0, %v385
      %v387 = vpop.f32.mrb[0].mxu0
      %v388 = vpop.f32.mrb[0].mxu0
      %v389 = vadd.f32 0.0, %v388
      %v390 = vpop.f32.mrb[0].mxu0
      %391 = vdwg.mxu0
      %v392 = vadd.f32 %v203, %v386
      %v393 = vadd.f32 %v203, %v389
      %v394 = vunpack.i.h.s16 %v233
      %v395 = vunpack.i.h.s16 %v255
      %v396 = vunpack.i.h.s16 %v277
      %s397 = scalar_lea.vmem %s1, 16
      %v398 = vld [vmem:[%s397] sm:$0xf]
      %v399 = vld [vmem:[%s397 + $0x4] sm:$0xf]
      %v400 = vld [vmem:[%s397 + $0x8] sm:$0xf]
      %v401 = vld [vmem:[%s397 + $0xc] sm:$0xf]
      %v402 = vpack.i.b16 %v280, %v279
      %v403 = vpack.i.b16 %v282, %v394
      %v404 = vpack.i.b16 %v395, %v283
      %v405 = vpack.i.b16 %v286, %v285
      %v407 = vcombine.low %v402, %v403
      %v408 = vcombine.low %v404, %v405
      %v410 = vunpack.c.l.s4 1966171168
      %v411 = vunpack.c.0.s8 %v410
      %v412 = vlaneseq
      %v413 = vshrl.u32 %v412, 7
      %v414 = vsub.s32 %v411, %v413
      %v415 = vrot.slane %v407, %v414
      %v417 = vunpack.c.l.s4 1966171168
      %v418 = vunpack.c.0.s8 %v417
      %v419 = vlaneseq
      %v420 = vshrl.u32 %v419, 7
      %v421 = vsub.s32 %v418, %v420
      %v422 = vrot.slane %v408, %v421
      %v424 = vunpack.c.l.s4 1966171168
      %v425 = vunpack.c.0.s8 %v424
      %v426 = vlaneseq
      %v427 = vshrl.u32 %v426, 7
      %v428 = vsub.s32 %v425, %v427
      %v429 = vrot.slane %v396, %v428
      %v430 = vcombine.low %v415, %v422
      %v432 = vunpack.c.l.s4 1966171168
      %v433 = vunpack.c.0.s8 %v432
      %v434 = vlaneseq
      %v435 = vshrl.u32 %v434, 7
      %v436 = vsub.s32 %v433, %v435
      %v437 = vrot.slane %v430, %v436
      %v439 = vunpack.c.l.s4 1966171168
      %v440 = vunpack.c.0.s8 %v439
      %v441 = vlaneseq
      %v442 = vshrl.u32 %v441, 7
      %v443 = vsub.s32 %v440, %v442
      %v444 = vrot.slane %v429, %v443
      %v445 = vcombine.low %v437, %v444
      %v450 = vunpack.c.l.b16 %v398
      %v451 = vunpack.c.l.b16 %v399
      %v452 = vunpack.c.l.b16 %v400
      %v453 = vunpack.c.l.b16 %v401
      %v454 = vpack.c.b16 %v451, %v450
      %v455 = vpack.c.b16 %v453, %v452
      %v459 = vsel %vm347, %v445, 0
      %461 = vmatprep.subr.bf16.mxu0 0
      %462 = vmatpush1.bf16.msra.mxu0 %v454
      %463 = vmatprep.subr.bf16.mxu0 0
      %464 = vmatpush1.bf16.msra.mxu0 %v455
      %465 = vmatprep.subr.bf16.mxu0 0
      %466 = vmatpush1.bf16.msra.mxu0 0
      %467 = vmatprep.subr.bf16.mxu0 0
      %468 = vmatpush1.bf16.msra.mxu0 0
      %469 = vmatprep.subr.bf16.mxu0 0
      %470 = vmatpush1.bf16.msra.mxu0 0
      %471 = vmatprep.subr.bf16.mxu0 0
      %472 = vmatpush1.bf16.msra.mxu0 0
      %473 = vmatprep.subr.bf16.mxu0 0
      %474 = vmatpush1.bf16.msra.mxu0 0
      %475 = vmatprep.subr.bf16.mxu0 0
      %476 = vmatpush1.bf16.msra.mxu0 0
      %477 = vmatprep.subr.bf16.mxu0 0
      %478 = vmatpush1.bf16.msra.mxu0 0
      %479 = vmatprep.subr.bf16.mxu0 0
      %480 = vmatpush1.bf16.msra.mxu0 0
      %481 = vmatprep.subr.bf16.mxu0 0
      %482 = vmatpush1.bf16.msra.mxu0 0
      %483 = vmatprep.subr.bf16.mxu0 0
      %484 = vmatpush1.bf16.msra.mxu0 0
      %485 = vmatprep.subr.bf16.mxu0 0
      %486 = vmatpush1.bf16.msra.mxu0 0
      %487 = vmatprep.subr.bf16.mxu0 0
      %488 = vmatpush1.bf16.msra.mxu0 0
      %489 = vmatprep.subr.bf16.mxu0 0
      %490 = vmatpush1.bf16.msra.mxu0 0
      %491 = vmatprep.subr.bf16.mxu0 0
      %492 = vmatpush1.bf16.msra.mxu0 0
      %493 = vmatprep.mubr.bf16.mxu0 0
      %494 = vmatmul.mubr.bf16.gmra.mrb[0].mxu0 %v459
      %v495 = vpop.f32.mrb[0].mxu0
      %v496 = vadd.f32 0.0, %v495
      %v497 = vpop.f32.mrb[0].mxu0
      %v498 = vpop.f32.mrb[0].mxu0
      %v499 = vadd.f32 0.0, %v498
      %v500 = vpop.f32.mrb[0].mxu0
      %501 = vdwg.mxu0
      %v502 = vadd.f32 %v392, %v496
      %v503 = vadd.f32 %v393, %v499
      %v504 = vcombine.high %v226, %v226
      %v505 = vcombine.high %v248, %v248
      %v506 = vcombine.high %v270, %v270
      %v507 = vunpack.i.l.s16 %v504
      %v508 = vunpack.i.l.s16 %v505
      %v509 = vunpack.i.l.s16 %v506
      %s510 = scalar_lea.vmem %s1, 32
      %v511 = vld [vmem:[%s510] sm:$0xf]
      %v512 = vld [vmem:[%s510 + $0x4] sm:$0xf]
      %v513 = vld [vmem:[%s510 + $0x8] sm:$0xf]
      %v514 = vld [vmem:[%s510 + $0xc] sm:$0xf]
      %v515 = vpack.i.b16 %v394, %v280
      %v516 = vpack.i.b16 %v283, %v507
      %v517 = vpack.i.b16 %v508, %v395
      %v518 = vpack.i.b16 %v396, %v286
      %v520 = vcombine.low %v515, %v516
      %v521 = vcombine.low %v517, %v518
      %v523 = vunpack.c.l.s4 1966171168
      %v524 = vunpack.c.0.s8 %v523
      %v525 = vlaneseq
      %v526 = vshrl.u32 %v525, 7
      %v527 = vsub.s32 %v524, %v526
      %v528 = vrot.slane %v520, %v527
      %v530 = vunpack.c.l.s4 1966171168
      %v531 = vunpack.c.0.s8 %v530
      %v532 = vlaneseq
      %v533 = vshrl.u32 %v532, 7
      %v534 = vsub.s32 %v531, %v533
      %v535 = vrot.slane %v521, %v534
      %v537 = vunpack.c.l.s4 1966171168
      %v538 = vunpack.c.0.s8 %v537
      %v539 = vlaneseq
      %v540 = vshrl.u32 %v539, 7
      %v541 = vsub.s32 %v538, %v540
      %v542 = vrot.slane %v509, %v541
      %v543 = vcombine.low %v528, %v535
      %v545 = vunpack.c.l.s4 1966171168
      %v546 = vunpack.c.0.s8 %v545
      %v547 = vlaneseq
      %v548 = vshrl.u32 %v547, 7
      %v549 = vsub.s32 %v546, %v548
      %v550 = vrot.slane %v543, %v549
      %v552 = vunpack.c.l.s4 1966171168
      %v553 = vunpack.c.0.s8 %v552
      %v554 = vlaneseq
      %v555 = vshrl.u32 %v554, 7
      %v556 = vsub.s32 %v553, %v555
      %v557 = vrot.slane %v542, %v556
      %v558 = vcombine.low %v550, %v557
      %v563 = vunpack.c.l.b16 %v511
      %v564 = vunpack.c.l.b16 %v512
      %v565 = vunpack.c.l.b16 %v513
      %v566 = vunpack.c.l.b16 %v514
      %v567 = vpack.c.b16 %v564, %v563
      %v568 = vpack.c.b16 %v566, %v565
      %v572 = vsel %vm347, %v558, 0
      %574 = vmatprep.subr.bf16.mxu0 0
      %575 = vmatpush1.bf16.msra.mxu0 %v567
      %576 = vmatprep.subr.bf16.mxu0 0
      %577 = vmatpush1.bf16.msra.mxu0 %v568
      %578 = vmatprep.subr.bf16.mxu0 0
      %579 = vmatpush1.bf16.msra.mxu0 0
      %580 = vmatprep.subr.bf16.mxu0 0
      %581 = vmatpush1.bf16.msra.mxu0 0
      %582 = vmatprep.subr.bf16.mxu0 0
      %583 = vmatpush1.bf16.msra.mxu0 0
      %584 = vmatprep.subr.bf16.mxu0 0
      %585 = vmatpush1.bf16.msra.mxu0 0
      %586 = vmatprep.subr.bf16.mxu0 0
      %587 = vmatpush1.bf16.msra.mxu0 0
      %588 = vmatprep.subr.bf16.mxu0 0
      %589 = vmatpush1.bf16.msra.mxu0 0
      %590 = vmatprep.subr.bf16.mxu0 0
      %591 = vmatpush1.bf16.msra.mxu0 0
      %592 = vmatprep.subr.bf16.mxu0 0
      %593 = vmatpush1.bf16.msra.mxu0 0
      %594 = vmatprep.subr.bf16.mxu0 0
      %595 = vmatpush1.bf16.msra.mxu0 0
      %596 = vmatprep.subr.bf16.mxu0 0
      %597 = vmatpush1.bf16.msra.mxu0 0
      %598 = vmatprep.subr.bf16.mxu0 0
      %599 = vmatpush1.bf16.msra.mxu0 0
      %600 = vmatprep.subr.bf16.mxu0 0
      %601 = vmatpush1.bf16.msra.mxu0 0
      %602 = vmatprep.subr.bf16.mxu0 0
      %603 = vmatpush1.bf16.msra.mxu0 0
      %604 = vmatprep.subr.bf16.mxu0 0
      %605 = vmatpush1.bf16.msra.mxu0 0
      %606 = vmatprep.mubr.bf16.mxu0 0
      %607 = vmatmul.mubr.bf16.gmra.mrb[0].mxu0 %v572
      %v608 = vpop.f32.mrb[0].mxu0
      %v609 = vadd.f32 0.0, %v608
      %v610 = vpop.f32.mrb[0].mxu0
      %v611 = vpop.f32.mrb[0].mxu0
      %v612 = vadd.f32 0.0, %v611
      %v613 = vpop.f32.mrb[0].mxu0
      %614 = vdwg.mxu0
      %v615 = vadd.f32 %v502, %v609
      %v616 = vadd.f32 %v503, %v612
      %v617 = vunpack.i.h.s16 %v504
      %v618 = vunpack.i.h.s16 %v505
      %v619 = vunpack.i.h.s16 %v506
      %s620 = scalar_lea.vmem %s1, 48
      %v621 = vld [vmem:[%s620] sm:$0xf]
      %v622 = vld [vmem:[%s620 + $0x4] sm:$0xf]
      %v623 = vld [vmem:[%s620 + $0x8] sm:$0xf]
      %v624 = vld [vmem:[%s620 + $0xc] sm:$0xf]
      %v625 = vpack.i.b16 %v507, %v394
      %v626 = vpack.i.b16 %v395, %v617
      %v627 = vpack.i.b16 %v618, %v508
      %v628 = vpack.i.b16 %v509, %v396
      %v630 = vcombine.low %v625, %v626
      %v631 = vcombine.low %v627, %v628
      %v633 = vunpack.c.l.s4 1966171168
      %v634 = vunpack.c.0.s8 %v633
      %v635 = vlaneseq
      %v636 = vshrl.u32 %v635, 7
      %v637 = vsub.s32 %v634, %v636
      %v638 = vrot.slane %v630, %v637
      %v640 = vunpack.c.l.s4 1966171168
      %v641 = vunpack.c.0.s8 %v640
      %v642 = vlaneseq
      %v643 = vshrl.u32 %v642, 7
      %v644 = vsub.s32 %v641, %v643
      %v645 = vrot.slane %v631, %v644
      %v647 = vunpack.c.l.s4 1966171168
      %v648 = vunpack.c.0.s8 %v647
      %v649 = vlaneseq
      %v650 = vshrl.u32 %v649, 7
      %v651 = vsub.s32 %v648, %v650
      %v652 = vrot.slane %v619, %v651
      %v653 = vcombine.low %v638, %v645
      %v655 = vunpack.c.l.s4 1966171168
      %v656 = vunpack.c.0.s8 %v655
      %v657 = vlaneseq
      %v658 = vshrl.u32 %v657, 7
      %v659 = vsub.s32 %v656, %v658
      %v660 = vrot.slane %v653, %v659
      %v662 = vunpack.c.l.s4 1966171168
      %v663 = vunpack.c.0.s8 %v662
      %v664 = vlaneseq
      %v665 = vshrl.u32 %v664, 7
      %v666 = vsub.s32 %v663, %v665
      %v667 = vrot.slane %v652, %v666
      %v668 = vcombine.low %v660, %v667
      %v673 = vunpack.c.l.b16 %v621
      %v674 = vunpack.c.l.b16 %v622
      %v675 = vunpack.c.l.b16 %v623
      %v676 = vunpack.c.l.b16 %v624
      %v677 = vpack.c.b16 %v674, %v673
      %v678 = vpack.c.b16 %v676, %v675
      %v682 = vsel %vm347, %v668, 0
      %684 = vmatprep.subr.bf16.mxu0 0
      %685 = vmatpush1.bf16.msra.mxu0 %v677
      %686 = vmatprep.subr.bf16.mxu0 0
      %687 = vmatpush1.bf16.msra.mxu0 %v678
      %688 = vmatprep.subr.bf16.mxu0 0
      %689 = vmatpush1.bf16.msra.mxu0 0
      %690 = vmatprep.subr.bf16.mxu0 0
      %691 = vmatpush1.bf16.msra.mxu0 0
      %692 = vmatprep.subr.bf16.mxu0 0
      %693 = vmatpush1.bf16.msra.mxu0 0
      %694 = vmatprep.subr.bf16.mxu0 0
      %695 = vmatpush1.bf16.msra.mxu0 0
      %696 = vmatprep.subr.bf16.mxu0 0
      %697 = vmatpush1.bf16.msra.mxu0 0
      %698 = vmatprep.subr.bf16.mxu0 0
      %699 = vmatpush1.bf16.msra.mxu0 0
      %700 = vmatprep.subr.bf16.mxu0 0
      %701 = vmatpush1.bf16.msra.mxu0 0
      %702 = vmatprep.subr.bf16.mxu0 0
      %703 = vmatpush1.bf16.msra.mxu0 0
      %704 = vmatprep.subr.bf16.mxu0 0
      %705 = vmatpush1.bf16.msra.mxu0 0
      %706 = vmatprep.subr.bf16.mxu0 0
      %707 = vmatpush1.bf16.msra.mxu0 0
      %708 = vmatprep.subr.bf16.mxu0 0
      %709 = vmatpush1.bf16.msra.mxu0 0
      %710 = vmatprep.subr.bf16.mxu0 0
      %711 = vmatpush1.bf16.msra.mxu0 0
      %712 = vmatprep.subr.bf16.mxu0 0
      %713 = vmatpush1.bf16.msra.mxu0 0
      %714 = vmatprep.subr.bf16.mxu0 0
      %715 = vmatpush1.bf16.msra.mxu0 0
      %716 = vmatprep.mubr.bf16.mxu0 0
      %717 = vmatmul.mubr.bf16.gmra.mrb[0].mxu0 %v682
      %v718 = vpop.f32.mrb[0].mxu0
      %v719 = vadd.f32 0.0, %v718
      %v720 = vpop.f32.mrb[0].mxu0
      %v721 = vpop.f32.mrb[0].mxu0
      %v722 = vadd.f32 0.0, %v721
      %v723 = vpop.f32.mrb[0].mxu0
      %724 = vdwg.mxu0
      %v725 = vadd.f32 %v615, %v719
      %v726 = vadd.f32 %v616, %v722
      %s727 = sadd.s32 %s195, 1
      %s728 = smul.addr %s727, 4
      %s729 = scalar_lea.vmem %s183, %s728
      %v730 = vld [vmem:[%s729] sm:$0x7]
      %v731 = vld [vmem:[%s729 + $0x4] sm:$0x7]
      %v732 = vld [vmem:[%s729 + $0x8] sm:$0x7]
      %v737 = vunpack.c.l.s4 1966171168
      %v738 = vunpack.c.0.s8 %v737
      %v739 = vlaneseq
      %v740 = vshrl.u32 %v739, 7
      %v741 = vsub.s32 %v738, %v740
      %v742 = vrot.slane %v730, %v741
      %v743 = vcombine.high %v742, %v742
      %v745 = vunpack.c.l.s4 1966171168
      %v746 = vunpack.c.0.s8 %v745
      %v747 = vlaneseq
      %v748 = vshrl.u32 %v747, 7
      %v749 = vsub.s32 %v746, %v748
      %v750 = vrot.slane %v742, %v749
      %v752 = vunpack.c.l.s4 1966171168
      %v753 = vunpack.c.0.s8 %v752
      %v754 = vlaneseq
      %v755 = vshrl.u32 %v754, 7
      %v756 = vsub.s32 %v753, %v755
      %v757 = vrot.slane %v743, %v756
      %v759 = vunpack.c.l.s4 1966171168
      %v760 = vunpack.c.0.s8 %v759
      %v761 = vlaneseq
      %v762 = vshrl.u32 %v761, 7
      %v763 = vsub.s32 %v760, %v762
      %v764 = vrot.slane %v731, %v763
      %v765 = vcombine.high %v764, %v764
      %v767 = vunpack.c.l.s4 1966171168
      %v768 = vunpack.c.0.s8 %v767
      %v769 = vlaneseq
      %v770 = vshrl.u32 %v769, 7
      %v771 = vsub.s32 %v768, %v770
      %v772 = vrot.slane %v764, %v771
      %v774 = vunpack.c.l.s4 1966171168
      %v775 = vunpack.c.0.s8 %v774
      %v776 = vlaneseq
      %v777 = vshrl.u32 %v776, 7
      %v778 = vsub.s32 %v775, %v777
      %v779 = vrot.slane %v765, %v778
      %v781 = vunpack.c.l.s4 1966171168
      %v782 = vunpack.c.0.s8 %v781
      %v783 = vlaneseq
      %v784 = vshrl.u32 %v783, 7
      %v785 = vsub.s32 %v782, %v784
      %v786 = vrot.slane %v732, %v785
      %v787 = vcombine.high %v786, %v786
      %v789 = vunpack.c.l.s4 1966171168
      %v790 = vunpack.c.0.s8 %v789
      %v791 = vlaneseq
      %v792 = vshrl.u32 %v791, 7
      %v793 = vsub.s32 %v790, %v792
      %v794 = vrot.slane %v786, %v793
      %v796 = vunpack.c.l.s4 1966171168
      %v797 = vunpack.c.0.s8 %v796
      %v798 = vlaneseq
      %v799 = vshrl.u32 %v798, 7
      %v800 = vsub.s32 %v797, %v799
      %v801 = vrot.slane %v787, %v800
      %v802 = vunpack.i.l.s16 %v750
      %v803 = vunpack.i.h.s16 %v750
      %v804 = vunpack.i.l.s16 %v757
      %v805 = vunpack.i.l.s16 %v772
      %v806 = vunpack.i.h.s16 %v772
      %v807 = vunpack.i.l.s16 %v779
      %v808 = vunpack.i.l.s16 %v794
      %v809 = vunpack.i.h.s16 %v794
      %v810 = vunpack.i.l.s16 %v801
      %s811 = scalar_lea.vmem %s1, 64
      %v812 = vld [vmem:[%s811] sm:$0xf]
      %v813 = vld [vmem:[%s811 + $0x4] sm:$0xf]
      %v814 = vld [vmem:[%s811 + $0x8] sm:$0xf]
      %v815 = vld [vmem:[%s811 + $0xc] sm:$0xf]
      %v816 = vpack.i.b16 %v803, %v802
      %v817 = vpack.i.b16 %v805, %v804
      %v818 = vpack.i.b16 %v807, %v806
      %v819 = vpack.i.b16 %v809, %v808
      %v821 = vcombine.low %v816, %v817
      %v822 = vcombine.low %v818, %v819
      %v824 = vunpack.c.l.s4 1966171168
      %v825 = vunpack.c.0.s8 %v824
      %v826 = vlaneseq
      %v827 = vshrl.u32 %v826, 7
      %v828 = vsub.s32 %v825, %v827
      %v829 = vrot.slane %v821, %v828
      %v831 = vunpack.c.l.s4 1966171168
      %v832 = vunpack.c.0.s8 %v831
      %v833 = vlaneseq
      %v834 = vshrl.u32 %v833, 7
      %v835 = vsub.s32 %v832, %v834
      %v836 = vrot.slane %v822, %v835
      %v838 = vunpack.c.l.s4 1966171168
      %v839 = vunpack.c.0.s8 %v838
      %v840 = vlaneseq
      %v841 = vshrl.u32 %v840, 7
      %v842 = vsub.s32 %v839, %v841
      %v843 = vrot.slane %v810, %v842
      %v844 = vcombine.low %v829, %v836
      %v846 = vunpack.c.l.s4 1966171168
      %v847 = vunpack.c.0.s8 %v846
      %v848 = vlaneseq
      %v849 = vshrl.u32 %v848, 7
      %v850 = vsub.s32 %v847, %v849
      %v851 = vrot.slane %v844, %v850
      %v853 = vunpack.c.l.s4 1966171168
      %v854 = vunpack.c.0.s8 %v853
      %v855 = vlaneseq
      %v856 = vshrl.u32 %v855, 7
      %v857 = vsub.s32 %v854, %v856
      %v858 = vrot.slane %v843, %v857
      %v859 = vcombine.low %v851, %v858
      %v864 = vunpack.c.l.b16 %v812
      %v865 = vunpack.c.l.b16 %v813
      %v866 = vunpack.c.l.b16 %v814
      %v867 = vunpack.c.l.b16 %v815
      %v868 = vpack.c.b16 %v865, %v864
      %v869 = vpack.c.b16 %v867, %v866
      %v873 = vsel %vm347, %v859, 0
      %875 = vmatprep.subr.bf16.mxu0 0
      %876 = vmatpush1.bf16.msra.mxu0 %v868
      %877 = vmatprep.subr.bf16.mxu0 0
      %878 = vmatpush1.bf16.msra.mxu0 %v869
      %879 = vmatprep.subr.bf16.mxu0 0
      %880 = vmatpush1.bf16.msra.mxu0 0
      %881 = vmatprep.subr.bf16.mxu0 0
      %882 = vmatpush1.bf16.msra.mxu0 0
      %883 = vmatprep.subr.bf16.mxu0 0
      %884 = vmatpush1.bf16.msra.mxu0 0
      %885 = vmatprep.subr.bf16.mxu0 0
      %886 = vmatpush1.bf16.msra.mxu0 0
      %887 = vmatprep.subr.bf16.mxu0 0
      %888 = vmatpush1.bf16.msra.mxu0 0
      %889 = vmatprep.subr.bf16.mxu0 0
      %890 = vmatpush1.bf16.msra.mxu0 0
      %891 = vmatprep.subr.bf16.mxu0 0
      %892 = vmatpush1.bf16.msra.mxu0 0
      %893 = vmatprep.subr.bf16.mxu0 0
      %894 = vmatpush1.bf16.msra.mxu0 0
      %895 = vmatprep.subr.bf16.mxu0 0
      %896 = vmatpush1.bf16.msra.mxu0 0
      %897 = vmatprep.subr.bf16.mxu0 0
      %898 = vmatpush1.bf16.msra.mxu0 0
      %899 = vmatprep.subr.bf16.mxu0 0
      %900 = vmatpush1.bf16.msra.mxu0 0
      %901 = vmatprep.subr.bf16.mxu0 0
      %902 = vmatpush1.bf16.msra.mxu0 0
      %903 = vmatprep.subr.bf16.mxu0 0
      %904 = vmatpush1.bf16.msra.mxu0 0
      %905 = vmatprep.subr.bf16.mxu0 0
      %906 = vmatpush1.bf16.msra.mxu0 0
      %907 = vmatprep.mubr.bf16.mxu0 0
      %908 = vmatmul.mubr.bf16.gmra.mrb[0].mxu0 %v873
      %v909 = vpop.f32.mrb[0].mxu0
      %v910 = vadd.f32 0.0, %v909
      %v911 = vpop.f32.mrb[0].mxu0
      %v912 = vpop.f32.mrb[0].mxu0
      %v913 = vadd.f32 0.0, %v912
      %v914 = vpop.f32.mrb[0].mxu0
      %915 = vdwg.mxu0
      %v916 = vadd.f32 %v725, %v910
      %v917 = vadd.f32 %v726, %v913
      %v918 = vunpack.i.h.s16 %v757
      %v919 = vunpack.i.h.s16 %v779
      %v920 = vunpack.i.h.s16 %v801
      %s921 = scalar_lea.vmem %s1, 80
      %v922 = vld [vmem:[%s921] sm:$0xf]
      %v923 = vld [vmem:[%s921 + $0x4] sm:$0xf]
      %v924 = vld [vmem:[%s921 + $0x8] sm:$0xf]
      %v925 = vld [vmem:[%s921 + $0xc] sm:$0xf]
      %v926 = vpack.i.b16 %v804, %v803
      %v927 = vpack.i.b16 %v806, %v918
      %v928 = vpack.i.b16 %v919, %v807
      %v929 = vpack.i.b16 %v810, %v809
      %v931 = vcombine.low %v926, %v927
      %v932 = vcombine.low %v928, %v929
      %v934 = vunpack.c.l.s4 1966171168
      %v935 = vunpack.c.0.s8 %v934
      %v936 = vlaneseq
      %v937 = vshrl.u32 %v936, 7
      %v938 = vsub.s32 %v935, %v937
      %v939 = vrot.slane %v931, %v938
      %v941 = vunpack.c.l.s4 1966171168
      %v942 = vunpack.c.0.s8 %v941
      %v943 = vlaneseq
      %v944 = vshrl.u32 %v943, 7
      %v945 = vsub.s32 %v942, %v944
      %v946 = vrot.slane %v932, %v945
      %v948 = vunpack.c.l.s4 1966171168
      %v949 = vunpack.c.0.s8 %v948
      %v950 = vlaneseq
      %v951 = vshrl.u32 %v950, 7
      %v952 = vsub.s32 %v949, %v951
      %v953 = vrot.slane %v920, %v952
      %v954 = vcombine.low %v939, %v946
      %v956 = vunpack.c.l.s4 1966171168
      %v957 = vunpack.c.0.s8 %v956
      %v958 = vlaneseq
      %v959 = vshrl.u32 %v958, 7
      %v960 = vsub.s32 %v957, %v959
      %v961 = vrot.slane %v954, %v960
      %v963 = vunpack.c.l.s4 1966171168
      %v964 = vunpack.c.0.s8 %v963
      %v965 = vlaneseq
      %v966 = vshrl.u32 %v965, 7
      %v967 = vsub.s32 %v964, %v966
      %v968 = vrot.slane %v953, %v967
      %v969 = vcombine.low %v961, %v968
      %v974 = vunpack.c.l.b16 %v922
      %v975 = vunpack.c.l.b16 %v923
      %v976 = vunpack.c.l.b16 %v924
      %v977 = vunpack.c.l.b16 %v925
      %v978 = vpack.c.b16 %v975, %v974
      %v979 = vpack.c.b16 %v977, %v976
      %v983 = vsel %vm347, %v969, 0
      %985 = vmatprep.subr.bf16.mxu0 0
      %986 = vmatpush1.bf16.msra.mxu0 %v978
      %987 = vmatprep.subr.bf16.mxu0 0
      %988 = vmatpush1.bf16.msra.mxu0 %v979
      %989 = vmatprep.subr.bf16.mxu0 0
      %990 = vmatpush1.bf16.msra.mxu0 0
      %991 = vmatprep.subr.bf16.mxu0 0
      %992 = vmatpush1.bf16.msra.mxu0 0
      %993 = vmatprep.subr.bf16.mxu0 0
      %994 = vmatpush1.bf16.msra.mxu0 0
      %995 = vmatprep.subr.bf16.mxu0 0
      %996 = vmatpush1.bf16.msra.mxu0 0
      %997 = vmatprep.subr.bf16.mxu0 0
      %998 = vmatpush1.bf16.msra.mxu0 0
      %999 = vmatprep.subr.bf16.mxu0 0
      %1000 = vmatpush1.bf16.msra.mxu0 0
      %1001 = vmatprep.subr.bf16.mxu0 0
      %1002 = vmatpush1.bf16.msra.mxu0 0
      %1003 = vmatprep.subr.bf16.mxu0 0
      %1004 = vmatpush1.bf16.msra.mxu0 0
      %1005 = vmatprep.subr.bf16.mxu0 0
      %1006 = vmatpush1.bf16.msra.mxu0 0
      %1007 = vmatprep.subr.bf16.mxu0 0
      %1008 = vmatpush1.bf16.msra.mxu0 0
      %1009 = vmatprep.subr.bf16.mxu0 0
      %1010 = vmatpush1.bf16.msra.mxu0 0
      %1011 = vmatprep.subr.bf16.mxu0 0
      %1012 = vmatpush1.bf16.msra.mxu0 0
      %1013 = vmatprep.subr.bf16.mxu0 0
      %1014 = vmatpush1.bf16.msra.mxu0 0
      %1015 = vmatprep.subr.bf16.mxu0 0
      %1016 = vmatpush1.bf16.msra.mxu0 0
      %1017 = vmatprep.mubr.bf16.mxu0 0
      %1018 = vmatmul.mubr.bf16.gmra.mrb[0].mxu0 %v983
      %v1019 = vpop.f32.mrb[0].mxu0
      %v1020 = vadd.f32 0.0, %v1019
      %v1021 = vpop.f32.mrb[0].mxu0
      %v1022 = vpop.f32.mrb[0].mxu0
      %v1023 = vadd.f32 0.0, %v1022
      %v1024 = vpop.f32.mrb[0].mxu0
      %1025 = vdwg.mxu0
      %v1026 = vadd.f32 %v916, %v1020
      %v1027 = vadd.f32 %v917, %v1023
      %v1028 = vcombine.high %v750, %v750
      %v1029 = vcombine.high %v772, %v772
      %v1030 = vcombine.high %v794, %v794
      %v1031 = vunpack.i.l.s16 %v1028
      %v1032 = vunpack.i.l.s16 %v1029
      %v1033 = vunpack.i.l.s16 %v1030
      %s1034 = scalar_lea.vmem %s1, 96
      %v1035 = vld [vmem:[%s1034] sm:$0xf]
      %v1036 = vld [vmem:[%s1034 + $0x4] sm:$0xf]
      %v1037 = vld [vmem:[%s1034 + $0x8] sm:$0xf]
      %v1038 = vld [vmem:[%s1034 + $0xc] sm:$0xf]
      %v1039 = vpack.i.b16 %v918, %v804
      %v1040 = vpack.i.b16 %v807, %v1031
      %v1041 = vpack.i.b16 %v1032, %v919
      %v1042 = vpack.i.b16 %v920, %v810
      %v1044 = vcombine.low %v1039, %v1040
      %v1045 = vcombine.low %v1041, %v1042
      %v1047 = vunpack.c.l.s4 1966171168
      %v1048 = vunpack.c.0.s8 %v1047
      %v1049 = vlaneseq
      %v1050 = vshrl.u32 %v1049, 7
      %v1051 = vsub.s32 %v1048, %v1050
      %v1052 = vrot.slane %v1044, %v1051
      %v1054 = vunpack.c.l.s4 1966171168
      %v1055 = vunpack.c.0.s8 %v1054
      %v1056 = vlaneseq
      %v1057 = vshrl.u32 %v1056, 7
      %v1058 = vsub.s32 %v1055, %v1057
      %v1059 = vrot.slane %v1045, %v1058
      %v1061 = vunpack.c.l.s4 1966171168
      %v1062 = vunpack.c.0.s8 %v1061
      %v1063 = vlaneseq
      %v1064 = vshrl.u32 %v1063, 7
      %v1065 = vsub.s32 %v1062, %v1064
      %v1066 = vrot.slane %v1033, %v1065
      %v1067 = vcombine.low %v1052, %v1059
      %v1069 = vunpack.c.l.s4 1966171168
      %v1070 = vunpack.c.0.s8 %v1069
      %v1071 = vlaneseq
      %v1072 = vshrl.u32 %v1071, 7
      %v1073 = vsub.s32 %v1070, %v1072
      %v1074 = vrot.slane %v1067, %v1073
      %v1076 = vunpack.c.l.s4 1966171168
      %v1077 = vunpack.c.0.s8 %v1076
      %v1078 = vlaneseq
      %v1079 = vshrl.u32 %v1078, 7
      %v1080 = vsub.s32 %v1077, %v1079
      %v1081 = vrot.slane %v1066, %v1080
      %v1082 = vcombine.low %v1074, %v1081
      %v1087 = vunpack.c.l.b16 %v1035
      %v1088 = vunpack.c.l.b16 %v1036
      %v1089 = vunpack.c.l.b16 %v1037
      %v1090 = vunpack.c.l.b16 %v1038
      %v1091 = vpack.c.b16 %v1088, %v1087
      %v1092 = vpack.c.b16 %v1090, %v1089
      %v1096 = vsel %vm347, %v1082, 0
      %1098 = vmatprep.subr.bf16.mxu0 0
      %1099 = vmatpush1.bf16.msra.mxu0 %v1091
      %1100 = vmatprep.subr.bf16.mxu0 0
      %1101 = vmatpush1.bf16.msra.mxu0 %v1092
      %1102 = vmatprep.subr.bf16.mxu0 0
      %1103 = vmatpush1.bf16.msra.mxu0 0
      %1104 = vmatprep.subr.bf16.mxu0 0
      %1105 = vmatpush1.bf16.msra.mxu0 0
      %1106 = vmatprep.subr.bf16.mxu0 0
      %1107 = vmatpush1.bf16.msra.mxu0 0
      %1108 = vmatprep.subr.bf16.mxu0 0
      %1109 = vmatpush1.bf16.msra.mxu0 0
      %1110 = vmatprep.subr.bf16.mxu0 0
      %1111 = vmatpush1.bf16.msra.mxu0 0
      %1112 = vmatprep.subr.bf16.mxu0 0
      %1113 = vmatpush1.bf16.msra.mxu0 0
      %1114 = vmatprep.subr.bf16.mxu0 0
      %1115 = vmatpush1.bf16.msra.mxu0 0
      %1116 = vmatprep.subr.bf16.mxu0 0
      %1117 = vmatpush1.bf16.msra.mxu0 0
      %1118 = vmatprep.subr.bf16.mxu0 0
      %1119 = vmatpush1.bf16.msra.mxu0 0
      %1120 = vmatprep.subr.bf16.mxu0 0
      %1121 = vmatpush1.bf16.msra.mxu0 0
      %1122 = vmatprep.subr.bf16.mxu0 0
      %1123 = vmatpush1.bf16.msra.mxu0 0
      %1124 = vmatprep.subr.bf16.mxu0 0
      %1125 = vmatpush1.bf16.msra.mxu0 0
      %1126 = vmatprep.subr.bf16.mxu0 0
      %1127 = vmatpush1.bf16.msra.mxu0 0
      %1128 = vmatprep.subr.bf16.mxu0 0
      %1129 = vmatpush1.bf16.msra.mxu0 0
      %1130 = vmatprep.mubr.bf16.mxu0 0
      %1131 = vmatmul.mubr.bf16.gmra.mrb[0].mxu0 %v1096
      %v1132 = vpop.f32.mrb[0].mxu0
      %v1133 = vadd.f32 0.0, %v1132
      %v1134 = vpop.f32.mrb[0].mxu0
      %v1135 = vpop.f32.mrb[0].mxu0
      %v1136 = vadd.f32 0.0, %v1135
      %v1137 = vpop.f32.mrb[0].mxu0
      %1138 = vdwg.mxu0
      %v1139 = vadd.f32 %v1026, %v1133
      %v1140 = vadd.f32 %v1027, %v1136
      %v1141 = vunpack.i.h.s16 %v1028
      %v1142 = vunpack.i.h.s16 %v1029
      %v1143 = vunpack.i.h.s16 %v1030
      %s1144 = scalar_lea.vmem %s1, 112
      %v1145 = vld [vmem:[%s1144] sm:$0xf]
      %v1146 = vld [vmem:[%s1144 + $0x4] sm:$0xf]
      %v1147 = vld [vmem:[%s1144 + $0x8] sm:$0xf]
      %v1148 = vld [vmem:[%s1144 + $0xc] sm:$0xf]
      %v1149 = vpack.i.b16 %v1031, %v918
      %v1150 = vpack.i.b16 %v919, %v1141
      %v1151 = vpack.i.b16 %v1142, %v1032
      %v1152 = vpack.i.b16 %v1033, %v920
      %v1154 = vcombine.low %v1149, %v1150
      %v1155 = vcombine.low %v1151, %v1152
      %v1157 = vunpack.c.l.s4 1966171168
      %v1158 = vunpack.c.0.s8 %v1157
      %v1159 = vlaneseq
      %v1160 = vshrl.u32 %v1159, 7
      %v1161 = vsub.s32 %v1158, %v1160
      %v1162 = vrot.slane %v1154, %v1161
      %v1164 = vunpack.c.l.s4 1966171168
      %v1165 = vunpack.c.0.s8 %v1164
      %v1166 = vlaneseq
      %v1167 = vshrl.u32 %v1166, 7
      %v1168 = vsub.s32 %v1165, %v1167
      %v1169 = vrot.slane %v1155, %v1168
      %v1171 = vunpack.c.l.s4 1966171168
      %v1172 = vunpack.c.0.s8 %v1171
      %v1173 = vlaneseq
      %v1174 = vshrl.u32 %v1173, 7
      %v1175 = vsub.s32 %v1172, %v1174
      %v1176 = vrot.slane %v1143, %v1175
      %v1177 = vcombine.low %v1162, %v1169
      %v1179 = vunpack.c.l.s4 1966171168
      %v1180 = vunpack.c.0.s8 %v1179
      %v1181 = vlaneseq
      %v1182 = vshrl.u32 %v1181, 7
      %v1183 = vsub.s32 %v1180, %v1182
      %v1184 = vrot.slane %v1177, %v1183
      %v1186 = vunpack.c.l.s4 1966171168
      %v1187 = vunpack.c.0.s8 %v1186
      %v1188 = vlaneseq
      %v1189 = vshrl.u32 %v1188, 7
      %v1190 = vsub.s32 %v1187, %v1189
      %v1191 = vrot.slane %v1176, %v1190
      %v1192 = vcombine.low %v1184, %v1191
      %v1197 = vunpack.c.l.b16 %v1145
      %v1198 = vunpack.c.l.b16 %v1146
      %v1199 = vunpack.c.l.b16 %v1147
      %v1200 = vunpack.c.l.b16 %v1148
      %v1201 = vpack.c.b16 %v1198, %v1197
      %v1202 = vpack.c.b16 %v1200, %v1199
      %v1206 = vsel %vm347, %v1192, 0
      %1208 = vmatprep.subr.bf16.mxu0 0
      %1209 = vmatpush1.bf16.msra.mxu0 %v1201
      %1210 = vmatprep.subr.bf16.mxu0 0
      %1211 = vmatpush1.bf16.msra.mxu0 %v1202
      %1212 = vmatprep.subr.bf16.mxu0 0
      %1213 = vmatpush1.bf16.msra.mxu0 0
      %1214 = vmatprep.subr.bf16.mxu0 0
      %1215 = vmatpush1.bf16.msra.mxu0 0
      %1216 = vmatprep.subr.bf16.mxu0 0
      %1217 = vmatpush1.bf16.msra.mxu0 0
      %1218 = vmatprep.subr.bf16.mxu0 0
      %1219 = vmatpush1.bf16.msra.mxu0 0
      %1220 = vmatprep.subr.bf16.mxu0 0
      %1221 = vmatpush1.bf16.msra.mxu0 0
      %1222 = vmatprep.subr.bf16.mxu0 0
      %1223 = vmatpush1.bf16.msra.mxu0 0
      %1224 = vmatprep.subr.bf16.mxu0 0
      %1225 = vmatpush1.bf16.msra.mxu0 0
      %1226 = vmatprep.subr.bf16.mxu0 0
      %1227 = vmatpush1.bf16.msra.mxu0 0
      %1228 = vmatprep.subr.bf16.mxu0 0
      %1229 = vmatpush1.bf16.msra.mxu0 0
      %1230 = vmatprep.subr.bf16.mxu0 0
      %1231 = vmatpush1.bf16.msra.mxu0 0
      %1232 = vmatprep.subr.bf16.mxu0 0
      %1233 = vmatpush1.bf16.msra.mxu0 0
      %1234 = vmatprep.subr.bf16.mxu0 0
      %1235 = vmatpush1.bf16.msra.mxu0 0
      %1236 = vmatprep.subr.bf16.mxu0 0
      %1237 = vmatpush1.bf16.msra.mxu0 0
      %1238 = vmatprep.subr.bf16.mxu0 0
      %1239 = vmatpush1.bf16.msra.mxu0 0
      %1240 = vmatprep.mubr.bf16.mxu0 0
      %1241 = vmatmul.mubr.bf16.gmra.mrb[0].mxu0 %v1206
      %v1242 = vpop.f32.mrb[0].mxu0
      %v1243 = vadd.f32 0.0, %v1242
      %v1244 = vpop.f32.mrb[0].mxu0
      %v1245 = vpop.f32.mrb[0].mxu0
      %v1246 = vadd.f32 0.0, %v1245
      %v1247 = vpop.f32.mrb[0].mxu0
      %1248 = vdwg.mxu0
      %v1249 = vadd.f32 %v1139, %v1243
      %v1250 = vadd.f32 %v1140, %v1246
      %s1251 = sadd.s32 %s195, 2
      %s1252 = smul.addr %s1251, 4
      %s1253 = scalar_lea.vmem %s183, %s1252
      %v1254 = vld [vmem:[%s1253] sm:$0x7]
      %v1255 = vld [vmem:[%s1253 + $0x4] sm:$0x7]
      %v1256 = vld [vmem:[%s1253 + $0x8] sm:$0x7]
      %v1261 = vunpack.c.l.s4 1966171168
      %v1262 = vunpack.c.0.s8 %v1261
      %v1263 = vlaneseq
      %v1264 = vshrl.u32 %v1263, 7
      %v1265 = vsub.s32 %v1262, %v1264
      %v1266 = vrot.slane %v1254, %v1265
      %v1267 = vcombine.high %v1266, %v1266
      %v1269 = vunpack.c.l.s4 1966171168
      %v1270 = vunpack.c.0.s8 %v1269
      %v1271 = vlaneseq
      %v1272 = vshrl.u32 %v1271, 7
      %v1273 = vsub.s32 %v1270, %v1272
      %v1274 = vrot.slane %v1266, %v1273
      %v1276 = vunpack.c.l.s4 1966171168
      %v1277 = vunpack.c.0.s8 %v1276
      %v1278 = vlaneseq
      %v1279 = vshrl.u32 %v1278, 7
      %v1280 = vsub.s32 %v1277, %v1279
      %v1281 = vrot.slane %v1267, %v1280
      %v1283 = vunpack.c.l.s4 1966171168
      %v1284 = vunpack.c.0.s8 %v1283
      %v1285 = vlaneseq
      %v1286 = vshrl.u32 %v1285, 7
      %v1287 = vsub.s32 %v1284, %v1286
      %v1288 = vrot.slane %v1255, %v1287
      %v1289 = vcombine.high %v1288, %v1288
      %v1291 = vunpack.c.l.s4 1966171168
      %v1292 = vunpack.c.0.s8 %v1291
      %v1293 = vlaneseq
      %v1294 = vshrl.u32 %v1293, 7
      %v1295 = vsub.s32 %v1292, %v1294
      %v1296 = vrot.slane %v1288, %v1295
      %v1298 = vunpack.c.l.s4 1966171168
      %v1299 = vunpack.c.0.s8 %v1298
      %v1300 = vlaneseq
      %v1301 = vshrl.u32 %v1300, 7
      %v1302 = vsub.s32 %v1299, %v1301
      %v1303 = vrot.slane %v1289, %v1302
      %v1305 = vunpack.c.l.s4 1966171168
      %v1306 = vunpack.c.0.s8 %v1305
      %v1307 = vlaneseq
      %v1308 = vshrl.u32 %v1307, 7
      %v1309 = vsub.s32 %v1306, %v1308
      %v1310 = vrot.slane %v1256, %v1309
      %v1311 = vcombine.high %v1310, %v1310
      %v1313 = vunpack.c.l.s4 1966171168
      %v1314 = vunpack.c.0.s8 %v1313
      %v1315 = vlaneseq
      %v1316 = vshrl.u32 %v1315, 7
      %v1317 = vsub.s32 %v1314, %v1316
      %v1318 = vrot.slane %v1310, %v1317
      %v1320 = vunpack.c.l.s4 1966171168
      %v1321 = vunpack.c.0.s8 %v1320
      %v1322 = vlaneseq
      %v1323 = vshrl.u32 %v1322, 7
      %v1324 = vsub.s32 %v1321, %v1323
      %v1325 = vrot.slane %v1311, %v1324
      %v1326 = vunpack.i.l.s16 %v1274
      %v1327 = vunpack.i.h.s16 %v1274
      %v1328 = vunpack.i.l.s16 %v1281
      %v1329 = vunpack.i.l.s16 %v1296
      %v1330 = vunpack.i.h.s16 %v1296
      %v1331 = vunpack.i.l.s16 %v1303
      %v1332 = vunpack.i.l.s16 %v1318
      %v1333 = vunpack.i.h.s16 %v1318
      %v1334 = vunpack.i.l.s16 %v1325
      %s1335 = scalar_lea.vmem %s1, 128
      %v1336 = vld [vmem:[%s1335] sm:$0xf]
      %v1337 = vld [vmem:[%s1335 + $0x4] sm:$0xf]
      %v1338 = vld [vmem:[%s1335 + $0x8] sm:$0xf]
      %v1339 = vld [vmem:[%s1335 + $0xc] sm:$0xf]
      %v1340 = vpack.i.b16 %v1327, %v1326
      %v1341 = vpack.i.b16 %v1329, %v1328
      %v1342 = vpack.i.b16 %v1331, %v1330
      %v1343 = vpack.i.b16 %v1333, %v1332
      %v1345 = vcombine.low %v1340, %v1341
      %v1346 = vcombine.low %v1342, %v1343
      %v1348 = vunpack.c.l.s4 1966171168
      %v1349 = vunpack.c.0.s8 %v1348
      %v1350 = vlaneseq
      %v1351 = vshrl.u32 %v1350, 7
      %v1352 = vsub.s32 %v1349, %v1351
      %v1353 = vrot.slane %v1345, %v1352
      %v1355 = vunpack.c.l.s4 1966171168
      %v1356 = vunpack.c.0.s8 %v1355
      %v1357 = vlaneseq
      %v1358 = vshrl.u32 %v1357, 7
      %v1359 = vsub.s32 %v1356, %v1358
      %v1360 = vrot.slane %v1346, %v1359
      %v1362 = vunpack.c.l.s4 1966171168
      %v1363 = vunpack.c.0.s8 %v1362
      %v1364 = vlaneseq
      %v1365 = vshrl.u32 %v1364, 7
      %v1366 = vsub.s32 %v1363, %v1365
      %v1367 = vrot.slane %v1334, %v1366
      %v1368 = vcombine.low %v1353, %v1360
      %v1370 = vunpack.c.l.s4 1966171168
      %v1371 = vunpack.c.0.s8 %v1370
      %v1372 = vlaneseq
      %v1373 = vshrl.u32 %v1372, 7
      %v1374 = vsub.s32 %v1371, %v1373
      %v1375 = vrot.slane %v1368, %v1374
      %v1377 = vunpack.c.l.s4 1966171168
      %v1378 = vunpack.c.0.s8 %v1377
      %v1379 = vlaneseq
      %v1380 = vshrl.u32 %v1379, 7
      %v1381 = vsub.s32 %v1378, %v1380
      %v1382 = vrot.slane %v1367, %v1381
      %v1383 = vcombine.low %v1375, %v1382
      %v1388 = vunpack.c.l.b16 %v1336
      %v1389 = vunpack.c.l.b16 %v1337
      %v1390 = vunpack.c.l.b16 %v1338
      %v1391 = vunpack.c.l.b16 %v1339
      %v1392 = vpack.c.b16 %v1389, %v1388
      %v1393 = vpack.c.b16 %v1391, %v1390
      %v1397 = vsel %vm347, %v1383, 0
      %1399 = vmatprep.subr.bf16.mxu0 0
      %1400 = vmatpush1.bf16.msra.mxu0 %v1392
      %1401 = vmatprep.subr.bf16.mxu0 0
      %1402 = vmatpush1.bf16.msra.mxu0 %v1393
      %1403 = vmatprep.subr.bf16.mxu0 0
      %1404 = vmatpush1.bf16.msra.mxu0 0
      %1405 = vmatprep.subr.bf16.mxu0 0
      %1406 = vmatpush1.bf16.msra.mxu0 0
      %1407 = vmatprep.subr.bf16.mxu0 0
      %1408 = vmatpush1.bf16.msra.mxu0 0
      %1409 = vmatprep.subr.bf16.mxu0 0
      %1410 = vmatpush1.bf16.msra.mxu0 0
      %1411 = vmatprep.subr.bf16.mxu0 0
      %1412 = vmatpush1.bf16.msra.mxu0 0
      %1413 = vmatprep.subr.bf16.mxu0 0
      %1414 = vmatpush1.bf16.msra.mxu0 0
      %1415 = vmatprep.subr.bf16.mxu0 0
      %1416 = vmatpush1.bf16.msra.mxu0 0
      %1417 = vmatprep.subr.bf16.mxu0 0
      %1418 = vmatpush1.bf16.msra.mxu0 0
      %1419 = vmatprep.subr.bf16.mxu0 0
      %1420 = vmatpush1.bf16.msra.mxu0 0
      %1421 = vmatprep.subr.bf16.mxu0 0
      %1422 = vmatpush1.bf16.msra.mxu0 0
      %1423 = vmatprep.subr.bf16.mxu0 0
      %1424 = vmatpush1.bf16.msra.mxu0 0
      %1425 = vmatprep.subr.bf16.mxu0 0
      %1426 = vmatpush1.bf16.msra.mxu0 0
      %1427 = vmatprep.subr.bf16.mxu0 0
      %1428 = vmatpush1.bf16.msra.mxu0 0
      %1429 = vmatprep.subr.bf16.mxu0 0
      %1430 = vmatpush1.bf16.msra.mxu0 0
      %1431 = vmatprep.mubr.bf16.mxu0 0
      %1432 = vmatmul.mubr.bf16.gmra.mrb[0].mxu0 %v1397
      %v1433 = vpop.f32.mrb[0].mxu0
      %v1434 = vadd.f32 0.0, %v1433
      %v1435 = vpop.f32.mrb[0].mxu0
      %v1436 = vpop.f32.mrb[0].mxu0
      %v1437 = vadd.f32 0.0, %v1436
      %v1438 = vpop.f32.mrb[0].mxu0
      %1439 = vdwg.mxu0
      %v1440 = vadd.f32 %v1249, %v1434
      %v1441 = vadd.f32 %v1250, %v1437
      %v1442 = vunpack.i.h.s16 %v1281
      %v1443 = vunpack.i.h.s16 %v1303
      %v1444 = vunpack.i.h.s16 %v1325
      %s1445 = scalar_lea.vmem %s1, 144
      %v1446 = vld [vmem:[%s1445] sm:$0xf]
      %v1447 = vld [vmem:[%s1445 + $0x4] sm:$0xf]
      %v1448 = vld [vmem:[%s1445 + $0x8] sm:$0xf]
      %v1449 = vld [vmem:[%s1445 + $0xc] sm:$0xf]
      %v1450 = vpack.i.b16 %v1328, %v1327
      %v1451 = vpack.i.b16 %v1330, %v1442
      %v1452 = vpack.i.b16 %v1443, %v1331
      %v1453 = vpack.i.b16 %v1334, %v1333
      %v1455 = vcombine.low %v1450, %v1451
      %v1456 = vcombine.low %v1452, %v1453
      %v1458 = vunpack.c.l.s4 1966171168
      %v1459 = vunpack.c.0.s8 %v1458
      %v1460 = vlaneseq
      %v1461 = vshrl.u32 %v1460, 7
      %v1462 = vsub.s32 %v1459, %v1461
      %v1463 = vrot.slane %v1455, %v1462
      %v1465 = vunpack.c.l.s4 1966171168
      %v1466 = vunpack.c.0.s8 %v1465
      %v1467 = vlaneseq
      %v1468 = vshrl.u32 %v1467, 7
      %v1469 = vsub.s32 %v1466, %v1468
      %v1470 = vrot.slane %v1456, %v1469
      %v1472 = vunpack.c.l.s4 1966171168
      %v1473 = vunpack.c.0.s8 %v1472
      %v1474 = vlaneseq
      %v1475 = vshrl.u32 %v1474, 7
      %v1476 = vsub.s32 %v1473, %v1475
      %v1477 = vrot.slane %v1444, %v1476
      %v1478 = vcombine.low %v1463, %v1470
      %v1480 = vunpack.c.l.s4 1966171168
      %v1481 = vunpack.c.0.s8 %v1480
      %v1482 = vlaneseq
      %v1483 = vshrl.u32 %v1482, 7
      %v1484 = vsub.s32 %v1481, %v1483
      %v1485 = vrot.slane %v1478, %v1484
      %v1487 = vunpack.c.l.s4 1966171168
      %v1488 = vunpack.c.0.s8 %v1487
      %v1489 = vlaneseq
      %v1490 = vshrl.u32 %v1489, 7
      %v1491 = vsub.s32 %v1488, %v1490
      %v1492 = vrot.slane %v1477, %v1491
      %v1493 = vcombine.low %v1485, %v1492
      %v1498 = vunpack.c.l.b16 %v1446
      %v1499 = vunpack.c.l.b16 %v1447
      %v1500 = vunpack.c.l.b16 %v1448
      %v1501 = vunpack.c.l.b16 %v1449
      %v1502 = vpack.c.b16 %v1499, %v1498
      %v1503 = vpack.c.b16 %v1501, %v1500
      %v1507 = vsel %vm347, %v1493, 0
      %1509 = vmatprep.subr.bf16.mxu0 0
      %1510 = vmatpush1.bf16.msra.mxu0 %v1502
      %1511 = vmatprep.subr.bf16.mxu0 0
      %1512 = vmatpush1.bf16.msra.mxu0 %v1503
      %1513 = vmatprep.subr.bf16.mxu0 0
      %1514 = vmatpush1.bf16.msra.mxu0 0
      %1515 = vmatprep.subr.bf16.mxu0 0
      %1516 = vmatpush1.bf16.msra.mxu0 0
      %1517 = vmatprep.subr.bf16.mxu0 0
      %1518 = vmatpush1.bf16.msra.mxu0 0
      %1519 = vmatprep.subr.bf16.mxu0 0
      %1520 = vmatpush1.bf16.msra.mxu0 0
      %1521 = vmatprep.subr.bf16.mxu0 0
      %1522 = vmatpush1.bf16.msra.mxu0 0
      %1523 = vmatprep.subr.bf16.mxu0 0
      %1524 = vmatpush1.bf16.msra.mxu0 0
      %1525 = vmatprep.subr.bf16.mxu0 0
      %1526 = vmatpush1.bf16.msra.mxu0 0
      %1527 = vmatprep.subr.bf16.mxu0 0
      %1528 = vmatpush1.bf16.msra.mxu0 0
      %1529 = vmatprep.subr.bf16.mxu0 0
      %1530 = vmatpush1.bf16.msra.mxu0 0
      %1531 = vmatprep.subr.bf16.mxu0 0
      %1532 = vmatpush1.bf16.msra.mxu0 0
      %1533 = vmatprep.subr.bf16.mxu0 0
      %1534 = vmatpush1.bf16.msra.mxu0 0
      %1535 = vmatprep.subr.bf16.mxu0 0
      %1536 = vmatpush1.bf16.msra.mxu0 0
      %1537 = vmatprep.subr.bf16.mxu0 0
      %1538 = vmatpush1.bf16.msra.mxu0 0
      %1539 = vmatprep.subr.bf16.mxu0 0
      %1540 = vmatpush1.bf16.msra.mxu0 0
      %1541 = vmatprep.mubr.bf16.mxu0 0
      %1542 = vmatmul.mubr.bf16.gmra.mrb[0].mxu0 %v1507
      %v1543 = vpop.f32.mrb[0].mxu0
      %v1544 = vadd.f32 0.0, %v1543
      %v1545 = vpop.f32.mrb[0].mxu0
      %v1546 = vpop.f32.mrb[0].mxu0
      %v1547 = vadd.f32 0.0, %v1546
      %v1548 = vpop.f32.mrb[0].mxu0
      %1549 = vdwg.mxu0
      %v1550 = vadd.f32 %v1440, %v1544
      %v1551 = vadd.f32 %v1441, %v1547
      %v1552 = vcombine.high %v1274, %v1274
      %v1553 = vcombine.high %v1296, %v1296
      %v1554 = vcombine.high %v1318, %v1318
      %v1555 = vunpack.i.l.s16 %v1552
      %v1556 = vunpack.i.l.s16 %v1553
      %v1557 = vunpack.i.l.s16 %v1554
      %s1558 = scalar_lea.vmem %s1, 160
      %v1559 = vld [vmem:[%s1558] sm:$0xf]
      %v1560 = vld [vmem:[%s1558 + $0x4] sm:$0xf]
      %v1561 = vld [vmem:[%s1558 + $0x8] sm:$0xf]
      %v1562 = vld [vmem:[%s1558 + $0xc] sm:$0xf]
      %v1563 = vpack.i.b16 %v1442, %v1328
      %v1564 = vpack.i.b16 %v1331, %v1555
      %v1565 = vpack.i.b16 %v1556, %v1443
      %v1566 = vpack.i.b16 %v1444, %v1334
      %v1568 = vcombine.low %v1563, %v1564
      %v1569 = vcombine.low %v1565, %v1566
      %v1571 = vunpack.c.l.s4 1966171168
      %v1572 = vunpack.c.0.s8 %v1571
      %v1573 = vlaneseq
      %v1574 = vshrl.u32 %v1573, 7
      %v1575 = vsub.s32 %v1572, %v1574
      %v1576 = vrot.slane %v1568, %v1575
      %v1578 = vunpack.c.l.s4 1966171168
      %v1579 = vunpack.c.0.s8 %v1578
      %v1580 = vlaneseq
      %v1581 = vshrl.u32 %v1580, 7
      %v1582 = vsub.s32 %v1579, %v1581
      %v1583 = vrot.slane %v1569, %v1582
      %v1585 = vunpack.c.l.s4 1966171168
      %v1586 = vunpack.c.0.s8 %v1585
      %v1587 = vlaneseq
      %v1588 = vshrl.u32 %v1587, 7
      %v1589 = vsub.s32 %v1586, %v1588
      %v1590 = vrot.slane %v1557, %v1589
      %v1591 = vcombine.low %v1576, %v1583
      %v1593 = vunpack.c.l.s4 1966171168
      %v1594 = vunpack.c.0.s8 %v1593
      %v1595 = vlaneseq
      %v1596 = vshrl.u32 %v1595, 7
      %v1597 = vsub.s32 %v1594, %v1596
      %v1598 = vrot.slane %v1591, %v1597
      %v1600 = vunpack.c.l.s4 1966171168
      %v1601 = vunpack.c.0.s8 %v1600
      %v1602 = vlaneseq
      %v1603 = vshrl.u32 %v1602, 7
      %v1604 = vsub.s32 %v1601, %v1603
      %v1605 = vrot.slane %v1590, %v1604
      %v1606 = vcombine.low %v1598, %v1605
      %v1611 = vunpack.c.l.b16 %v1559
      %v1612 = vunpack.c.l.b16 %v1560
      %v1613 = vunpack.c.l.b16 %v1561
      %v1614 = vunpack.c.l.b16 %v1562
      %v1615 = vpack.c.b16 %v1612, %v1611
      %v1616 = vpack.c.b16 %v1614, %v1613
      %v1620 = vsel %vm347, %v1606, 0
      %1622 = vmatprep.subr.bf16.mxu0 0
      %1623 = vmatpush1.bf16.msra.mxu0 %v1615
      %1624 = vmatprep.subr.bf16.mxu0 0
      %1625 = vmatpush1.bf16.msra.mxu0 %v1616
      %1626 = vmatprep.subr.bf16.mxu0 0
      %1627 = vmatpush1.bf16.msra.mxu0 0
      %1628 = vmatprep.subr.bf16.mxu0 0
      %1629 = vmatpush1.bf16.msra.mxu0 0
      %1630 = vmatprep.subr.bf16.mxu0 0
      %1631 = vmatpush1.bf16.msra.mxu0 0
      %1632 = vmatprep.subr.bf16.mxu0 0
      %1633 = vmatpush1.bf16.msra.mxu0 0
      %1634 = vmatprep.subr.bf16.mxu0 0
      %1635 = vmatpush1.bf16.msra.mxu0 0
      %1636 = vmatprep.subr.bf16.mxu0 0
      %1637 = vmatpush1.bf16.msra.mxu0 0
      %1638 = vmatprep.subr.bf16.mxu0 0
      %1639 = vmatpush1.bf16.msra.mxu0 0
      %1640 = vmatprep.subr.bf16.mxu0 0
      %1641 = vmatpush1.bf16.msra.mxu0 0
      %1642 = vmatprep.subr.bf16.mxu0 0
      %1643 = vmatpush1.bf16.msra.mxu0 0
      %1644 = vmatprep.subr.bf16.mxu0 0
      %1645 = vmatpush1.bf16.msra.mxu0 0
      %1646 = vmatprep.subr.bf16.mxu0 0
      %1647 = vmatpush1.bf16.msra.mxu0 0
      %1648 = vmatprep.subr.bf16.mxu0 0
      %1649 = vmatpush1.bf16.msra.mxu0 0
      %1650 = vmatprep.subr.bf16.mxu0 0
      %1651 = vmatpush1.bf16.msra.mxu0 0
      %1652 = vmatprep.subr.bf16.mxu0 0
      %1653 = vmatpush1.bf16.msra.mxu0 0
      %1654 = vmatprep.mubr.bf16.mxu0 0
      %1655 = vmatmul.mubr.bf16.gmra.mrb[0].mxu0 %v1620
      %v1656 = vpop.f32.mrb[0].mxu0
      %v1657 = vadd.f32 0.0, %v1656
      %v1658 = vpop.f32.mrb[0].mxu0
      %v1659 = vpop.f32.mrb[0].mxu0
      %v1660 = vadd.f32 0.0, %v1659
      %v1661 = vpop.f32.mrb[0].mxu0
      %1662 = vdwg.mxu0
      %v1663 = vadd.f32 %v1550, %v1657
      %v1664 = vadd.f32 %v1551, %v1660
      %v1665 = vunpack.i.h.s16 %v1552
      %v1666 = vunpack.i.h.s16 %v1553
      %v1667 = vunpack.i.h.s16 %v1554
      %s1668 = scalar_lea.vmem %s1, 176
      %v1669 = vld [vmem:[%s1668] sm:$0xf]
      %v1670 = vld [vmem:[%s1668 + $0x4] sm:$0xf]
      %v1671 = vld [vmem:[%s1668 + $0x8] sm:$0xf]
      %v1672 = vld [vmem:[%s1668 + $0xc] sm:$0xf]
      %v1673 = vpack.i.b16 %v1555, %v1442
      %v1674 = vpack.i.b16 %v1443, %v1665
      %v1675 = vpack.i.b16 %v1666, %v1556
      %v1676 = vpack.i.b16 %v1557, %v1444
      %v1678 = vcombine.low %v1673, %v1674
      %v1679 = vcombine.low %v1675, %v1676
      %v1681 = vunpack.c.l.s4 1966171168
      %v1682 = vunpack.c.0.s8 %v1681
      %v1683 = vlaneseq
      %v1684 = vshrl.u32 %v1683, 7
      %v1685 = vsub.s32 %v1682, %v1684
      %v1686 = vrot.slane %v1678, %v1685
      %v1688 = vunpack.c.l.s4 1966171168
      %v1689 = vunpack.c.0.s8 %v1688
      %v1690 = vlaneseq
      %v1691 = vshrl.u32 %v1690, 7
      %v1692 = vsub.s32 %v1689, %v1691
      %v1693 = vrot.slane %v1679, %v1692
      %v1695 = vunpack.c.l.s4 1966171168
      %v1696 = vunpack.c.0.s8 %v1695
      %v1697 = vlaneseq
      %v1698 = vshrl.u32 %v1697, 7
      %v1699 = vsub.s32 %v1696, %v1698
      %v1700 = vrot.slane %v1667, %v1699
      %v1701 = vcombine.low %v1686, %v1693
      %v1703 = vunpack.c.l.s4 1966171168
      %v1704 = vunpack.c.0.s8 %v1703
      %v1705 = vlaneseq
      %v1706 = vshrl.u32 %v1705, 7
      %v1707 = vsub.s32 %v1704, %v1706
      %v1708 = vrot.slane %v1701, %v1707
      %v1710 = vunpack.c.l.s4 1966171168
      %v1711 = vunpack.c.0.s8 %v1710
      %v1712 = vlaneseq
      %v1713 = vshrl.u32 %v1712, 7
      %v1714 = vsub.s32 %v1711, %v1713
      %v1715 = vrot.slane %v1700, %v1714
      %v1716 = vcombine.low %v1708, %v1715
      %v1721 = vunpack.c.l.b16 %v1669
      %v1722 = vunpack.c.l.b16 %v1670
      %v1723 = vunpack.c.l.b16 %v1671
      %v1724 = vunpack.c.l.b16 %v1672
      %v1725 = vpack.c.b16 %v1722, %v1721
      %v1726 = vpack.c.b16 %v1724, %v1723
      %v1730 = vsel %vm347, %v1716, 0
      %1732 = vmatprep.subr.bf16.mxu0 0
      %1733 = vmatpush1.bf16.msra.mxu0 %v1725
      %1734 = vmatprep.subr.bf16.mxu0 0
      %1735 = vmatpush1.bf16.msra.mxu0 %v1726
      %1736 = vmatprep.subr.bf16.mxu0 0
      %1737 = vmatpush1.bf16.msra.mxu0 0
      %1738 = vmatprep.subr.bf16.mxu0 0
      %1739 = vmatpush1.bf16.msra.mxu0 0
      %1740 = vmatprep.subr.bf16.mxu0 0
      %1741 = vmatpush1.bf16.msra.mxu0 0
      %1742 = vmatprep.subr.bf16.mxu0 0
      %1743 = vmatpush1.bf16.msra.mxu0 0
      %1744 = vmatprep.subr.bf16.mxu0 0
      %1745 = vmatpush1.bf16.msra.mxu0 0
      %1746 = vmatprep.subr.bf16.mxu0 0
      %1747 = vmatpush1.bf16.msra.mxu0 0
      %1748 = vmatprep.subr.bf16.mxu0 0
      %1749 = vmatpush1.bf16.msra.mxu0 0
      %1750 = vmatprep.subr.bf16.mxu0 0
      %1751 = vmatpush1.bf16.msra.mxu0 0
      %1752 = vmatprep.subr.bf16.mxu0 0
      %1753 = vmatpush1.bf16.msra.mxu0 0
      %1754 = vmatprep.subr.bf16.mxu0 0
      %1755 = vmatpush1.bf16.msra.mxu0 0
      %1756 = vmatprep.subr.bf16.mxu0 0
      %1757 = vmatpush1.bf16.msra.mxu0 0
      %1758 = vmatprep.subr.bf16.mxu0 0
      %1759 = vmatpush1.bf16.msra.mxu0 0
      %1760 = vmatprep.subr.bf16.mxu0 0
      %1761 = vmatpush1.bf16.msra.mxu0 0
      %1762 = vmatprep.subr.bf16.mxu0 0
      %1763 = vmatpush1.bf16.msra.mxu0 0
      %1764 = vmatprep.mubr.bf16.mxu0 0
      %1765 = vmatmul.mubr.bf16.gmra.mrb[0].mxu0 %v1730
      %v1766 = vpop.f32.mrb[0].mxu0
      %v1767 = vadd.f32 0.0, %v1766
      %v1768 = vpop.f32.mrb[0].mxu0
      %v1769 = vpop.f32.mrb[0].mxu0
      %v1770 = vadd.f32 0.0, %v1769
      %v1771 = vpop.f32.mrb[0].mxu0
      %1772 = vdwg.mxu0
      %v1773 = vadd.f32 %v1663, %v1767
      %v1774 = vadd.f32 %v1664, %v1770
      %s1775 = sadd.s32 %s195, 3
      %s1776 = smul.addr %s1775, 4
      %s1777 = scalar_lea.vmem %s183, %s1776
      %v1778 = vld [vmem:[%s1777] sm:$0x7]
      %v1779 = vld [vmem:[%s1777 + $0x4] sm:$0x7]
      %v1780 = vld [vmem:[%s1777 + $0x8] sm:$0x7]
      %v1785 = vunpack.c.l.s4 1966171168
      %v1786 = vunpack.c.0.s8 %v1785
      %v1787 = vlaneseq
      %v1788 = vshrl.u32 %v1787, 7
      %v1789 = vsub.s32 %v1786, %v1788
      %v1790 = vrot.slane %v1778, %v1789
      %v1791 = vcombine.high %v1790, %v1790
      %v1793 = vunpack.c.l.s4 1966171168
      %v1794 = vunpack.c.0.s8 %v1793
      %v1795 = vlaneseq
      %v1796 = vshrl.u32 %v1795, 7
      %v1797 = vsub.s32 %v1794, %v1796
      %v1798 = vrot.slane %v1790, %v1797
      %v1800 = vunpack.c.l.s4 1966171168
      %v1801 = vunpack.c.0.s8 %v1800
      %v1802 = vlaneseq
      %v1803 = vshrl.u32 %v1802, 7
      %v1804 = vsub.s32 %v1801, %v1803
      %v1805 = vrot.slane %v1791, %v1804
      %v1807 = vunpack.c.l.s4 1966171168
      %v1808 = vunpack.c.0.s8 %v1807
      %v1809 = vlaneseq
      %v1810 = vshrl.u32 %v1809, 7
      %v1811 = vsub.s32 %v1808, %v1810
      %v1812 = vrot.slane %v1779, %v1811
      %v1813 = vcombine.high %v1812, %v1812
      %v1815 = vunpack.c.l.s4 1966171168
      %v1816 = vunpack.c.0.s8 %v1815
      %v1817 = vlaneseq
      %v1818 = vshrl.u32 %v1817, 7
      %v1819 = vsub.s32 %v1816, %v1818
      %v1820 = vrot.slane %v1812, %v1819
      %v1822 = vunpack.c.l.s4 1966171168
      %v1823 = vunpack.c.0.s8 %v1822
      %v1824 = vlaneseq
      %v1825 = vshrl.u32 %v1824, 7
      %v1826 = vsub.s32 %v1823, %v1825
      %v1827 = vrot.slane %v1813, %v1826
      %v1829 = vunpack.c.l.s4 1966171168
      %v1830 = vunpack.c.0.s8 %v1829
      %v1831 = vlaneseq
      %v1832 = vshrl.u32 %v1831, 7
      %v1833 = vsub.s32 %v1830, %v1832
      %v1834 = vrot.slane %v1780, %v1833
      %v1835 = vcombine.high %v1834, %v1834
      %v1837 = vunpack.c.l.s4 1966171168
      %v1838 = vunpack.c.0.s8 %v1837
      %v1839 = vlaneseq
      %v1840 = vshrl.u32 %v1839, 7
      %v1841 = vsub.s32 %v1838, %v1840
      %v1842 = vrot.slane %v1834, %v1841
      %v1844 = vunpack.c.l.s4 1966171168
      %v1845 = vunpack.c.0.s8 %v1844
      %v1846 = vlaneseq
      %v1847 = vshrl.u32 %v1846, 7
      %v1848 = vsub.s32 %v1845, %v1847
      %v1849 = vrot.slane %v1835, %v1848
      %v1850 = vunpack.i.l.s16 %v1798
      %v1851 = vunpack.i.h.s16 %v1798
      %v1852 = vunpack.i.l.s16 %v1805
      %v1853 = vunpack.i.l.s16 %v1820
      %v1854 = vunpack.i.h.s16 %v1820
      %v1855 = vunpack.i.l.s16 %v1827
      %v1856 = vunpack.i.l.s16 %v1842
      %v1857 = vunpack.i.h.s16 %v1842
      %v1858 = vunpack.i.l.s16 %v1849
      %s1859 = scalar_lea.vmem %s1, 192
      %v1860 = vld [vmem:[%s1859] sm:$0xf]
      %v1861 = vld [vmem:[%s1859 + $0x4] sm:$0xf]
      %v1862 = vld [vmem:[%s1859 + $0x8] sm:$0xf]
      %v1863 = vld [vmem:[%s1859 + $0xc] sm:$0xf]
      %v1864 = vpack.i.b16 %v1851, %v1850
      %v1865 = vpack.i.b16 %v1853, %v1852
      %v1866 = vpack.i.b16 %v1855, %v1854
      %v1867 = vpack.i.b16 %v1857, %v1856
      %v1869 = vcombine.low %v1864, %v1865
      %v1870 = vcombine.low %v1866, %v1867
      %v1872 = vunpack.c.l.s4 1966171168
      %v1873 = vunpack.c.0.s8 %v1872
      %v1874 = vlaneseq
      %v1875 = vshrl.u32 %v1874, 7
      %v1876 = vsub.s32 %v1873, %v1875
      %v1877 = vrot.slane %v1869, %v1876
      %v1879 = vunpack.c.l.s4 1966171168
      %v1880 = vunpack.c.0.s8 %v1879
      %v1881 = vlaneseq
      %v1882 = vshrl.u32 %v1881, 7
      %v1883 = vsub.s32 %v1880, %v1882
      %v1884 = vrot.slane %v1870, %v1883
      %v1886 = vunpack.c.l.s4 1966171168
      %v1887 = vunpack.c.0.s8 %v1886
      %v1888 = vlaneseq
      %v1889 = vshrl.u32 %v1888, 7
      %v1890 = vsub.s32 %v1887, %v1889
      %v1891 = vrot.slane %v1858, %v1890
      %v1892 = vcombine.low %v1877, %v1884
      %v1894 = vunpack.c.l.s4 1966171168
      %v1895 = vunpack.c.0.s8 %v1894
      %v1896 = vlaneseq
      %v1897 = vshrl.u32 %v1896, 7
      %v1898 = vsub.s32 %v1895, %v1897
      %v1899 = vrot.slane %v1892, %v1898
      %v1901 = vunpack.c.l.s4 1966171168
      %v1902 = vunpack.c.0.s8 %v1901
      %v1903 = vlaneseq
      %v1904 = vshrl.u32 %v1903, 7
      %v1905 = vsub.s32 %v1902, %v1904
      %v1906 = vrot.slane %v1891, %v1905
      %v1907 = vcombine.low %v1899, %v1906
      %v1912 = vunpack.c.l.b16 %v1860
      %v1913 = vunpack.c.l.b16 %v1861
      %v1914 = vunpack.c.l.b16 %v1862
      %v1915 = vunpack.c.l.b16 %v1863
      %v1916 = vpack.c.b16 %v1913, %v1912
      %v1917 = vpack.c.b16 %v1915, %v1914
      %v1921 = vsel %vm347, %v1907, 0
      %1923 = vmatprep.subr.bf16.mxu0 0
      %1924 = vmatpush1.bf16.msra.mxu0 %v1916
      %1925 = vmatprep.subr.bf16.mxu0 0
      %1926 = vmatpush1.bf16.msra.mxu0 %v1917
      %1927 = vmatprep.subr.bf16.mxu0 0
      %1928 = vmatpush1.bf16.msra.mxu0 0
      %1929 = vmatprep.subr.bf16.mxu0 0
      %1930 = vmatpush1.bf16.msra.mxu0 0
      %1931 = vmatprep.subr.bf16.mxu0 0
      %1932 = vmatpush1.bf16.msra.mxu0 0
      %1933 = vmatprep.subr.bf16.mxu0 0
      %1934 = vmatpush1.bf16.msra.mxu0 0
      %1935 = vmatprep.subr.bf16.mxu0 0
      %1936 = vmatpush1.bf16.msra.mxu0 0
      %1937 = vmatprep.subr.bf16.mxu0 0
      %1938 = vmatpush1.bf16.msra.mxu0 0
      %1939 = vmatprep.subr.bf16.mxu0 0
      %1940 = vmatpush1.bf16.msra.mxu0 0
      %1941 = vmatprep.subr.bf16.mxu0 0
      %1942 = vmatpush1.bf16.msra.mxu0 0
      %1943 = vmatprep.subr.bf16.mxu0 0
      %1944 = vmatpush1.bf16.msra.mxu0 0
      %1945 = vmatprep.subr.bf16.mxu0 0
      %1946 = vmatpush1.bf16.msra.mxu0 0
      %1947 = vmatprep.subr.bf16.mxu0 0
      %1948 = vmatpush1.bf16.msra.mxu0 0
      %1949 = vmatprep.subr.bf16.mxu0 0
      %1950 = vmatpush1.bf16.msra.mxu0 0
      %1951 = vmatprep.subr.bf16.mxu0 0
      %1952 = vmatpush1.bf16.msra.mxu0 0
      %1953 = vmatprep.subr.bf16.mxu0 0
      %1954 = vmatpush1.bf16.msra.mxu0 0
      %1955 = vmatprep.mubr.bf16.mxu0 0
      %1956 = vmatmul.mubr.bf16.gmra.mrb[0].mxu0 %v1921
      %v1957 = vpop.f32.mrb[0].mxu0
      %v1958 = vadd.f32 0.0, %v1957
      %v1959 = vpop.f32.mrb[0].mxu0
      %v1960 = vpop.f32.mrb[0].mxu0
      %v1961 = vadd.f32 0.0, %v1960
      %v1962 = vpop.f32.mrb[0].mxu0
      %1963 = vdwg.mxu0
      %v1964 = vadd.f32 %v1773, %v1958
      %v1965 = vadd.f32 %v1774, %v1961
      %v1966 = vunpack.i.h.s16 %v1805
      %v1967 = vunpack.i.h.s16 %v1827
      %v1968 = vunpack.i.h.s16 %v1849
      %s1969 = scalar_lea.vmem %s1, 208
      %v1970 = vld [vmem:[%s1969] sm:$0xf]
      %v1971 = vld [vmem:[%s1969 + $0x4] sm:$0xf]
      %v1972 = vld [vmem:[%s1969 + $0x8] sm:$0xf]
      %v1973 = vld [vmem:[%s1969 + $0xc] sm:$0xf]
      %v1974 = vpack.i.b16 %v1852, %v1851
      %v1975 = vpack.i.b16 %v1854, %v1966
      %v1976 = vpack.i.b16 %v1967, %v1855
      %v1977 = vpack.i.b16 %v1858, %v1857
      %v1979 = vcombine.low %v1974, %v1975
      %v1980 = vcombine.low %v1976, %v1977
      %v1982 = vunpack.c.l.s4 1966171168
      %v1983 = vunpack.c.0.s8 %v1982
      %v1984 = vlaneseq
      %v1985 = vshrl.u32 %v1984, 7
      %v1986 = vsub.s32 %v1983, %v1985
      %v1987 = vrot.slane %v1979, %v1986
      %v1989 = vunpack.c.l.s4 1966171168
      %v1990 = vunpack.c.0.s8 %v1989
      %v1991 = vlaneseq
      %v1992 = vshrl.u32 %v1991, 7
      %v1993 = vsub.s32 %v1990, %v1992
      %v1994 = vrot.slane %v1980, %v1993
      %v1996 = vunpack.c.l.s4 1966171168
      %v1997 = vunpack.c.0.s8 %v1996
      %v1998 = vlaneseq
      %v1999 = vshrl.u32 %v1998, 7
      %v2000 = vsub.s32 %v1997, %v1999
      %v2001 = vrot.slane %v1968, %v2000
      %v2002 = vcombine.low %v1987, %v1994
      %v2004 = vunpack.c.l.s4 1966171168
      %v2005 = vunpack.c.0.s8 %v2004
      %v2006 = vlaneseq
      %v2007 = vshrl.u32 %v2006, 7
      %v2008 = vsub.s32 %v2005, %v2007
      %v2009 = vrot.slane %v2002, %v2008
      %v2011 = vunpack.c.l.s4 1966171168
      %v2012 = vunpack.c.0.s8 %v2011
      %v2013 = vlaneseq
      %v2014 = vshrl.u32 %v2013, 7
      %v2015 = vsub.s32 %v2012, %v2014
      %v2016 = vrot.slane %v2001, %v2015
      %v2017 = vcombine.low %v2009, %v2016
      %v2022 = vunpack.c.l.b16 %v1970
      %v2023 = vunpack.c.l.b16 %v1971
      %v2024 = vunpack.c.l.b16 %v1972
      %v2025 = vunpack.c.l.b16 %v1973
      %v2026 = vpack.c.b16 %v2023, %v2022
      %v2027 = vpack.c.b16 %v2025, %v2024
      %v2031 = vsel %vm347, %v2017, 0
      %2033 = vmatprep.subr.bf16.mxu0 0
      %2034 = vmatpush1.bf16.msra.mxu0 %v2026
      %2035 = vmatprep.subr.bf16.mxu0 0
      %2036 = vmatpush1.bf16.msra.mxu0 %v2027
      %2037 = vmatprep.subr.bf16.mxu0 0
      %2038 = vmatpush1.bf16.msra.mxu0 0
      %2039 = vmatprep.subr.bf16.mxu0 0
      %2040 = vmatpush1.bf16.msra.mxu0 0
      %2041 = vmatprep.subr.bf16.mxu0 0
      %2042 = vmatpush1.bf16.msra.mxu0 0
      %2043 = vmatprep.subr.bf16.mxu0 0
      %2044 = vmatpush1.bf16.msra.mxu0 0
      %2045 = vmatprep.subr.bf16.mxu0 0
      %2046 = vmatpush1.bf16.msra.mxu0 0
      %2047 = vmatprep.subr.bf16.mxu0 0
      %2048 = vmatpush1.bf16.msra.mxu0 0
      %2049 = vmatprep.subr.bf16.mxu0 0
      %2050 = vmatpush1.bf16.msra.mxu0 0
      %2051 = vmatprep.subr.bf16.mxu0 0
      %2052 = vmatpush1.bf16.msra.mxu0 0
      %2053 = vmatprep.subr.bf16.mxu0 0
      %2054 = vmatpush1.bf16.msra.mxu0 0
      %2055 = vmatprep.subr.bf16.mxu0 0
      %2056 = vmatpush1.bf16.msra.mxu0 0
      %2057 = vmatprep.subr.bf16.mxu0 0
      %2058 = vmatpush1.bf16.msra.mxu0 0
      %2059 = vmatprep.subr.bf16.mxu0 0
      %2060 = vmatpush1.bf16.msra.mxu0 0
      %2061 = vmatprep.subr.bf16.mxu0 0
      %2062 = vmatpush1.bf16.msra.mxu0 0
      %2063 = vmatprep.subr.bf16.mxu0 0
      %2064 = vmatpush1.bf16.msra.mxu0 0
      %2065 = vmatprep.mubr.bf16.mxu0 0
      %2066 = vmatmul.mubr.bf16.gmra.mrb[0].mxu0 %v2031
      %v2067 = vpop.f32.mrb[0].mxu0
      %v2068 = vadd.f32 0.0, %v2067
      %v2069 = vpop.f32.mrb[0].mxu0
      %v2070 = vpop.f32.mrb[0].mxu0
      %v2071 = vadd.f32 0.0, %v2070
      %v2072 = vpop.f32.mrb[0].mxu0
      %2073 = vdwg.mxu0
      %v2074 = vadd.f32 %v1964, %v2068
      %v2075 = vadd.f32 %v1965, %v2071
      %v2076 = vcombine.high %v1798, %v1798
      %v2077 = vcombine.high %v1820, %v1820
      %v2078 = vcombine.high %v1842, %v1842
      %v2079 = vunpack.i.l.s16 %v2076
      %v2080 = vunpack.i.l.s16 %v2077
      %v2081 = vunpack.i.l.s16 %v2078
      %s2082 = scalar_lea.vmem %s1, 224
      %v2083 = vld [vmem:[%s2082] sm:$0xf]
      %v2084 = vld [vmem:[%s2082 + $0x4] sm:$0xf]
      %v2085 = vld [vmem:[%s2082 + $0x8] sm:$0xf]
      %v2086 = vld [vmem:[%s2082 + $0xc] sm:$0xf]
      %v2087 = vpack.i.b16 %v1966, %v1852
      %v2088 = vpack.i.b16 %v1855, %v2079
      %v2089 = vpack.i.b16 %v2080, %v1967
      %v2090 = vpack.i.b16 %v1968, %v1858
      %v2092 = vcombine.low %v2087, %v2088
      %v2093 = vcombine.low %v2089, %v2090
      %v2095 = vunpack.c.l.s4 1966171168
      %v2096 = vunpack.c.0.s8 %v2095
      %v2097 = vlaneseq
      %v2098 = vshrl.u32 %v2097, 7
      %v2099 = vsub.s32 %v2096, %v2098
      %v2100 = vrot.slane %v2092, %v2099
      %v2102 = vunpack.c.l.s4 1966171168
      %v2103 = vunpack.c.0.s8 %v2102
      %v2104 = vlaneseq
      %v2105 = vshrl.u32 %v2104, 7
      %v2106 = vsub.s32 %v2103, %v2105
      %v2107 = vrot.slane %v2093, %v2106
      %v2109 = vunpack.c.l.s4 1966171168
      %v2110 = vunpack.c.0.s8 %v2109
      %v2111 = vlaneseq
      %v2112 = vshrl.u32 %v2111, 7
      %v2113 = vsub.s32 %v2110, %v2112
      %v2114 = vrot.slane %v2081, %v2113
      %v2115 = vcombine.low %v2100, %v2107
      %v2117 = vunpack.c.l.s4 1966171168
      %v2118 = vunpack.c.0.s8 %v2117
      %v2119 = vlaneseq
      %v2120 = vshrl.u32 %v2119, 7
      %v2121 = vsub.s32 %v2118, %v2120
      %v2122 = vrot.slane %v2115, %v2121
      %v2124 = vunpack.c.l.s4 1966171168
      %v2125 = vunpack.c.0.s8 %v2124
      %v2126 = vlaneseq
      %v2127 = vshrl.u32 %v2126, 7
      %v2128 = vsub.s32 %v2125, %v2127
      %v2129 = vrot.slane %v2114, %v2128
      %v2130 = vcombine.low %v2122, %v2129
      %v2135 = vunpack.c.l.b16 %v2083
      %v2136 = vunpack.c.l.b16 %v2084
      %v2137 = vunpack.c.l.b16 %v2085
      %v2138 = vunpack.c.l.b16 %v2086
      %v2139 = vpack.c.b16 %v2136, %v2135
      %v2140 = vpack.c.b16 %v2138, %v2137
      %v2144 = vsel %vm347, %v2130, 0
      %2146 = vmatprep.subr.bf16.mxu0 0
      %2147 = vmatpush1.bf16.msra.mxu0 %v2139
      %2148 = vmatprep.subr.bf16.mxu0 0
      %2149 = vmatpush1.bf16.msra.mxu0 %v2140
      %2150 = vmatprep.subr.bf16.mxu0 0
      %2151 = vmatpush1.bf16.msra.mxu0 0
      %2152 = vmatprep.subr.bf16.mxu0 0
      %2153 = vmatpush1.bf16.msra.mxu0 0
      %2154 = vmatprep.subr.bf16.mxu0 0
      %2155 = vmatpush1.bf16.msra.mxu0 0
      %2156 = vmatprep.subr.bf16.mxu0 0
      %2157 = vmatpush1.bf16.msra.mxu0 0
      %2158 = vmatprep.subr.bf16.mxu0 0
      %2159 = vmatpush1.bf16.msra.mxu0 0
      %2160 = vmatprep.subr.bf16.mxu0 0
      %2161 = vmatpush1.bf16.msra.mxu0 0
      %2162 = vmatprep.subr.bf16.mxu0 0
      %2163 = vmatpush1.bf16.msra.mxu0 0
      %2164 = vmatprep.subr.bf16.mxu0 0
      %2165 = vmatpush1.bf16.msra.mxu0 0
      %2166 = vmatprep.subr.bf16.mxu0 0
      %2167 = vmatpush1.bf16.msra.mxu0 0
      %2168 = vmatprep.subr.bf16.mxu0 0
      %2169 = vmatpush1.bf16.msra.mxu0 0
      %2170 = vmatprep.subr.bf16.mxu0 0
      %2171 = vmatpush1.bf16.msra.mxu0 0
      %2172 = vmatprep.subr.bf16.mxu0 0
      %2173 = vmatpush1.bf16.msra.mxu0 0
      %2174 = vmatprep.subr.bf16.mxu0 0
      %2175 = vmatpush1.bf16.msra.mxu0 0
      %2176 = vmatprep.subr.bf16.mxu0 0
      %2177 = vmatpush1.bf16.msra.mxu0 0
      %2178 = vmatprep.mubr.bf16.mxu0 0
      %2179 = vmatmul.mubr.bf16.gmra.mrb[0].mxu0 %v2144
      %v2180 = vpop.f32.mrb[0].mxu0
      %v2181 = vadd.f32 0.0, %v2180
      %v2182 = vpop.f32.mrb[0].mxu0
      %v2183 = vpop.f32.mrb[0].mxu0
      %v2184 = vadd.f32 0.0, %v2183
      %v2185 = vpop.f32.mrb[0].mxu0
      %2186 = vdwg.mxu0
      %v2187 = vadd.f32 %v2074, %v2181
      %v2188 = vadd.f32 %v2075, %v2184
      %v2189 = vunpack.i.h.s16 %v2076
      %v2190 = vunpack.i.h.s16 %v2077
      %v2191 = vunpack.i.h.s16 %v2078
      %s2192 = scalar_lea.vmem %s1, 240
      %v2193 = vld [vmem:[%s2192] sm:$0xf]
      %v2194 = vld [vmem:[%s2192 + $0x4] sm:$0xf]
      %v2195 = vld [vmem:[%s2192 + $0x8] sm:$0xf]
      %v2196 = vld [vmem:[%s2192 + $0xc] sm:$0xf]
      %v2197 = vpack.i.b16 %v2079, %v1966
      %v2198 = vpack.i.b16 %v1967, %v2189
      %v2199 = vpack.i.b16 %v2190, %v2080
      %v2200 = vpack.i.b16 %v2081, %v1968
      %v2202 = vcombine.low %v2197, %v2198
      %v2203 = vcombine.low %v2199, %v2200
      %v2205 = vunpack.c.l.s4 1966171168
      %v2206 = vunpack.c.0.s8 %v2205
      %v2207 = vlaneseq
      %v2208 = vshrl.u32 %v2207, 7
      %v2209 = vsub.s32 %v2206, %v2208
      %v2210 = vrot.slane %v2202, %v2209
      %v2212 = vunpack.c.l.s4 1966171168
      %v2213 = vunpack.c.0.s8 %v2212
      %v2214 = vlaneseq
      %v2215 = vshrl.u32 %v2214, 7
      %v2216 = vsub.s32 %v2213, %v2215
      %v2217 = vrot.slane %v2203, %v2216
      %v2219 = vunpack.c.l.s4 1966171168
      %v2220 = vunpack.c.0.s8 %v2219
      %v2221 = vlaneseq
      %v2222 = vshrl.u32 %v2221, 7
      %v2223 = vsub.s32 %v2220, %v2222
      %v2224 = vrot.slane %v2191, %v2223
      %v2225 = vcombine.low %v2210, %v2217
      %v2227 = vunpack.c.l.s4 1966171168
      %v2228 = vunpack.c.0.s8 %v2227
      %v2229 = vlaneseq
      %v2230 = vshrl.u32 %v2229, 7
      %v2231 = vsub.s32 %v2228, %v2230
      %v2232 = vrot.slane %v2225, %v2231
      %v2234 = vunpack.c.l.s4 1966171168
      %v2235 = vunpack.c.0.s8 %v2234
      %v2236 = vlaneseq
      %v2237 = vshrl.u32 %v2236, 7
      %v2238 = vsub.s32 %v2235, %v2237
      %v2239 = vrot.slane %v2224, %v2238
      %v2240 = vcombine.low %v2232, %v2239
      %v2245 = vunpack.c.l.b16 %v2193
      %v2246 = vunpack.c.l.b16 %v2194
      %v2247 = vunpack.c.l.b16 %v2195
      %v2248 = vunpack.c.l.b16 %v2196
      %v2249 = vpack.c.b16 %v2246, %v2245
      %v2250 = vpack.c.b16 %v2248, %v2247
      %v2254 = vsel %vm347, %v2240, 0
      %2256 = vmatprep.subr.bf16.mxu0 0
      %2257 = vmatpush1.bf16.msra.mxu0 %v2249
      %2258 = vmatprep.subr.bf16.mxu0 0
      %2259 = vmatpush1.bf16.msra.mxu0 %v2250
      %2260 = vmatprep.subr.bf16.mxu0 0
      %2261 = vmatpush1.bf16.msra.mxu0 0
      %2262 = vmatprep.subr.bf16.mxu0 0
      %2263 = vmatpush1.bf16.msra.mxu0 0
      %2264 = vmatprep.subr.bf16.mxu0 0
      %2265 = vmatpush1.bf16.msra.mxu0 0
      %2266 = vmatprep.subr.bf16.mxu0 0
      %2267 = vmatpush1.bf16.msra.mxu0 0
      %2268 = vmatprep.subr.bf16.mxu0 0
      %2269 = vmatpush1.bf16.msra.mxu0 0
      %2270 = vmatprep.subr.bf16.mxu0 0
      %2271 = vmatpush1.bf16.msra.mxu0 0
      %2272 = vmatprep.subr.bf16.mxu0 0
      %2273 = vmatpush1.bf16.msra.mxu0 0
      %2274 = vmatprep.subr.bf16.mxu0 0
      %2275 = vmatpush1.bf16.msra.mxu0 0
      %2276 = vmatprep.subr.bf16.mxu0 0
      %2277 = vmatpush1.bf16.msra.mxu0 0
      %2278 = vmatprep.subr.bf16.mxu0 0
      %2279 = vmatpush1.bf16.msra.mxu0 0
      %2280 = vmatprep.subr.bf16.mxu0 0
      %2281 = vmatpush1.bf16.msra.mxu0 0
      %2282 = vmatprep.subr.bf16.mxu0 0
      %2283 = vmatpush1.bf16.msra.mxu0 0
      %2284 = vmatprep.subr.bf16.mxu0 0
      %2285 = vmatpush1.bf16.msra.mxu0 0
      %2286 = vmatprep.subr.bf16.mxu0 0
      %2287 = vmatpush1.bf16.msra.mxu0 0
      %2288 = vmatprep.mubr.bf16.mxu0 0
      %2289 = vmatmul.mubr.bf16.gmra.mrb[0].mxu0 %v2254
      %v2290 = vpop.f32.mrb[0].mxu0
      %v2291 = vadd.f32 0.0, %v2290
      %v2292 = vpop.f32.mrb[0].mxu0
      %v2293 = vpop.f32.mrb[0].mxu0
      %v2294 = vadd.f32 0.0, %v2293
      %v2295 = vpop.f32.mrb[0].mxu0
      %2296 = vdwg.mxu0
      %v2297 = vadd.f32 %v2187, %v2291
      %v2298 = vadd.f32 %v2188, %v2294
      %vm2299 = vcmp.gt.f32.partialorder %v2297, 0.0
      %vm2300 = vcmp.gt.f32.partialorder %v2298, 0.0
      %v2301 = vmul.f32 %v2297, 0.2
      %v2302 = vmul.f32 %v2298, 0.2
      %v2303 = vsel %vm2299, %v2297, %v2301
      %v2304 = vsel %vm2300, %v2298, %v2302
      %v2307 = vcombine.high %v2303, %v2303
      %v2309 = vunpack.c.l.s4 1966171168
      %v2310 = vunpack.c.0.s8 %v2309
      %v2311 = vlaneseq
      %v2312 = vshrl.u32 %v2311, 7
      %v2313 = vsub.s32 %v2310, %v2312
      %v2314 = vrot.slane %v2303, %v2313
      %v2316 = vunpack.c.l.s4 1966171168
      %v2317 = vunpack.c.0.s8 %v2316
      %v2318 = vlaneseq
      %v2319 = vshrl.u32 %v2318, 7
      %v2320 = vsub.s32 %v2317, %v2319
      %v2321 = vrot.slane %v2307, %v2320
      %v2322 = vcombine.high %v2314, %v2314
      %v2323 = vcombine.high %v2321, %v2321
      %v2325 = vunpack.c.l.s4 1966171168
      %v2326 = vunpack.c.0.s8 %v2325
      %v2327 = vlaneseq
      %v2328 = vshrl.u32 %v2327, 7
      %v2329 = vsub.s32 %v2326, %v2328
      %v2330 = vrot.slane %v2314, %v2329
      %v2332 = vunpack.c.l.s4 1966171168
      %v2333 = vunpack.c.0.s8 %v2332
      %v2334 = vlaneseq
      %v2335 = vshrl.u32 %v2334, 7
      %v2336 = vsub.s32 %v2333, %v2335
      %v2337 = vrot.slane %v2321, %v2336
      %v2339 = vunpack.c.l.s4 1966171168
      %v2340 = vunpack.c.0.s8 %v2339
      %v2341 = vlaneseq
      %v2342 = vshrl.u32 %v2341, 7
      %v2343 = vsub.s32 %v2340, %v2342
      %v2344 = vrot.slane %v2322, %v2343
      %v2346 = vunpack.c.l.s4 1966171168
      %v2347 = vunpack.c.0.s8 %v2346
      %v2348 = vlaneseq
      %v2349 = vshrl.u32 %v2348, 7
      %v2350 = vsub.s32 %v2347, %v2349
      %v2351 = vrot.slane %v2323, %v2350
      %v2352 = vcombine.high %v2330, %v2330
      %v2353 = vcombine.high %v2337, %v2337
      %v2354 = vcombine.high %v2344, %v2344
      %v2355 = vcombine.high %v2351, %v2351
      %v2357 = vunpack.c.l.s4 1966171168
      %v2358 = vunpack.c.0.s8 %v2357
      %v2359 = vlaneseq
      %v2360 = vshrl.u32 %v2359, 7
      %v2361 = vsub.s32 %v2358, %v2360
      %v2362 = vrot.slane %v2304, %v2361
      %v2364 = vunpack.c.l.s4 1966171168
      %v2365 = vunpack.c.0.s8 %v2364
      %v2366 = vlaneseq
      %v2367 = vshrl.u32 %v2366, 7
      %v2368 = vsub.s32 %v2365, %v2367
      %v2369 = vrot.slane %v2362, %v2368
      %v2370 = vcombine.low %v2330, %v2344
      %v2372 = vunpack.c.l.s4 1966171168
      %v2373 = vunpack.c.0.s8 %v2372
      %v2374 = vlaneseq
      %v2375 = vshrl.u32 %v2374, 7
      %v2376 = vsub.s32 %v2373, %v2375
      %v2377 = vrot.slane %v2370, %v2376
      %v2379 = vunpack.c.l.s4 1966171168
      %v2380 = vunpack.c.0.s8 %v2379
      %v2381 = vlaneseq
      %v2382 = vshrl.u32 %v2381, 7
      %v2383 = vsub.s32 %v2380, %v2382
      %v2384 = vrot.slane %v2352, %v2383
      %v2385 = vcombine.low %v2377, %v2384
      %v2387 = vunpack.c.l.s4 1966171168
      %v2388 = vunpack.c.0.s8 %v2387
      %v2389 = vlaneseq
      %v2390 = vshrl.u32 %v2389, 7
      %v2391 = vsub.s32 %v2388, %v2390
      %v2392 = vrot.slane %v2385, %v2391
      %v2393 = vcombine.low %v2354, %v2337
      %v2395 = vunpack.c.l.s4 1966171168
      %v2396 = vunpack.c.0.s8 %v2395
      %v2397 = vlaneseq
      %v2398 = vshrl.u32 %v2397, 7
      %v2399 = vsub.s32 %v2396, %v2398
      %v2400 = vrot.slane %v2393, %v2399
      %v2402 = vunpack.c.l.s4 1966171168
      %v2403 = vunpack.c.0.s8 %v2402
      %v2404 = vlaneseq
      %v2405 = vshrl.u32 %v2404, 7
      %v2406 = vsub.s32 %v2403, %v2405
      %v2407 = vrot.slane %v2351, %v2406
      %v2408 = vcombine.low %v2400, %v2407
      %v2410 = vunpack.c.l.s4 1966171168
      %v2411 = vunpack.c.0.s8 %v2410
      %v2412 = vlaneseq
      %v2413 = vshrl.u32 %v2412, 7
      %v2414 = vsub.s32 %v2411, %v2413
      %v2415 = vrot.slane %v2408, %v2414
      %v2416 = vcombine.low %v2353, %v2355
      %v2418 = vunpack.c.l.s4 1966171168
      %v2419 = vunpack.c.0.s8 %v2418
      %v2420 = vlaneseq
      %v2421 = vshrl.u32 %v2420, 7
      %v2422 = vsub.s32 %v2419, %v2421
      %v2423 = vrot.slane %v2416, %v2422
      %v2425 = vunpack.c.l.s4 1966171168
      %v2426 = vunpack.c.0.s8 %v2425
      %v2427 = vlaneseq
      %v2428 = vshrl.u32 %v2427, 7
      %v2429 = vsub.s32 %v2426, %v2428
      %v2430 = vrot.slane %v2369, %v2429
      %v2431 = vcombine.low %v2423, %v2430
      %v2433 = vunpack.c.l.s4 1966171168
      %v2434 = vunpack.c.0.s8 %v2433
      %v2435 = vlaneseq
      %v2436 = vshrl.u32 %v2435, 7
      %v2437 = vsub.s32 %v2434, %v2436
      %v2438 = vrot.slane %v2431, %v2437
      %v2442 = vpack.c.bf16 %v2392, %v2392
      %v2443 = vpack.c.bf16 %v2415, %v2415
      %v2444 = vpack.c.bf16 %v2438, %v2438
      %vm2445 = vcmask 517120
      %vm2446 = vsmask.f32 1280
      %vm2447 = vmand %vm2445, %vm2446
      %v2448 = vld [vmem:[%s192] sm:$0x3]
      %v2449 = vsel %vm2447, %v2442, %v2448
      %2450 = vst [vmem:[%s192] sm:$0x3] %v2449
      %v2451 = vld [vmem:[%s192 + $0x2] sm:$0x3]
      %v2452 = vsel %vm2447, %v2443, %v2451
      %2453 = vst [vmem:[%s192 + $0x2] sm:$0x3] %v2452
      %v2454 = vld [vmem:[%s192 + $0x4] sm:$0x3]
      %v2455 = vsel %vm2447, %v2444, %v2454
      %2456 = vst [vmem:[%s192 + $0x4] sm:$0x3] %v2455
      %s2457 = smul.u32 3, %s19
      %p2458 = scmp.lt.s32.totalorder %s18, 1
      %s2459 = scalar_select %p2458, %s18, 1
      %p2460 = scmp.lt.s32.totalorder %s2457, 2
      %s2461 = scalar_select %p2460, %s2457, 2
      %s2462 = smul.addr %s2459, 3
      %s2463 = sadd.s32 %s2461, %s2462
      %s2464 = smul.addr %s2463, 2
      %s2465 = scalar_lea.vmem %s3, %s2464
      // Predicated region
      $region33: #{discriminator_forward.9} parent=31 // pred_check
        %p2466 = pneg %p114
      $region34: #{discriminator_forward.9} parent=31 // pred_check_branch
        %2468 = sbr.rel (%p2466) target = $region36
      $region35: #{discriminator_forward.9} parent=31 // pred_region
        %s2469 = smul.u32 3, %s19
      $region36: #{discriminator_forward.9} parent=31 // pred_fallthru
        _
    $region32: #{discriminator_forward.9} parent=5 // pred_fallthru
      _
    %p2470 = scmp.le.s32.totalorder 2, %s9
    // Predicated region
    $region37: #{discriminator_forward.9} parent=5 // pred_check
      %p2471 = pneg %p2470
    $region38: #{discriminator_forward.9} parent=5 // pred_check_branch
      %2473 = sbr.rel (%p2471) target = $region40
    $region39: #{discriminator_forward.9} parent=5 // pred_region
      %s2474 = ssub.s32 %s9, 2
      // Predicated region
      $region41: #{discriminator_forward.9} parent=39 // pred_check
        %p2475 = pneg %p120
      $region42: #{discriminator_forward.9} parent=39 // pred_check_branch
        %2477 = sbr.rel (%p2475) target = $region44
      $region43: #{discriminator_forward.9} parent=39 // pred_region
        %s2478 = smul.u32 3, %s21
        %p2479 = scmp.lt.s32.totalorder %s20, 1
        %s2480 = scalar_select %p2479, %s20, 1
        %p2481 = scmp.lt.s32.totalorder %s2478, 2
        %s2482 = scalar_select %p2481, %s2478, 2
        %s2483 = smul.addr %s2480, 3
        %s2484 = sadd.s32 %s2482, %s2483
        %s2485 = smul.addr %s2484, 2
        %s2486 = scalar_lea.vmem %s3, %s2485
      $region44: #{discriminator_forward.9} parent=39 // pred_fallthru
        _
    $region40: #{discriminator_forward.9} parent=5 // pred_fallthru
      _
  $region6: #{discriminator_forward.9} parent=0 // loop_footer
    %s13 = sadd.s32 1, %s9
  $region7: #{discriminator_forward.9} parent=0 // loop_footer_branch
    %8 = sbr.rel target = $region3
  $region8: #{discriminator_forward.9} parent=0 // loop_exit
    _

</llo_original>
